<compile_context>
chip_gen: v5e
topology: v5e:2x2
jax: 0.10.0
libtpu: 0.0.40
codegen_flags: <defaults>
</compile_context>

<pallas_src>
import jax
import jax.numpy as jnp
from jax import lax
from jax.experimental import pallas as pl
from jax.experimental.pallas import tpu as pltpu


_LEAKY_SLOPE = 0.01          # PyTorch F.leaky_relu default
_PER_LAYER_REFS = 12         # 10 Wcompute refs (w1,b1..w5,b5) + 2 Gconv refs (fw, fb)
_NUM_LAYERS = 3              # 2 hidden Gconv layers + final Gconv -> 1


def _leaky(x, slope=_LEAKY_SLOPE):
    return jnp.where(x > 0, x, slope * x)


# -----------------------------------------------------------------------------
# Fused kernel: whole GNN_nl forward for one batch element, resident in VMEM
# -----------------------------------------------------------------------------
def fused_gnn_kernel(x_ref, *refs):
    """refs = 3 * 12 weight refs  ++  (logits_ref, wlast_ref).

    Per layer l (l = 0, 1, last), the 12 weight refs are:
      w1 (d, 2nf), b1 (1, 2nf), w2 (2nf, 2nf), b2, w3 (2nf, nf), b3,
      w4 (nf, nf),  b4,          w5 (1, nf),    b5 (1, 1),
      fw (2d, dout), fb (1, dout)
    """
    n_w = _NUM_LAYERS * _PER_LAYER_REFS
    w_refs = refs[:n_w]
    logits_ref, wlast_ref = refs[n_w], refs[n_w + 1]

    x0 = x_ref[0]                                     # (N, d0)
    N = x0.shape[0]

    # self-edge mask, computed once and shared by all three Wcompute layers
    row = lax.broadcasted_iota(jnp.int32, (N, N), 0)
    col = lax.broadcasted_iota(jnp.int32, (N, N), 1)
    diag = row == col

    def chunked_dot(chunks, w_ref, row_off=0):
        """sum_k chunks[k] @ w_ref[row_off + off_k : +d_k, :]  (no lane-dim concat)."""
        acc = None
        off = row_off
        for c in chunks:
            d = c.shape[-1]
            part = jnp.dot(c, w_ref[off:off + d, :],
                           preferred_element_type=jnp.float32)
            acc = part if acc is None else acc + part
            off += d
        return acc

    def wcompute(chunks, lr):
        """pairwise |xi - xj| -> 4-layer MLP -> 1-ch projection -> masked row softmax."""
        w1, b1, w2, b2, w3, b3, w4, b4, w5, b5 = lr
        phi_chunks = []
        for c in chunks:
            d = c.shape[-1]
            ci = jnp.broadcast_to(c[:, None, :], (N, N, d))
            cj = jnp.broadcast_to(c[None, :, :], (N, N, d))
            phi_chunks.append(jnp.abs(ci - cj).reshape(N * N, d))

        h = _leaky(chunked_dot(phi_chunks, w1) + b1[...])
        h = _leaky(jnp.dot(h, w2[...], preferred_element_type=jnp.float32) + b2[...])
        h = _leaky(jnp.dot(h, w3[...], preferred_element_type=jnp.float32) + b3[...])
        h = _leaky(jnp.dot(h, w4[...], preferred_element_type=jnp.float32) + b4[...])
        nf = h.shape[-1]
        # final 1x1 conv (nf -> 1) as a lane reduction (w5 stored as (1, nf))
        s = jnp.sum(h.reshape(N, N, nf) * w5[...], axis=-1) + b5[...]    # (N, N)
        s = jnp.where(diag, s - 1e8, s)                # mask self edges (W_id * 1e8)
        s = s - jnp.max(s, axis=-1, keepdims=True)     # row softmax over j
        e = jnp.exp(s)
        return e / jnp.sum(e, axis=-1, keepdims=True)

    def gconv(chunks, w_adj, fw, fb, apply_act):
        """J2 Gconv, single stacked fc weight fw = [W_id; W_adj] of shape (2d, dout)."""
        d = sum(c.shape[-1] for c in chunks)
        agg_chunks = [jnp.dot(w_adj, c, preferred_element_type=jnp.float32)
                      for c in chunks]
        y = chunked_dot(chunks, fw, 0) + chunked_dot(agg_chunks, fw, d) + fb[...]
        return _leaky(y) if apply_act else y           # BN treated as eval identity

    # --- two hidden layers: x <- [x, leaky(Gconv(x, Wcompute(x)))] -----------------
    chunks = [x0]
    for l in range(2):
        lr = w_refs[l * _PER_LAYER_REFS:(l + 1) * _PER_LAYER_REFS]
        w_adj = wcompute(chunks, lr[:10])
        chunks.append(gconv(chunks, w_adj, lr[10], lr[11], apply_act=True))

    # --- last layer: Gconv -> 1 logit per node, no activation -----------------------
    lr = w_refs[2 * _PER_LAYER_REFS:3 * _PER_LAYER_REFS]
    w_last = wcompute(chunks, lr[:10])
    out = gconv(chunks, w_last, lr[10], lr[11], apply_act=False)   # (N, 1)

    logits_ref[0] = out.astype(logits_ref.dtype)       # (N, 1)
    wlast_ref[0] = w_last.astype(wlast_ref.dtype)      # (N, N)


# -----------------------------------------------------------------------------
# Pallas wrapper
# -----------------------------------------------------------------------------
def metric_gnn_pallas(nodes, params):
    """nodes: (B, N, d0) -> (logits (B, N, 1), w_last (B, N, N))."""
    B, N, d0 = nodes.shape

    flat = []
    in_specs = [pl.BlockSpec((1, N, d0), lambda b: (b, 0, 0))]
    for wk, gk in (("w0", "g0"), ("w1", "g1"), ("w_last", "g_last")):
        for w, bias in params[wk]:
            flat += [w, bias]
            in_specs += [pl.BlockSpec(w.shape, lambda b: (0, 0)),
                         pl.BlockSpec(bias.shape, lambda b: (0, 0))]
        fw, fb = params[gk]
        flat += [fw, fb]
        in_specs += [pl.BlockSpec(fw.shape, lambda b: (0, 0)),
                     pl.BlockSpec(fb.shape, lambda b: (0, 0))]

    out_shape = (jax.ShapeDtypeStruct((B, N, 1), jnp.float32),
                 jax.ShapeDtypeStruct((B, N, N), jnp.float32))
    out_specs = (pl.BlockSpec((1, N, 1), lambda b: (b, 0, 0)),
                 pl.BlockSpec((1, N, N), lambda b: (b, 0, 0)))

    logits, w_last = pl.pallas_call(
        fused_gnn_kernel,
        out_shape=out_shape,
        grid=(B,),
        in_specs=in_specs,
        out_specs=out_specs,
        compiler_params=pltpu.CompilerParams(
            # one batch element per TensorCore on v7x megacore; neutral on v5e/v6e
            dimension_semantics=("parallel",)),
    )(nodes, *flat)
    return logits, w_last


# -----------------------------------------------------------------------------
# Deterministic parameter init (synthetic; no checkpoint load)
# -----------------------------------------------------------------------------
def _uniform(key, shape, lim):
    return jax.random.uniform(key, shape, jnp.float32, -lim, lim)


def init_wcompute_params(key, din, nf):
    # ratio = [2, 2, 1, 1], final 1x1 conv -> 1 channel (stored transposed as (1, nf))
    dims = [din, 2 * nf, 2 * nf, nf, nf, 1]
    keys = jax.random.split(key, 5)
    params = []
    for i, k in enumerate(keys):
        k1, k2 = jax.random.split(k)
        lim = 1.0 / float(dims[i]) ** 0.5
        if i == 4:
            w = _uniform(k1, (1, dims[i]), lim)          # (1, nf) for lane-reduce proj
        else:
            w = _uniform(k1, (dims[i], dims[i + 1]), lim)
        b = _uniform(k2, (1, dims[i + 1]), lim)
        params.append((w, b))
    return params


def init_gconv_params(key, din, dout):
    # single fc over J*din = 2*din inputs, applied to [x | W@x]  (matches gmul + fc)
    k1, k2 = jax.random.split(key)
    lim = 1.0 / float(2 * din) ** 0.5
    fw = _uniform(k1, (2 * din, dout), lim)
    fb = _uniform(k2, (1, dout), lim)
    return (fw, fb)


def init_metric_nn_params(key, num_inputs, nf):
    keys = jax.random.split(key, 6)
    d0 = num_inputs
    d1 = d0 + nf // 2
    d2 = d1 + nf // 2
    return {
        "w0": init_wcompute_params(keys[0], d0, nf),
        "g0": init_gconv_params(keys[1], d0, nf // 2),
        "w1": init_wcompute_params(keys[2], d1, nf),
        "g1": init_gconv_params(keys[3], d1, nf // 2),
        "w_last": init_wcompute_params(keys[4], d2, nf),
        "g_last": init_gconv_params(keys[5], d2, 1),
    }


# -----------------------------------------------------------------------------
# MetricNN forward (gnn_iclr_nl path)
# -----------------------------------------------------------------------------
def metric_nn_forward(params, z, zi_s, labels_yi):
    """inputs: z (B,1,1,E), zi_s list of (B,1,1,E), labels_yi list of (B,NWAY)."""
    zero_pad = jnp.zeros_like(labels_yi[0])
    labels = [zero_pad] + list(labels_yi)
    zs = [z] + list(zi_s)
    # nodes[:, k, :] = cat([zi_k[:, 0, 0, :], label_k], -1)
    nodes = jnp.stack(
        [jnp.concatenate([zi[:, 0, 0, :], lab], axis=1)
         for zi, lab in zip(zs, labels)], axis=1)              # (B, N, E + NWAY)

    out, w_last = metric_gnn_pallas(nodes, params)             # (B,N,1), (B,N,N)
    logits = out[..., 0]                                       # squeeze(-1)
    outputs = jax.nn.sigmoid(logits)

    B, N, _ = nodes.shape
    # TODO(synk): GNN_nl source not provided; W_ALL assumed to be the last-layer
    # J2 operator stack [W_id, W_softmax] of shape (B, N, N, 2).
    eye = jnp.broadcast_to(jnp.eye(N, dtype=jnp.float32)[None, :, :, None],
                           (B, N, N, 1))
    W_ALL = jnp.concatenate([eye, w_last[..., None]], axis=-1)
    return W_ALL, outputs, logits


# -----------------------------------------------------------------------------
if __name__ == "__main__":
    key = jax.random.PRNGKey(0)
    B, EMB, NWAY, NF = 2, 28, 4, 32          # emb_size=28, train_N_way=4, hidden_f=32
    NUM_SUPPORT = 15                         # -> 16 graph nodes (1 query + 15 support)

    kz, ksup, klab, kp = jax.random.split(key, 4)
    z = jax.random.normal(kz, (B, 1, 1, EMB), jnp.float32)
    zi_s = [jax.random.normal(jax.random.fold_in(ksup, i), (B, 1, 1, EMB), jnp.float32)
            for i in range(NUM_SUPPORT)]
    labels_yi = [jax.nn.one_hot(
                     jax.random.randint(jax.random.fold_in(klab, i), (B,), 0, NWAY),
                     NWAY, dtype=jnp.float32)
                 for i in range(NUM_SUPPORT)]

    params = init_metric_nn_params(kp, EMB + NWAY, NF)

    W_ALL, outputs, logits = metric_nn_forward(params, z, zi_s, labels_yi)
    jax.block_until_ready((W_ALL, outputs, logits))

    assert W_ALL.shape == (B, NUM_SUPPORT + 1, NUM_SUPPORT + 1, 2)
    assert outputs.shape == (B, NUM_SUPPORT + 1)
    assert logits.shape == (B, NUM_SUPPORT + 1)
    assert bool(jnp.all(jnp.isfinite(logits)))
    print("KERNEL_OK")
</pallas_src>

<mosaic_0001>
module attributes {stable_mosaic.version = 11 : i64} {
  func.func @fused_gnn_kernel(%arg0: i32, %arg1: memref<1x16x32xf32, #tpu.memory_space<vmem>>, %arg2: memref<32x64xf32, #tpu.memory_space<vmem>>, %arg3: memref<1x64xf32, #tpu.memory_space<vmem>>, %arg4: memref<64x64xf32, #tpu.memory_space<vmem>>, %arg5: memref<1x64xf32, #tpu.memory_space<vmem>>, %arg6: memref<64x32xf32, #tpu.memory_space<vmem>>, %arg7: memref<1x32xf32, #tpu.memory_space<vmem>>, %arg8: memref<32x32xf32, #tpu.memory_space<vmem>>, %arg9: memref<1x32xf32, #tpu.memory_space<vmem>>, %arg10: memref<1x32xf32, #tpu.memory_space<vmem>>, %arg11: memref<1x1xf32, #tpu.memory_space<vmem>>, %arg12: memref<64x16xf32, #tpu.memory_space<vmem>>, %arg13: memref<1x16xf32, #tpu.memory_space<vmem>>, %arg14: memref<48x64xf32, #tpu.memory_space<vmem>>, %arg15: memref<1x64xf32, #tpu.memory_space<vmem>>, %arg16: memref<64x64xf32, #tpu.memory_space<vmem>>, %arg17: memref<1x64xf32, #tpu.memory_space<vmem>>, %arg18: memref<64x32xf32, #tpu.memory_space<vmem>>, %arg19: memref<1x32xf32, #tpu.memory_space<vmem>>, %arg20: memref<32x32xf32, #tpu.memory_space<vmem>>, %arg21: memref<1x32xf32, #tpu.memory_space<vmem>>, %arg22: memref<1x32xf32, #tpu.memory_space<vmem>>, %arg23: memref<1x1xf32, #tpu.memory_space<vmem>>, %arg24: memref<96x16xf32, #tpu.memory_space<vmem>>, %arg25: memref<1x16xf32, #tpu.memory_space<vmem>>, %arg26: memref<64x64xf32, #tpu.memory_space<vmem>>, %arg27: memref<1x64xf32, #tpu.memory_space<vmem>>, %arg28: memref<64x64xf32, #tpu.memory_space<vmem>>, %arg29: memref<1x64xf32, #tpu.memory_space<vmem>>, %arg30: memref<64x32xf32, #tpu.memory_space<vmem>>, %arg31: memref<1x32xf32, #tpu.memory_space<vmem>>, %arg32: memref<32x32xf32, #tpu.memory_space<vmem>>, %arg33: memref<1x32xf32, #tpu.memory_space<vmem>>, %arg34: memref<1x32xf32, #tpu.memory_space<vmem>>, %arg35: memref<1x1xf32, #tpu.memory_space<vmem>>, %arg36: memref<128x1xf32, #tpu.memory_space<vmem>>, %arg37: memref<1x1xf32, #tpu.memory_space<vmem>>, %arg38: memref<1x16x1xf32, #tpu.memory_space<vmem>>, %arg39: memref<1x16x16xf32, #tpu.memory_space<vmem>>) attributes {dimension_semantics = [#tpu.dimension_semantics<parallel>], iteration_bounds = array<i64: 2>, scalar_prefetch = 0 : i64, scratch_operands = 0 : i64, tpu.core_type = #tpu.core_type<tc>, window_params = [{transform_indices = @transform_0, window_bounds = array<i64: 1, 16, 32>}, {pipeline_mode = #tpu.pipeline_mode<synchronous>, transform_indices = @transform_1, window_bounds = array<i64: 32, 64>}, {pipeline_mode = #tpu.pipeline_mode<synchronous>, transform_indices = @transform_2, window_bounds = array<i64: 1, 64>}, {pipeline_mode = #tpu.pipeline_mode<synchronous>, transform_indices = @transform_3, window_bounds = array<i64: 64, 64>}, {pipeline_mode = #tpu.pipeline_mode<synchronous>, transform_indices = @transform_4, window_bounds = array<i64: 1, 64>}, {pipeline_mode = #tpu.pipeline_mode<synchronous>, transform_indices = @transform_5, window_bounds = array<i64: 64, 32>}, {pipeline_mode = #tpu.pipeline_mode<synchronous>, transform_indices = @transform_6, window_bounds = array<i64: 1, 32>}, {pipeline_mode = #tpu.pipeline_mode<synchronous>, transform_indices = @transform_7, window_bounds = array<i64: 32, 32>}, {pipeline_mode = #tpu.pipeline_mode<synchronous>, transform_indices = @transform_8, window_bounds = array<i64: 1, 32>}, {pipeline_mode = #tpu.pipeline_mode<synchronous>, transform_indices = @transform_9, window_bounds = array<i64: 1, 32>}, {pipeline_mode = #tpu.pipeline_mode<synchronous>, transform_indices = @transform_10, window_bounds = array<i64: 1, 1>}, {pipeline_mode = #tpu.pipeline_mode<synchronous>, transform_indices = @transform_11, window_bounds = array<i64: 64, 16>}, {pipeline_mode = #tpu.pipeline_mode<synchronous>, transform_indices = @transform_12, window_bounds = array<i64: 1, 16>}, {pipeline_mode = #tpu.pipeline_mode<synchronous>, transform_indices = @transform_13, window_bounds = array<i64: 48, 64>}, {pipeline_mode = #tpu.pipeline_mode<synchronous>, transform_indices = @transform_14, window_bounds = array<i64: 1, 64>}, {pipeline_mode = #tpu.pipeline_mode<synchronous>, transform_indices = @transform_15, window_bounds = array<i64: 64, 64>}, {pipeline_mode = #tpu.pipeline_mode<synchronous>, transform_indices = @transform_16, window_bounds = array<i64: 1, 64>}, {pipeline_mode = #tpu.pipeline_mode<synchronous>, transform_indices = @transform_17, window_bounds = array<i64: 64, 32>}, {pipeline_mode = #tpu.pipeline_mode<synchronous>, transform_indices = @transform_18, window_bounds = array<i64: 1, 32>}, {pipeline_mode = #tpu.pipeline_mode<synchronous>, transform_indices = @transform_19, window_bounds = array<i64: 32, 32>}, {pipeline_mode = #tpu.pipeline_mode<synchronous>, transform_indices = @transform_20, window_bounds = array<i64: 1, 32>}, {pipeline_mode = #tpu.pipeline_mode<synchronous>, transform_indices = @transform_21, window_bounds = array<i64: 1, 32>}, {pipeline_mode = #tpu.pipeline_mode<synchronous>, transform_indices = @transform_22, window_bounds = array<i64: 1, 1>}, {pipeline_mode = #tpu.pipeline_mode<synchronous>, transform_indices = @transform_23, window_bounds = array<i64: 96, 16>}, {pipeline_mode = #tpu.pipeline_mode<synchronous>, transform_indices = @transform_24, window_bounds = array<i64: 1, 16>}, {pipeline_mode = #tpu.pipeline_mode<synchronous>, transform_indices = @transform_25, window_bounds = array<i64: 64, 64>}, {pipeline_mode = #tpu.pipeline_mode<synchronous>, transform_indices = @transform_26, window_bounds = array<i64: 1, 64>}, {pipeline_mode = #tpu.pipeline_mode<synchronous>, transform_indices = @transform_27, window_bounds = array<i64: 64, 64>}, {pipeline_mode = #tpu.pipeline_mode<synchronous>, transform_indices = @transform_28, window_bounds = array<i64: 1, 64>}, {pipeline_mode = #tpu.pipeline_mode<synchronous>, transform_indices = @transform_29, window_bounds = array<i64: 64, 32>}, {pipeline_mode = #tpu.pipeline_mode<synchronous>, transform_indices = @transform_30, window_bounds = array<i64: 1, 32>}, {pipeline_mode = #tpu.pipeline_mode<synchronous>, transform_indices = @transform_31, window_bounds = array<i64: 32, 32>}, {pipeline_mode = #tpu.pipeline_mode<synchronous>, transform_indices = @transform_32, window_bounds = array<i64: 1, 32>}, {pipeline_mode = #tpu.pipeline_mode<synchronous>, transform_indices = @transform_33, window_bounds = array<i64: 1, 32>}, {pipeline_mode = #tpu.pipeline_mode<synchronous>, transform_indices = @transform_34, window_bounds = array<i64: 1, 1>}, {pipeline_mode = #tpu.pipeline_mode<synchronous>, transform_indices = @transform_35, window_bounds = array<i64: 128, 1>}, {pipeline_mode = #tpu.pipeline_mode<synchronous>, transform_indices = @transform_36, window_bounds = array<i64: 1, 1>}, {transform_indices = @transform_37, window_bounds = array<i64: 1, 16, 1>}, {transform_indices = @transform_38, window_bounds = array<i64: 1, 16, 16>}]} {
    %c0 = arith.constant 0 : index
    %c0_0 = arith.constant 0 : index
    %c0_1 = arith.constant 0 : index
    %0 = vector.load %arg1[%c0, %c0_0, %c0_1] : memref<1x16x32xf32, #tpu.memory_space<vmem>>, vector<1x16x32xf32>
    %1 = vector.shape_cast %0 : vector<1x16x32xf32> to vector<16x32xf32>
    %2 = tpu.iota {dimensions = array<i32: 0>} : vector<16x16xi32>
    %3 = tpu.iota {dimensions = array<i32: 1>} : vector<16x16xi32>
    %4 = arith.cmpi eq, %2, %3 : vector<16x16xi32>
    %5 = vector.shape_cast %1 : vector<16x32xf32> to vector<16x1x32xf32>
    %6 = vector.shape_cast %5 : vector<16x1x32xf32> to vector<16x1x32xf32>
    %7 = vector.broadcast %6 : vector<16x1x32xf32> to vector<16x16x32xf32>
    %8 = vector.shape_cast %1 : vector<16x32xf32> to vector<1x16x32xf32>
    %9 = vector.shape_cast %8 : vector<1x16x32xf32> to vector<1x16x32xf32>
    %10 = vector.broadcast %9 : vector<1x16x32xf32> to vector<16x16x32xf32>
    %11 = arith.subf %7, %10 : vector<16x16x32xf32>
    %12 = math.absf %11 : vector<16x16x32xf32>
    %13 = vector.shape_cast %12 : vector<16x16x32xf32> to vector<256x32xf32>
    %c0_2 = arith.constant 0 : index
    %c0_3 = arith.constant 0 : index
    %14 = vector.load %arg2[%c0_2, %c0_3] : memref<32x64xf32, #tpu.memory_space<vmem>>, vector<32x64xf32>
    %cst = arith.constant dense<0.000000e+00> : vector<256x64xf32>
    %15 = tpu.matmul %13, %14, %cst {dimension_numbers = #tpu.dot_dimension_numbers<[1], [0], [0], [1], [0, 0, 1, 1], [], []>} : vector<256x32xf32>, vector<32x64xf32>, vector<256x64xf32> -> vector<256x64xf32>
    %c0_4 = arith.constant 0 : index
    %c0_5 = arith.constant 0 : index
    %16 = vector.load %arg3[%c0_4, %c0_5] : memref<1x64xf32, #tpu.memory_space<vmem>>, vector<1x64xf32>
    %17 = vector.broadcast %16 : vector<1x64xf32> to vector<256x64xf32>
    %18 = arith.addf %15, %17 : vector<256x64xf32>
    %cst_6 = arith.constant 0.000000e+00 : f32
    %19 = vector.broadcast %cst_6 : f32 to vector<256x64xf32>
    %20 = arith.cmpf ogt, %18, %19 : vector<256x64xf32>
    %cst_7 = arith.constant 0.00999999977 : f32
    %21 = vector.broadcast %cst_7 : f32 to vector<256x64xf32>
    %22 = arith.mulf %21, %18 : vector<256x64xf32>
    %23 = arith.select %20, %18, %22 : vector<256x64xi1>, vector<256x64xf32>
    %c0_8 = arith.constant 0 : index
    %c0_9 = arith.constant 0 : index
    %24 = vector.load %arg4[%c0_8, %c0_9] : memref<64x64xf32, #tpu.memory_space<vmem>>, vector<64x64xf32>
    %cst_10 = arith.constant dense<0.000000e+00> : vector<256x64xf32>
    %25 = tpu.matmul %23, %24, %cst_10 {dimension_numbers = #tpu.dot_dimension_numbers<[1], [0], [0], [1], [0, 0, 1, 1], [], []>} : vector<256x64xf32>, vector<64x64xf32>, vector<256x64xf32> -> vector<256x64xf32>
    %c0_11 = arith.constant 0 : index
    %c0_12 = arith.constant 0 : index
    %26 = vector.load %arg5[%c0_11, %c0_12] : memref<1x64xf32, #tpu.memory_space<vmem>>, vector<1x64xf32>
    %27 = vector.broadcast %26 : vector<1x64xf32> to vector<256x64xf32>
    %28 = arith.addf %25, %27 : vector<256x64xf32>
    %cst_13 = arith.constant 0.000000e+00 : f32
    %29 = vector.broadcast %cst_13 : f32 to vector<256x64xf32>
    %30 = arith.cmpf ogt, %28, %29 : vector<256x64xf32>
    %cst_14 = arith.constant 0.00999999977 : f32
    %31 = vector.broadcast %cst_14 : f32 to vector<256x64xf32>
    %32 = arith.mulf %31, %28 : vector<256x64xf32>
    %33 = arith.select %30, %28, %32 : vector<256x64xi1>, vector<256x64xf32>
    %c0_15 = arith.constant 0 : index
    %c0_16 = arith.constant 0 : index
    %34 = vector.load %arg6[%c0_15, %c0_16] : memref<64x32xf32, #tpu.memory_space<vmem>>, vector<64x32xf32>
    %cst_17 = arith.constant dense<0.000000e+00> : vector<256x32xf32>
    %35 = tpu.matmul %33, %34, %cst_17 {dimension_numbers = #tpu.dot_dimension_numbers<[1], [0], [0], [1], [0, 0, 1, 1], [], []>} : vector<256x64xf32>, vector<64x32xf32>, vector<256x32xf32> -> vector<256x32xf32>
    %c0_18 = arith.constant 0 : index
    %c0_19 = arith.constant 0 : index
    %36 = vector.load %arg7[%c0_18, %c0_19] : memref<1x32xf32, #tpu.memory_space<vmem>>, vector<1x32xf32>
    %37 = vector.broadcast %36 : vector<1x32xf32> to vector<256x32xf32>
    %38 = arith.addf %35, %37 : vector<256x32xf32>
    %cst_20 = arith.constant 0.000000e+00 : f32
    %39 = vector.broadcast %cst_20 : f32 to vector<256x32xf32>
    %40 = arith.cmpf ogt, %38, %39 : vector<256x32xf32>
    %cst_21 = arith.constant 0.00999999977 : f32
    %41 = vector.broadcast %cst_21 : f32 to vector<256x32xf32>
    %42 = arith.mulf %41, %38 : vector<256x32xf32>
    %43 = arith.select %40, %38, %42 : vector<256x32xi1>, vector<256x32xf32>
    %c0_22 = arith.constant 0 : index
    %c0_23 = arith.constant 0 : index
    %44 = vector.load %arg8[%c0_22, %c0_23] : memref<32x32xf32, #tpu.memory_space<vmem>>, vector<32x32xf32>
    %cst_24 = arith.constant dense<0.000000e+00> : vector<256x32xf32>
    %45 = tpu.matmul %43, %44, %cst_24 {dimension_numbers = #tpu.dot_dimension_numbers<[1], [0], [0], [1], [0, 0, 1, 1], [], []>} : vector<256x32xf32>, vector<32x32xf32>, vector<256x32xf32> -> vector<256x32xf32>
    %c0_25 = arith.constant 0 : index
    %c0_26 = arith.constant 0 : index
    %46 = vector.load %arg9[%c0_25, %c0_26] : memref<1x32xf32, #tpu.memory_space<vmem>>, vector<1x32xf32>
    %47 = vector.broadcast %46 : vector<1x32xf32> to vector<256x32xf32>
    %48 = arith.addf %45, %47 : vector<256x32xf32>
    %cst_27 = arith.constant 0.000000e+00 : f32
    %49 = vector.broadcast %cst_27 : f32 to vector<256x32xf32>
    %50 = arith.cmpf ogt, %48, %49 : vector<256x32xf32>
    %cst_28 = arith.constant 0.00999999977 : f32
    %51 = vector.broadcast %cst_28 : f32 to vector<256x32xf32>
    %52 = arith.mulf %51, %48 : vector<256x32xf32>
    %53 = arith.select %50, %48, %52 : vector<256x32xi1>, vector<256x32xf32>
    %54 = vector.shape_cast %53 : vector<256x32xf32> to vector<16x16x32xf32>
    %c0_29 = arith.constant 0 : index
    %c0_30 = arith.constant 0 : index
    %55 = vector.load %arg10[%c0_29, %c0_30] : memref<1x32xf32, #tpu.memory_space<vmem>>, vector<1x32xf32>
    %56 = vector.shape_cast %55 : vector<1x32xf32> to vector<1x1x32xf32>
    %57 = vector.broadcast %56 : vector<1x1x32xf32> to vector<16x16x32xf32>
    %58 = arith.mulf %54, %57 : vector<16x16x32xf32>
    %cst_31 = arith.constant dense<0.000000e+00> : vector<16x16xf32>
    %59 = vector.multi_reduction <add>, %58, %cst_31 [2] : vector<16x16x32xf32> to vector<16x16xf32>
    %c0_32 = arith.constant 0 : index
    %c0_33 = arith.constant 0 : index
    %60 = vector.load %arg11[%c0_32, %c0_33] : memref<1x1xf32, #tpu.memory_space<vmem>>, vector<1x1xf32>
    %61 = vector.broadcast %60 : vector<1x1xf32> to vector<16x16xf32>
    %62 = arith.addf %59, %61 : vector<16x16xf32>
    %cst_34 = arith.constant 1.000000e+08 : f32
    %63 = vector.broadcast %cst_34 : f32 to vector<16x16xf32>
    %64 = arith.subf %62, %63 : vector<16x16xf32>
    %65 = arith.select %4, %64, %62 : vector<16x16xi1>, vector<16x16xf32>
    %cst_35 = arith.constant dense<0xFF800000> : vector<16xf32>
    %66 = vector.multi_reduction <maximumf>, %65, %cst_35 [1] : vector<16x16xf32> to vector<16xf32>
    %67 = vector.shape_cast %66 : vector<16xf32> to vector<16x1xf32>
    %68 = vector.broadcast %67 : vector<16x1xf32> to vector<16x16xf32>
    %69 = arith.subf %65, %68 : vector<16x16xf32>
    %70 = math.exp %69 : vector<16x16xf32>
    %cst_36 = arith.constant dense<0.000000e+00> : vector<16xf32>
    %71 = vector.multi_reduction <add>, %70, %cst_36 [1] : vector<16x16xf32> to vector<16xf32>
    %72 = vector.shape_cast %71 : vector<16xf32> to vector<16x1xf32>
    %73 = vector.broadcast %72 : vector<16x1xf32> to vector<16x16xf32>
    %74 = arith.divf %70, %73 : vector<16x16xf32>
    %cst_37 = arith.constant dense<0.000000e+00> : vector<16x32xf32>
    %75 = tpu.matmul %74, %1, %cst_37 {dimension_numbers = #tpu.dot_dimension_numbers<[1], [0], [0], [1], [0, 0, 1, 1], [], []>} : vector<16x16xf32>, vector<16x32xf32>, vector<16x32xf32> -> vector<16x32xf32>
    %c0_38 = arith.constant 0 : index
    %c0_39 = arith.constant 0 : index
    %76 = vector.load %arg12[%c0_38, %c0_39] : memref<64x16xf32, #tpu.memory_space<vmem>>, vector<32x16xf32>
    %cst_40 = arith.constant dense<0.000000e+00> : vector<16x16xf32>
    %77 = tpu.matmul %1, %76, %cst_40 {dimension_numbers = #tpu.dot_dimension_numbers<[1], [0], [0], [1], [0, 0, 1, 1], [], []>} : vector<16x32xf32>, vector<32x16xf32>, vector<16x16xf32> -> vector<16x16xf32>
    %c32 = arith.constant 32 : index
    %c0_41 = arith.constant 0 : index
    %78 = vector.load %arg12[%c32, %c0_41] : memref<64x16xf32, #tpu.memory_space<vmem>>, vector<32x16xf32>
    %cst_42 = arith.constant dense<0.000000e+00> : vector<16x16xf32>
    %79 = tpu.matmul %75, %78, %cst_42 {dimension_numbers = #tpu.dot_dimension_numbers<[1], [0], [0], [1], [0, 0, 1, 1], [], []>} : vector<16x32xf32>, vector<32x16xf32>, vector<16x16xf32> -> vector<16x16xf32>
    %80 = arith.addf %77, %79 : vector<16x16xf32>
    %c0_43 = arith.constant 0 : index
    %c0_44 = arith.constant 0 : index
    %81 = vector.load %arg13[%c0_43, %c0_44] : memref<1x16xf32, #tpu.memory_space<vmem>>, vector<1x16xf32>
    %82 = vector.broadcast %81 : vector<1x16xf32> to vector<16x16xf32>
    %83 = arith.addf %80, %82 : vector<16x16xf32>
    %cst_45 = arith.constant 0.000000e+00 : f32
    %84 = vector.broadcast %cst_45 : f32 to vector<16x16xf32>
    %85 = arith.cmpf ogt, %83, %84 : vector<16x16xf32>
    %cst_46 = arith.constant 0.00999999977 : f32
    %86 = vector.broadcast %cst_46 : f32 to vector<16x16xf32>
    %87 = arith.mulf %86, %83 : vector<16x16xf32>
    %88 = arith.select %85, %83, %87 : vector<16x16xi1>, vector<16x16xf32>
    %89 = vector.shape_cast %1 : vector<16x32xf32> to vector<16x1x32xf32>
    %90 = vector.shape_cast %89 : vector<16x1x32xf32> to vector<16x1x32xf32>
    %91 = vector.broadcast %90 : vector<16x1x32xf32> to vector<16x16x32xf32>
    %92 = vector.shape_cast %1 : vector<16x32xf32> to vector<1x16x32xf32>
    %93 = vector.shape_cast %92 : vector<1x16x32xf32> to vector<1x16x32xf32>
    %94 = vector.broadcast %93 : vector<1x16x32xf32> to vector<16x16x32xf32>
    %95 = arith.subf %91, %94 : vector<16x16x32xf32>
    %96 = math.absf %95 : vector<16x16x32xf32>
    %97 = vector.shape_cast %96 : vector<16x16x32xf32> to vector<256x32xf32>
    %98 = vector.shape_cast %88 : vector<16x16xf32> to vector<16x1x16xf32>
    %99 = vector.shape_cast %98 : vector<16x1x16xf32> to vector<16x1x16xf32>
    %100 = vector.broadcast %99 : vector<16x1x16xf32> to vector<16x16x16xf32>
    %101 = vector.shape_cast %88 : vector<16x16xf32> to vector<1x16x16xf32>
    %102 = vector.shape_cast %101 : vector<1x16x16xf32> to vector<1x16x16xf32>
    %103 = vector.broadcast %102 : vector<1x16x16xf32> to vector<16x16x16xf32>
    %104 = arith.subf %100, %103 : vector<16x16x16xf32>
    %105 = math.absf %104 : vector<16x16x16xf32>
    %106 = vector.shape_cast %105 : vector<16x16x16xf32> to vector<256x16xf32>
    %c0_47 = arith.constant 0 : index
    %c0_48 = arith.constant 0 : index
    %107 = vector.load %arg14[%c0_47, %c0_48] : memref<48x64xf32, #tpu.memory_space<vmem>>, vector<32x64xf32>
    %cst_49 = arith.constant dense<0.000000e+00> : vector<256x64xf32>
    %108 = tpu.matmul %97, %107, %cst_49 {dimension_numbers = #tpu.dot_dimension_numbers<[1], [0], [0], [1], [0, 0, 1, 1], [], []>} : vector<256x32xf32>, vector<32x64xf32>, vector<256x64xf32> -> vector<256x64xf32>
    %c32_50 = arith.constant 32 : index
    %c0_51 = arith.constant 0 : index
    %109 = vector.load %arg14[%c32_50, %c0_51] : memref<48x64xf32, #tpu.memory_space<vmem>>, vector<16x64xf32>
    %cst_52 = arith.constant dense<0.000000e+00> : vector<256x64xf32>
    %110 = tpu.matmul %106, %109, %cst_52 {dimension_numbers = #tpu.dot_dimension_numbers<[1], [0], [0], [1], [0, 0, 1, 1], [], []>} : vector<256x16xf32>, vector<16x64xf32>, vector<256x64xf32> -> vector<256x64xf32>
    %111 = arith.addf %108, %110 : vector<256x64xf32>
    %c0_53 = arith.constant 0 : index
    %c0_54 = arith.constant 0 : index
    %112 = vector.load %arg15[%c0_53, %c0_54] : memref<1x64xf32, #tpu.memory_space<vmem>>, vector<1x64xf32>
    %113 = vector.broadcast %112 : vector<1x64xf32> to vector<256x64xf32>
    %114 = arith.addf %111, %113 : vector<256x64xf32>
    %cst_55 = arith.constant 0.000000e+00 : f32
    %115 = vector.broadcast %cst_55 : f32 to vector<256x64xf32>
    %116 = arith.cmpf ogt, %114, %115 : vector<256x64xf32>
    %cst_56 = arith.constant 0.00999999977 : f32
    %117 = vector.broadcast %cst_56 : f32 to vector<256x64xf32>
    %118 = arith.mulf %117, %114 : vector<256x64xf32>
    %119 = arith.select %116, %114, %118 : vector<256x64xi1>, vector<256x64xf32>
    %c0_57 = arith.constant 0 : index
    %c0_58 = arith.constant 0 : index
    %120 = vector.load %arg16[%c0_57, %c0_58] : memref<64x64xf32, #tpu.memory_space<vmem>>, vector<64x64xf32>
    %cst_59 = arith.constant dense<0.000000e+00> : vector<256x64xf32>
    %121 = tpu.matmul %119, %120, %cst_59 {dimension_numbers = #tpu.dot_dimension_numbers<[1], [0], [0], [1], [0, 0, 1, 1], [], []>} : vector<256x64xf32>, vector<64x64xf32>, vector<256x64xf32> -> vector<256x64xf32>
    %c0_60 = arith.constant 0 : index
    %c0_61 = arith.constant 0 : index
    %122 = vector.load %arg17[%c0_60, %c0_61] : memref<1x64xf32, #tpu.memory_space<vmem>>, vector<1x64xf32>
    %123 = vector.broadcast %122 : vector<1x64xf32> to vector<256x64xf32>
    %124 = arith.addf %121, %123 : vector<256x64xf32>
    %cst_62 = arith.constant 0.000000e+00 : f32
    %125 = vector.broadcast %cst_62 : f32 to vector<256x64xf32>
    %126 = arith.cmpf ogt, %124, %125 : vector<256x64xf32>
    %cst_63 = arith.constant 0.00999999977 : f32
    %127 = vector.broadcast %cst_63 : f32 to vector<256x64xf32>
    %128 = arith.mulf %127, %124 : vector<256x64xf32>
    %129 = arith.select %126, %124, %128 : vector<256x64xi1>, vector<256x64xf32>
    %c0_64 = arith.constant 0 : index
    %c0_65 = arith.constant 0 : index
    %130 = vector.load %arg18[%c0_64, %c0_65] : memref<64x32xf32, #tpu.memory_space<vmem>>, vector<64x32xf32>
    %cst_66 = arith.constant dense<0.000000e+00> : vector<256x32xf32>
    %131 = tpu.matmul %129, %130, %cst_66 {dimension_numbers = #tpu.dot_dimension_numbers<[1], [0], [0], [1], [0, 0, 1, 1], [], []>} : vector<256x64xf32>, vector<64x32xf32>, vector<256x32xf32> -> vector<256x32xf32>
    %c0_67 = arith.constant 0 : index
    %c0_68 = arith.constant 0 : index
    %132 = vector.load %arg19[%c0_67, %c0_68] : memref<1x32xf32, #tpu.memory_space<vmem>>, vector<1x32xf32>
    %133 = vector.broadcast %132 : vector<1x32xf32> to vector<256x32xf32>
    %134 = arith.addf %131, %133 : vector<256x32xf32>
    %cst_69 = arith.constant 0.000000e+00 : f32
    %135 = vector.broadcast %cst_69 : f32 to vector<256x32xf32>
    %136 = arith.cmpf ogt, %134, %135 : vector<256x32xf32>
    %cst_70 = arith.constant 0.00999999977 : f32
    %137 = vector.broadcast %cst_70 : f32 to vector<256x32xf32>
    %138 = arith.mulf %137, %134 : vector<256x32xf32>
    %139 = arith.select %136, %134, %138 : vector<256x32xi1>, vector<256x32xf32>
    %c0_71 = arith.constant 0 : index
    %c0_72 = arith.constant 0 : index
    %140 = vector.load %arg20[%c0_71, %c0_72] : memref<32x32xf32, #tpu.memory_space<vmem>>, vector<32x32xf32>
    %cst_73 = arith.constant dense<0.000000e+00> : vector<256x32xf32>
    %141 = tpu.matmul %139, %140, %cst_73 {dimension_numbers = #tpu.dot_dimension_numbers<[1], [0], [0], [1], [0, 0, 1, 1], [], []>} : vector<256x32xf32>, vector<32x32xf32>, vector<256x32xf32> -> vector<256x32xf32>
    %c0_74 = arith.constant 0 : index
    %c0_75 = arith.constant 0 : index
    %142 = vector.load %arg21[%c0_74, %c0_75] : memref<1x32xf32, #tpu.memory_space<vmem>>, vector<1x32xf32>
    %143 = vector.broadcast %142 : vector<1x32xf32> to vector<256x32xf32>
    %144 = arith.addf %141, %143 : vector<256x32xf32>
    %cst_76 = arith.constant 0.000000e+00 : f32
    %145 = vector.broadcast %cst_76 : f32 to vector<256x32xf32>
    %146 = arith.cmpf ogt, %144, %145 : vector<256x32xf32>
    %cst_77 = arith.constant 0.00999999977 : f32
    %147 = vector.broadcast %cst_77 : f32 to vector<256x32xf32>
    %148 = arith.mulf %147, %144 : vector<256x32xf32>
    %149 = arith.select %146, %144, %148 : vector<256x32xi1>, vector<256x32xf32>
    %150 = vector.shape_cast %149 : vector<256x32xf32> to vector<16x16x32xf32>
    %c0_78 = arith.constant 0 : index
    %c0_79 = arith.constant 0 : index
    %151 = vector.load %arg22[%c0_78, %c0_79] : memref<1x32xf32, #tpu.memory_space<vmem>>, vector<1x32xf32>
    %152 = vector.shape_cast %151 : vector<1x32xf32> to vector<1x1x32xf32>
    %153 = vector.broadcast %152 : vector<1x1x32xf32> to vector<16x16x32xf32>
    %154 = arith.mulf %150, %153 : vector<16x16x32xf32>
    %cst_80 = arith.constant dense<0.000000e+00> : vector<16x16xf32>
    %155 = vector.multi_reduction <add>, %154, %cst_80 [2] : vector<16x16x32xf32> to vector<16x16xf32>
    %c0_81 = arith.constant 0 : index
    %c0_82 = arith.constant 0 : index
    %156 = vector.load %arg23[%c0_81, %c0_82] : memref<1x1xf32, #tpu.memory_space<vmem>>, vector<1x1xf32>
    %157 = vector.broadcast %156 : vector<1x1xf32> to vector<16x16xf32>
    %158 = arith.addf %155, %157 : vector<16x16xf32>
    %cst_83 = arith.constant 1.000000e+08 : f32
    %159 = vector.broadcast %cst_83 : f32 to vector<16x16xf32>
    %160 = arith.subf %158, %159 : vector<16x16xf32>
    %161 = arith.select %4, %160, %158 : vector<16x16xi1>, vector<16x16xf32>
    %cst_84 = arith.constant dense<0xFF800000> : vector<16xf32>
    %162 = vector.multi_reduction <maximumf>, %161, %cst_84 [1] : vector<16x16xf32> to vector<16xf32>
    %163 = vector.shape_cast %162 : vector<16xf32> to vector<16x1xf32>
    %164 = vector.broadcast %163 : vector<16x1xf32> to vector<16x16xf32>
    %165 = arith.subf %161, %164 : vector<16x16xf32>
    %166 = math.exp %165 : vector<16x16xf32>
    %cst_85 = arith.constant dense<0.000000e+00> : vector<16xf32>
    %167 = vector.multi_reduction <add>, %166, %cst_85 [1] : vector<16x16xf32> to vector<16xf32>
    %168 = vector.shape_cast %167 : vector<16xf32> to vector<16x1xf32>
    %169 = vector.broadcast %168 : vector<16x1xf32> to vector<16x16xf32>
    %170 = arith.divf %166, %169 : vector<16x16xf32>
    %cst_86 = arith.constant dense<0.000000e+00> : vector<16x32xf32>
    %171 = tpu.matmul %170, %1, %cst_86 {dimension_numbers = #tpu.dot_dimension_numbers<[1], [0], [0], [1], [0, 0, 1, 1], [], []>} : vector<16x16xf32>, vector<16x32xf32>, vector<16x32xf32> -> vector<16x32xf32>
    %cst_87 = arith.constant dense<0.000000e+00> : vector<16x16xf32>
    %172 = tpu.matmul %170, %88, %cst_87 {dimension_numbers = #tpu.dot_dimension_numbers<[1], [0], [0], [1], [0, 0, 1, 1], [], []>} : vector<16x16xf32>, vector<16x16xf32>, vector<16x16xf32> -> vector<16x16xf32>
    %c0_88 = arith.constant 0 : index
    %c0_89 = arith.constant 0 : index
    %173 = vector.load %arg24[%c0_88, %c0_89] : memref<96x16xf32, #tpu.memory_space<vmem>>, vector<32x16xf32>
    %cst_90 = arith.constant dense<0.000000e+00> : vector<16x16xf32>
    %174 = tpu.matmul %1, %173, %cst_90 {dimension_numbers = #tpu.dot_dimension_numbers<[1], [0], [0], [1], [0, 0, 1, 1], [], []>} : vector<16x32xf32>, vector<32x16xf32>, vector<16x16xf32> -> vector<16x16xf32>
    %c32_91 = arith.constant 32 : index
    %c0_92 = arith.constant 0 : index
    %175 = vector.load %arg24[%c32_91, %c0_92] : memref<96x16xf32, #tpu.memory_space<vmem>>, vector<16x16xf32>
    %cst_93 = arith.constant dense<0.000000e+00> : vector<16x16xf32>
    %176 = tpu.matmul %88, %175, %cst_93 {dimension_numbers = #tpu.dot_dimension_numbers<[1], [0], [0], [1], [0, 0, 1, 1], [], []>} : vector<16x16xf32>, vector<16x16xf32>, vector<16x16xf32> -> vector<16x16xf32>
    %177 = arith.addf %174, %176 : vector<16x16xf32>
    %c48 = arith.constant 48 : index
    %c0_94 = arith.constant 0 : index
    %178 = vector.load %arg24[%c48, %c0_94] : memref<96x16xf32, #tpu.memory_space<vmem>>, vector<32x16xf32>
    %cst_95 = arith.constant dense<0.000000e+00> : vector<16x16xf32>
    %179 = tpu.matmul %171, %178, %cst_95 {dimension_numbers = #tpu.dot_dimension_numbers<[1], [0], [0], [1], [0, 0, 1, 1], [], []>} : vector<16x32xf32>, vector<32x16xf32>, vector<16x16xf32> -> vector<16x16xf32>
    %c80 = arith.constant 80 : index
    %c0_96 = arith.constant 0 : index
    %180 = vector.load %arg24[%c80, %c0_96] : memref<96x16xf32, #tpu.memory_space<vmem>>, vector<16x16xf32>
    %cst_97 = arith.constant dense<0.000000e+00> : vector<16x16xf32>
    %181 = tpu.matmul %172, %180, %cst_97 {dimension_numbers = #tpu.dot_dimension_numbers<[1], [0], [0], [1], [0, 0, 1, 1], [], []>} : vector<16x16xf32>, vector<16x16xf32>, vector<16x16xf32> -> vector<16x16xf32>
    %182 = arith.addf %179, %181 : vector<16x16xf32>
    %183 = arith.addf %177, %182 : vector<16x16xf32>
    %c0_98 = arith.constant 0 : index
    %c0_99 = arith.constant 0 : index
    %184 = vector.load %arg25[%c0_98, %c0_99] : memref<1x16xf32, #tpu.memory_space<vmem>>, vector<1x16xf32>
    %185 = vector.broadcast %184 : vector<1x16xf32> to vector<16x16xf32>
    %186 = arith.addf %183, %185 : vector<16x16xf32>
    %cst_100 = arith.constant 0.000000e+00 : f32
    %187 = vector.broadcast %cst_100 : f32 to vector<16x16xf32>
    %188 = arith.cmpf ogt, %186, %187 : vector<16x16xf32>
    %cst_101 = arith.constant 0.00999999977 : f32
    %189 = vector.broadcast %cst_101 : f32 to vector<16x16xf32>
    %190 = arith.mulf %189, %186 : vector<16x16xf32>
    %191 = arith.select %188, %186, %190 : vector<16x16xi1>, vector<16x16xf32>
    %192 = vector.shape_cast %1 : vector<16x32xf32> to vector<16x1x32xf32>
    %193 = vector.shape_cast %192 : vector<16x1x32xf32> to vector<16x1x32xf32>
    %194 = vector.broadcast %193 : vector<16x1x32xf32> to vector<16x16x32xf32>
    %195 = vector.shape_cast %1 : vector<16x32xf32> to vector<1x16x32xf32>
    %196 = vector.shape_cast %195 : vector<1x16x32xf32> to vector<1x16x32xf32>
    %197 = vector.broadcast %196 : vector<1x16x32xf32> to vector<16x16x32xf32>
    %198 = arith.subf %194, %197 : vector<16x16x32xf32>
    %199 = math.absf %198 : vector<16x16x32xf32>
    %200 = vector.shape_cast %199 : vector<16x16x32xf32> to vector<256x32xf32>
    %201 = vector.shape_cast %88 : vector<16x16xf32> to vector<16x1x16xf32>
    %202 = vector.shape_cast %201 : vector<16x1x16xf32> to vector<16x1x16xf32>
    %203 = vector.broadcast %202 : vector<16x1x16xf32> to vector<16x16x16xf32>
    %204 = vector.shape_cast %88 : vector<16x16xf32> to vector<1x16x16xf32>
    %205 = vector.shape_cast %204 : vector<1x16x16xf32> to vector<1x16x16xf32>
    %206 = vector.broadcast %205 : vector<1x16x16xf32> to vector<16x16x16xf32>
    %207 = arith.subf %203, %206 : vector<16x16x16xf32>
    %208 = math.absf %207 : vector<16x16x16xf32>
    %209 = vector.shape_cast %208 : vector<16x16x16xf32> to vector<256x16xf32>
    %210 = vector.shape_cast %191 : vector<16x16xf32> to vector<16x1x16xf32>
    %211 = vector.shape_cast %210 : vector<16x1x16xf32> to vector<16x1x16xf32>
    %212 = vector.broadcast %211 : vector<16x1x16xf32> to vector<16x16x16xf32>
    %213 = vector.shape_cast %191 : vector<16x16xf32> to vector<1x16x16xf32>
    %214 = vector.shape_cast %213 : vector<1x16x16xf32> to vector<1x16x16xf32>
    %215 = vector.broadcast %214 : vector<1x16x16xf32> to vector<16x16x16xf32>
    %216 = arith.subf %212, %215 : vector<16x16x16xf32>
    %217 = math.absf %216 : vector<16x16x16xf32>
    %218 = vector.shape_cast %217 : vector<16x16x16xf32> to vector<256x16xf32>
    %c0_102 = arith.constant 0 : index
    %c0_103 = arith.constant 0 : index
    %219 = vector.load %arg26[%c0_102, %c0_103] : memref<64x64xf32, #tpu.memory_space<vmem>>, vector<32x64xf32>
    %cst_104 = arith.constant dense<0.000000e+00> : vector<256x64xf32>
    %220 = tpu.matmul %200, %219, %cst_104 {dimension_numbers = #tpu.dot_dimension_numbers<[1], [0], [0], [1], [0, 0, 1, 1], [], []>} : vector<256x32xf32>, vector<32x64xf32>, vector<256x64xf32> -> vector<256x64xf32>
    %c32_105 = arith.constant 32 : index
    %c0_106 = arith.constant 0 : index
    %221 = vector.load %arg26[%c32_105, %c0_106] : memref<64x64xf32, #tpu.memory_space<vmem>>, vector<16x64xf32>
    %cst_107 = arith.constant dense<0.000000e+00> : vector<256x64xf32>
    %222 = tpu.matmul %209, %221, %cst_107 {dimension_numbers = #tpu.dot_dimension_numbers<[1], [0], [0], [1], [0, 0, 1, 1], [], []>} : vector<256x16xf32>, vector<16x64xf32>, vector<256x64xf32> -> vector<256x64xf32>
    %223 = arith.addf %220, %222 : vector<256x64xf32>
    %c48_108 = arith.constant 48 : index
    %c0_109 = arith.constant 0 : index
    %224 = vector.load %arg26[%c48_108, %c0_109] : memref<64x64xf32, #tpu.memory_space<vmem>>, vector<16x64xf32>
    %cst_110 = arith.constant dense<0.000000e+00> : vector<256x64xf32>
    %225 = tpu.matmul %218, %224, %cst_110 {dimension_numbers = #tpu.dot_dimension_numbers<[1], [0], [0], [1], [0, 0, 1, 1], [], []>} : vector<256x16xf32>, vector<16x64xf32>, vector<256x64xf32> -> vector<256x64xf32>
    %226 = arith.addf %223, %225 : vector<256x64xf32>
    %c0_111 = arith.constant 0 : index
    %c0_112 = arith.constant 0 : index
    %227 = vector.load %arg27[%c0_111, %c0_112] : memref<1x64xf32, #tpu.memory_space<vmem>>, vector<1x64xf32>
    %228 = vector.broadcast %227 : vector<1x64xf32> to vector<256x64xf32>
    %229 = arith.addf %226, %228 : vector<256x64xf32>
    %cst_113 = arith.constant 0.000000e+00 : f32
    %230 = vector.broadcast %cst_113 : f32 to vector<256x64xf32>
    %231 = arith.cmpf ogt, %229, %230 : vector<256x64xf32>
    %cst_114 = arith.constant 0.00999999977 : f32
    %232 = vector.broadcast %cst_114 : f32 to vector<256x64xf32>
    %233 = arith.mulf %232, %229 : vector<256x64xf32>
    %234 = arith.select %231, %229, %233 : vector<256x64xi1>, vector<256x64xf32>
    %c0_115 = arith.constant 0 : index
    %c0_116 = arith.constant 0 : index
    %235 = vector.load %arg28[%c0_115, %c0_116] : memref<64x64xf32, #tpu.memory_space<vmem>>, vector<64x64xf32>
    %cst_117 = arith.constant dense<0.000000e+00> : vector<256x64xf32>
    %236 = tpu.matmul %234, %235, %cst_117 {dimension_numbers = #tpu.dot_dimension_numbers<[1], [0], [0], [1], [0, 0, 1, 1], [], []>} : vector<256x64xf32>, vector<64x64xf32>, vector<256x64xf32> -> vector<256x64xf32>
    %c0_118 = arith.constant 0 : index
    %c0_119 = arith.constant 0 : index
    %237 = vector.load %arg29[%c0_118, %c0_119] : memref<1x64xf32, #tpu.memory_space<vmem>>, vector<1x64xf32>
    %238 = vector.broadcast %237 : vector<1x64xf32> to vector<256x64xf32>
    %239 = arith.addf %236, %238 : vector<256x64xf32>
    %cst_120 = arith.constant 0.000000e+00 : f32
    %240 = vector.broadcast %cst_120 : f32 to vector<256x64xf32>
    %241 = arith.cmpf ogt, %239, %240 : vector<256x64xf32>
    %cst_121 = arith.constant 0.00999999977 : f32
    %242 = vector.broadcast %cst_121 : f32 to vector<256x64xf32>
    %243 = arith.mulf %242, %239 : vector<256x64xf32>
    %244 = arith.select %241, %239, %243 : vector<256x64xi1>, vector<256x64xf32>
    %c0_122 = arith.constant 0 : index
    %c0_123 = arith.constant 0 : index
    %245 = vector.load %arg30[%c0_122, %c0_123] : memref<64x32xf32, #tpu.memory_space<vmem>>, vector<64x32xf32>
    %cst_124 = arith.constant dense<0.000000e+00> : vector<256x32xf32>
    %246 = tpu.matmul %244, %245, %cst_124 {dimension_numbers = #tpu.dot_dimension_numbers<[1], [0], [0], [1], [0, 0, 1, 1], [], []>} : vector<256x64xf32>, vector<64x32xf32>, vector<256x32xf32> -> vector<256x32xf32>
    %c0_125 = arith.constant 0 : index
    %c0_126 = arith.constant 0 : index
    %247 = vector.load %arg31[%c0_125, %c0_126] : memref<1x32xf32, #tpu.memory_space<vmem>>, vector<1x32xf32>
    %248 = vector.broadcast %247 : vector<1x32xf32> to vector<256x32xf32>
    %249 = arith.addf %246, %248 : vector<256x32xf32>
    %cst_127 = arith.constant 0.000000e+00 : f32
    %250 = vector.broadcast %cst_127 : f32 to vector<256x32xf32>
    %251 = arith.cmpf ogt, %249, %250 : vector<256x32xf32>
    %cst_128 = arith.constant 0.00999999977 : f32
    %252 = vector.broadcast %cst_128 : f32 to vector<256x32xf32>
    %253 = arith.mulf %252, %249 : vector<256x32xf32>
    %254 = arith.select %251, %249, %253 : vector<256x32xi1>, vector<256x32xf32>
    %c0_129 = arith.constant 0 : index
    %c0_130 = arith.constant 0 : index
    %255 = vector.load %arg32[%c0_129, %c0_130] : memref<32x32xf32, #tpu.memory_space<vmem>>, vector<32x32xf32>
    %cst_131 = arith.constant dense<0.000000e+00> : vector<256x32xf32>
    %256 = tpu.matmul %254, %255, %cst_131 {dimension_numbers = #tpu.dot_dimension_numbers<[1], [0], [0], [1], [0, 0, 1, 1], [], []>} : vector<256x32xf32>, vector<32x32xf32>, vector<256x32xf32> -> vector<256x32xf32>
    %c0_132 = arith.constant 0 : index
    %c0_133 = arith.constant 0 : index
    %257 = vector.load %arg33[%c0_132, %c0_133] : memref<1x32xf32, #tpu.memory_space<vmem>>, vector<1x32xf32>
    %258 = vector.broadcast %257 : vector<1x32xf32> to vector<256x32xf32>
    %259 = arith.addf %256, %258 : vector<256x32xf32>
    %cst_134 = arith.constant 0.000000e+00 : f32
    %260 = vector.broadcast %cst_134 : f32 to vector<256x32xf32>
    %261 = arith.cmpf ogt, %259, %260 : vector<256x32xf32>
    %cst_135 = arith.constant 0.00999999977 : f32
    %262 = vector.broadcast %cst_135 : f32 to vector<256x32xf32>
    %263 = arith.mulf %262, %259 : vector<256x32xf32>
    %264 = arith.select %261, %259, %263 : vector<256x32xi1>, vector<256x32xf32>
    %265 = vector.shape_cast %264 : vector<256x32xf32> to vector<16x16x32xf32>
    %c0_136 = arith.constant 0 : index
    %c0_137 = arith.constant 0 : index
    %266 = vector.load %arg34[%c0_136, %c0_137] : memref<1x32xf32, #tpu.memory_space<vmem>>, vector<1x32xf32>
    %267 = vector.shape_cast %266 : vector<1x32xf32> to vector<1x1x32xf32>
    %268 = vector.broadcast %267 : vector<1x1x32xf32> to vector<16x16x32xf32>
    %269 = arith.mulf %265, %268 : vector<16x16x32xf32>
    %cst_138 = arith.constant dense<0.000000e+00> : vector<16x16xf32>
    %270 = vector.multi_reduction <add>, %269, %cst_138 [2] : vector<16x16x32xf32> to vector<16x16xf32>
    %c0_139 = arith.constant 0 : index
    %c0_140 = arith.constant 0 : index
    %271 = vector.load %arg35[%c0_139, %c0_140] : memref<1x1xf32, #tpu.memory_space<vmem>>, vector<1x1xf32>
    %272 = vector.broadcast %271 : vector<1x1xf32> to vector<16x16xf32>
    %273 = arith.addf %270, %272 : vector<16x16xf32>
    %cst_141 = arith.constant 1.000000e+08 : f32
    %274 = vector.broadcast %cst_141 : f32 to vector<16x16xf32>
    %275 = arith.subf %273, %274 : vector<16x16xf32>
    %276 = arith.select %4, %275, %273 : vector<16x16xi1>, vector<16x16xf32>
    %cst_142 = arith.constant dense<0xFF800000> : vector<16xf32>
    %277 = vector.multi_reduction <maximumf>, %276, %cst_142 [1] : vector<16x16xf32> to vector<16xf32>
    %278 = vector.shape_cast %277 : vector<16xf32> to vector<16x1xf32>
    %279 = vector.broadcast %278 : vector<16x1xf32> to vector<16x16xf32>
    %280 = arith.subf %276, %279 : vector<16x16xf32>
    %281 = math.exp %280 : vector<16x16xf32>
    %cst_143 = arith.constant dense<0.000000e+00> : vector<16xf32>
    %282 = vector.multi_reduction <add>, %281, %cst_143 [1] : vector<16x16xf32> to vector<16xf32>
    %283 = vector.shape_cast %282 : vector<16xf32> to vector<16x1xf32>
    %284 = vector.broadcast %283 : vector<16x1xf32> to vector<16x16xf32>
    %285 = arith.divf %281, %284 : vector<16x16xf32>
    %cst_144 = arith.constant dense<0.000000e+00> : vector<16x32xf32>
    %286 = tpu.matmul %285, %1, %cst_144 {dimension_numbers = #tpu.dot_dimension_numbers<[1], [0], [0], [1], [0, 0, 1, 1], [], []>} : vector<16x16xf32>, vector<16x32xf32>, vector<16x32xf32> -> vector<16x32xf32>
    %cst_145 = arith.constant dense<0.000000e+00> : vector<16x16xf32>
    %287 = tpu.matmul %285, %88, %cst_145 {dimension_numbers = #tpu.dot_dimension_numbers<[1], [0], [0], [1], [0, 0, 1, 1], [], []>} : vector<16x16xf32>, vector<16x16xf32>, vector<16x16xf32> -> vector<16x16xf32>
    %cst_146 = arith.constant dense<0.000000e+00> : vector<16x16xf32>
    %288 = tpu.matmul %285, %191, %cst_146 {dimension_numbers = #tpu.dot_dimension_numbers<[1], [0], [0], [1], [0, 0, 1, 1], [], []>} : vector<16x16xf32>, vector<16x16xf32>, vector<16x16xf32> -> vector<16x16xf32>
    %c0_147 = arith.constant 0 : index
    %c0_148 = arith.constant 0 : index
    %289 = vector.load %arg36[%c0_147, %c0_148] : memref<128x1xf32, #tpu.memory_space<vmem>>, vector<32x1xf32>
    %cst_149 = arith.constant dense<0.000000e+00> : vector<16x1xf32>
    %290 = tpu.matmul %1, %289, %cst_149 {dimension_numbers = #tpu.dot_dimension_numbers<[1], [0], [0], [1], [0, 0, 1, 1], [], []>} : vector<16x32xf32>, vector<32x1xf32>, vector<16x1xf32> -> vector<16x1xf32>
    %c32_150 = arith.constant 32 : index
    %c0_151 = arith.constant 0 : index
    %291 = vector.load %arg36[%c32_150, %c0_151] : memref<128x1xf32, #tpu.memory_space<vmem>>, vector<16x1xf32>
    %cst_152 = arith.constant dense<0.000000e+00> : vector<16x1xf32>
    %292 = tpu.matmul %88, %291, %cst_152 {dimension_numbers = #tpu.dot_dimension_numbers<[1], [0], [0], [1], [0, 0, 1, 1], [], []>} : vector<16x16xf32>, vector<16x1xf32>, vector<16x1xf32> -> vector<16x1xf32>
    %293 = arith.addf %290, %292 : vector<16x1xf32>
    %c48_153 = arith.constant 48 : index
    %c0_154 = arith.constant 0 : index
    %294 = vector.load %arg36[%c48_153, %c0_154] : memref<128x1xf32, #tpu.memory_space<vmem>>, vector<16x1xf32>
    %cst_155 = arith.constant dense<0.000000e+00> : vector<16x1xf32>
    %295 = tpu.matmul %191, %294, %cst_155 {dimension_numbers = #tpu.dot_dimension_numbers<[1], [0], [0], [1], [0, 0, 1, 1], [], []>} : vector<16x16xf32>, vector<16x1xf32>, vector<16x1xf32> -> vector<16x1xf32>
    %296 = arith.addf %293, %295 : vector<16x1xf32>
    %c64 = arith.constant 64 : index
    %c0_156 = arith.constant 0 : index
    %297 = vector.load %arg36[%c64, %c0_156] : memref<128x1xf32, #tpu.memory_space<vmem>>, vector<32x1xf32>
    %cst_157 = arith.constant dense<0.000000e+00> : vector<16x1xf32>
    %298 = tpu.matmul %286, %297, %cst_157 {dimension_numbers = #tpu.dot_dimension_numbers<[1], [0], [0], [1], [0, 0, 1, 1], [], []>} : vector<16x32xf32>, vector<32x1xf32>, vector<16x1xf32> -> vector<16x1xf32>
    %c96 = arith.constant 96 : index
    %c0_158 = arith.constant 0 : index
    %299 = vector.load %arg36[%c96, %c0_158] : memref<128x1xf32, #tpu.memory_space<vmem>>, vector<16x1xf32>
    %cst_159 = arith.constant dense<0.000000e+00> : vector<16x1xf32>
    %300 = tpu.matmul %287, %299, %cst_159 {dimension_numbers = #tpu.dot_dimension_numbers<[1], [0], [0], [1], [0, 0, 1, 1], [], []>} : vector<16x16xf32>, vector<16x1xf32>, vector<16x1xf32> -> vector<16x1xf32>
    %301 = arith.addf %298, %300 : vector<16x1xf32>
    %c112 = arith.constant 112 : index
    %c0_160 = arith.constant 0 : index
    %302 = vector.load %arg36[%c112, %c0_160] : memref<128x1xf32, #tpu.memory_space<vmem>>, vector<16x1xf32>
    %cst_161 = arith.constant dense<0.000000e+00> : vector<16x1xf32>
    %303 = tpu.matmul %288, %302, %cst_161 {dimension_numbers = #tpu.dot_dimension_numbers<[1], [0], [0], [1], [0, 0, 1, 1], [], []>} : vector<16x16xf32>, vector<16x1xf32>, vector<16x1xf32> -> vector<16x1xf32>
    %304 = arith.addf %301, %303 : vector<16x1xf32>
    %305 = arith.addf %296, %304 : vector<16x1xf32>
    %c0_162 = arith.constant 0 : index
    %c0_163 = arith.constant 0 : index
    %306 = vector.load %arg37[%c0_162, %c0_163] : memref<1x1xf32, #tpu.memory_space<vmem>>, vector<1x1xf32>
    %307 = vector.broadcast %306 : vector<1x1xf32> to vector<16x1xf32>
    %308 = arith.addf %305, %307 : vector<16x1xf32>
    %c0_164 = arith.constant 0 : index
    %c0_165 = arith.constant 0 : index
    %c0_166 = arith.constant 0 : index
    %309 = vector.load %arg38[%c0_164, %c0_165, %c0_166] : memref<1x16x1xf32, #tpu.memory_space<vmem>>, vector<1x16x1xf32>
    %310 = vector.shape_cast %309 : vector<1x16x1xf32> to vector<16x1xf32>
    %311 = vector.shape_cast %308 : vector<16x1xf32> to vector<1x16x1xf32>
    tpu.vector_store %arg38[%c0_164, %c0_165, %c0_166], %311 {strides = array<i32>} : memref<1x16x1xf32, #tpu.memory_space<vmem>>, vector<1x16x1xf32>,
    %c0_167 = arith.constant 0 : index
    %c0_168 = arith.constant 0 : index
    %c0_169 = arith.constant 0 : index
    %312 = vector.load %arg39[%c0_167, %c0_168, %c0_169] : memref<1x16x16xf32, #tpu.memory_space<vmem>>, vector<1x16x16xf32>
    %313 = vector.shape_cast %312 : vector<1x16x16xf32> to vector<16x16xf32>
    %314 = vector.shape_cast %285 : vector<16x16xf32> to vector<1x16x16xf32>
    tpu.vector_store %arg39[%c0_167, %c0_168, %c0_169], %314 {strides = array<i32>} : memref<1x16x16xf32, #tpu.memory_space<vmem>>, vector<1x16x16xf32>,
    return
  }
  func.func @transform_0(%arg0: i32) -> (i32, i32, i32) {
    %c0_i32 = arith.constant 0 : i32
    %c0_i32_0 = arith.constant 0 : i32
    %c0_i32_1 = arith.constant 0 : i32
    return %arg0, %c0_i32, %c0_i32_0 : i32, i32, i32
  }
  func.func @transform_1(%arg0: i32) -> (i32, i32) {
    %c0_i32 = arith.constant 0 : i32
    %c0_i32_0 = arith.constant 0 : i32
    %c0_i32_1 = arith.constant 0 : i32
    return %c0_i32, %c0_i32_0 : i32, i32
  }
  func.func @transform_2(%arg0: i32) -> (i32, i32) {
    %c0_i32 = arith.constant 0 : i32
    %c0_i32_0 = arith.constant 0 : i32
    %c0_i32_1 = arith.constant 0 : i32
    return %c0_i32, %c0_i32_0 : i32, i32
  }
  func.func @transform_3(%arg0: i32) -> (i32, i32) {
    %c0_i32 = arith.constant 0 : i32
    %c0_i32_0 = arith.constant 0 : i32
    %c0_i32_1 = arith.constant 0 : i32
    return %c0_i32, %c0_i32_0 : i32, i32
  }
  func.func @transform_4(%arg0: i32) -> (i32, i32) {
    %c0_i32 = arith.constant 0 : i32
    %c0_i32_0 = arith.constant 0 : i32
    %c0_i32_1 = arith.constant 0 : i32
    return %c0_i32, %c0_i32_0 : i32, i32
  }
  func.func @transform_5(%arg0: i32) -> (i32, i32) {
    %c0_i32 = arith.constant 0 : i32
    %c0_i32_0 = arith.constant 0 : i32
    %c0_i32_1 = arith.constant 0 : i32
    return %c0_i32, %c0_i32_0 : i32, i32
  }
  func.func @transform_6(%arg0: i32) -> (i32, i32) {
    %c0_i32 = arith.constant 0 : i32
    %c0_i32_0 = arith.constant 0 : i32
    %c0_i32_1 = arith.constant 0 : i32
    return %c0_i32, %c0_i32_0 : i32, i32
  }
  func.func @transform_7(%arg0: i32) -> (i32, i32) {
    %c0_i32 = arith.constant 0 : i32
    %c0_i32_0 = arith.constant 0 : i32
    %c0_i32_1 = arith.constant 0 : i32
    return %c0_i32, %c0_i32_0 : i32, i32
  }
  func.func @transform_8(%arg0: i32) -> (i32, i32) {
    %c0_i32 = arith.constant 0 : i32
    %c0_i32_0 = arith.constant 0 : i32
    %c0_i32_1 = arith.constant 0 : i32
    return %c0_i32, %c0_i32_0 : i32, i32
  }
  func.func @transform_9(%arg0: i32) -> (i32, i32) {
    %c0_i32 = arith.constant 0 : i32
    %c0_i32_0 = arith.constant 0 : i32
    %c0_i32_1 = arith.constant 0 : i32
    return %c0_i32, %c0_i32_0 : i32, i32
  }
  func.func @transform_10(%arg0: i32) -> (i32, i32) {
    %c0_i32 = arith.constant 0 : i32
    %c0_i32_0 = arith.constant 0 : i32
    %c0_i32_1 = arith.constant 0 : i32
    return %c0_i32, %c0_i32_0 : i32, i32
  }
  func.func @transform_11(%arg0: i32) -> (i32, i32) {
    %c0_i32 = arith.constant 0 : i32
    %c0_i32_0 = arith.constant 0 : i32
    %c0_i32_1 = arith.constant 0 : i32
    return %c0_i32, %c0_i32_0 : i32, i32
  }
  func.func @transform_12(%arg0: i32) -> (i32, i32) {
    %c0_i32 = arith.constant 0 : i32
    %c0_i32_0 = arith.constant 0 : i32
    %c0_i32_1 = arith.constant 0 : i32
    return %c0_i32, %c0_i32_0 : i32, i32
  }
  func.func @transform_13(%arg0: i32) -> (i32, i32) {
    %c0_i32 = arith.constant 0 : i32
    %c0_i32_0 = arith.constant 0 : i32
    %c0_i32_1 = arith.constant 0 : i32
    return %c0_i32, %c0_i32_0 : i32, i32
  }
  func.func @transform_14(%arg0: i32) -> (i32, i32) {
    %c0_i32 = arith.constant 0 : i32
    %c0_i32_0 = arith.constant 0 : i32
    %c0_i32_1 = arith.constant 0 : i32
    return %c0_i32, %c0_i32_0 : i32, i32
  }
  func.func @transform_15(%arg0: i32) -> (i32, i32) {
    %c0_i32 = arith.constant 0 : i32
    %c0_i32_0 = arith.constant 0 : i32
    %c0_i32_1 = arith.constant 0 : i32
    return %c0_i32, %c0_i32_0 : i32, i32
  }
  func.func @transform_16(%arg0: i32) -> (i32, i32) {
    %c0_i32 = arith.constant 0 : i32
    %c0_i32_0 = arith.constant 0 : i32
    %c0_i32_1 = arith.constant 0 : i32
    return %c0_i32, %c0_i32_0 : i32, i32
  }
  func.func @transform_17(%arg0: i32) -> (i32, i32) {
    %c0_i32 = arith.constant 0 : i32
    %c0_i32_0 = arith.constant 0 : i32
    %c0_i32_1 = arith.constant 0 : i32
    return %c0_i32, %c0_i32_0 : i32, i32
  }
  func.func @transform_18(%arg0: i32) -> (i32, i32) {
    %c0_i32 = arith.constant 0 : i32
    %c0_i32_0 = arith.constant 0 : i32
    %c0_i32_1 = arith.constant 0 : i32
    return %c0_i32, %c0_i32_0 : i32, i32
  }
  func.func @transform_19(%arg0: i32) -> (i32, i32) {
    %c0_i32 = arith.constant 0 : i32
    %c0_i32_0 = arith.constant 0 : i32
    %c0_i32_1 = arith.constant 0 : i32
    return %c0_i32, %c0_i32_0 : i32, i32
  }
  func.func @transform_20(%arg0: i32) -> (i32, i32) {
    %c0_i32 = arith.constant 0 : i32
    %c0_i32_0 = arith.constant 0 : i32
    %c0_i32_1 = arith.constant 0 : i32
    return %c0_i32, %c0_i32_0 : i32, i32
  }
  func.func @transform_21(%arg0: i32) -> (i32, i32) {
    %c0_i32 = arith.constant 0 : i32
    %c0_i32_0 = arith.constant 0 : i32
    %c0_i32_1 = arith.constant 0 : i32
    return %c0_i32, %c0_i32_0 : i32, i32
  }
  func.func @transform_22(%arg0: i32) -> (i32, i32) {
    %c0_i32 = arith.constant 0 : i32
    %c0_i32_0 = arith.constant 0 : i32
    %c0_i32_1 = arith.constant 0 : i32
    return %c0_i32, %c0_i32_0 : i32, i32
  }
  func.func @transform_23(%arg0: i32) -> (i32, i32) {
    %c0_i32 = arith.constant 0 : i32
    %c0_i32_0 = arith.constant 0 : i32
    %c0_i32_1 = arith.constant 0 : i32
    return %c0_i32, %c0_i32_0 : i32, i32
  }
  func.func @transform_24(%arg0: i32) -> (i32, i32) {
    %c0_i32 = arith.constant 0 : i32
    %c0_i32_0 = arith.constant 0 : i32
    %c0_i32_1 = arith.constant 0 : i32
    return %c0_i32, %c0_i32_0 : i32, i32
  }
  func.func @transform_25(%arg0: i32) -> (i32, i32) {
    %c0_i32 = arith.constant 0 : i32
    %c0_i32_0 = arith.constant 0 : i32
    %c0_i32_1 = arith.constant 0 : i32
    return %c0_i32, %c0_i32_0 : i32, i32
  }
  func.func @transform_26(%arg0: i32) -> (i32, i32) {
    %c0_i32 = arith.constant 0 : i32
    %c0_i32_0 = arith.constant 0 : i32
    %c0_i32_1 = arith.constant 0 : i32
    return %c0_i32, %c0_i32_0 : i32, i32
  }
  func.func @transform_27(%arg0: i32) -> (i32, i32) {
    %c0_i32 = arith.constant 0 : i32
    %c0_i32_0 = arith.constant 0 : i32
    %c0_i32_1 = arith.constant 0 : i32
    return %c0_i32, %c0_i32_0 : i32, i32
  }
  func.func @transform_28(%arg0: i32) -> (i32, i32) {
    %c0_i32 = arith.constant 0 : i32
    %c0_i32_0 = arith.constant 0 : i32
    %c0_i32_1 = arith.constant 0 : i32
    return %c0_i32, %c0_i32_0 : i32, i32
  }
  func.func @transform_29(%arg0: i32) -> (i32, i32) {
    %c0_i32 = arith.constant 0 : i32
    %c0_i32_0 = arith.constant 0 : i32
    %c0_i32_1 = arith.constant 0 : i32
    return %c0_i32, %c0_i32_0 : i32, i32
  }
  func.func @transform_30(%arg0: i32) -> (i32, i32) {
    %c0_i32 = arith.constant 0 : i32
    %c0_i32_0 = arith.constant 0 : i32
    %c0_i32_1 = arith.constant 0 : i32
    return %c0_i32, %c0_i32_0 : i32, i32
  }
  func.func @transform_31(%arg0: i32) -> (i32, i32) {
    %c0_i32 = arith.constant 0 : i32
    %c0_i32_0 = arith.constant 0 : i32
    %c0_i32_1 = arith.constant 0 : i32
    return %c0_i32, %c0_i32_0 : i32, i32
  }
  func.func @transform_32(%arg0: i32) -> (i32, i32) {
    %c0_i32 = arith.constant 0 : i32
    %c0_i32_0 = arith.constant 0 : i32
    %c0_i32_1 = arith.constant 0 : i32
    return %c0_i32, %c0_i32_0 : i32, i32
  }
  func.func @transform_33(%arg0: i32) -> (i32, i32) {
    %c0_i32 = arith.constant 0 : i32
    %c0_i32_0 = arith.constant 0 : i32
    %c0_i32_1 = arith.constant 0 : i32
    return %c0_i32, %c0_i32_0 : i32, i32
  }
  func.func @transform_34(%arg0: i32) -> (i32, i32) {
    %c0_i32 = arith.constant 0 : i32
    %c0_i32_0 = arith.constant 0 : i32
    %c0_i32_1 = arith.constant 0 : i32
    return %c0_i32, %c0_i32_0 : i32, i32
  }
  func.func @transform_35(%arg0: i32) -> (i32, i32) {
    %c0_i32 = arith.constant 0 : i32
    %c0_i32_0 = arith.constant 0 : i32
    %c0_i32_1 = arith.constant 0 : i32
    return %c0_i32, %c0_i32_0 : i32, i32
  }
  func.func @transform_36(%arg0: i32) -> (i32, i32) {
    %c0_i32 = arith.constant 0 : i32
    %c0_i32_0 = arith.constant 0 : i32
    %c0_i32_1 = arith.constant 0 : i32
    return %c0_i32, %c0_i32_0 : i32, i32
  }
  func.func @transform_37(%arg0: i32) -> (i32, i32, i32) {
    %c0_i32 = arith.constant 0 : i32
    %c0_i32_0 = arith.constant 0 : i32
    %c0_i32_1 = arith.constant 0 : i32
    return %arg0, %c0_i32, %c0_i32_0 : i32, i32, i32
  }
  func.func @transform_38(%arg0: i32) -> (i32, i32, i32) {
    %c0_i32 = arith.constant 0 : i32
    %c0_i32_0 = arith.constant 0 : i32
    %c0_i32_1 = arith.constant 0 : i32
    return %arg0, %c0_i32, %c0_i32_0 : i32, i32, i32
  }
}

</mosaic_0001>

<llo_original>
// kernel: tpu_custom_call.1
$region0: #{tpu_custom_call.1}
  #allocation0 [shape = 'u32[]', space=smem, size = 0x4, offset = 0x4, fixed_abs, tag = 'smem constant byte address 0x4 - core index']
  #allocation1 [shape = 'u32[72,128]{1,0:T(1,128)}', space=vmem, size = 0x9000, scoped, tag = 'internal scratch']
  #allocation2 [shape = 'f32[1,1]{1,0:T(1,128)S(1)}', space=vmem, size = 0x200, scoped, tag = 'scoped memory for tpu_custom_call.1']
  #allocation3 [shape = 'f32[1,1]{1,0:T(1,128)S(1)}', space=vmem, size = 0x200, scoped, tag = 'scoped memory for tpu_custom_call.1']
  #allocation4 [shape = 'f32[1,1]{1,0:T(1,128)S(1)}', space=vmem, size = 0x200, scoped, tag = 'scoped memory for tpu_custom_call.1']
  #allocation5 [shape = 'f32[1,1]{1,0:T(1,128)S(1)}', space=vmem, size = 0x200, scoped, tag = 'scoped memory for tpu_custom_call.1']
  %s0 = inlined_call_operand.smem [shape: u32[39], index: -1, kind: input, shape index: {}]
  %s1 = sld [smem:[%s0]]
  %s2 = scalar_lea.smem %s0, 1
  %s3 = sld [smem:[%s2]]
  %s4 = scalar_lea.smem %s0, 2
  %s5 = sld [smem:[%s4]]
  %s6 = scalar_lea.smem %s0, 3
  %s7 = sld [smem:[%s6]]
  %s8 = scalar_lea.smem %s0, 4
  %s9 = sld [smem:[%s8]]
  %s10 = scalar_lea.smem %s0, 5
  %s11 = sld [smem:[%s10]]
  %s12 = scalar_lea.smem %s0, 6
  %s13 = sld [smem:[%s12]]
  %s14 = scalar_lea.smem %s0, 7
  %s15 = sld [smem:[%s14]]
  %s16 = scalar_lea.smem %s0, 8
  %s17 = sld [smem:[%s16]]
  %s18 = scalar_lea.smem %s0, 9
  %s19 = sld [smem:[%s18]]
  %s20 = scalar_lea.smem %s0, 10
  %s21 = sld [smem:[%s20]]
  %s22 = scalar_lea.smem %s0, 11
  %s23 = sld [smem:[%s22]]
  %s24 = scalar_lea.smem %s0, 12
  %s25 = sld [smem:[%s24]]
  %s26 = scalar_lea.smem %s0, 13
  %s27 = sld [smem:[%s26]]
  %s28 = scalar_lea.smem %s0, 14
  %s29 = sld [smem:[%s28]]
  %s30 = scalar_lea.smem %s0, 15
  %s31 = sld [smem:[%s30]]
  %s32 = scalar_lea.smem %s0, 16
  %s33 = sld [smem:[%s32]]
  %s34 = scalar_lea.smem %s0, 17
  %s35 = sld [smem:[%s34]]
  %s36 = scalar_lea.smem %s0, 18
  %s37 = sld [smem:[%s36]]
  %s38 = scalar_lea.smem %s0, 19
  %s39 = sld [smem:[%s38]]
  %s40 = scalar_lea.smem %s0, 20
  %s41 = sld [smem:[%s40]]
  %s42 = scalar_lea.smem %s0, 21
  %s43 = sld [smem:[%s42]]
  %s44 = scalar_lea.smem %s0, 22
  %s45 = sld [smem:[%s44]]
  %s46 = scalar_lea.smem %s0, 23
  %s47 = sld [smem:[%s46]]
  %s48 = scalar_lea.smem %s0, 24
  %s49 = sld [smem:[%s48]]
  %s50 = scalar_lea.smem %s0, 25
  %s51 = sld [smem:[%s50]]
  %s52 = scalar_lea.smem %s0, 26
  %s53 = sld [smem:[%s52]]
  %s54 = scalar_lea.smem %s0, 27
  %s55 = sld [smem:[%s54]]
  %s56 = scalar_lea.smem %s0, 28
  %s57 = sld [smem:[%s56]]
  %s58 = scalar_lea.smem %s0, 29
  %s59 = sld [smem:[%s58]]
  %s60 = scalar_lea.smem %s0, 30
  %s61 = sld [smem:[%s60]]
  %s62 = scalar_lea.smem %s0, 31
  %s63 = sld [smem:[%s62]]
  %s64 = scalar_lea.smem %s0, 32
  %s65 = sld [smem:[%s64]]
  %s66 = scalar_lea.smem %s0, 33
  %s67 = sld [smem:[%s66]]
  %s68 = scalar_lea.smem %s0, 34
  %s69 = sld [smem:[%s68]]
  %s70 = scalar_lea.smem %s0, 35
  %s71 = sld [smem:[%s70]]
  %s72 = scalar_lea.smem %s0, 36
  %s73 = sld [smem:[%s72]]
  %s74 = scalar_lea.smem %s0, 37
  %s75 = sld [smem:[%s74]]
  %s76 = scalar_lea.smem %s0, 38
  %s77 = sld [smem:[%s76]]
  %78 = xla_tuple %s75, %s77
  %s79 = sld [smem:[#allocation0]]
  $region189: #{tpu_custom_call.1} parent=0
    _
  %s81 = ssub.s32 1, %s79
  %s82 = scalar_select 0, %s81, %s79
  %v83 = vstv %s21
  %84 = vst [vmem:[#allocation2] sm:$0x1] %v83
  %v85 = vstv %s45
  %86 = vst [vmem:[#allocation3] sm:$0x1] %v85
  %v87 = vstv %s69
  %88 = vst [vmem:[#allocation4] sm:$0x1] %v87
  %v89 = vstv %s73
  %90 = vst [vmem:[#allocation5] sm:$0x1] %v89
  $region1: #{tpu_custom_call.1} parent=0
    #allocation6 [shape = 'u8[16384]{0}', space=vmem, size = 0x4000, scoped, tag = 'output window, operand 1']
    #allocation7 [shape = 's32[2]{0}', space=sflag, size = 0x8, scoped, tag = 'scoped memory for tpu_custom_call.1']
    %91 = vsyncpa [#allocation7], 0
    %s92 = scalar_lea.sflag [#allocation7], 1
    %93 = vsyncpa %s92, 0
    loop: start=0, step=1, limit=4
    $region2: #{tpu_custom_call.1} parent=1 // loop_pre_header
      _
    $region3: #{tpu_custom_call.1} parent=1 // loop_header
      %s95 = sphi 0, %s99
      %p96 = scmp.ge.s32.totalorder %s95, 4
      %s105 = sphi 0, %s107
      %s108 = sphi 0, %s105
      %s109 = sphi 0, %s108
      %s125 = sphi 0, %s109
      %s129 = sphi 0, %s129
      %s131 = sphi 0, %s129
      %s132 = sphi 0, %s131
      %s146 = sphi 0, %s132
      %s150 = sphi 0, %s150
      %s152 = sphi 0, %s150
      %s153 = sphi 0, %s152
      %s167 = sphi 0, %s153
      %s171 = sphi 0, %s171
      %s173 = sphi 0, %s171
      %s174 = sphi 0, %s173
      %s188 = sphi 0, %s174
      %s192 = sphi 0, %s192
      %s194 = sphi 0, %s192
      %s195 = sphi 0, %s194
      %s209 = sphi 0, %s195
      %s213 = sphi 0, %s213
      %s215 = sphi 0, %s213
      %s216 = sphi 0, %s215
      %s230 = sphi 0, %s216
      %s234 = sphi 0, %s234
      %s236 = sphi 0, %s234
      %s237 = sphi 0, %s236
      %s251 = sphi 0, %s237
      %s255 = sphi 0, %s255
      %s257 = sphi 0, %s255
      %s258 = sphi 0, %s257
      %s272 = sphi 0, %s258
      %s276 = sphi 0, %s276
      %s278 = sphi 0, %s276
      %s279 = sphi 0, %s278
      %s293 = sphi 0, %s279
      %s297 = sphi 0, %s297
      %s299 = sphi 0, %s297
      %s300 = sphi 0, %s299
      %s314 = sphi 0, %s300
      %s318 = sphi 0, %s318
      %s320 = sphi 0, %s318
      %s321 = sphi 0, %s320
      %s335 = sphi 0, %s321
      %s339 = sphi 0, %s339
      %s341 = sphi 0, %s339
      %s342 = sphi 0, %s341
      %s356 = sphi 0, %s342
      %s360 = sphi 0, %s360
      %s362 = sphi 0, %s360
      %s363 = sphi 0, %s362
      %s377 = sphi 0, %s363
      %s381 = sphi 0, %s381
      %s383 = sphi 0, %s381
      %s384 = sphi 0, %s383
      %s398 = sphi 0, %s384
      %s402 = sphi 0, %s402
      %s404 = sphi 0, %s402
      %s405 = sphi 0, %s404
      %s419 = sphi 0, %s405
      %s423 = sphi 0, %s423
      %s425 = sphi 0, %s423
      %s426 = sphi 0, %s425
      %s440 = sphi 0, %s426
      %s444 = sphi 0, %s444
      %s446 = sphi 0, %s444
      %s447 = sphi 0, %s446
      %s461 = sphi 0, %s447
      %s465 = sphi 0, %s465
      %s467 = sphi 0, %s465
      %s468 = sphi 0, %s467
      %s482 = sphi 0, %s468
      %s486 = sphi 0, %s486
      %s488 = sphi 0, %s486
      %s489 = sphi 0, %s488
      %s503 = sphi 0, %s489
      %s507 = sphi 0, %s507
      %s509 = sphi 0, %s507
      %s510 = sphi 0, %s509
      %s524 = sphi 0, %s510
      %s528 = sphi 0, %s528
      %s530 = sphi 0, %s528
      %s531 = sphi 0, %s530
      %s545 = sphi 0, %s531
      %s549 = sphi 0, %s549
      %s551 = sphi 0, %s549
      %s552 = sphi 0, %s551
      %s566 = sphi 0, %s552
      %s570 = sphi 0, %s570
      %s572 = sphi 0, %s570
      %s573 = sphi 0, %s572
      %s587 = sphi 0, %s573
      %s591 = sphi 0, %s591
      %s593 = sphi 0, %s591
      %s594 = sphi 0, %s593
      %s608 = sphi 0, %s594
      %s612 = sphi 0, %s612
      %s614 = sphi 0, %s612
      %s615 = sphi 0, %s614
      %s629 = sphi 0, %s615
      %s633 = sphi 0, %s633
      %s635 = sphi 0, %s633
      %s636 = sphi 0, %s635
      %s650 = sphi 0, %s636
      %s654 = sphi 0, %s654
      %s656 = sphi 0, %s654
      %s657 = sphi 0, %s656
      %s671 = sphi 0, %s657
      %s675 = sphi 0, %s675
      %s677 = sphi 0, %s675
      %s678 = sphi 0, %s677
      %s692 = sphi 0, %s678
      %s696 = sphi 0, %s696
      %s698 = sphi 0, %s696
      %s699 = sphi 0, %s698
      %s713 = sphi 0, %s699
      %s717 = sphi 0, %s717
      %s719 = sphi 0, %s717
      %s720 = sphi 0, %s719
      %s734 = sphi 0, %s720
      %s738 = sphi 0, %s738
      %s740 = sphi 0, %s738
      %s741 = sphi 0, %s740
      %s755 = sphi 0, %s741
      %s759 = sphi 0, %s759
      %s761 = sphi 0, %s759
      %s762 = sphi 0, %s761
      %s776 = sphi 0, %s762
      %s780 = sphi 0, %s780
      %s782 = sphi 0, %s780
      %s783 = sphi 0, %s782
      %s797 = sphi 0, %s783
      %s801 = sphi 0, %s801
      %s803 = sphi 0, %s801
      %s804 = sphi 0, %s803
      %s818 = sphi 0, %s804
      %s822 = sphi 0, %s822
      %s824 = sphi 0, %s822
      %s825 = sphi 0, %s824
      %s839 = sphi 0, %s825
      %s843 = sphi 0, %s843
      %s845 = sphi 0, %s843
      %s846 = sphi 0, %s845
      %s860 = sphi 0, %s846
      %s864 = sphi 0, %s864
      %s866 = sphi 0, %s864
      %s867 = sphi 0, %s866
      %s881 = sphi 0, %s867
      %s887 = sphi 0, %s889
      %s890 = sphi 0, %s887
      %s891 = sphi 0, %s890
      %s907 = sphi 0, %s891
      %s913 = sphi 0, %s915
      %s916 = sphi 0, %s913
      %s917 = sphi 0, %s916
      %s933 = sphi 0, %s917
    $region4: #{tpu_custom_call.1} parent=1 // loop_header_branch
      %98 = sbr.rel (%p96) target = $region8
    $region5: #{tpu_custom_call.1} parent=1 // loop_body
      %s100 = ssub.s32 %s95, 1
      %s101 = ssub.s32 %s95, 2
      %s102 = sadd.s32 %s95, 1
      %s103 = ssub.s32 %s95, %s102
      %p104 = scmp.eq.s32.totalorder %s103, 0
      %s106 = sadd.s32 %s105, 1
      %s107 = scalar_select %p104, %s105, %s106
      %p110 = pneg %p104
      %p111 = scmp.eq.s32.totalorder %s95, 1
      %p112 = por %p110, %p111
      %p113 = scmp.ne.s32.totalorder %s105, %s108
      %p114 = scmp.eq.s32.totalorder %s95, 0
      %p115 = por %p113, %p114
      %p116 = scmp.ne.s32.totalorder %s105, %s108
      %p117 = scmp.eq.s32.totalorder %s100, 1
      %p118 = por %p116, %p117
      %p119 = scmp.ne.s32.totalorder %s108, %s109
      %p120 = scmp.eq.s32.totalorder %s100, 0
      %p121 = por %p119, %p120
      %p122 = scmp.ne.s32.totalorder %s108, %s109
      %p123 = scmp.eq.s32.totalorder %s101, 1
      %p124 = por %p122, %p123
      %p126 = scmp.ne.s32.totalorder %s109, %s125
      %p127 = scmp.eq.s32.totalorder %s101, 0
      %p128 = por %p126, %p127
      %s130 = sadd.s32 %s129, 1
      %p133 = scmp.eq.s32.totalorder %s95, 1
      %p134 = scmp.ne.s32.totalorder %s129, %s131
      %p135 = scmp.eq.s32.totalorder %s95, 0
      %p136 = por %p134, %p135
      %p137 = scmp.ne.s32.totalorder %s129, %s131
      %p138 = scmp.eq.s32.totalorder %s100, 1
      %p139 = por %p137, %p138
      %p140 = scmp.ne.s32.totalorder %s131, %s132
      %p141 = scmp.eq.s32.totalorder %s100, 0
      %p142 = por %p140, %p141
      %p143 = scmp.ne.s32.totalorder %s131, %s132
      %p144 = scmp.eq.s32.totalorder %s101, 1
      %p145 = por %p143, %p144
      %p147 = scmp.ne.s32.totalorder %s132, %s146
      %p148 = scmp.eq.s32.totalorder %s101, 0
      %p149 = por %p147, %p148
      %s151 = sadd.s32 %s150, 1
      %p154 = scmp.eq.s32.totalorder %s95, 1
      %p155 = scmp.ne.s32.totalorder %s150, %s152
      %p156 = scmp.eq.s32.totalorder %s95, 0
      %p157 = por %p155, %p156
      %p158 = scmp.ne.s32.totalorder %s150, %s152
      %p159 = scmp.eq.s32.totalorder %s100, 1
      %p160 = por %p158, %p159
      %p161 = scmp.ne.s32.totalorder %s152, %s153
      %p162 = scmp.eq.s32.totalorder %s100, 0
      %p163 = por %p161, %p162
      %p164 = scmp.ne.s32.totalorder %s152, %s153
      %p165 = scmp.eq.s32.totalorder %s101, 1
      %p166 = por %p164, %p165
      %p168 = scmp.ne.s32.totalorder %s153, %s167
      %p169 = scmp.eq.s32.totalorder %s101, 0
      %p170 = por %p168, %p169
      %s172 = sadd.s32 %s171, 1
      %p175 = scmp.eq.s32.totalorder %s95, 1
      %p176 = scmp.ne.s32.totalorder %s171, %s173
      %p177 = scmp.eq.s32.totalorder %s95, 0
      %p178 = por %p176, %p177
      %p179 = scmp.ne.s32.totalorder %s171, %s173
      %p180 = scmp.eq.s32.totalorder %s100, 1
      %p181 = por %p179, %p180
      %p182 = scmp.ne.s32.totalorder %s173, %s174
      %p183 = scmp.eq.s32.totalorder %s100, 0
      %p184 = por %p182, %p183
      %p185 = scmp.ne.s32.totalorder %s173, %s174
      %p186 = scmp.eq.s32.totalorder %s101, 1
      %p187 = por %p185, %p186
      %p189 = scmp.ne.s32.totalorder %s174, %s188
      %p190 = scmp.eq.s32.totalorder %s101, 0
      %p191 = por %p189, %p190
      %s193 = sadd.s32 %s192, 1
      %p196 = scmp.eq.s32.totalorder %s95, 1
      %p197 = scmp.ne.s32.totalorder %s192, %s194
      %p198 = scmp.eq.s32.totalorder %s95, 0
      %p199 = por %p197, %p198
      %p200 = scmp.ne.s32.totalorder %s192, %s194
      %p201 = scmp.eq.s32.totalorder %s100, 1
      %p202 = por %p200, %p201
      %p203 = scmp.ne.s32.totalorder %s194, %s195
      %p204 = scmp.eq.s32.totalorder %s100, 0
      %p205 = por %p203, %p204
      %p206 = scmp.ne.s32.totalorder %s194, %s195
      %p207 = scmp.eq.s32.totalorder %s101, 1
      %p208 = por %p206, %p207
      %p210 = scmp.ne.s32.totalorder %s195, %s209
      %p211 = scmp.eq.s32.totalorder %s101, 0
      %p212 = por %p210, %p211
      %s214 = sadd.s32 %s213, 1
      %p217 = scmp.eq.s32.totalorder %s95, 1
      %p218 = scmp.ne.s32.totalorder %s213, %s215
      %p219 = scmp.eq.s32.totalorder %s95, 0
      %p220 = por %p218, %p219
      %p221 = scmp.ne.s32.totalorder %s213, %s215
      %p222 = scmp.eq.s32.totalorder %s100, 1
      %p223 = por %p221, %p222
      %p224 = scmp.ne.s32.totalorder %s215, %s216
      %p225 = scmp.eq.s32.totalorder %s100, 0
      %p226 = por %p224, %p225
      %p227 = scmp.ne.s32.totalorder %s215, %s216
      %p228 = scmp.eq.s32.totalorder %s101, 1
      %p229 = por %p227, %p228
      %p231 = scmp.ne.s32.totalorder %s216, %s230
      %p232 = scmp.eq.s32.totalorder %s101, 0
      %p233 = por %p231, %p232
      %s235 = sadd.s32 %s234, 1
      %p238 = scmp.eq.s32.totalorder %s95, 1
      %p239 = scmp.ne.s32.totalorder %s234, %s236
      %p240 = scmp.eq.s32.totalorder %s95, 0
      %p241 = por %p239, %p240
      %p242 = scmp.ne.s32.totalorder %s234, %s236
      %p243 = scmp.eq.s32.totalorder %s100, 1
      %p244 = por %p242, %p243
      %p245 = scmp.ne.s32.totalorder %s236, %s237
      %p246 = scmp.eq.s32.totalorder %s100, 0
      %p247 = por %p245, %p246
      %p248 = scmp.ne.s32.totalorder %s236, %s237
      %p249 = scmp.eq.s32.totalorder %s101, 1
      %p250 = por %p248, %p249
      %p252 = scmp.ne.s32.totalorder %s237, %s251
      %p253 = scmp.eq.s32.totalorder %s101, 0
      %p254 = por %p252, %p253
      %s256 = sadd.s32 %s255, 1
      %p259 = scmp.eq.s32.totalorder %s95, 1
      %p260 = scmp.ne.s32.totalorder %s255, %s257
      %p261 = scmp.eq.s32.totalorder %s95, 0
      %p262 = por %p260, %p261
      %p263 = scmp.ne.s32.totalorder %s255, %s257
      %p264 = scmp.eq.s32.totalorder %s100, 1
      %p265 = por %p263, %p264
      %p266 = scmp.ne.s32.totalorder %s257, %s258
      %p267 = scmp.eq.s32.totalorder %s100, 0
      %p268 = por %p266, %p267
      %p269 = scmp.ne.s32.totalorder %s257, %s258
      %p270 = scmp.eq.s32.totalorder %s101, 1
      %p271 = por %p269, %p270
      %p273 = scmp.ne.s32.totalorder %s258, %s272
      %p274 = scmp.eq.s32.totalorder %s101, 0
      %p275 = por %p273, %p274
      %s277 = sadd.s32 %s276, 1
      %p280 = scmp.eq.s32.totalorder %s95, 1
      %p281 = scmp.ne.s32.totalorder %s276, %s278
      %p282 = scmp.eq.s32.totalorder %s95, 0
      %p283 = por %p281, %p282
      %p284 = scmp.ne.s32.totalorder %s276, %s278
      %p285 = scmp.eq.s32.totalorder %s100, 1
      %p286 = por %p284, %p285
      %p287 = scmp.ne.s32.totalorder %s278, %s279
      %p288 = scmp.eq.s32.totalorder %s100, 0
      %p289 = por %p287, %p288
      %p290 = scmp.ne.s32.totalorder %s278, %s279
      %p291 = scmp.eq.s32.totalorder %s101, 1
      %p292 = por %p290, %p291
      %p294 = scmp.ne.s32.totalorder %s279, %s293
      %p295 = scmp.eq.s32.totalorder %s101, 0
      %p296 = por %p294, %p295
      %s298 = sadd.s32 %s297, 1
      %p301 = scmp.eq.s32.totalorder %s95, 1
      %p302 = scmp.ne.s32.totalorder %s297, %s299
      %p303 = scmp.eq.s32.totalorder %s95, 0
      %p304 = por %p302, %p303
      %p305 = scmp.ne.s32.totalorder %s297, %s299
      %p306 = scmp.eq.s32.totalorder %s100, 1
      %p307 = por %p305, %p306
      %p308 = scmp.ne.s32.totalorder %s299, %s300
      %p309 = scmp.eq.s32.totalorder %s100, 0
      %p310 = por %p308, %p309
      %p311 = scmp.ne.s32.totalorder %s299, %s300
      %p312 = scmp.eq.s32.totalorder %s101, 1
      %p313 = por %p311, %p312
      %p315 = scmp.ne.s32.totalorder %s300, %s314
      %p316 = scmp.eq.s32.totalorder %s101, 0
      %p317 = por %p315, %p316
      %s319 = sadd.s32 %s318, 1
      %p322 = scmp.eq.s32.totalorder %s95, 1
      %p323 = scmp.ne.s32.totalorder %s318, %s320
      %p324 = scmp.eq.s32.totalorder %s95, 0
      %p325 = por %p323, %p324
      %p326 = scmp.ne.s32.totalorder %s318, %s320
      %p327 = scmp.eq.s32.totalorder %s100, 1
      %p328 = por %p326, %p327
      %p329 = scmp.ne.s32.totalorder %s320, %s321
      %p330 = scmp.eq.s32.totalorder %s100, 0
      %p331 = por %p329, %p330
      %p332 = scmp.ne.s32.totalorder %s320, %s321
      %p333 = scmp.eq.s32.totalorder %s101, 1
      %p334 = por %p332, %p333
      %p336 = scmp.ne.s32.totalorder %s321, %s335
      %p337 = scmp.eq.s32.totalorder %s101, 0
      %p338 = por %p336, %p337
      %s340 = sadd.s32 %s339, 1
      %p343 = scmp.eq.s32.totalorder %s95, 1
      %p344 = scmp.ne.s32.totalorder %s339, %s341
      %p345 = scmp.eq.s32.totalorder %s95, 0
      %p346 = por %p344, %p345
      %p347 = scmp.ne.s32.totalorder %s339, %s341
      %p348 = scmp.eq.s32.totalorder %s100, 1
      %p349 = por %p347, %p348
      %p350 = scmp.ne.s32.totalorder %s341, %s342
      %p351 = scmp.eq.s32.totalorder %s100, 0
      %p352 = por %p350, %p351
      %p353 = scmp.ne.s32.totalorder %s341, %s342
      %p354 = scmp.eq.s32.totalorder %s101, 1
      %p355 = por %p353, %p354
      %p357 = scmp.ne.s32.totalorder %s342, %s356
      %p358 = scmp.eq.s32.totalorder %s101, 0
      %p359 = por %p357, %p358
      %s361 = sadd.s32 %s360, 1
      %p364 = scmp.eq.s32.totalorder %s95, 1
      %p365 = scmp.ne.s32.totalorder %s360, %s362
      %p366 = scmp.eq.s32.totalorder %s95, 0
      %p367 = por %p365, %p366
      %p368 = scmp.ne.s32.totalorder %s360, %s362
      %p369 = scmp.eq.s32.totalorder %s100, 1
      %p370 = por %p368, %p369
      %p371 = scmp.ne.s32.totalorder %s362, %s363
      %p372 = scmp.eq.s32.totalorder %s100, 0
      %p373 = por %p371, %p372
      %p374 = scmp.ne.s32.totalorder %s362, %s363
      %p375 = scmp.eq.s32.totalorder %s101, 1
      %p376 = por %p374, %p375
      %p378 = scmp.ne.s32.totalorder %s363, %s377
      %p379 = scmp.eq.s32.totalorder %s101, 0
      %p380 = por %p378, %p379
      %s382 = sadd.s32 %s381, 1
      %p385 = scmp.eq.s32.totalorder %s95, 1
      %p386 = scmp.ne.s32.totalorder %s381, %s383
      %p387 = scmp.eq.s32.totalorder %s95, 0
      %p388 = por %p386, %p387
      %p389 = scmp.ne.s32.totalorder %s381, %s383
      %p390 = scmp.eq.s32.totalorder %s100, 1
      %p391 = por %p389, %p390
      %p392 = scmp.ne.s32.totalorder %s383, %s384
      %p393 = scmp.eq.s32.totalorder %s100, 0
      %p394 = por %p392, %p393
      %p395 = scmp.ne.s32.totalorder %s383, %s384
      %p396 = scmp.eq.s32.totalorder %s101, 1
      %p397 = por %p395, %p396
      %p399 = scmp.ne.s32.totalorder %s384, %s398
      %p400 = scmp.eq.s32.totalorder %s101, 0
      %p401 = por %p399, %p400
      %s403 = sadd.s32 %s402, 1
      %p406 = scmp.eq.s32.totalorder %s95, 1
      %p407 = scmp.ne.s32.totalorder %s402, %s404
      %p408 = scmp.eq.s32.totalorder %s95, 0
      %p409 = por %p407, %p408
      %p410 = scmp.ne.s32.totalorder %s402, %s404
      %p411 = scmp.eq.s32.totalorder %s100, 1
      %p412 = por %p410, %p411
      %p413 = scmp.ne.s32.totalorder %s404, %s405
      %p414 = scmp.eq.s32.totalorder %s100, 0
      %p415 = por %p413, %p414
      %p416 = scmp.ne.s32.totalorder %s404, %s405
      %p417 = scmp.eq.s32.totalorder %s101, 1
      %p418 = por %p416, %p417
      %p420 = scmp.ne.s32.totalorder %s405, %s419
      %p421 = scmp.eq.s32.totalorder %s101, 0
      %p422 = por %p420, %p421
      %s424 = sadd.s32 %s423, 1
      %p427 = scmp.eq.s32.totalorder %s95, 1
      %p428 = scmp.ne.s32.totalorder %s423, %s425
      %p429 = scmp.eq.s32.totalorder %s95, 0
      %p430 = por %p428, %p429
      %p431 = scmp.ne.s32.totalorder %s423, %s425
      %p432 = scmp.eq.s32.totalorder %s100, 1
      %p433 = por %p431, %p432
      %p434 = scmp.ne.s32.totalorder %s425, %s426
      %p435 = scmp.eq.s32.totalorder %s100, 0
      %p436 = por %p434, %p435
      %p437 = scmp.ne.s32.totalorder %s425, %s426
      %p438 = scmp.eq.s32.totalorder %s101, 1
      %p439 = por %p437, %p438
      %p441 = scmp.ne.s32.totalorder %s426, %s440
      %p442 = scmp.eq.s32.totalorder %s101, 0
      %p443 = por %p441, %p442
      %s445 = sadd.s32 %s444, 1
      %p448 = scmp.eq.s32.totalorder %s95, 1
      %p449 = scmp.ne.s32.totalorder %s444, %s446
      %p450 = scmp.eq.s32.totalorder %s95, 0
      %p451 = por %p449, %p450
      %p452 = scmp.ne.s32.totalorder %s444, %s446
      %p453 = scmp.eq.s32.totalorder %s100, 1
      %p454 = por %p452, %p453
      %p455 = scmp.ne.s32.totalorder %s446, %s447
      %p456 = scmp.eq.s32.totalorder %s100, 0
      %p457 = por %p455, %p456
      %p458 = scmp.ne.s32.totalorder %s446, %s447
      %p459 = scmp.eq.s32.totalorder %s101, 1
      %p460 = por %p458, %p459
      %p462 = scmp.ne.s32.totalorder %s447, %s461
      %p463 = scmp.eq.s32.totalorder %s101, 0
      %p464 = por %p462, %p463
      %s466 = sadd.s32 %s465, 1
      %p469 = scmp.eq.s32.totalorder %s95, 1
      %p470 = scmp.ne.s32.totalorder %s465, %s467
      %p471 = scmp.eq.s32.totalorder %s95, 0
      %p472 = por %p470, %p471
      %p473 = scmp.ne.s32.totalorder %s465, %s467
      %p474 = scmp.eq.s32.totalorder %s100, 1
      %p475 = por %p473, %p474
      %p476 = scmp.ne.s32.totalorder %s467, %s468
      %p477 = scmp.eq.s32.totalorder %s100, 0
      %p478 = por %p476, %p477
      %p479 = scmp.ne.s32.totalorder %s467, %s468
      %p480 = scmp.eq.s32.totalorder %s101, 1
      %p481 = por %p479, %p480
      %p483 = scmp.ne.s32.totalorder %s468, %s482
      %p484 = scmp.eq.s32.totalorder %s101, 0
      %p485 = por %p483, %p484
      %s487 = sadd.s32 %s486, 1
      %p490 = scmp.eq.s32.totalorder %s95, 1
      %p491 = scmp.ne.s32.totalorder %s486, %s488
      %p492 = scmp.eq.s32.totalorder %s95, 0
      %p493 = por %p491, %p492
      %p494 = scmp.ne.s32.totalorder %s486, %s488
      %p495 = scmp.eq.s32.totalorder %s100, 1
      %p496 = por %p494, %p495
      %p497 = scmp.ne.s32.totalorder %s488, %s489
      %p498 = scmp.eq.s32.totalorder %s100, 0
      %p499 = por %p497, %p498
      %p500 = scmp.ne.s32.totalorder %s488, %s489
      %p501 = scmp.eq.s32.totalorder %s101, 1
      %p502 = por %p500, %p501
      %p504 = scmp.ne.s32.totalorder %s489, %s503
      %p505 = scmp.eq.s32.totalorder %s101, 0
      %p506 = por %p504, %p505
      %s508 = sadd.s32 %s507, 1
      %p511 = scmp.eq.s32.totalorder %s95, 1
      %p512 = scmp.ne.s32.totalorder %s507, %s509
      %p513 = scmp.eq.s32.totalorder %s95, 0
      %p514 = por %p512, %p513
      %p515 = scmp.ne.s32.totalorder %s507, %s509
      %p516 = scmp.eq.s32.totalorder %s100, 1
      %p517 = por %p515, %p516
      %p518 = scmp.ne.s32.totalorder %s509, %s510
      %p519 = scmp.eq.s32.totalorder %s100, 0
      %p520 = por %p518, %p519
      %p521 = scmp.ne.s32.totalorder %s509, %s510
      %p522 = scmp.eq.s32.totalorder %s101, 1
      %p523 = por %p521, %p522
      %p525 = scmp.ne.s32.totalorder %s510, %s524
      %p526 = scmp.eq.s32.totalorder %s101, 0
      %p527 = por %p525, %p526
      %s529 = sadd.s32 %s528, 1
      %p532 = scmp.eq.s32.totalorder %s95, 1
      %p533 = scmp.ne.s32.totalorder %s528, %s530
      %p534 = scmp.eq.s32.totalorder %s95, 0
      %p535 = por %p533, %p534
      %p536 = scmp.ne.s32.totalorder %s528, %s530
      %p537 = scmp.eq.s32.totalorder %s100, 1
      %p538 = por %p536, %p537
      %p539 = scmp.ne.s32.totalorder %s530, %s531
      %p540 = scmp.eq.s32.totalorder %s100, 0
      %p541 = por %p539, %p540
      %p542 = scmp.ne.s32.totalorder %s530, %s531
      %p543 = scmp.eq.s32.totalorder %s101, 1
      %p544 = por %p542, %p543
      %p546 = scmp.ne.s32.totalorder %s531, %s545
      %p547 = scmp.eq.s32.totalorder %s101, 0
      %p548 = por %p546, %p547
      %s550 = sadd.s32 %s549, 1
      %p553 = scmp.eq.s32.totalorder %s95, 1
      %p554 = scmp.ne.s32.totalorder %s549, %s551
      %p555 = scmp.eq.s32.totalorder %s95, 0
      %p556 = por %p554, %p555
      %p557 = scmp.ne.s32.totalorder %s549, %s551
      %p558 = scmp.eq.s32.totalorder %s100, 1
      %p559 = por %p557, %p558
      %p560 = scmp.ne.s32.totalorder %s551, %s552
      %p561 = scmp.eq.s32.totalorder %s100, 0
      %p562 = por %p560, %p561
      %p563 = scmp.ne.s32.totalorder %s551, %s552
      %p564 = scmp.eq.s32.totalorder %s101, 1
      %p565 = por %p563, %p564
      %p567 = scmp.ne.s32.totalorder %s552, %s566
      %p568 = scmp.eq.s32.totalorder %s101, 0
      %p569 = por %p567, %p568
      %s571 = sadd.s32 %s570, 1
      %p574 = scmp.eq.s32.totalorder %s95, 1
      %p575 = scmp.ne.s32.totalorder %s570, %s572
      %p576 = scmp.eq.s32.totalorder %s95, 0
      %p577 = por %p575, %p576
      %p578 = scmp.ne.s32.totalorder %s570, %s572
      %p579 = scmp.eq.s32.totalorder %s100, 1
      %p580 = por %p578, %p579
      %p581 = scmp.ne.s32.totalorder %s572, %s573
      %p582 = scmp.eq.s32.totalorder %s100, 0
      %p583 = por %p581, %p582
      %p584 = scmp.ne.s32.totalorder %s572, %s573
      %p585 = scmp.eq.s32.totalorder %s101, 1
      %p586 = por %p584, %p585
      %p588 = scmp.ne.s32.totalorder %s573, %s587
      %p589 = scmp.eq.s32.totalorder %s101, 0
      %p590 = por %p588, %p589
      %s592 = sadd.s32 %s591, 1
      %p595 = scmp.eq.s32.totalorder %s95, 1
      %p596 = scmp.ne.s32.totalorder %s591, %s593
      %p597 = scmp.eq.s32.totalorder %s95, 0
      %p598 = por %p596, %p597
      %p599 = scmp.ne.s32.totalorder %s591, %s593
      %p600 = scmp.eq.s32.totalorder %s100, 1
      %p601 = por %p599, %p600
      %p602 = scmp.ne.s32.totalorder %s593, %s594
      %p603 = scmp.eq.s32.totalorder %s100, 0
      %p604 = por %p602, %p603
      %p605 = scmp.ne.s32.totalorder %s593, %s594
      %p606 = scmp.eq.s32.totalorder %s101, 1
      %p607 = por %p605, %p606
      %p609 = scmp.ne.s32.totalorder %s594, %s608
      %p610 = scmp.eq.s32.totalorder %s101, 0
      %p611 = por %p609, %p610
      %s613 = sadd.s32 %s612, 1
      %p616 = scmp.eq.s32.totalorder %s95, 1
      %p617 = scmp.ne.s32.totalorder %s612, %s614
      %p618 = scmp.eq.s32.totalorder %s95, 0
      %p619 = por %p617, %p618
      %p620 = scmp.ne.s32.totalorder %s612, %s614
      %p621 = scmp.eq.s32.totalorder %s100, 1
      %p622 = por %p620, %p621
      %p623 = scmp.ne.s32.totalorder %s614, %s615
      %p624 = scmp.eq.s32.totalorder %s100, 0
      %p625 = por %p623, %p624
      %p626 = scmp.ne.s32.totalorder %s614, %s615
      %p627 = scmp.eq.s32.totalorder %s101, 1
      %p628 = por %p626, %p627
      %p630 = scmp.ne.s32.totalorder %s615, %s629
      %p631 = scmp.eq.s32.totalorder %s101, 0
      %p632 = por %p630, %p631
      %s634 = sadd.s32 %s633, 1
      %p637 = scmp.eq.s32.totalorder %s95, 1
      %p638 = scmp.ne.s32.totalorder %s633, %s635
      %p639 = scmp.eq.s32.totalorder %s95, 0
      %p640 = por %p638, %p639
      %p641 = scmp.ne.s32.totalorder %s633, %s635
      %p642 = scmp.eq.s32.totalorder %s100, 1
      %p643 = por %p641, %p642
      %p644 = scmp.ne.s32.totalorder %s635, %s636
      %p645 = scmp.eq.s32.totalorder %s100, 0
      %p646 = por %p644, %p645
      %p647 = scmp.ne.s32.totalorder %s635, %s636
      %p648 = scmp.eq.s32.totalorder %s101, 1
      %p649 = por %p647, %p648
      %p651 = scmp.ne.s32.totalorder %s636, %s650
      %p652 = scmp.eq.s32.totalorder %s101, 0
      %p653 = por %p651, %p652
      %s655 = sadd.s32 %s654, 1
      %p658 = scmp.eq.s32.totalorder %s95, 1
      %p659 = scmp.ne.s32.totalorder %s654, %s656
      %p660 = scmp.eq.s32.totalorder %s95, 0
      %p661 = por %p659, %p660
      %p662 = scmp.ne.s32.totalorder %s654, %s656
      %p663 = scmp.eq.s32.totalorder %s100, 1
      %p664 = por %p662, %p663
      %p665 = scmp.ne.s32.totalorder %s656, %s657
      %p666 = scmp.eq.s32.totalorder %s100, 0
      %p667 = por %p665, %p666
      %p668 = scmp.ne.s32.totalorder %s656, %s657
      %p669 = scmp.eq.s32.totalorder %s101, 1
      %p670 = por %p668, %p669
      %p672 = scmp.ne.s32.totalorder %s657, %s671
      %p673 = scmp.eq.s32.totalorder %s101, 0
      %p674 = por %p672, %p673
      %s676 = sadd.s32 %s675, 1
      %p679 = scmp.eq.s32.totalorder %s95, 1
      %p680 = scmp.ne.s32.totalorder %s675, %s677
      %p681 = scmp.eq.s32.totalorder %s95, 0
      %p682 = por %p680, %p681
      %p683 = scmp.ne.s32.totalorder %s675, %s677
      %p684 = scmp.eq.s32.totalorder %s100, 1
      %p685 = por %p683, %p684
      %p686 = scmp.ne.s32.totalorder %s677, %s678
      %p687 = scmp.eq.s32.totalorder %s100, 0
      %p688 = por %p686, %p687
      %p689 = scmp.ne.s32.totalorder %s677, %s678
      %p690 = scmp.eq.s32.totalorder %s101, 1
      %p691 = por %p689, %p690
      %p693 = scmp.ne.s32.totalorder %s678, %s692
      %p694 = scmp.eq.s32.totalorder %s101, 0
      %p695 = por %p693, %p694
      %s697 = sadd.s32 %s696, 1
      %p700 = scmp.eq.s32.totalorder %s95, 1
      %p701 = scmp.ne.s32.totalorder %s696, %s698
      %p702 = scmp.eq.s32.totalorder %s95, 0
      %p703 = por %p701, %p702
      %p704 = scmp.ne.s32.totalorder %s696, %s698
      %p705 = scmp.eq.s32.totalorder %s100, 1
      %p706 = por %p704, %p705
      %p707 = scmp.ne.s32.totalorder %s698, %s699
      %p708 = scmp.eq.s32.totalorder %s100, 0
      %p709 = por %p707, %p708
      %p710 = scmp.ne.s32.totalorder %s698, %s699
      %p711 = scmp.eq.s32.totalorder %s101, 1
      %p712 = por %p710, %p711
      %p714 = scmp.ne.s32.totalorder %s699, %s713
      %p715 = scmp.eq.s32.totalorder %s101, 0
      %p716 = por %p714, %p715
      %s718 = sadd.s32 %s717, 1
      %p721 = scmp.eq.s32.totalorder %s95, 1
      %p722 = scmp.ne.s32.totalorder %s717, %s719
      %p723 = scmp.eq.s32.totalorder %s95, 0
      %p724 = por %p722, %p723
      %p725 = scmp.ne.s32.totalorder %s717, %s719
      %p726 = scmp.eq.s32.totalorder %s100, 1
      %p727 = por %p725, %p726
      %p728 = scmp.ne.s32.totalorder %s719, %s720
      %p729 = scmp.eq.s32.totalorder %s100, 0
      %p730 = por %p728, %p729
      %p731 = scmp.ne.s32.totalorder %s719, %s720
      %p732 = scmp.eq.s32.totalorder %s101, 1
      %p733 = por %p731, %p732
      %p735 = scmp.ne.s32.totalorder %s720, %s734
      %p736 = scmp.eq.s32.totalorder %s101, 0
      %p737 = por %p735, %p736
      %s739 = sadd.s32 %s738, 1
      %p742 = scmp.eq.s32.totalorder %s95, 1
      %p743 = scmp.ne.s32.totalorder %s738, %s740
      %p744 = scmp.eq.s32.totalorder %s95, 0
      %p745 = por %p743, %p744
      %p746 = scmp.ne.s32.totalorder %s738, %s740
      %p747 = scmp.eq.s32.totalorder %s100, 1
      %p748 = por %p746, %p747
      %p749 = scmp.ne.s32.totalorder %s740, %s741
      %p750 = scmp.eq.s32.totalorder %s100, 0
      %p751 = por %p749, %p750
      %p752 = scmp.ne.s32.totalorder %s740, %s741
      %p753 = scmp.eq.s32.totalorder %s101, 1
      %p754 = por %p752, %p753
      %p756 = scmp.ne.s32.totalorder %s741, %s755
      %p757 = scmp.eq.s32.totalorder %s101, 0
      %p758 = por %p756, %p757
      %s760 = sadd.s32 %s759, 1
      %p763 = scmp.eq.s32.totalorder %s95, 1
      %p764 = scmp.ne.s32.totalorder %s759, %s761
      %p765 = scmp.eq.s32.totalorder %s95, 0
      %p766 = por %p764, %p765
      %p767 = scmp.ne.s32.totalorder %s759, %s761
      %p768 = scmp.eq.s32.totalorder %s100, 1
      %p769 = por %p767, %p768
      %p770 = scmp.ne.s32.totalorder %s761, %s762
      %p771 = scmp.eq.s32.totalorder %s100, 0
      %p772 = por %p770, %p771
      %p773 = scmp.ne.s32.totalorder %s761, %s762
      %p774 = scmp.eq.s32.totalorder %s101, 1
      %p775 = por %p773, %p774
      %p777 = scmp.ne.s32.totalorder %s762, %s776
      %p778 = scmp.eq.s32.totalorder %s101, 0
      %p779 = por %p777, %p778
      %s781 = sadd.s32 %s780, 1
      %p784 = scmp.eq.s32.totalorder %s95, 1
      %p785 = scmp.ne.s32.totalorder %s780, %s782
      %p786 = scmp.eq.s32.totalorder %s95, 0
      %p787 = por %p785, %p786
      %p788 = scmp.ne.s32.totalorder %s780, %s782
      %p789 = scmp.eq.s32.totalorder %s100, 1
      %p790 = por %p788, %p789
      %p791 = scmp.ne.s32.totalorder %s782, %s783
      %p792 = scmp.eq.s32.totalorder %s100, 0
      %p793 = por %p791, %p792
      %p794 = scmp.ne.s32.totalorder %s782, %s783
      %p795 = scmp.eq.s32.totalorder %s101, 1
      %p796 = por %p794, %p795
      %p798 = scmp.ne.s32.totalorder %s783, %s797
      %p799 = scmp.eq.s32.totalorder %s101, 0
      %p800 = por %p798, %p799
      %s802 = sadd.s32 %s801, 1
      %p805 = scmp.eq.s32.totalorder %s95, 1
      %p806 = scmp.ne.s32.totalorder %s801, %s803
      %p807 = scmp.eq.s32.totalorder %s95, 0
      %p808 = por %p806, %p807
      %p809 = scmp.ne.s32.totalorder %s801, %s803
      %p810 = scmp.eq.s32.totalorder %s100, 1
      %p811 = por %p809, %p810
      %p812 = scmp.ne.s32.totalorder %s803, %s804
      %p813 = scmp.eq.s32.totalorder %s100, 0
      %p814 = por %p812, %p813
      %p815 = scmp.ne.s32.totalorder %s803, %s804
      %p816 = scmp.eq.s32.totalorder %s101, 1
      %p817 = por %p815, %p816
      %p819 = scmp.ne.s32.totalorder %s804, %s818
      %p820 = scmp.eq.s32.totalorder %s101, 0
      %p821 = por %p819, %p820
      %s823 = sadd.s32 %s822, 1
      %p826 = scmp.eq.s32.totalorder %s95, 1
      %p827 = scmp.ne.s32.totalorder %s822, %s824
      %p828 = scmp.eq.s32.totalorder %s95, 0
      %p829 = por %p827, %p828
      %p830 = scmp.ne.s32.totalorder %s822, %s824
      %p831 = scmp.eq.s32.totalorder %s100, 1
      %p832 = por %p830, %p831
      %p833 = scmp.ne.s32.totalorder %s824, %s825
      %p834 = scmp.eq.s32.totalorder %s100, 0
      %p835 = por %p833, %p834
      %p836 = scmp.ne.s32.totalorder %s824, %s825
      %p837 = scmp.eq.s32.totalorder %s101, 1
      %p838 = por %p836, %p837
      %p840 = scmp.ne.s32.totalorder %s825, %s839
      %p841 = scmp.eq.s32.totalorder %s101, 0
      %p842 = por %p840, %p841
      %s844 = sadd.s32 %s843, 1
      %p847 = scmp.eq.s32.totalorder %s95, 1
      %p848 = scmp.ne.s32.totalorder %s843, %s845
      %p849 = scmp.eq.s32.totalorder %s95, 0
      %p850 = por %p848, %p849
      %p851 = scmp.ne.s32.totalorder %s843, %s845
      %p852 = scmp.eq.s32.totalorder %s100, 1
      %p853 = por %p851, %p852
      %p854 = scmp.ne.s32.totalorder %s845, %s846
      %p855 = scmp.eq.s32.totalorder %s100, 0
      %p856 = por %p854, %p855
      %p857 = scmp.ne.s32.totalorder %s845, %s846
      %p858 = scmp.eq.s32.totalorder %s101, 1
      %p859 = por %p857, %p858
      %p861 = scmp.ne.s32.totalorder %s846, %s860
      %p862 = scmp.eq.s32.totalorder %s101, 0
      %p863 = por %p861, %p862
      %s865 = sadd.s32 %s864, 1
      %p868 = scmp.eq.s32.totalorder %s95, 1
      %p869 = scmp.ne.s32.totalorder %s864, %s866
      %p870 = scmp.eq.s32.totalorder %s95, 0
      %p871 = por %p869, %p870
      %p872 = scmp.ne.s32.totalorder %s864, %s866
      %p873 = scmp.eq.s32.totalorder %s100, 1
      %p874 = por %p872, %p873
      %p875 = scmp.ne.s32.totalorder %s866, %s867
      %p876 = scmp.eq.s32.totalorder %s100, 0
      %p877 = por %p875, %p876
      %p878 = scmp.ne.s32.totalorder %s866, %s867
      %p879 = scmp.eq.s32.totalorder %s101, 1
      %p880 = por %p878, %p879
      %p882 = scmp.ne.s32.totalorder %s867, %s881
      %p883 = scmp.eq.s32.totalorder %s101, 0
      %p884 = por %p882, %p883
      %s885 = ssub.s32 %s95, %s102
      %p886 = scmp.eq.s32.totalorder %s885, 0
      %s888 = sadd.s32 %s887, 1
      %s889 = scalar_select %p886, %s887, %s888
      %p892 = pneg %p886
      %p893 = scmp.eq.s32.totalorder %s95, 1
      %p894 = por %p892, %p893
      %p895 = scmp.ne.s32.totalorder %s887, %s890
      %p896 = scmp.eq.s32.totalorder %s95, 0
      %p897 = por %p895, %p896
      %p898 = scmp.ne.s32.totalorder %s887, %s890
      %p899 = scmp.eq.s32.totalorder %s100, 1
      %p900 = por %p898, %p899
      %p901 = scmp.ne.s32.totalorder %s890, %s891
      %p902 = scmp.eq.s32.totalorder %s100, 0
      %p903 = por %p901, %p902
      %p904 = scmp.ne.s32.totalorder %s890, %s891
      %p905 = scmp.eq.s32.totalorder %s101, 1
      %p906 = por %p904, %p905
      %p908 = scmp.ne.s32.totalorder %s891, %s907
      %p909 = scmp.eq.s32.totalorder %s101, 0
      %p910 = por %p908, %p909
      %s911 = ssub.s32 %s95, %s102
      %p912 = scmp.eq.s32.totalorder %s911, 0
      %s914 = sadd.s32 %s913, 1
      %s915 = scalar_select %p912, %s913, %s914
      %p918 = pneg %p912
      %p919 = scmp.eq.s32.totalorder %s95, 1
      %p920 = por %p918, %p919
      %p921 = scmp.ne.s32.totalorder %s913, %s916
      %p922 = scmp.eq.s32.totalorder %s95, 0
      %p923 = por %p921, %p922
      %p924 = scmp.ne.s32.totalorder %s913, %s916
      %p925 = scmp.eq.s32.totalorder %s100, 1
      %p926 = por %p924, %p925
      %p927 = scmp.ne.s32.totalorder %s916, %s917
      %p928 = scmp.eq.s32.totalorder %s100, 0
      %p929 = por %p927, %p928
      %p930 = scmp.ne.s32.totalorder %s916, %s917
      %p931 = scmp.eq.s32.totalorder %s101, 1
      %p932 = por %p930, %p931
      %p934 = scmp.ne.s32.totalorder %s917, %s933
      %p935 = scmp.eq.s32.totalorder %s101, 0
      %p936 = por %p934, %p935
      %p937 = scmp.le.s32.totalorder 1, %s95
      %p938 = scmp.lt.s32.totalorder %s95, 3
      %p939 = pnand %p937, %p938
      %p940 = pneg %p939
      // Predicated region
      $region9: #{tpu_custom_call.1} parent=5 // pred_check
        _
      $region10: #{tpu_custom_call.1} parent=5 // pred_check_branch
        %942 = sbr.rel (%p939) target = $region12
      $region11: #{tpu_custom_call.1} parent=5 // pred_region
        %s943 = ssub.s32 %s95, 1
        // Predicated region
        $region13: #{tpu_custom_call.1} parent=11 // pred_check
          %p944 = pneg %p142
        $region14: #{tpu_custom_call.1} parent=11 // pred_check_branch
          %946 = sbr.rel (%p944) target = $region16
        $region15: #{tpu_custom_call.1} parent=11 // pred_region
          _
        $region16: #{tpu_custom_call.1} parent=11 // pred_fallthru
          _
        // Predicated region
        $region17: #{tpu_custom_call.1} parent=11 // pred_check
          %p947 = pneg %p163
        $region18: #{tpu_custom_call.1} parent=11 // pred_check_branch
          %949 = sbr.rel (%p947) target = $region20
        $region19: #{tpu_custom_call.1} parent=11 // pred_region
          _
        $region20: #{tpu_custom_call.1} parent=11 // pred_fallthru
          _
        // Predicated region
        $region21: #{tpu_custom_call.1} parent=11 // pred_check
          %p950 = pneg %p184
        $region22: #{tpu_custom_call.1} parent=11 // pred_check_branch
          %952 = sbr.rel (%p950) target = $region24
        $region23: #{tpu_custom_call.1} parent=11 // pred_region
          _
        $region24: #{tpu_custom_call.1} parent=11 // pred_fallthru
          _
        // Predicated region
        $region25: #{tpu_custom_call.1} parent=11 // pred_check
          %p953 = pneg %p205
        $region26: #{tpu_custom_call.1} parent=11 // pred_check_branch
          %955 = sbr.rel (%p953) target = $region28
        $region27: #{tpu_custom_call.1} parent=11 // pred_region
          _
        $region28: #{tpu_custom_call.1} parent=11 // pred_fallthru
          _
        // Predicated region
        $region29: #{tpu_custom_call.1} parent=11 // pred_check
          %p956 = pneg %p226
        $region30: #{tpu_custom_call.1} parent=11 // pred_check_branch
          %958 = sbr.rel (%p956) target = $region32
        $region31: #{tpu_custom_call.1} parent=11 // pred_region
          _
        $region32: #{tpu_custom_call.1} parent=11 // pred_fallthru
          _
        // Predicated region
        $region33: #{tpu_custom_call.1} parent=11 // pred_check
          %p959 = pneg %p247
        $region34: #{tpu_custom_call.1} parent=11 // pred_check_branch
          %961 = sbr.rel (%p959) target = $region36
        $region35: #{tpu_custom_call.1} parent=11 // pred_region
          _
        $region36: #{tpu_custom_call.1} parent=11 // pred_fallthru
          _
        // Predicated region
        $region37: #{tpu_custom_call.1} parent=11 // pred_check
          %p962 = pneg %p268
        $region38: #{tpu_custom_call.1} parent=11 // pred_check_branch
          %964 = sbr.rel (%p962) target = $region40
        $region39: #{tpu_custom_call.1} parent=11 // pred_region
          _
        $region40: #{tpu_custom_call.1} parent=11 // pred_fallthru
          _
        // Predicated region
        $region41: #{tpu_custom_call.1} parent=11 // pred_check
          %p965 = pneg %p289
        $region42: #{tpu_custom_call.1} parent=11 // pred_check_branch
          %967 = sbr.rel (%p965) target = $region44
        $region43: #{tpu_custom_call.1} parent=11 // pred_region
          _
        $region44: #{tpu_custom_call.1} parent=11 // pred_fallthru
          _
        // Predicated region
        $region45: #{tpu_custom_call.1} parent=11 // pred_check
          %p968 = pneg %p310
        $region46: #{tpu_custom_call.1} parent=11 // pred_check_branch
          %970 = sbr.rel (%p968) target = $region48
        $region47: #{tpu_custom_call.1} parent=11 // pred_region
          _
        $region48: #{tpu_custom_call.1} parent=11 // pred_fallthru
          _
        // Predicated region
        $region49: #{tpu_custom_call.1} parent=11 // pred_check
          %p971 = pneg %p331
        $region50: #{tpu_custom_call.1} parent=11 // pred_check_branch
          %973 = sbr.rel (%p971) target = $region52
        $region51: #{tpu_custom_call.1} parent=11 // pred_region
          _
        $region52: #{tpu_custom_call.1} parent=11 // pred_fallthru
          _
        // Predicated region
        $region53: #{tpu_custom_call.1} parent=11 // pred_check
          %p974 = pneg %p352
        $region54: #{tpu_custom_call.1} parent=11 // pred_check_branch
          %976 = sbr.rel (%p974) target = $region56
        $region55: #{tpu_custom_call.1} parent=11 // pred_region
          _
        $region56: #{tpu_custom_call.1} parent=11 // pred_fallthru
          _
        // Predicated region
        $region57: #{tpu_custom_call.1} parent=11 // pred_check
          %p977 = pneg %p373
        $region58: #{tpu_custom_call.1} parent=11 // pred_check_branch
          %979 = sbr.rel (%p977) target = $region60
        $region59: #{tpu_custom_call.1} parent=11 // pred_region
          _
        $region60: #{tpu_custom_call.1} parent=11 // pred_fallthru
          _
        // Predicated region
        $region61: #{tpu_custom_call.1} parent=11 // pred_check
          %p980 = pneg %p394
        $region62: #{tpu_custom_call.1} parent=11 // pred_check_branch
          %982 = sbr.rel (%p980) target = $region64
        $region63: #{tpu_custom_call.1} parent=11 // pred_region
          _
        $region64: #{tpu_custom_call.1} parent=11 // pred_fallthru
          _
        // Predicated region
        $region65: #{tpu_custom_call.1} parent=11 // pred_check
          %p983 = pneg %p415
        $region66: #{tpu_custom_call.1} parent=11 // pred_check_branch
          %985 = sbr.rel (%p983) target = $region68
        $region67: #{tpu_custom_call.1} parent=11 // pred_region
          _
        $region68: #{tpu_custom_call.1} parent=11 // pred_fallthru
          _
        // Predicated region
        $region69: #{tpu_custom_call.1} parent=11 // pred_check
          %p986 = pneg %p436
        $region70: #{tpu_custom_call.1} parent=11 // pred_check_branch
          %988 = sbr.rel (%p986) target = $region72
        $region71: #{tpu_custom_call.1} parent=11 // pred_region
          _
        $region72: #{tpu_custom_call.1} parent=11 // pred_fallthru
          _
        // Predicated region
        $region73: #{tpu_custom_call.1} parent=11 // pred_check
          %p989 = pneg %p457
        $region74: #{tpu_custom_call.1} parent=11 // pred_check_branch
          %991 = sbr.rel (%p989) target = $region76
        $region75: #{tpu_custom_call.1} parent=11 // pred_region
          _
        $region76: #{tpu_custom_call.1} parent=11 // pred_fallthru
          _
        // Predicated region
        $region77: #{tpu_custom_call.1} parent=11 // pred_check
          %p992 = pneg %p478
        $region78: #{tpu_custom_call.1} parent=11 // pred_check_branch
          %994 = sbr.rel (%p992) target = $region80
        $region79: #{tpu_custom_call.1} parent=11 // pred_region
          _
        $region80: #{tpu_custom_call.1} parent=11 // pred_fallthru
          _
        // Predicated region
        $region81: #{tpu_custom_call.1} parent=11 // pred_check
          %p995 = pneg %p499
        $region82: #{tpu_custom_call.1} parent=11 // pred_check_branch
          %997 = sbr.rel (%p995) target = $region84
        $region83: #{tpu_custom_call.1} parent=11 // pred_region
          _
        $region84: #{tpu_custom_call.1} parent=11 // pred_fallthru
          _
        // Predicated region
        $region85: #{tpu_custom_call.1} parent=11 // pred_check
          %p998 = pneg %p520
        $region86: #{tpu_custom_call.1} parent=11 // pred_check_branch
          %1000 = sbr.rel (%p998) target = $region88
        $region87: #{tpu_custom_call.1} parent=11 // pred_region
          _
        $region88: #{tpu_custom_call.1} parent=11 // pred_fallthru
          _
        // Predicated region
        $region89: #{tpu_custom_call.1} parent=11 // pred_check
          %p1001 = pneg %p541
        $region90: #{tpu_custom_call.1} parent=11 // pred_check_branch
          %1003 = sbr.rel (%p1001) target = $region92
        $region91: #{tpu_custom_call.1} parent=11 // pred_region
          _
        $region92: #{tpu_custom_call.1} parent=11 // pred_fallthru
          _
        // Predicated region
        $region93: #{tpu_custom_call.1} parent=11 // pred_check
          %p1004 = pneg %p562
        $region94: #{tpu_custom_call.1} parent=11 // pred_check_branch
          %1006 = sbr.rel (%p1004) target = $region96
        $region95: #{tpu_custom_call.1} parent=11 // pred_region
          _
        $region96: #{tpu_custom_call.1} parent=11 // pred_fallthru
          _
        // Predicated region
        $region97: #{tpu_custom_call.1} parent=11 // pred_check
          %p1007 = pneg %p583
        $region98: #{tpu_custom_call.1} parent=11 // pred_check_branch
          %1009 = sbr.rel (%p1007) target = $region100
        $region99: #{tpu_custom_call.1} parent=11 // pred_region
          _
        $region100: #{tpu_custom_call.1} parent=11 // pred_fallthru
          _
        // Predicated region
        $region101: #{tpu_custom_call.1} parent=11 // pred_check
          %p1010 = pneg %p604
        $region102: #{tpu_custom_call.1} parent=11 // pred_check_branch
          %1012 = sbr.rel (%p1010) target = $region104
        $region103: #{tpu_custom_call.1} parent=11 // pred_region
          _
        $region104: #{tpu_custom_call.1} parent=11 // pred_fallthru
          _
        // Predicated region
        $region105: #{tpu_custom_call.1} parent=11 // pred_check
          %p1013 = pneg %p625
        $region106: #{tpu_custom_call.1} parent=11 // pred_check_branch
          %1015 = sbr.rel (%p1013) target = $region108
        $region107: #{tpu_custom_call.1} parent=11 // pred_region
          _
        $region108: #{tpu_custom_call.1} parent=11 // pred_fallthru
          _
        // Predicated region
        $region109: #{tpu_custom_call.1} parent=11 // pred_check
          %p1016 = pneg %p646
        $region110: #{tpu_custom_call.1} parent=11 // pred_check_branch
          %1018 = sbr.rel (%p1016) target = $region112
        $region111: #{tpu_custom_call.1} parent=11 // pred_region
          _
        $region112: #{tpu_custom_call.1} parent=11 // pred_fallthru
          _
        // Predicated region
        $region113: #{tpu_custom_call.1} parent=11 // pred_check
          %p1019 = pneg %p667
        $region114: #{tpu_custom_call.1} parent=11 // pred_check_branch
          %1021 = sbr.rel (%p1019) target = $region116
        $region115: #{tpu_custom_call.1} parent=11 // pred_region
          _
        $region116: #{tpu_custom_call.1} parent=11 // pred_fallthru
          _
        // Predicated region
        $region117: #{tpu_custom_call.1} parent=11 // pred_check
          %p1022 = pneg %p688
        $region118: #{tpu_custom_call.1} parent=11 // pred_check_branch
          %1024 = sbr.rel (%p1022) target = $region120
        $region119: #{tpu_custom_call.1} parent=11 // pred_region
          _
        $region120: #{tpu_custom_call.1} parent=11 // pred_fallthru
          _
        // Predicated region
        $region121: #{tpu_custom_call.1} parent=11 // pred_check
          %p1025 = pneg %p709
        $region122: #{tpu_custom_call.1} parent=11 // pred_check_branch
          %1027 = sbr.rel (%p1025) target = $region124
        $region123: #{tpu_custom_call.1} parent=11 // pred_region
          _
        $region124: #{tpu_custom_call.1} parent=11 // pred_fallthru
          _
        // Predicated region
        $region125: #{tpu_custom_call.1} parent=11 // pred_check
          %p1028 = pneg %p730
        $region126: #{tpu_custom_call.1} parent=11 // pred_check_branch
          %1030 = sbr.rel (%p1028) target = $region128
        $region127: #{tpu_custom_call.1} parent=11 // pred_region
          _
        $region128: #{tpu_custom_call.1} parent=11 // pred_fallthru
          _
        // Predicated region
        $region129: #{tpu_custom_call.1} parent=11 // pred_check
          %p1031 = pneg %p751
        $region130: #{tpu_custom_call.1} parent=11 // pred_check_branch
          %1033 = sbr.rel (%p1031) target = $region132
        $region131: #{tpu_custom_call.1} parent=11 // pred_region
          _
        $region132: #{tpu_custom_call.1} parent=11 // pred_fallthru
          _
        // Predicated region
        $region133: #{tpu_custom_call.1} parent=11 // pred_check
          %p1034 = pneg %p772
        $region134: #{tpu_custom_call.1} parent=11 // pred_check_branch
          %1036 = sbr.rel (%p1034) target = $region136
        $region135: #{tpu_custom_call.1} parent=11 // pred_region
          _
        $region136: #{tpu_custom_call.1} parent=11 // pred_fallthru
          _
        // Predicated region
        $region137: #{tpu_custom_call.1} parent=11 // pred_check
          %p1037 = pneg %p793
        $region138: #{tpu_custom_call.1} parent=11 // pred_check_branch
          %1039 = sbr.rel (%p1037) target = $region140
        $region139: #{tpu_custom_call.1} parent=11 // pred_region
          _
        $region140: #{tpu_custom_call.1} parent=11 // pred_fallthru
          _
        // Predicated region
        $region141: #{tpu_custom_call.1} parent=11 // pred_check
          %p1040 = pneg %p814
        $region142: #{tpu_custom_call.1} parent=11 // pred_check_branch
          %1042 = sbr.rel (%p1040) target = $region144
        $region143: #{tpu_custom_call.1} parent=11 // pred_region
          _
        $region144: #{tpu_custom_call.1} parent=11 // pred_fallthru
          _
        // Predicated region
        $region145: #{tpu_custom_call.1} parent=11 // pred_check
          %p1043 = pneg %p835
        $region146: #{tpu_custom_call.1} parent=11 // pred_check_branch
          %1045 = sbr.rel (%p1043) target = $region148
        $region147: #{tpu_custom_call.1} parent=11 // pred_region
          _
        $region148: #{tpu_custom_call.1} parent=11 // pred_fallthru
          _
        // Predicated region
        $region149: #{tpu_custom_call.1} parent=11 // pred_check
          %p1046 = pneg %p856
        $region150: #{tpu_custom_call.1} parent=11 // pred_check_branch
          %1048 = sbr.rel (%p1046) target = $region152
        $region151: #{tpu_custom_call.1} parent=11 // pred_region
          _
        $region152: #{tpu_custom_call.1} parent=11 // pred_fallthru
          _
        // Predicated region
        $region153: #{tpu_custom_call.1} parent=11 // pred_check
          %p1049 = pneg %p877
        $region154: #{tpu_custom_call.1} parent=11 // pred_check_branch
          %1051 = sbr.rel (%p1049) target = $region156
        $region155: #{tpu_custom_call.1} parent=11 // pred_region
          _
        $region156: #{tpu_custom_call.1} parent=11 // pred_fallthru
          _
      $region12: #{tpu_custom_call.1} parent=5 // pred_fallthru
        _
      %p1052 = scmp.lt.s32.totalorder %s95, 2
      // Predicated region
      $region157: #{tpu_custom_call.1} parent=5 // pred_check
        %p1053 = pneg %p1052
      $region158: #{tpu_custom_call.1} parent=5 // pred_check_branch
        %1055 = sbr.rel (%p1053) target = $region160
      $region159: #{tpu_custom_call.1} parent=5 // pred_region
        // Predicated region
        $region161: #{tpu_custom_call.1} parent=159 // pred_check
          %p1056 = pneg %p115
        $region162: #{tpu_custom_call.1} parent=159 // pred_check_branch
          %1058 = sbr.rel (%p1056) target = $region164
        $region163: #{tpu_custom_call.1} parent=159 // pred_region
          %p1059 = scmp.lt.s32.totalorder %s95, 1
          %s1060 = scalar_select %p1059, %s95, 1
          %s1061 = smul.addr %s1060, 2
          %s1062 = smul.addr %s1061, 8
          %s1063 = scalar_lea.vmem %s1, %s1062
        $region164: #{tpu_custom_call.1} parent=159 // pred_fallthru
          _
      $region160: #{tpu_custom_call.1} parent=5 // pred_fallthru
        _
      %p1064 = scmp.le.s32.totalorder 1, %s95
      %p1065 = scmp.lt.s32.totalorder %s95, 3
      %p1066 = pnand %p1064, %p1065
      %p1067 = pneg %p1066
      // Predicated region
      $region165: #{tpu_custom_call.1} parent=5 // pred_check
        _
      $region166: #{tpu_custom_call.1} parent=5 // pred_check_branch
        %1069 = sbr.rel (%p1066) target = $region168
      $region167: #{tpu_custom_call.1} parent=5 // pred_region
        %s1070 = ssub.s32 %s95, 1
        %p1071 = scmp.lt.s32.totalorder %s100, 1
        %s1072 = scalar_select %p1071, %s100, 1
        %s1073 = smul.addr %s1072, 2
        %s1074 = smul.addr %s1073, 8
        %s1075 = scalar_lea.vmem %s1, %s1074
        %p1076 = pneg %p121
        %p1077 = pneg %p118
        %p1078 = pneg %p142
        %p1079 = pneg %p139
        %p1080 = pneg %p163
        %p1081 = pneg %p160
        %p1082 = pneg %p184
        %p1083 = pneg %p181
        %p1084 = pneg %p205
        %p1085 = pneg %p202
        %p1086 = pneg %p226
        %p1087 = pneg %p223
        %p1088 = pneg %p247
        %p1089 = pneg %p244
        %p1090 = pneg %p268
        %p1091 = pneg %p265
        %p1092 = pneg %p289
        %p1093 = pneg %p286
        %p1094 = pneg %p310
        %p1095 = pneg %p307
        %p1096 = pneg %p331
        %p1097 = pneg %p328
        %p1098 = pneg %p352
        %p1099 = pneg %p349
        %p1100 = pneg %p373
        %p1101 = pneg %p370
        %p1102 = pneg %p394
        %p1103 = pneg %p391
        %p1104 = pneg %p415
        %p1105 = pneg %p412
        %p1106 = pneg %p436
        %p1107 = pneg %p433
        %p1108 = pneg %p457
        %p1109 = pneg %p454
        %p1110 = pneg %p478
        %p1111 = pneg %p475
        %p1112 = pneg %p499
        %p1113 = pneg %p496
        %p1114 = pneg %p520
        %p1115 = pneg %p517
        %p1116 = pneg %p541
        %p1117 = pneg %p538
        %p1118 = pneg %p562
        %p1119 = pneg %p559
        %p1120 = pneg %p583
        %p1121 = pneg %p580
        %p1122 = pneg %p604
        %p1123 = pneg %p601
        %p1124 = pneg %p625
        %p1125 = pneg %p622
        %p1126 = pneg %p646
        %p1127 = pneg %p643
        %p1128 = pneg %p667
        %p1129 = pneg %p664
        %p1130 = pneg %p688
        %p1131 = pneg %p685
        %p1132 = pneg %p709
        %p1133 = pneg %p706
        %p1134 = pneg %p730
        %p1135 = pneg %p727
        %p1136 = pneg %p751
        %p1137 = pneg %p748
        %p1138 = pneg %p772
        %p1139 = pneg %p769
        %p1140 = pneg %p793
        %p1141 = pneg %p790
        %p1142 = pneg %p814
        %p1143 = pneg %p811
        %p1144 = pneg %p835
        %p1145 = pneg %p832
        %p1146 = pneg %p856
        %p1147 = pneg %p853
        %p1148 = pneg %p877
        %p1149 = pneg %p874
        %p1150 = pneg %p903
        %p1151 = pneg %p900
        %p1152 = scmp.lt.s32.totalorder %s100, 1
        %s1153 = scalar_select %p1152, %s100, 1
        %s1154 = smul.addr %s1153, 2
        %s1155 = smul.addr %s1154, 8
        %s1156 = scalar_lea.vmem %s75, %s1155
        %p1157 = pneg %p929
        %p1158 = pneg %p926
        %s1159 = sand.u32 %s916, 1
        %s1160 = scalar_lea.sflag [#allocation7], %s1159
        %s1161 = sand.u32 %s916, 1
        %s1162 = smul.addr %s1161, 16
        %s1163 = scalar_lea.vmem [#allocation6], %s1162
        %p1164 = scmp.lt.s32.totalorder %s100, 1
        %s1165 = scalar_select %p1164, %s100, 1
        %s1166 = smul.addr %s1165, 2
        %s1167 = smul.addr %s1166, 8
        %s1168 = scalar_lea.vmem %s1, %s1167
        %p1169 = scmp.lt.s32.totalorder %s100, 1
        %s1170 = scalar_select %p1169, %s100, 1
        %s1171 = smul.addr %s1170, 2
        %s1172 = smul.addr %s1171, 8
        %s1173 = scalar_lea.vmem %s75, %s1172
        %v1174 = vld [vmem:[%s1168] sm:$0xff]
        %v1175 = vld [vmem:[%s1168 + $0x8] sm:$0xff]
        %v1176 = vlaneseq
        %v1177 = vshrl.u32 %v1176, 7
        %v1178 = vadd.s32 %v1177, 8
        %v1179 = vlaneseq
        %v1180 = vand.u32 %v1179, 127
        %vm1181 = vcmp.eq.s32.totalorder %v1177, %v1180
        %vm1182 = vcmp.eq.s32.totalorder %v1178, %v1180
        %v1185 = vrot.slane %v1174, 1
        %v1186 = vrot.slane %v1174, 2
        %v1187 = vrot.slane %v1174, 3
        %v1188 = vrot.slane %v1174, 4
        %v1189 = vrot.slane %v1174, 5
        %v1190 = vrot.slane %v1174, 6
        %v1191 = vrot.slane %v1174, 7
        %v1192 = vrot.slane %v1175, 1
        %v1193 = vrot.slane %v1175, 2
        %v1194 = vrot.slane %v1175, 3
        %v1195 = vrot.slane %v1175, 4
        %v1196 = vrot.slane %v1175, 5
        %v1197 = vrot.slane %v1175, 6
        %v1198 = vrot.slane %v1175, 7
        %v1199 = vperm.slane %v1174, 0
        %v1200 = vperm.slane %v1185, 0
        %v1201 = vperm.slane %v1186, 0
        %v1202 = vperm.slane %v1187, 0
        %v1203 = vperm.slane %v1188, 0
        %v1204 = vperm.slane %v1189, 0
        %v1205 = vperm.slane %v1190, 0
        %v1206 = vperm.slane %v1191, 0
        %v1207 = vperm.slane %v1175, 0
        %v1208 = vperm.slane %v1192, 0
        %v1209 = vperm.slane %v1193, 0
        %v1210 = vperm.slane %v1194, 0
        %v1211 = vperm.slane %v1195, 0
        %v1212 = vperm.slane %v1196, 0
        %v1213 = vperm.slane %v1197, 0
        %v1214 = vperm.slane %v1198, 0
        %v1231 = vsub.f32 %v1199, %v1174
        %v1232 = vsub.f32 %v1199, %v1175
        %v1233 = vsub.f32 %v1200, %v1174
        %v1234 = vsub.f32 %v1200, %v1175
        %v1235 = vsub.f32 %v1201, %v1174
        %v1236 = vsub.f32 %v1201, %v1175
        %v1237 = vsub.f32 %v1202, %v1174
        %v1238 = vsub.f32 %v1202, %v1175
        %v1239 = vsub.f32 %v1203, %v1174
        %v1240 = vsub.f32 %v1203, %v1175
        %v1241 = vsub.f32 %v1204, %v1174
        %v1242 = vsub.f32 %v1204, %v1175
        %v1243 = vsub.f32 %v1205, %v1174
        %v1244 = vsub.f32 %v1205, %v1175
        %v1245 = vsub.f32 %v1206, %v1174
        %v1246 = vsub.f32 %v1206, %v1175
        %v1247 = vsub.f32 %v1207, %v1174
        %v1248 = vsub.f32 %v1207, %v1175
        %v1249 = vsub.f32 %v1208, %v1174
        %v1250 = vsub.f32 %v1208, %v1175
        %v1251 = vsub.f32 %v1209, %v1174
        %v1252 = vsub.f32 %v1209, %v1175
        %v1253 = vsub.f32 %v1210, %v1174
        %v1254 = vsub.f32 %v1210, %v1175
        %v1255 = vsub.f32 %v1211, %v1174
        %v1256 = vsub.f32 %v1211, %v1175
        %v1257 = vsub.f32 %v1212, %v1174
        %v1258 = vsub.f32 %v1212, %v1175
        %v1259 = vsub.f32 %v1213, %v1174
        %v1260 = vsub.f32 %v1213, %v1175
        %v1261 = vsub.f32 %v1214, %v1174
        %v1262 = vsub.f32 %v1214, %v1175
        %v1263 = vand.u32 2147483647, %v1231
        %v1264 = vand.u32 2147483647, %v1232
        %v1265 = vand.u32 2147483647, %v1233
        %v1266 = vand.u32 2147483647, %v1234
        %v1267 = vand.u32 2147483647, %v1235
        %v1268 = vand.u32 2147483647, %v1236
        %v1269 = vand.u32 2147483647, %v1237
        %v1270 = vand.u32 2147483647, %v1238
        %v1271 = vand.u32 2147483647, %v1239
        %v1272 = vand.u32 2147483647, %v1240
        %v1273 = vand.u32 2147483647, %v1241
        %v1274 = vand.u32 2147483647, %v1242
        %v1275 = vand.u32 2147483647, %v1243
        %v1276 = vand.u32 2147483647, %v1244
        %v1277 = vand.u32 2147483647, %v1245
        %v1278 = vand.u32 2147483647, %v1246
        %v1279 = vand.u32 2147483647, %v1247
        %v1280 = vand.u32 2147483647, %v1248
        %v1281 = vand.u32 2147483647, %v1249
        %v1282 = vand.u32 2147483647, %v1250
        %v1283 = vand.u32 2147483647, %v1251
        %v1284 = vand.u32 2147483647, %v1252
        %v1285 = vand.u32 2147483647, %v1253
        %v1286 = vand.u32 2147483647, %v1254
        %v1287 = vand.u32 2147483647, %v1255
        %v1288 = vand.u32 2147483647, %v1256
        %v1289 = vand.u32 2147483647, %v1257
        %v1290 = vand.u32 2147483647, %v1258
        %v1291 = vand.u32 2147483647, %v1259
        %v1292 = vand.u32 2147483647, %v1260
        %v1293 = vand.u32 2147483647, %v1261
        %v1294 = vand.u32 2147483647, %v1262
        %v1295 = vld [vmem:[%s3] sm:$0xff]
        %v1296 = vld [vmem:[%s3 + $0x8] sm:$0xff]
        %v1297 = vld [vmem:[%s3 + $0x10] sm:$0xff]
        %v1298 = vld [vmem:[%s3 + $0x18] sm:$0xff]
        %v1299 = vld [vmem:[%s5] sm:$0x1]
        %v1301 = vperm.slane %v1299, 0
        %vm1303 = vcmask 261120
        %v1305 = vsel %vm1303, %v1263, 0
        %v1308 = vsel %vm1303, %v1264, 0
        %v1311 = vsel %vm1303, %v1265, 0
        %v1314 = vsel %vm1303, %v1266, 0
        %v1317 = vsel %vm1303, %v1267, 0
        %v1320 = vsel %vm1303, %v1268, 0
        %v1323 = vsel %vm1303, %v1269, 0
        %v1326 = vsel %vm1303, %v1270, 0
        %v1329 = vsel %vm1303, %v1271, 0
        %v1332 = vsel %vm1303, %v1272, 0
        %v1335 = vsel %vm1303, %v1273, 0
        %v1338 = vsel %vm1303, %v1274, 0
        %v1341 = vsel %vm1303, %v1275, 0
        %v1344 = vsel %vm1303, %v1276, 0
        %v1347 = vsel %vm1303, %v1277, 0
        %v1350 = vsel %vm1303, %v1278, 0
        %v1353 = vsel %vm1303, %v1279, 0
        %v1356 = vsel %vm1303, %v1280, 0
        %v1359 = vsel %vm1303, %v1281, 0
        %v1362 = vsel %vm1303, %v1282, 0
        %v1365 = vsel %vm1303, %v1283, 0
        %v1368 = vsel %vm1303, %v1284, 0
        %v1371 = vsel %vm1303, %v1285, 0
        %v1374 = vsel %vm1303, %v1286, 0
        %v1377 = vsel %vm1303, %v1287, 0
        %v1380 = vsel %vm1303, %v1288, 0
        %v1383 = vsel %vm1303, %v1289, 0
        %v1386 = vsel %vm1303, %v1290, 0
        %v1389 = vsel %vm1303, %v1291, 0
        %v1392 = vsel %vm1303, %v1292, 0
        %v1395 = vsel %vm1303, %v1293, 0
        %v1398 = vsel %vm1303, %v1294, 0
        %1400 = vmatpush.msra.mxu0 0.0
        %1401 = vmatpush.msra.mxu0 0.0
        %1402 = vmatpush.msra.mxu0 0.0
        %1403 = vmatpush.msra.mxu0 0.0
        %1404 = vmatpush.msra.mxu0 0.0
        %1405 = vmatpush.msra.mxu0 0.0
        %1406 = vmatpush.msra.mxu0 0.0
        %1407 = vmatpush.msra.mxu0 0.0
        %1408 = vmatpush.msra.mxu0 0.0
        %1409 = vmatpush.msra.mxu0 0.0
        %1410 = vmatpush.msra.mxu0 0.0
        %1411 = vmatpush.msra.mxu0 0.0
        %1412 = vmatpush.msra.mxu0 %v1298
        %1413 = vmatpush.msra.mxu0 %v1297
        %1414 = vmatpush.msra.mxu0 %v1296
        %1415 = vmatpush.msra.mxu0 %v1295
        %1416 = vmatmul.f32.gmra.mxu0 %v1305
        %v1417 = vpop.f32.mrf.mxu0
        %v1418 = vadd.f32 %v1301, %v1417
        %1419 = vmatmul.f32.gmra.mxu0 %v1308
        %v1420 = vpop.f32.mrf.mxu0
        %v1421 = vadd.f32 %v1301, %v1420
        %1422 = vmatmul.f32.gmra.mxu0 %v1311
        %v1423 = vpop.f32.mrf.mxu0
        %v1424 = vadd.f32 %v1301, %v1423
        %1425 = vmatmul.f32.gmra.mxu0 %v1314
        %v1426 = vpop.f32.mrf.mxu0
        %v1427 = vadd.f32 %v1301, %v1426
        %1428 = vmatmul.f32.gmra.mxu0 %v1317
        %v1429 = vpop.f32.mrf.mxu0
        %v1430 = vadd.f32 %v1301, %v1429
        %1431 = vmatmul.f32.gmra.mxu0 %v1320
        %v1432 = vpop.f32.mrf.mxu0
        %v1433 = vadd.f32 %v1301, %v1432
        %1434 = vmatmul.f32.gmra.mxu0 %v1323
        %v1435 = vpop.f32.mrf.mxu0
        %v1436 = vadd.f32 %v1301, %v1435
        %1437 = vmatmul.f32.gmra.mxu0 %v1326
        %v1438 = vpop.f32.mrf.mxu0
        %v1439 = vadd.f32 %v1301, %v1438
        %1440 = vmatmul.f32.gmra.mxu0 %v1329
        %v1441 = vpop.f32.mrf.mxu0
        %v1442 = vadd.f32 %v1301, %v1441
        %1443 = vmatmul.f32.gmra.mxu0 %v1332
        %v1444 = vpop.f32.mrf.mxu0
        %v1445 = vadd.f32 %v1301, %v1444
        %1446 = vmatmul.f32.gmra.mxu0 %v1335
        %v1447 = vpop.f32.mrf.mxu0
        %v1448 = vadd.f32 %v1301, %v1447
        %1449 = vmatmul.f32.gmra.mxu0 %v1338
        %v1450 = vpop.f32.mrf.mxu0
        %v1451 = vadd.f32 %v1301, %v1450
        %1452 = vmatmul.f32.gmra.mxu0 %v1341
        %v1453 = vpop.f32.mrf.mxu0
        %v1454 = vadd.f32 %v1301, %v1453
        %1455 = vmatmul.f32.gmra.mxu0 %v1344
        %v1456 = vpop.f32.mrf.mxu0
        %v1457 = vadd.f32 %v1301, %v1456
        %1458 = vmatmul.f32.gmra.mxu0 %v1347
        %v1459 = vpop.f32.mrf.mxu0
        %v1460 = vadd.f32 %v1301, %v1459
        %1461 = vmatmul.f32.gmra.mxu0 %v1350
        %v1462 = vpop.f32.mrf.mxu0
        %v1463 = vadd.f32 %v1301, %v1462
        %1464 = vmatmul.f32.gmra.mxu0 %v1353
        %v1465 = vpop.f32.mrf.mxu0
        %v1466 = vadd.f32 %v1301, %v1465
        %1467 = vmatmul.f32.gmra.mxu0 %v1356
        %v1468 = vpop.f32.mrf.mxu0
        %v1469 = vadd.f32 %v1301, %v1468
        %1470 = vmatmul.f32.gmra.mxu0 %v1359
        %v1471 = vpop.f32.mrf.mxu0
        %v1472 = vadd.f32 %v1301, %v1471
        %1473 = vmatmul.f32.gmra.mxu0 %v1362
        %v1474 = vpop.f32.mrf.mxu0
        %v1475 = vadd.f32 %v1301, %v1474
        %1476 = vmatmul.f32.gmra.mxu0 %v1365
        %v1477 = vpop.f32.mrf.mxu0
        %v1478 = vadd.f32 %v1301, %v1477
        %1479 = vmatmul.f32.gmra.mxu0 %v1368
        %v1480 = vpop.f32.mrf.mxu0
        %v1481 = vadd.f32 %v1301, %v1480
        %1482 = vmatmul.f32.gmra.mxu0 %v1371
        %v1483 = vpop.f32.mrf.mxu0
        %v1484 = vadd.f32 %v1301, %v1483
        %1485 = vmatmul.f32.gmra.mxu0 %v1374
        %v1486 = vpop.f32.mrf.mxu0
        %v1487 = vadd.f32 %v1301, %v1486
        %1488 = vmatmul.f32.gmra.mxu0 %v1377
        %v1489 = vpop.f32.mrf.mxu0
        %v1490 = vadd.f32 %v1301, %v1489
        %1491 = vmatmul.f32.gmra.mxu0 %v1380
        %v1492 = vpop.f32.mrf.mxu0
        %v1493 = vadd.f32 %v1301, %v1492
        %1494 = vmatmul.f32.gmra.mxu0 %v1383
        %v1495 = vpop.f32.mrf.mxu0
        %v1496 = vadd.f32 %v1301, %v1495
        %1497 = vmatmul.f32.gmra.mxu0 %v1386
        %v1498 = vpop.f32.mrf.mxu0
        %v1499 = vadd.f32 %v1301, %v1498
        %1500 = vmatmul.f32.gmra.mxu0 %v1389
        %v1501 = vpop.f32.mrf.mxu0
        %v1502 = vadd.f32 %v1301, %v1501
        %1503 = vmatmul.f32.gmra.mxu0 %v1392
        %v1504 = vpop.f32.mrf.mxu0
        %v1505 = vadd.f32 %v1301, %v1504
        %1506 = vmatmul.f32.gmra.mxu0 %v1395
        %v1507 = vpop.f32.mrf.mxu0
        %v1508 = vadd.f32 %v1301, %v1507
        %1509 = vmatmul.f32.gmra.mxu0 %v1398
        %v1510 = vpop.f32.mrf.mxu0
        %v1511 = vadd.f32 %v1301, %v1510
        %1512 = vdwg.mxu0
        %vm1513 = vcmp.gt.f32.partialorder %v1418, 0.0
        %vm1514 = vcmp.gt.f32.partialorder %v1421, 0.0
        %vm1515 = vcmp.gt.f32.partialorder %v1424, 0.0
        %vm1516 = vcmp.gt.f32.partialorder %v1427, 0.0
        %vm1517 = vcmp.gt.f32.partialorder %v1430, 0.0
        %vm1518 = vcmp.gt.f32.partialorder %v1433, 0.0
        %vm1519 = vcmp.gt.f32.partialorder %v1436, 0.0
        %vm1520 = vcmp.gt.f32.partialorder %v1439, 0.0
        %vm1521 = vcmp.gt.f32.partialorder %v1442, 0.0
        %vm1522 = vcmp.gt.f32.partialorder %v1445, 0.0
        %vm1523 = vcmp.gt.f32.partialorder %v1448, 0.0
        %vm1524 = vcmp.gt.f32.partialorder %v1451, 0.0
        %vm1525 = vcmp.gt.f32.partialorder %v1454, 0.0
        %vm1526 = vcmp.gt.f32.partialorder %v1457, 0.0
        %vm1527 = vcmp.gt.f32.partialorder %v1460, 0.0
        %vm1528 = vcmp.gt.f32.partialorder %v1463, 0.0
        %vm1529 = vcmp.gt.f32.partialorder %v1466, 0.0
        %vm1530 = vcmp.gt.f32.partialorder %v1469, 0.0
        %vm1531 = vcmp.gt.f32.partialorder %v1472, 0.0
        %vm1532 = vcmp.gt.f32.partialorder %v1475, 0.0
        %vm1533 = vcmp.gt.f32.partialorder %v1478, 0.0
        %vm1534 = vcmp.gt.f32.partialorder %v1481, 0.0
        %vm1535 = vcmp.gt.f32.partialorder %v1484, 0.0
        %vm1536 = vcmp.gt.f32.partialorder %v1487, 0.0
        %vm1537 = vcmp.gt.f32.partialorder %v1490, 0.0
        %vm1538 = vcmp.gt.f32.partialorder %v1493, 0.0
        %vm1539 = vcmp.gt.f32.partialorder %v1496, 0.0
        %vm1540 = vcmp.gt.f32.partialorder %v1499, 0.0
        %vm1541 = vcmp.gt.f32.partialorder %v1502, 0.0
        %vm1542 = vcmp.gt.f32.partialorder %v1505, 0.0
        %vm1543 = vcmp.gt.f32.partialorder %v1508, 0.0
        %vm1544 = vcmp.gt.f32.partialorder %v1511, 0.0
        %v1545 = vmul.f32 %v1418, 0.01
        %v1546 = vmul.f32 %v1421, 0.01
        %v1547 = vmul.f32 %v1424, 0.01
        %v1548 = vmul.f32 %v1427, 0.01
        %v1549 = vmul.f32 %v1430, 0.01
        %v1550 = vmul.f32 %v1433, 0.01
        %v1551 = vmul.f32 %v1436, 0.01
        %v1552 = vmul.f32 %v1439, 0.01
        %v1553 = vmul.f32 %v1442, 0.01
        %v1554 = vmul.f32 %v1445, 0.01
        %v1555 = vmul.f32 %v1448, 0.01
        %v1556 = vmul.f32 %v1451, 0.01
        %v1557 = vmul.f32 %v1454, 0.01
        %v1558 = vmul.f32 %v1457, 0.01
        %v1559 = vmul.f32 %v1460, 0.01
        %v1560 = vmul.f32 %v1463, 0.01
        %v1561 = vmul.f32 %v1466, 0.01
        %v1562 = vmul.f32 %v1469, 0.01
        %v1563 = vmul.f32 %v1472, 0.01
        %v1564 = vmul.f32 %v1475, 0.01
        %v1565 = vmul.f32 %v1478, 0.01
        %v1566 = vmul.f32 %v1481, 0.01
        %v1567 = vmul.f32 %v1484, 0.01
        %v1568 = vmul.f32 %v1487, 0.01
        %v1569 = vmul.f32 %v1490, 0.01
        %v1570 = vmul.f32 %v1493, 0.01
        %v1571 = vmul.f32 %v1496, 0.01
        %v1572 = vmul.f32 %v1499, 0.01
        %v1573 = vmul.f32 %v1502, 0.01
        %v1574 = vmul.f32 %v1505, 0.01
        %v1575 = vmul.f32 %v1508, 0.01
        %v1576 = vmul.f32 %v1511, 0.01
        %v1577 = vsel %vm1513, %v1418, %v1545
        %v1578 = vsel %vm1514, %v1421, %v1546
        %v1579 = vsel %vm1515, %v1424, %v1547
        %v1580 = vsel %vm1516, %v1427, %v1548
        %v1581 = vsel %vm1517, %v1430, %v1549
        %v1582 = vsel %vm1518, %v1433, %v1550
        %v1583 = vsel %vm1519, %v1436, %v1551
        %v1584 = vsel %vm1520, %v1439, %v1552
        %v1585 = vsel %vm1521, %v1442, %v1553
        %v1586 = vsel %vm1522, %v1445, %v1554
        %v1587 = vsel %vm1523, %v1448, %v1555
        %v1588 = vsel %vm1524, %v1451, %v1556
        %v1589 = vsel %vm1525, %v1454, %v1557
        %v1590 = vsel %vm1526, %v1457, %v1558
        %v1591 = vsel %vm1527, %v1460, %v1559
        %v1592 = vsel %vm1528, %v1463, %v1560
        %v1593 = vsel %vm1529, %v1466, %v1561
        %v1594 = vsel %vm1530, %v1469, %v1562
        %v1595 = vsel %vm1531, %v1472, %v1563
        %v1596 = vsel %vm1532, %v1475, %v1564
        %v1597 = vsel %vm1533, %v1478, %v1565
        %v1598 = vsel %vm1534, %v1481, %v1566
        %v1599 = vsel %vm1535, %v1484, %v1567
        %v1600 = vsel %vm1536, %v1487, %v1568
        %v1601 = vsel %vm1537, %v1490, %v1569
        %v1602 = vsel %vm1538, %v1493, %v1570
        %v1603 = vsel %vm1539, %v1496, %v1571
        %v1604 = vsel %vm1540, %v1499, %v1572
        %v1605 = vsel %vm1541, %v1502, %v1573
        %v1606 = vsel %vm1542, %v1505, %v1574
        %v1607 = vsel %vm1543, %v1508, %v1575
        %v1608 = vsel %vm1544, %v1511, %v1576
        %v1609 = vld [vmem:[%s7] sm:$0xff]
        %v1610 = vld [vmem:[%s7 + $0x8] sm:$0xff]
        %v1611 = vld [vmem:[%s7 + $0x10] sm:$0xff]
        %v1612 = vld [vmem:[%s7 + $0x18] sm:$0xff]
        %v1613 = vld [vmem:[%s7 + $0x20] sm:$0xff]
        %v1614 = vld [vmem:[%s7 + $0x28] sm:$0xff]
        %v1615 = vld [vmem:[%s7 + $0x30] sm:$0xff]
        %v1616 = vld [vmem:[%s7 + $0x38] sm:$0xff]
        %v1617 = vld [vmem:[%s9] sm:$0x1]
        %v1619 = vperm.slane %v1617, 0
        %vm1621 = vcmask 523264
        %v1623 = vsel %vm1621, %v1577, 0
        %v1626 = vsel %vm1621, %v1578, 0
        %v1629 = vsel %vm1621, %v1579, 0
        %v1632 = vsel %vm1621, %v1580, 0
        %v1635 = vsel %vm1621, %v1581, 0
        %v1638 = vsel %vm1621, %v1582, 0
        %v1641 = vsel %vm1621, %v1583, 0
        %v1644 = vsel %vm1621, %v1584, 0
        %v1647 = vsel %vm1621, %v1585, 0
        %v1650 = vsel %vm1621, %v1586, 0
        %v1653 = vsel %vm1621, %v1587, 0
        %v1656 = vsel %vm1621, %v1588, 0
        %v1659 = vsel %vm1621, %v1589, 0
        %v1662 = vsel %vm1621, %v1590, 0
        %v1665 = vsel %vm1621, %v1591, 0
        %v1668 = vsel %vm1621, %v1592, 0
        %v1671 = vsel %vm1621, %v1593, 0
        %v1674 = vsel %vm1621, %v1594, 0
        %v1677 = vsel %vm1621, %v1595, 0
        %v1680 = vsel %vm1621, %v1596, 0
        %v1683 = vsel %vm1621, %v1597, 0
        %v1686 = vsel %vm1621, %v1598, 0
        %v1689 = vsel %vm1621, %v1599, 0
        %v1692 = vsel %vm1621, %v1600, 0
        %v1695 = vsel %vm1621, %v1601, 0
        %v1698 = vsel %vm1621, %v1602, 0
        %v1701 = vsel %vm1621, %v1603, 0
        %v1704 = vsel %vm1621, %v1604, 0
        %v1707 = vsel %vm1621, %v1605, 0
        %v1710 = vsel %vm1621, %v1606, 0
        %v1713 = vsel %vm1621, %v1607, 0
        %v1716 = vsel %vm1621, %v1608, 0
        %1718 = vmatpush.msra.mxu0 0.0
        %1719 = vmatpush.msra.mxu0 0.0
        %1720 = vmatpush.msra.mxu0 0.0
        %1721 = vmatpush.msra.mxu0 0.0
        %1722 = vmatpush.msra.mxu0 0.0
        %1723 = vmatpush.msra.mxu0 0.0
        %1724 = vmatpush.msra.mxu0 0.0
        %1725 = vmatpush.msra.mxu0 0.0
        %1726 = vmatpush.msra.mxu0 %v1616
        %1727 = vmatpush.msra.mxu0 %v1615
        %1728 = vmatpush.msra.mxu0 %v1614
        %1729 = vmatpush.msra.mxu0 %v1613
        %1730 = vmatpush.msra.mxu0 %v1612
        %1731 = vmatpush.msra.mxu0 %v1611
        %1732 = vmatpush.msra.mxu0 %v1610
        %1733 = vmatpush.msra.mxu0 %v1609
        %1734 = vmatmul.f32.gmra.mxu0 %v1623
        %v1735 = vpop.f32.mrf.mxu0
        %v1736 = vadd.f32 %v1619, %v1735
        %1737 = vmatmul.f32.gmra.mxu0 %v1626
        %v1738 = vpop.f32.mrf.mxu0
        %v1739 = vadd.f32 %v1619, %v1738
        %1740 = vmatmul.f32.gmra.mxu0 %v1629
        %v1741 = vpop.f32.mrf.mxu0
        %v1742 = vadd.f32 %v1619, %v1741
        %1743 = vmatmul.f32.gmra.mxu0 %v1632
        %v1744 = vpop.f32.mrf.mxu0
        %v1745 = vadd.f32 %v1619, %v1744
        %1746 = vmatmul.f32.gmra.mxu0 %v1635
        %v1747 = vpop.f32.mrf.mxu0
        %v1748 = vadd.f32 %v1619, %v1747
        %1749 = vmatmul.f32.gmra.mxu0 %v1638
        %v1750 = vpop.f32.mrf.mxu0
        %v1751 = vadd.f32 %v1619, %v1750
        %1752 = vmatmul.f32.gmra.mxu0 %v1641
        %v1753 = vpop.f32.mrf.mxu0
        %v1754 = vadd.f32 %v1619, %v1753
        %1755 = vmatmul.f32.gmra.mxu0 %v1644
        %v1756 = vpop.f32.mrf.mxu0
        %v1757 = vadd.f32 %v1619, %v1756
        %1758 = vmatmul.f32.gmra.mxu0 %v1647
        %v1759 = vpop.f32.mrf.mxu0
        %v1760 = vadd.f32 %v1619, %v1759
        %1761 = vmatmul.f32.gmra.mxu0 %v1650
        %v1762 = vpop.f32.mrf.mxu0
        %v1763 = vadd.f32 %v1619, %v1762
        %1764 = vmatmul.f32.gmra.mxu0 %v1653
        %v1765 = vpop.f32.mrf.mxu0
        %v1766 = vadd.f32 %v1619, %v1765
        %1767 = vmatmul.f32.gmra.mxu0 %v1656
        %v1768 = vpop.f32.mrf.mxu0
        %v1769 = vadd.f32 %v1619, %v1768
        %1770 = vmatmul.f32.gmra.mxu0 %v1659
        %v1771 = vpop.f32.mrf.mxu0
        %v1772 = vadd.f32 %v1619, %v1771
        %1773 = vmatmul.f32.gmra.mxu0 %v1662
        %v1774 = vpop.f32.mrf.mxu0
        %v1775 = vadd.f32 %v1619, %v1774
        %1776 = vmatmul.f32.gmra.mxu0 %v1665
        %v1777 = vpop.f32.mrf.mxu0
        %v1778 = vadd.f32 %v1619, %v1777
        %1779 = vmatmul.f32.gmra.mxu0 %v1668
        %v1780 = vpop.f32.mrf.mxu0
        %v1781 = vadd.f32 %v1619, %v1780
        %1782 = vmatmul.f32.gmra.mxu0 %v1671
        %v1783 = vpop.f32.mrf.mxu0
        %v1784 = vadd.f32 %v1619, %v1783
        %1785 = vmatmul.f32.gmra.mxu0 %v1674
        %v1786 = vpop.f32.mrf.mxu0
        %v1787 = vadd.f32 %v1619, %v1786
        %1788 = vmatmul.f32.gmra.mxu0 %v1677
        %v1789 = vpop.f32.mrf.mxu0
        %v1790 = vadd.f32 %v1619, %v1789
        %1791 = vmatmul.f32.gmra.mxu0 %v1680
        %v1792 = vpop.f32.mrf.mxu0
        %v1793 = vadd.f32 %v1619, %v1792
        %1794 = vmatmul.f32.gmra.mxu0 %v1683
        %v1795 = vpop.f32.mrf.mxu0
        %v1796 = vadd.f32 %v1619, %v1795
        %1797 = vmatmul.f32.gmra.mxu0 %v1686
        %v1798 = vpop.f32.mrf.mxu0
        %v1799 = vadd.f32 %v1619, %v1798
        %1800 = vmatmul.f32.gmra.mxu0 %v1689
        %v1801 = vpop.f32.mrf.mxu0
        %v1802 = vadd.f32 %v1619, %v1801
        %1803 = vmatmul.f32.gmra.mxu0 %v1692
        %v1804 = vpop.f32.mrf.mxu0
        %v1805 = vadd.f32 %v1619, %v1804
        %1806 = vmatmul.f32.gmra.mxu0 %v1695
        %v1807 = vpop.f32.mrf.mxu0
        %v1808 = vadd.f32 %v1619, %v1807
        %1809 = vmatmul.f32.gmra.mxu0 %v1698
        %v1810 = vpop.f32.mrf.mxu0
        %v1811 = vadd.f32 %v1619, %v1810
        %1812 = vmatmul.f32.gmra.mxu0 %v1701
        %v1813 = vpop.f32.mrf.mxu0
        %v1814 = vadd.f32 %v1619, %v1813
        %1815 = vmatmul.f32.gmra.mxu0 %v1704
        %v1816 = vpop.f32.mrf.mxu0
        %v1817 = vadd.f32 %v1619, %v1816
        %1818 = vmatmul.f32.gmra.mxu0 %v1707
        %v1819 = vpop.f32.mrf.mxu0
        %v1820 = vadd.f32 %v1619, %v1819
        %1821 = vmatmul.f32.gmra.mxu0 %v1710
        %v1822 = vpop.f32.mrf.mxu0
        %v1823 = vadd.f32 %v1619, %v1822
        %1824 = vmatmul.f32.gmra.mxu0 %v1713
        %v1825 = vpop.f32.mrf.mxu0
        %v1826 = vadd.f32 %v1619, %v1825
        %1827 = vmatmul.f32.gmra.mxu0 %v1716
        %v1828 = vpop.f32.mrf.mxu0
        %v1829 = vadd.f32 %v1619, %v1828
        %1830 = vdwg.mxu0
        %vm1831 = vcmp.gt.f32.partialorder %v1736, 0.0
        %vm1832 = vcmp.gt.f32.partialorder %v1739, 0.0
        %vm1833 = vcmp.gt.f32.partialorder %v1742, 0.0
        %vm1834 = vcmp.gt.f32.partialorder %v1745, 0.0
        %vm1835 = vcmp.gt.f32.partialorder %v1748, 0.0
        %vm1836 = vcmp.gt.f32.partialorder %v1751, 0.0
        %vm1837 = vcmp.gt.f32.partialorder %v1754, 0.0
        %vm1838 = vcmp.gt.f32.partialorder %v1757, 0.0
        %vm1839 = vcmp.gt.f32.partialorder %v1760, 0.0
        %vm1840 = vcmp.gt.f32.partialorder %v1763, 0.0
        %vm1841 = vcmp.gt.f32.partialorder %v1766, 0.0
        %vm1842 = vcmp.gt.f32.partialorder %v1769, 0.0
        %vm1843 = vcmp.gt.f32.partialorder %v1772, 0.0
        %vm1844 = vcmp.gt.f32.partialorder %v1775, 0.0
        %vm1845 = vcmp.gt.f32.partialorder %v1778, 0.0
        %vm1846 = vcmp.gt.f32.partialorder %v1781, 0.0
        %vm1847 = vcmp.gt.f32.partialorder %v1784, 0.0
        %vm1848 = vcmp.gt.f32.partialorder %v1787, 0.0
        %vm1849 = vcmp.gt.f32.partialorder %v1790, 0.0
        %vm1850 = vcmp.gt.f32.partialorder %v1793, 0.0
        %vm1851 = vcmp.gt.f32.partialorder %v1796, 0.0
        %vm1852 = vcmp.gt.f32.partialorder %v1799, 0.0
        %vm1853 = vcmp.gt.f32.partialorder %v1802, 0.0
        %vm1854 = vcmp.gt.f32.partialorder %v1805, 0.0
        %vm1855 = vcmp.gt.f32.partialorder %v1808, 0.0
        %vm1856 = vcmp.gt.f32.partialorder %v1811, 0.0
        %vm1857 = vcmp.gt.f32.partialorder %v1814, 0.0
        %vm1858 = vcmp.gt.f32.partialorder %v1817, 0.0
        %vm1859 = vcmp.gt.f32.partialorder %v1820, 0.0
        %vm1860 = vcmp.gt.f32.partialorder %v1823, 0.0
        %vm1861 = vcmp.gt.f32.partialorder %v1826, 0.0
        %vm1862 = vcmp.gt.f32.partialorder %v1829, 0.0
        %v1863 = vmul.f32 %v1736, 0.01
        %v1864 = vmul.f32 %v1739, 0.01
        %v1865 = vmul.f32 %v1742, 0.01
        %v1866 = vmul.f32 %v1745, 0.01
        %v1867 = vmul.f32 %v1748, 0.01
        %v1868 = vmul.f32 %v1751, 0.01
        %v1869 = vmul.f32 %v1754, 0.01
        %v1870 = vmul.f32 %v1757, 0.01
        %v1871 = vmul.f32 %v1760, 0.01
        %v1872 = vmul.f32 %v1763, 0.01
        %v1873 = vmul.f32 %v1766, 0.01
        %v1874 = vmul.f32 %v1769, 0.01
        %v1875 = vmul.f32 %v1772, 0.01
        %v1876 = vmul.f32 %v1775, 0.01
        %v1877 = vmul.f32 %v1778, 0.01
        %v1878 = vmul.f32 %v1781, 0.01
        %v1879 = vmul.f32 %v1784, 0.01
        %v1880 = vmul.f32 %v1787, 0.01
        %v1881 = vmul.f32 %v1790, 0.01
        %v1882 = vmul.f32 %v1793, 0.01
        %v1883 = vmul.f32 %v1796, 0.01
        %v1884 = vmul.f32 %v1799, 0.01
        %v1885 = vmul.f32 %v1802, 0.01
        %v1886 = vmul.f32 %v1805, 0.01
        %v1887 = vmul.f32 %v1808, 0.01
        %v1888 = vmul.f32 %v1811, 0.01
        %v1889 = vmul.f32 %v1814, 0.01
        %v1890 = vmul.f32 %v1817, 0.01
        %v1891 = vmul.f32 %v1820, 0.01
        %v1892 = vmul.f32 %v1823, 0.01
        %v1893 = vmul.f32 %v1826, 0.01
        %v1894 = vmul.f32 %v1829, 0.01
        %v1895 = vsel %vm1831, %v1736, %v1863
        %v1896 = vsel %vm1832, %v1739, %v1864
        %v1897 = vsel %vm1833, %v1742, %v1865
        %v1898 = vsel %vm1834, %v1745, %v1866
        %v1899 = vsel %vm1835, %v1748, %v1867
        %v1900 = vsel %vm1836, %v1751, %v1868
        %v1901 = vsel %vm1837, %v1754, %v1869
        %v1902 = vsel %vm1838, %v1757, %v1870
        %v1903 = vsel %vm1839, %v1760, %v1871
        %v1904 = vsel %vm1840, %v1763, %v1872
        %v1905 = vsel %vm1841, %v1766, %v1873
        %v1906 = vsel %vm1842, %v1769, %v1874
        %v1907 = vsel %vm1843, %v1772, %v1875
        %v1908 = vsel %vm1844, %v1775, %v1876
        %v1909 = vsel %vm1845, %v1778, %v1877
        %v1910 = vsel %vm1846, %v1781, %v1878
        %v1911 = vsel %vm1847, %v1784, %v1879
        %v1912 = vsel %vm1848, %v1787, %v1880
        %v1913 = vsel %vm1849, %v1790, %v1881
        %v1914 = vsel %vm1850, %v1793, %v1882
        %v1915 = vsel %vm1851, %v1796, %v1883
        %v1916 = vsel %vm1852, %v1799, %v1884
        %v1917 = vsel %vm1853, %v1802, %v1885
        %v1918 = vsel %vm1854, %v1805, %v1886
        %v1919 = vsel %vm1855, %v1808, %v1887
        %v1920 = vsel %vm1856, %v1811, %v1888
        %v1921 = vsel %vm1857, %v1814, %v1889
        %v1922 = vsel %vm1858, %v1817, %v1890
        %v1923 = vsel %vm1859, %v1820, %v1891
        %v1924 = vsel %vm1860, %v1823, %v1892
        %v1925 = vsel %vm1861, %v1826, %v1893
        %v1926 = vsel %vm1862, %v1829, %v1894
        %v1927 = vld [vmem:[%s11] sm:$0xff]
        %v1928 = vld [vmem:[%s11 + $0x8] sm:$0xff]
        %v1929 = vld [vmem:[%s11 + $0x10] sm:$0xff]
        %v1930 = vld [vmem:[%s11 + $0x18] sm:$0xff]
        %v1931 = vld [vmem:[%s11 + $0x20] sm:$0xff]
        %v1932 = vld [vmem:[%s11 + $0x28] sm:$0xff]
        %v1933 = vld [vmem:[%s11 + $0x30] sm:$0xff]
        %v1934 = vld [vmem:[%s11 + $0x38] sm:$0xff]
        %v1935 = vld [vmem:[%s13] sm:$0x1]
        %v1937 = vperm.slane %v1935, 0
        %v1940 = vsel %vm1621, %v1895, 0
        %v1943 = vsel %vm1621, %v1896, 0
        %v1946 = vsel %vm1621, %v1897, 0
        %v1949 = vsel %vm1621, %v1898, 0
        %v1952 = vsel %vm1621, %v1899, 0
        %v1955 = vsel %vm1621, %v1900, 0
        %v1958 = vsel %vm1621, %v1901, 0
        %v1961 = vsel %vm1621, %v1902, 0
        %v1964 = vsel %vm1621, %v1903, 0
        %v1967 = vsel %vm1621, %v1904, 0
        %v1970 = vsel %vm1621, %v1905, 0
        %v1973 = vsel %vm1621, %v1906, 0
        %v1976 = vsel %vm1621, %v1907, 0
        %v1979 = vsel %vm1621, %v1908, 0
        %v1982 = vsel %vm1621, %v1909, 0
        %v1985 = vsel %vm1621, %v1910, 0
        %v1988 = vsel %vm1621, %v1911, 0
        %v1991 = vsel %vm1621, %v1912, 0
        %v1994 = vsel %vm1621, %v1913, 0
        %v1997 = vsel %vm1621, %v1914, 0
        %v2000 = vsel %vm1621, %v1915, 0
        %v2003 = vsel %vm1621, %v1916, 0
        %v2006 = vsel %vm1621, %v1917, 0
        %v2009 = vsel %vm1621, %v1918, 0
        %v2012 = vsel %vm1621, %v1919, 0
        %v2015 = vsel %vm1621, %v1920, 0
        %v2018 = vsel %vm1621, %v1921, 0
        %v2021 = vsel %vm1621, %v1922, 0
        %v2024 = vsel %vm1621, %v1923, 0
        %v2027 = vsel %vm1621, %v1924, 0
        %v2030 = vsel %vm1621, %v1925, 0
        %v2033 = vsel %vm1621, %v1926, 0
        %2035 = vmatpush.msra.mxu0 0.0
        %2036 = vmatpush.msra.mxu0 0.0
        %2037 = vmatpush.msra.mxu0 0.0
        %2038 = vmatpush.msra.mxu0 0.0
        %2039 = vmatpush.msra.mxu0 0.0
        %2040 = vmatpush.msra.mxu0 0.0
        %2041 = vmatpush.msra.mxu0 0.0
        %2042 = vmatpush.msra.mxu0 0.0
        %2043 = vmatpush.msra.mxu0 %v1934
        %2044 = vmatpush.msra.mxu0 %v1933
        %2045 = vmatpush.msra.mxu0 %v1932
        %2046 = vmatpush.msra.mxu0 %v1931
        %2047 = vmatpush.msra.mxu0 %v1930
        %2048 = vmatpush.msra.mxu0 %v1929
        %2049 = vmatpush.msra.mxu0 %v1928
        %2050 = vmatpush.msra.mxu0 %v1927
        %2051 = vmatmul.f32.gmra.mxu0 %v1940
        %v2052 = vpop.f32.mrf.mxu0
        %v2053 = vadd.f32 %v1937, %v2052
        %2054 = vmatmul.f32.gmra.mxu0 %v1943
        %v2055 = vpop.f32.mrf.mxu0
        %v2056 = vadd.f32 %v1937, %v2055
        %2057 = vmatmul.f32.gmra.mxu0 %v1946
        %v2058 = vpop.f32.mrf.mxu0
        %v2059 = vadd.f32 %v1937, %v2058
        %2060 = vmatmul.f32.gmra.mxu0 %v1949
        %v2061 = vpop.f32.mrf.mxu0
        %v2062 = vadd.f32 %v1937, %v2061
        %2063 = vmatmul.f32.gmra.mxu0 %v1952
        %v2064 = vpop.f32.mrf.mxu0
        %v2065 = vadd.f32 %v1937, %v2064
        %2066 = vmatmul.f32.gmra.mxu0 %v1955
        %v2067 = vpop.f32.mrf.mxu0
        %v2068 = vadd.f32 %v1937, %v2067
        %2069 = vmatmul.f32.gmra.mxu0 %v1958
        %v2070 = vpop.f32.mrf.mxu0
        %v2071 = vadd.f32 %v1937, %v2070
        %2072 = vmatmul.f32.gmra.mxu0 %v1961
        %v2073 = vpop.f32.mrf.mxu0
        %v2074 = vadd.f32 %v1937, %v2073
        %2075 = vmatmul.f32.gmra.mxu0 %v1964
        %v2076 = vpop.f32.mrf.mxu0
        %v2077 = vadd.f32 %v1937, %v2076
        %2078 = vmatmul.f32.gmra.mxu0 %v1967
        %v2079 = vpop.f32.mrf.mxu0
        %v2080 = vadd.f32 %v1937, %v2079
        %2081 = vmatmul.f32.gmra.mxu0 %v1970
        %v2082 = vpop.f32.mrf.mxu0
        %v2083 = vadd.f32 %v1937, %v2082
        %2084 = vmatmul.f32.gmra.mxu0 %v1973
        %v2085 = vpop.f32.mrf.mxu0
        %v2086 = vadd.f32 %v1937, %v2085
        %2087 = vmatmul.f32.gmra.mxu0 %v1976
        %v2088 = vpop.f32.mrf.mxu0
        %v2089 = vadd.f32 %v1937, %v2088
        %2090 = vmatmul.f32.gmra.mxu0 %v1979
        %v2091 = vpop.f32.mrf.mxu0
        %v2092 = vadd.f32 %v1937, %v2091
        %2093 = vmatmul.f32.gmra.mxu0 %v1982
        %v2094 = vpop.f32.mrf.mxu0
        %v2095 = vadd.f32 %v1937, %v2094
        %2096 = vmatmul.f32.gmra.mxu0 %v1985
        %v2097 = vpop.f32.mrf.mxu0
        %v2098 = vadd.f32 %v1937, %v2097
        %2099 = vmatmul.f32.gmra.mxu0 %v1988
        %v2100 = vpop.f32.mrf.mxu0
        %v2101 = vadd.f32 %v1937, %v2100
        %2102 = vmatmul.f32.gmra.mxu0 %v1991
        %v2103 = vpop.f32.mrf.mxu0
        %v2104 = vadd.f32 %v1937, %v2103
        %2105 = vmatmul.f32.gmra.mxu0 %v1994
        %v2106 = vpop.f32.mrf.mxu0
        %v2107 = vadd.f32 %v1937, %v2106
        %2108 = vmatmul.f32.gmra.mxu0 %v1997
        %v2109 = vpop.f32.mrf.mxu0
        %v2110 = vadd.f32 %v1937, %v2109
        %2111 = vmatmul.f32.gmra.mxu0 %v2000
        %v2112 = vpop.f32.mrf.mxu0
        %v2113 = vadd.f32 %v1937, %v2112
        %2114 = vmatmul.f32.gmra.mxu0 %v2003
        %v2115 = vpop.f32.mrf.mxu0
        %v2116 = vadd.f32 %v1937, %v2115
        %2117 = vmatmul.f32.gmra.mxu0 %v2006
        %v2118 = vpop.f32.mrf.mxu0
        %v2119 = vadd.f32 %v1937, %v2118
        %2120 = vmatmul.f32.gmra.mxu0 %v2009
        %v2121 = vpop.f32.mrf.mxu0
        %v2122 = vadd.f32 %v1937, %v2121
        %2123 = vmatmul.f32.gmra.mxu0 %v2012
        %v2124 = vpop.f32.mrf.mxu0
        %v2125 = vadd.f32 %v1937, %v2124
        %2126 = vmatmul.f32.gmra.mxu0 %v2015
        %v2127 = vpop.f32.mrf.mxu0
        %v2128 = vadd.f32 %v1937, %v2127
        %2129 = vmatmul.f32.gmra.mxu0 %v2018
        %v2130 = vpop.f32.mrf.mxu0
        %v2131 = vadd.f32 %v1937, %v2130
        %2132 = vmatmul.f32.gmra.mxu0 %v2021
        %v2133 = vpop.f32.mrf.mxu0
        %v2134 = vadd.f32 %v1937, %v2133
        %2135 = vmatmul.f32.gmra.mxu0 %v2024
        %v2136 = vpop.f32.mrf.mxu0
        %v2137 = vadd.f32 %v1937, %v2136
        %2138 = vmatmul.f32.gmra.mxu0 %v2027
        %v2139 = vpop.f32.mrf.mxu0
        %v2140 = vadd.f32 %v1937, %v2139
        %2141 = vmatmul.f32.gmra.mxu0 %v2030
        %v2142 = vpop.f32.mrf.mxu0
        %v2143 = vadd.f32 %v1937, %v2142
        %2144 = vmatmul.f32.gmra.mxu0 %v2033
        %v2145 = vpop.f32.mrf.mxu0
        %v2146 = vadd.f32 %v1937, %v2145
        %2147 = vdwg.mxu0
        %vm2148 = vcmp.gt.f32.partialorder %v2053, 0.0
        %vm2149 = vcmp.gt.f32.partialorder %v2056, 0.0
        %vm2150 = vcmp.gt.f32.partialorder %v2059, 0.0
        %vm2151 = vcmp.gt.f32.partialorder %v2062, 0.0
        %vm2152 = vcmp.gt.f32.partialorder %v2065, 0.0
        %vm2153 = vcmp.gt.f32.partialorder %v2068, 0.0
        %vm2154 = vcmp.gt.f32.partialorder %v2071, 0.0
        %vm2155 = vcmp.gt.f32.partialorder %v2074, 0.0
        %vm2156 = vcmp.gt.f32.partialorder %v2077, 0.0
        %vm2157 = vcmp.gt.f32.partialorder %v2080, 0.0
        %vm2158 = vcmp.gt.f32.partialorder %v2083, 0.0
        %vm2159 = vcmp.gt.f32.partialorder %v2086, 0.0
        %vm2160 = vcmp.gt.f32.partialorder %v2089, 0.0
        %vm2161 = vcmp.gt.f32.partialorder %v2092, 0.0
        %vm2162 = vcmp.gt.f32.partialorder %v2095, 0.0
        %vm2163 = vcmp.gt.f32.partialorder %v2098, 0.0
        %vm2164 = vcmp.gt.f32.partialorder %v2101, 0.0
        %vm2165 = vcmp.gt.f32.partialorder %v2104, 0.0
        %vm2166 = vcmp.gt.f32.partialorder %v2107, 0.0
        %vm2167 = vcmp.gt.f32.partialorder %v2110, 0.0
        %vm2168 = vcmp.gt.f32.partialorder %v2113, 0.0
        %vm2169 = vcmp.gt.f32.partialorder %v2116, 0.0
        %vm2170 = vcmp.gt.f32.partialorder %v2119, 0.0
        %vm2171 = vcmp.gt.f32.partialorder %v2122, 0.0
        %vm2172 = vcmp.gt.f32.partialorder %v2125, 0.0
        %vm2173 = vcmp.gt.f32.partialorder %v2128, 0.0
        %vm2174 = vcmp.gt.f32.partialorder %v2131, 0.0
        %vm2175 = vcmp.gt.f32.partialorder %v2134, 0.0
        %vm2176 = vcmp.gt.f32.partialorder %v2137, 0.0
        %vm2177 = vcmp.gt.f32.partialorder %v2140, 0.0
        %vm2178 = vcmp.gt.f32.partialorder %v2143, 0.0
        %vm2179 = vcmp.gt.f32.partialorder %v2146, 0.0
        %v2180 = vmul.f32 %v2053, 0.01
        %v2181 = vmul.f32 %v2056, 0.01
        %v2182 = vmul.f32 %v2059, 0.01
        %v2183 = vmul.f32 %v2062, 0.01
        %v2184 = vmul.f32 %v2065, 0.01
        %v2185 = vmul.f32 %v2068, 0.01
        %v2186 = vmul.f32 %v2071, 0.01
        %v2187 = vmul.f32 %v2074, 0.01
        %v2188 = vmul.f32 %v2077, 0.01
        %v2189 = vmul.f32 %v2080, 0.01
        %v2190 = vmul.f32 %v2083, 0.01
        %v2191 = vmul.f32 %v2086, 0.01
        %v2192 = vmul.f32 %v2089, 0.01
        %v2193 = vmul.f32 %v2092, 0.01
        %v2194 = vmul.f32 %v2095, 0.01
        %v2195 = vmul.f32 %v2098, 0.01
        %v2196 = vmul.f32 %v2101, 0.01
        %v2197 = vmul.f32 %v2104, 0.01
        %v2198 = vmul.f32 %v2107, 0.01
        %v2199 = vmul.f32 %v2110, 0.01
        %v2200 = vmul.f32 %v2113, 0.01
        %v2201 = vmul.f32 %v2116, 0.01
        %v2202 = vmul.f32 %v2119, 0.01
        %v2203 = vmul.f32 %v2122, 0.01
        %v2204 = vmul.f32 %v2125, 0.01
        %v2205 = vmul.f32 %v2128, 0.01
        %v2206 = vmul.f32 %v2131, 0.01
        %v2207 = vmul.f32 %v2134, 0.01
        %v2208 = vmul.f32 %v2137, 0.01
        %v2209 = vmul.f32 %v2140, 0.01
        %v2210 = vmul.f32 %v2143, 0.01
        %v2211 = vmul.f32 %v2146, 0.01
        %v2212 = vsel %vm2148, %v2053, %v2180
        %v2213 = vsel %vm2149, %v2056, %v2181
        %v2214 = vsel %vm2150, %v2059, %v2182
        %v2215 = vsel %vm2151, %v2062, %v2183
        %v2216 = vsel %vm2152, %v2065, %v2184
        %v2217 = vsel %vm2153, %v2068, %v2185
        %v2218 = vsel %vm2154, %v2071, %v2186
        %v2219 = vsel %vm2155, %v2074, %v2187
        %v2220 = vsel %vm2156, %v2077, %v2188
        %v2221 = vsel %vm2157, %v2080, %v2189
        %v2222 = vsel %vm2158, %v2083, %v2190
        %v2223 = vsel %vm2159, %v2086, %v2191
        %v2224 = vsel %vm2160, %v2089, %v2192
        %v2225 = vsel %vm2161, %v2092, %v2193
        %v2226 = vsel %vm2162, %v2095, %v2194
        %v2227 = vsel %vm2163, %v2098, %v2195
        %v2228 = vsel %vm2164, %v2101, %v2196
        %v2229 = vsel %vm2165, %v2104, %v2197
        %v2230 = vsel %vm2166, %v2107, %v2198
        %v2231 = vsel %vm2167, %v2110, %v2199
        %v2232 = vsel %vm2168, %v2113, %v2200
        %v2233 = vsel %vm2169, %v2116, %v2201
        %v2234 = vsel %vm2170, %v2119, %v2202
        %v2235 = vsel %vm2171, %v2122, %v2203
        %v2236 = vsel %vm2172, %v2125, %v2204
        %v2237 = vsel %vm2173, %v2128, %v2205
        %v2238 = vsel %vm2174, %v2131, %v2206
        %v2239 = vsel %vm2175, %v2134, %v2207
        %v2240 = vsel %vm2176, %v2137, %v2208
        %v2241 = vsel %vm2177, %v2140, %v2209
        %v2242 = vsel %vm2178, %v2143, %v2210
        %v2243 = vsel %vm2179, %v2146, %v2211
        %v2244 = vld [vmem:[%s15] sm:$0xff]
        %v2245 = vld [vmem:[%s15 + $0x8] sm:$0xff]
        %v2246 = vld [vmem:[%s15 + $0x10] sm:$0xff]
        %v2247 = vld [vmem:[%s15 + $0x18] sm:$0xff]
        %v2248 = vld [vmem:[%s17] sm:$0x1]
        %v2250 = vperm.slane %v2248, 0
        %v2253 = vsel %vm1303, %v2212, 0
        %v2256 = vsel %vm1303, %v2213, 0
        %v2259 = vsel %vm1303, %v2214, 0
        %v2262 = vsel %vm1303, %v2215, 0
        %v2265 = vsel %vm1303, %v2216, 0
        %v2268 = vsel %vm1303, %v2217, 0
        %v2271 = vsel %vm1303, %v2218, 0
        %v2274 = vsel %vm1303, %v2219, 0
        %v2277 = vsel %vm1303, %v2220, 0
        %v2280 = vsel %vm1303, %v2221, 0
        %v2283 = vsel %vm1303, %v2222, 0
        %v2286 = vsel %vm1303, %v2223, 0
        %v2289 = vsel %vm1303, %v2224, 0
        %v2292 = vsel %vm1303, %v2225, 0
        %v2295 = vsel %vm1303, %v2226, 0
        %v2298 = vsel %vm1303, %v2227, 0
        %v2301 = vsel %vm1303, %v2228, 0
        %v2304 = vsel %vm1303, %v2229, 0
        %v2307 = vsel %vm1303, %v2230, 0
        %v2310 = vsel %vm1303, %v2231, 0
        %v2313 = vsel %vm1303, %v2232, 0
        %v2316 = vsel %vm1303, %v2233, 0
        %v2319 = vsel %vm1303, %v2234, 0
        %v2322 = vsel %vm1303, %v2235, 0
        %v2325 = vsel %vm1303, %v2236, 0
        %v2328 = vsel %vm1303, %v2237, 0
        %v2331 = vsel %vm1303, %v2238, 0
        %v2334 = vsel %vm1303, %v2239, 0
        %v2337 = vsel %vm1303, %v2240, 0
        %v2340 = vsel %vm1303, %v2241, 0
        %v2343 = vsel %vm1303, %v2242, 0
        %v2346 = vsel %vm1303, %v2243, 0
        %2348 = vmatpush.msra.mxu0 0.0
        %2349 = vmatpush.msra.mxu0 0.0
        %2350 = vmatpush.msra.mxu0 0.0
        %2351 = vmatpush.msra.mxu0 0.0
        %2352 = vmatpush.msra.mxu0 0.0
        %2353 = vmatpush.msra.mxu0 0.0
        %2354 = vmatpush.msra.mxu0 0.0
        %2355 = vmatpush.msra.mxu0 0.0
        %2356 = vmatpush.msra.mxu0 0.0
        %2357 = vmatpush.msra.mxu0 0.0
        %2358 = vmatpush.msra.mxu0 0.0
        %2359 = vmatpush.msra.mxu0 0.0
        %2360 = vmatpush.msra.mxu0 %v2247
        %2361 = vmatpush.msra.mxu0 %v2246
        %2362 = vmatpush.msra.mxu0 %v2245
        %2363 = vmatpush.msra.mxu0 %v2244
        %2364 = vmatmul.f32.gmra.mxu0 %v2253
        %v2365 = vpop.f32.mrf.mxu0
        %v2366 = vadd.f32 %v2250, %v2365
        %2367 = vmatmul.f32.gmra.mxu0 %v2256
        %v2368 = vpop.f32.mrf.mxu0
        %v2369 = vadd.f32 %v2250, %v2368
        %2370 = vmatmul.f32.gmra.mxu0 %v2259
        %v2371 = vpop.f32.mrf.mxu0
        %v2372 = vadd.f32 %v2250, %v2371
        %2373 = vmatmul.f32.gmra.mxu0 %v2262
        %v2374 = vpop.f32.mrf.mxu0
        %v2375 = vadd.f32 %v2250, %v2374
        %2376 = vmatmul.f32.gmra.mxu0 %v2265
        %v2377 = vpop.f32.mrf.mxu0
        %v2378 = vadd.f32 %v2250, %v2377
        %2379 = vmatmul.f32.gmra.mxu0 %v2268
        %v2380 = vpop.f32.mrf.mxu0
        %v2381 = vadd.f32 %v2250, %v2380
        %2382 = vmatmul.f32.gmra.mxu0 %v2271
        %v2383 = vpop.f32.mrf.mxu0
        %v2384 = vadd.f32 %v2250, %v2383
        %2385 = vmatmul.f32.gmra.mxu0 %v2274
        %v2386 = vpop.f32.mrf.mxu0
        %v2387 = vadd.f32 %v2250, %v2386
        %2388 = vmatmul.f32.gmra.mxu0 %v2277
        %v2389 = vpop.f32.mrf.mxu0
        %v2390 = vadd.f32 %v2250, %v2389
        %2391 = vmatmul.f32.gmra.mxu0 %v2280
        %v2392 = vpop.f32.mrf.mxu0
        %v2393 = vadd.f32 %v2250, %v2392
        %2394 = vmatmul.f32.gmra.mxu0 %v2283
        %v2395 = vpop.f32.mrf.mxu0
        %v2396 = vadd.f32 %v2250, %v2395
        %2397 = vmatmul.f32.gmra.mxu0 %v2286
        %v2398 = vpop.f32.mrf.mxu0
        %v2399 = vadd.f32 %v2250, %v2398
        %2400 = vmatmul.f32.gmra.mxu0 %v2289
        %v2401 = vpop.f32.mrf.mxu0
        %v2402 = vadd.f32 %v2250, %v2401
        %2403 = vmatmul.f32.gmra.mxu0 %v2292
        %v2404 = vpop.f32.mrf.mxu0
        %v2405 = vadd.f32 %v2250, %v2404
        %2406 = vmatmul.f32.gmra.mxu0 %v2295
        %v2407 = vpop.f32.mrf.mxu0
        %v2408 = vadd.f32 %v2250, %v2407
        %2409 = vmatmul.f32.gmra.mxu0 %v2298
        %v2410 = vpop.f32.mrf.mxu0
        %v2411 = vadd.f32 %v2250, %v2410
        %2412 = vmatmul.f32.gmra.mxu0 %v2301
        %v2413 = vpop.f32.mrf.mxu0
        %v2414 = vadd.f32 %v2250, %v2413
        %2415 = vmatmul.f32.gmra.mxu0 %v2304
        %v2416 = vpop.f32.mrf.mxu0
        %v2417 = vadd.f32 %v2250, %v2416
        %2418 = vmatmul.f32.gmra.mxu0 %v2307
        %v2419 = vpop.f32.mrf.mxu0
        %v2420 = vadd.f32 %v2250, %v2419
        %2421 = vmatmul.f32.gmra.mxu0 %v2310
        %v2422 = vpop.f32.mrf.mxu0
        %v2423 = vadd.f32 %v2250, %v2422
        %2424 = vmatmul.f32.gmra.mxu0 %v2313
        %v2425 = vpop.f32.mrf.mxu0
        %v2426 = vadd.f32 %v2250, %v2425
        %2427 = vmatmul.f32.gmra.mxu0 %v2316
        %v2428 = vpop.f32.mrf.mxu0
        %v2429 = vadd.f32 %v2250, %v2428
        %2430 = vmatmul.f32.gmra.mxu0 %v2319
        %v2431 = vpop.f32.mrf.mxu0
        %v2432 = vadd.f32 %v2250, %v2431
        %2433 = vmatmul.f32.gmra.mxu0 %v2322
        %v2434 = vpop.f32.mrf.mxu0
        %v2435 = vadd.f32 %v2250, %v2434
        %2436 = vmatmul.f32.gmra.mxu0 %v2325
        %v2437 = vpop.f32.mrf.mxu0
        %v2438 = vadd.f32 %v2250, %v2437
        %2439 = vmatmul.f32.gmra.mxu0 %v2328
        %v2440 = vpop.f32.mrf.mxu0
        %v2441 = vadd.f32 %v2250, %v2440
        %2442 = vmatmul.f32.gmra.mxu0 %v2331
        %v2443 = vpop.f32.mrf.mxu0
        %v2444 = vadd.f32 %v2250, %v2443
        %2445 = vmatmul.f32.gmra.mxu0 %v2334
        %v2446 = vpop.f32.mrf.mxu0
        %v2447 = vadd.f32 %v2250, %v2446
        %2448 = vmatmul.f32.gmra.mxu0 %v2337
        %v2449 = vpop.f32.mrf.mxu0
        %v2450 = vadd.f32 %v2250, %v2449
        %2451 = vmatmul.f32.gmra.mxu0 %v2340
        %v2452 = vpop.f32.mrf.mxu0
        %v2453 = vadd.f32 %v2250, %v2452
        %2454 = vmatmul.f32.gmra.mxu0 %v2343
        %v2455 = vpop.f32.mrf.mxu0
        %v2456 = vadd.f32 %v2250, %v2455
        %2457 = vmatmul.f32.gmra.mxu0 %v2346
        %v2458 = vpop.f32.mrf.mxu0
        %v2459 = vadd.f32 %v2250, %v2458
        %2460 = vdwg.mxu0
        %vm2461 = vcmp.gt.f32.partialorder %v2366, 0.0
        %vm2462 = vcmp.gt.f32.partialorder %v2369, 0.0
        %vm2463 = vcmp.gt.f32.partialorder %v2372, 0.0
        %vm2464 = vcmp.gt.f32.partialorder %v2375, 0.0
        %vm2465 = vcmp.gt.f32.partialorder %v2378, 0.0
        %vm2466 = vcmp.gt.f32.partialorder %v2381, 0.0
        %vm2467 = vcmp.gt.f32.partialorder %v2384, 0.0
        %vm2468 = vcmp.gt.f32.partialorder %v2387, 0.0
        %vm2469 = vcmp.gt.f32.partialorder %v2390, 0.0
        %vm2470 = vcmp.gt.f32.partialorder %v2393, 0.0
        %vm2471 = vcmp.gt.f32.partialorder %v2396, 0.0
        %vm2472 = vcmp.gt.f32.partialorder %v2399, 0.0
        %vm2473 = vcmp.gt.f32.partialorder %v2402, 0.0
        %vm2474 = vcmp.gt.f32.partialorder %v2405, 0.0
        %vm2475 = vcmp.gt.f32.partialorder %v2408, 0.0
        %vm2476 = vcmp.gt.f32.partialorder %v2411, 0.0
        %vm2477 = vcmp.gt.f32.partialorder %v2414, 0.0
        %vm2478 = vcmp.gt.f32.partialorder %v2417, 0.0
        %vm2479 = vcmp.gt.f32.partialorder %v2420, 0.0
        %vm2480 = vcmp.gt.f32.partialorder %v2423, 0.0
        %vm2481 = vcmp.gt.f32.partialorder %v2426, 0.0
        %vm2482 = vcmp.gt.f32.partialorder %v2429, 0.0
        %vm2483 = vcmp.gt.f32.partialorder %v2432, 0.0
        %vm2484 = vcmp.gt.f32.partialorder %v2435, 0.0
        %vm2485 = vcmp.gt.f32.partialorder %v2438, 0.0
        %vm2486 = vcmp.gt.f32.partialorder %v2441, 0.0
        %vm2487 = vcmp.gt.f32.partialorder %v2444, 0.0
        %vm2488 = vcmp.gt.f32.partialorder %v2447, 0.0
        %vm2489 = vcmp.gt.f32.partialorder %v2450, 0.0
        %vm2490 = vcmp.gt.f32.partialorder %v2453, 0.0
        %vm2491 = vcmp.gt.f32.partialorder %v2456, 0.0
        %vm2492 = vcmp.gt.f32.partialorder %v2459, 0.0
        %v2493 = vmul.f32 %v2366, 0.01
        %v2494 = vmul.f32 %v2369, 0.01
        %v2495 = vmul.f32 %v2372, 0.01
        %v2496 = vmul.f32 %v2375, 0.01
        %v2497 = vmul.f32 %v2378, 0.01
        %v2498 = vmul.f32 %v2381, 0.01
        %v2499 = vmul.f32 %v2384, 0.01
        %v2500 = vmul.f32 %v2387, 0.01
        %v2501 = vmul.f32 %v2390, 0.01
        %v2502 = vmul.f32 %v2393, 0.01
        %v2503 = vmul.f32 %v2396, 0.01
        %v2504 = vmul.f32 %v2399, 0.01
        %v2505 = vmul.f32 %v2402, 0.01
        %v2506 = vmul.f32 %v2405, 0.01
        %v2507 = vmul.f32 %v2408, 0.01
        %v2508 = vmul.f32 %v2411, 0.01
        %v2509 = vmul.f32 %v2414, 0.01
        %v2510 = vmul.f32 %v2417, 0.01
        %v2511 = vmul.f32 %v2420, 0.01
        %v2512 = vmul.f32 %v2423, 0.01
        %v2513 = vmul.f32 %v2426, 0.01
        %v2514 = vmul.f32 %v2429, 0.01
        %v2515 = vmul.f32 %v2432, 0.01
        %v2516 = vmul.f32 %v2435, 0.01
        %v2517 = vmul.f32 %v2438, 0.01
        %v2518 = vmul.f32 %v2441, 0.01
        %v2519 = vmul.f32 %v2444, 0.01
        %v2520 = vmul.f32 %v2447, 0.01
        %v2521 = vmul.f32 %v2450, 0.01
        %v2522 = vmul.f32 %v2453, 0.01
        %v2523 = vmul.f32 %v2456, 0.01
        %v2524 = vmul.f32 %v2459, 0.01
        %v2525 = vsel %vm2461, %v2366, %v2493
        %v2526 = vsel %vm2462, %v2369, %v2494
        %v2527 = vsel %vm2463, %v2372, %v2495
        %v2528 = vsel %vm2464, %v2375, %v2496
        %v2529 = vsel %vm2465, %v2378, %v2497
        %v2530 = vsel %vm2466, %v2381, %v2498
        %v2531 = vsel %vm2467, %v2384, %v2499
        %v2532 = vsel %vm2468, %v2387, %v2500
        %v2533 = vsel %vm2469, %v2390, %v2501
        %v2534 = vsel %vm2470, %v2393, %v2502
        %v2535 = vsel %vm2471, %v2396, %v2503
        %v2536 = vsel %vm2472, %v2399, %v2504
        %v2537 = vsel %vm2473, %v2402, %v2505
        %v2538 = vsel %vm2474, %v2405, %v2506
        %v2539 = vsel %vm2475, %v2408, %v2507
        %v2540 = vsel %vm2476, %v2411, %v2508
        %v2541 = vsel %vm2477, %v2414, %v2509
        %v2542 = vsel %vm2478, %v2417, %v2510
        %v2543 = vsel %vm2479, %v2420, %v2511
        %v2544 = vsel %vm2480, %v2423, %v2512
        %v2545 = vsel %vm2481, %v2426, %v2513
        %v2546 = vsel %vm2482, %v2429, %v2514
        %v2547 = vsel %vm2483, %v2432, %v2515
        %v2548 = vsel %vm2484, %v2435, %v2516
        %v2549 = vsel %vm2485, %v2438, %v2517
        %v2550 = vsel %vm2486, %v2441, %v2518
        %v2551 = vsel %vm2487, %v2444, %v2519
        %v2552 = vsel %vm2488, %v2447, %v2520
        %v2553 = vsel %vm2489, %v2450, %v2521
        %v2554 = vsel %vm2490, %v2453, %v2522
        %v2555 = vsel %vm2491, %v2456, %v2523
        %v2556 = vsel %vm2492, %v2459, %v2524
        %v2557 = vld [vmem:[%s19] sm:$0x1]
        %v2559 = vperm.slane %v2557, 0
        %v2561 = vmul.f32 %v2525, %v2559
        %v2562 = vmul.f32 %v2526, %v2559
        %v2563 = vmul.f32 %v2527, %v2559
        %v2564 = vmul.f32 %v2528, %v2559
        %v2565 = vmul.f32 %v2529, %v2559
        %v2566 = vmul.f32 %v2530, %v2559
        %v2567 = vmul.f32 %v2531, %v2559
        %v2568 = vmul.f32 %v2532, %v2559
        %v2569 = vmul.f32 %v2533, %v2559
        %v2570 = vmul.f32 %v2534, %v2559
        %v2571 = vmul.f32 %v2535, %v2559
        %v2572 = vmul.f32 %v2536, %v2559
        %v2573 = vmul.f32 %v2537, %v2559
        %v2574 = vmul.f32 %v2538, %v2559
        %v2575 = vmul.f32 %v2539, %v2559
        %v2576 = vmul.f32 %v2540, %v2559
        %v2577 = vmul.f32 %v2541, %v2559
        %v2578 = vmul.f32 %v2542, %v2559
        %v2579 = vmul.f32 %v2543, %v2559
        %v2580 = vmul.f32 %v2544, %v2559
        %v2581 = vmul.f32 %v2545, %v2559
        %v2582 = vmul.f32 %v2546, %v2559
        %v2583 = vmul.f32 %v2547, %v2559
        %v2584 = vmul.f32 %v2548, %v2559
        %v2585 = vmul.f32 %v2549, %v2559
        %v2586 = vmul.f32 %v2550, %v2559
        %v2587 = vmul.f32 %v2551, %v2559
        %v2588 = vmul.f32 %v2552, %v2559
        %v2589 = vmul.f32 %v2553, %v2559
        %v2590 = vmul.f32 %v2554, %v2559
        %v2591 = vmul.f32 %v2555, %v2559
        %v2592 = vmul.f32 %v2556, %v2559
        %v2593 = vsel %vm1303, %v2561, 0.0
        %2594 = vadd.xlane.f32.xlu0 %v2593
        %v2595 = vpop.xlane.xlu0 %2594
        %v2596 = vsel %vm1303, %v2562, 0.0
        %2597 = vadd.xlane.f32.xlu0 %v2596
        %v2598 = vpop.xlane.xlu0 %2597
        %v2599 = vsel %vm1303, %v2563, 0.0
        %2600 = vadd.xlane.f32.xlu0 %v2599
        %v2601 = vpop.xlane.xlu0 %2600
        %v2602 = vsel %vm1303, %v2564, 0.0
        %2603 = vadd.xlane.f32.xlu0 %v2602
        %v2604 = vpop.xlane.xlu0 %2603
        %v2605 = vsel %vm1303, %v2565, 0.0
        %2606 = vadd.xlane.f32.xlu0 %v2605
        %v2607 = vpop.xlane.xlu0 %2606
        %v2608 = vsel %vm1303, %v2566, 0.0
        %2609 = vadd.xlane.f32.xlu0 %v2608
        %v2610 = vpop.xlane.xlu0 %2609
        %v2611 = vsel %vm1303, %v2567, 0.0
        %2612 = vadd.xlane.f32.xlu0 %v2611
        %v2613 = vpop.xlane.xlu0 %2612
        %v2614 = vsel %vm1303, %v2568, 0.0
        %2615 = vadd.xlane.f32.xlu0 %v2614
        %v2616 = vpop.xlane.xlu0 %2615
        %v2617 = vsel %vm1303, %v2569, 0.0
        %2618 = vadd.xlane.f32.xlu0 %v2617
        %v2619 = vpop.xlane.xlu0 %2618
        %v2620 = vsel %vm1303, %v2570, 0.0
        %2621 = vadd.xlane.f32.xlu0 %v2620
        %v2622 = vpop.xlane.xlu0 %2621
        %v2623 = vsel %vm1303, %v2571, 0.0
        %2624 = vadd.xlane.f32.xlu0 %v2623
        %v2625 = vpop.xlane.xlu0 %2624
        %v2626 = vsel %vm1303, %v2572, 0.0
        %2627 = vadd.xlane.f32.xlu0 %v2626
        %v2628 = vpop.xlane.xlu0 %2627
        %v2629 = vsel %vm1303, %v2573, 0.0
        %2630 = vadd.xlane.f32.xlu0 %v2629
        %v2631 = vpop.xlane.xlu0 %2630
        %v2632 = vsel %vm1303, %v2574, 0.0
        %2633 = vadd.xlane.f32.xlu0 %v2632
        %v2634 = vpop.xlane.xlu0 %2633
        %v2635 = vsel %vm1303, %v2575, 0.0
        %2636 = vadd.xlane.f32.xlu0 %v2635
        %v2637 = vpop.xlane.xlu0 %2636
        %v2638 = vsel %vm1303, %v2576, 0.0
        %2639 = vadd.xlane.f32.xlu0 %v2638
        %v2640 = vpop.xlane.xlu0 %2639
        %v2641 = vsel %vm1303, %v2577, 0.0
        %2642 = vadd.xlane.f32.xlu0 %v2641
        %v2643 = vpop.xlane.xlu0 %2642
        %v2644 = vsel %vm1303, %v2578, 0.0
        %2645 = vadd.xlane.f32.xlu0 %v2644
        %v2646 = vpop.xlane.xlu0 %2645
        %v2647 = vsel %vm1303, %v2579, 0.0
        %2648 = vadd.xlane.f32.xlu0 %v2647
        %v2649 = vpop.xlane.xlu0 %2648
        %v2650 = vsel %vm1303, %v2580, 0.0
        %2651 = vadd.xlane.f32.xlu0 %v2650
        %v2652 = vpop.xlane.xlu0 %2651
        %v2653 = vsel %vm1303, %v2581, 0.0
        %2654 = vadd.xlane.f32.xlu0 %v2653
        %v2655 = vpop.xlane.xlu0 %2654
        %v2656 = vsel %vm1303, %v2582, 0.0
        %2657 = vadd.xlane.f32.xlu0 %v2656
        %v2658 = vpop.xlane.xlu0 %2657
        %v2659 = vsel %vm1303, %v2583, 0.0
        %2660 = vadd.xlane.f32.xlu0 %v2659
        %v2661 = vpop.xlane.xlu0 %2660
        %v2662 = vsel %vm1303, %v2584, 0.0
        %2663 = vadd.xlane.f32.xlu0 %v2662
        %v2664 = vpop.xlane.xlu0 %2663
        %v2665 = vsel %vm1303, %v2585, 0.0
        %2666 = vadd.xlane.f32.xlu0 %v2665
        %v2667 = vpop.xlane.xlu0 %2666
        %v2668 = vsel %vm1303, %v2586, 0.0
        %2669 = vadd.xlane.f32.xlu0 %v2668
        %v2670 = vpop.xlane.xlu0 %2669
        %v2671 = vsel %vm1303, %v2587, 0.0
        %2672 = vadd.xlane.f32.xlu0 %v2671
        %v2673 = vpop.xlane.xlu0 %2672
        %v2674 = vsel %vm1303, %v2588, 0.0
        %2675 = vadd.xlane.f32.xlu0 %v2674
        %v2676 = vpop.xlane.xlu0 %2675
        %v2677 = vsel %vm1303, %v2589, 0.0
        %2678 = vadd.xlane.f32.xlu0 %v2677
        %v2679 = vpop.xlane.xlu0 %2678
        %v2680 = vsel %vm1303, %v2590, 0.0
        %2681 = vadd.xlane.f32.xlu0 %v2680
        %v2682 = vpop.xlane.xlu0 %2681
        %v2683 = vsel %vm1303, %v2591, 0.0
        %2684 = vadd.xlane.f32.xlu0 %v2683
        %v2685 = vpop.xlane.xlu0 %2684
        %v2686 = vsel %vm1303, %v2592, 0.0
        %2687 = vadd.xlane.f32.xlu0 %v2686
        %v2688 = vpop.xlane.xlu0 %2687
        %v2689 = vld [vmem:[#allocation2] sm:$0x1]
        %v2691 = vperm.slane %v2689, 0
        %2692 = vset.pattern.permute.xlu0 0
        %2693 = vperm.xlu0 %2692, %v2691
        %v2694 = vpop.permute.xlu0 %2693
        %v2696 = vadd.f32 %v2595, %v2694
        %v2697 = vadd.f32 %v2598, %v2694
        %v2698 = vadd.f32 %v2601, %v2694
        %v2699 = vadd.f32 %v2604, %v2694
        %v2700 = vadd.f32 %v2607, %v2694
        %v2701 = vadd.f32 %v2610, %v2694
        %v2702 = vadd.f32 %v2613, %v2694
        %v2703 = vadd.f32 %v2616, %v2694
        %v2704 = vadd.f32 %v2619, %v2694
        %v2705 = vadd.f32 %v2622, %v2694
        %v2706 = vadd.f32 %v2625, %v2694
        %v2707 = vadd.f32 %v2628, %v2694
        %v2708 = vadd.f32 %v2631, %v2694
        %v2709 = vadd.f32 %v2634, %v2694
        %v2710 = vadd.f32 %v2637, %v2694
        %v2711 = vadd.f32 %v2640, %v2694
        %v2712 = vadd.f32 %v2643, %v2694
        %v2713 = vadd.f32 %v2646, %v2694
        %v2714 = vadd.f32 %v2649, %v2694
        %v2715 = vadd.f32 %v2652, %v2694
        %v2716 = vadd.f32 %v2655, %v2694
        %v2717 = vadd.f32 %v2658, %v2694
        %v2718 = vadd.f32 %v2661, %v2694
        %v2719 = vadd.f32 %v2664, %v2694
        %v2720 = vadd.f32 %v2667, %v2694
        %v2721 = vadd.f32 %v2670, %v2694
        %v2722 = vadd.f32 %v2673, %v2694
        %v2723 = vadd.f32 %v2676, %v2694
        %v2724 = vadd.f32 %v2679, %v2694
        %v2725 = vadd.f32 %v2682, %v2694
        %v2726 = vadd.f32 %v2685, %v2694
        %v2727 = vadd.f32 %v2688, %v2694
        %v2728 = vsub.f32 %v2696, 1e+08
        %v2729 = vsub.f32 %v2697, 1e+08
        %v2730 = vsub.f32 %v2698, 1e+08
        %v2731 = vsub.f32 %v2699, 1e+08
        %v2732 = vsub.f32 %v2700, 1e+08
        %v2733 = vsub.f32 %v2701, 1e+08
        %v2734 = vsub.f32 %v2702, 1e+08
        %v2735 = vsub.f32 %v2703, 1e+08
        %v2736 = vsub.f32 %v2704, 1e+08
        %v2737 = vsub.f32 %v2705, 1e+08
        %v2738 = vsub.f32 %v2706, 1e+08
        %v2739 = vsub.f32 %v2707, 1e+08
        %v2740 = vsub.f32 %v2708, 1e+08
        %v2741 = vsub.f32 %v2709, 1e+08
        %v2742 = vsub.f32 %v2710, 1e+08
        %v2743 = vsub.f32 %v2711, 1e+08
        %v2744 = vsub.f32 %v2712, 1e+08
        %v2745 = vsub.f32 %v2713, 1e+08
        %v2746 = vsub.f32 %v2714, 1e+08
        %v2747 = vsub.f32 %v2715, 1e+08
        %v2748 = vsub.f32 %v2716, 1e+08
        %v2749 = vsub.f32 %v2717, 1e+08
        %v2750 = vsub.f32 %v2718, 1e+08
        %v2751 = vsub.f32 %v2719, 1e+08
        %v2752 = vsub.f32 %v2720, 1e+08
        %v2753 = vsub.f32 %v2721, 1e+08
        %v2754 = vsub.f32 %v2722, 1e+08
        %v2755 = vsub.f32 %v2723, 1e+08
        %v2756 = vsub.f32 %v2724, 1e+08
        %v2757 = vsub.f32 %v2725, 1e+08
        %v2758 = vsub.f32 %v2726, 1e+08
        %v2759 = vsub.f32 %v2727, 1e+08
        %v2792 = vperm.slane %v2728, %v1180
        %v2793 = vadd.s32 %v1180, 4294967288
        %v2794 = vperm.slane %v2729, %v2793
        %vm2795 = vcmask 130112
        %v2796 = vsel %vm2795, %v2794, %v2792
        %v2797 = vperm.slane %v2730, %v1180
        %v2798 = vperm.slane %v2731, %v2793
        %v2799 = vsel %vm2795, %v2798, %v2797
        %v2800 = vperm.slane %v2732, %v1180
        %v2801 = vperm.slane %v2733, %v2793
        %v2802 = vsel %vm2795, %v2801, %v2800
        %v2803 = vperm.slane %v2734, %v1180
        %v2804 = vperm.slane %v2735, %v2793
        %v2805 = vsel %vm2795, %v2804, %v2803
        %v2806 = vperm.slane %v2736, %v1180
        %v2807 = vperm.slane %v2737, %v2793
        %v2808 = vsel %vm2795, %v2807, %v2806
        %v2809 = vperm.slane %v2738, %v1180
        %v2810 = vperm.slane %v2739, %v2793
        %v2811 = vsel %vm2795, %v2810, %v2809
        %v2812 = vperm.slane %v2740, %v1180
        %v2813 = vperm.slane %v2741, %v2793
        %v2814 = vsel %vm2795, %v2813, %v2812
        %v2815 = vperm.slane %v2742, %v1180
        %v2816 = vperm.slane %v2743, %v2793
        %v2817 = vsel %vm2795, %v2816, %v2815
        %v2818 = vperm.slane %v2744, %v1180
        %v2819 = vperm.slane %v2745, %v2793
        %v2820 = vsel %vm2795, %v2819, %v2818
        %v2821 = vperm.slane %v2746, %v1180
        %v2822 = vperm.slane %v2747, %v2793
        %v2823 = vsel %vm2795, %v2822, %v2821
        %v2824 = vperm.slane %v2748, %v1180
        %v2825 = vperm.slane %v2749, %v2793
        %v2826 = vsel %vm2795, %v2825, %v2824
        %v2827 = vperm.slane %v2750, %v1180
        %v2828 = vperm.slane %v2751, %v2793
        %v2829 = vsel %vm2795, %v2828, %v2827
        %v2830 = vperm.slane %v2752, %v1180
        %v2831 = vperm.slane %v2753, %v2793
        %v2832 = vsel %vm2795, %v2831, %v2830
        %v2833 = vperm.slane %v2754, %v1180
        %v2834 = vperm.slane %v2755, %v2793
        %v2835 = vsel %vm2795, %v2834, %v2833
        %v2836 = vperm.slane %v2756, %v1180
        %v2837 = vperm.slane %v2757, %v2793
        %v2838 = vsel %vm2795, %v2837, %v2836
        %v2839 = vperm.slane %v2758, %v1180
        %v2840 = vperm.slane %v2759, %v2793
        %v2841 = vsel %vm2795, %v2840, %v2839
        %vm2842 = vcmask 1041409
        %v2843 = vsel %vm2842, %v2799, %v2796
        %vm2844 = vcmask 1042434
        %v2845 = vsel %vm2844, %v2802, %v2843
        %vm2846 = vcmask 1043459
        %v2847 = vsel %vm2846, %v2805, %v2845
        %vm2848 = vcmask 1044484
        %v2849 = vsel %vm2848, %v2808, %v2847
        %vm2850 = vcmask 1045509
        %v2851 = vsel %vm2850, %v2811, %v2849
        %vm2852 = vcmask 1046534
        %v2853 = vsel %vm2852, %v2814, %v2851
        %vm2854 = vcmask 1047559
        %v2855 = vsel %vm2854, %v2817, %v2853
        %v2856 = vsel %vm2842, %v2823, %v2820
        %v2857 = vsel %vm2844, %v2826, %v2856
        %v2858 = vsel %vm2846, %v2829, %v2857
        %v2859 = vsel %vm2848, %v2832, %v2858
        %v2860 = vsel %vm2850, %v2835, %v2859
        %v2861 = vsel %vm2852, %v2838, %v2860
        %v2862 = vsel %vm2854, %v2841, %v2861
        %v2897 = vperm.slane %v2696, %v1180
        %v2898 = vperm.slane %v2697, %v2793
        %v2899 = vsel %vm2795, %v2898, %v2897
        %v2900 = vperm.slane %v2698, %v1180
        %v2901 = vperm.slane %v2699, %v2793
        %v2902 = vsel %vm2795, %v2901, %v2900
        %v2903 = vperm.slane %v2700, %v1180
        %v2904 = vperm.slane %v2701, %v2793
        %v2905 = vsel %vm2795, %v2904, %v2903
        %v2906 = vperm.slane %v2702, %v1180
        %v2907 = vperm.slane %v2703, %v2793
        %v2908 = vsel %vm2795, %v2907, %v2906
        %v2909 = vperm.slane %v2704, %v1180
        %v2910 = vperm.slane %v2705, %v2793
        %v2911 = vsel %vm2795, %v2910, %v2909
        %v2912 = vperm.slane %v2706, %v1180
        %v2913 = vperm.slane %v2707, %v2793
        %v2914 = vsel %vm2795, %v2913, %v2912
        %v2915 = vperm.slane %v2708, %v1180
        %v2916 = vperm.slane %v2709, %v2793
        %v2917 = vsel %vm2795, %v2916, %v2915
        %v2918 = vperm.slane %v2710, %v1180
        %v2919 = vperm.slane %v2711, %v2793
        %v2920 = vsel %vm2795, %v2919, %v2918
        %v2921 = vperm.slane %v2712, %v1180
        %v2922 = vperm.slane %v2713, %v2793
        %v2923 = vsel %vm2795, %v2922, %v2921
        %v2924 = vperm.slane %v2714, %v1180
        %v2925 = vperm.slane %v2715, %v2793
        %v2926 = vsel %vm2795, %v2925, %v2924
        %v2927 = vperm.slane %v2716, %v1180
        %v2928 = vperm.slane %v2717, %v2793
        %v2929 = vsel %vm2795, %v2928, %v2927
        %v2930 = vperm.slane %v2718, %v1180
        %v2931 = vperm.slane %v2719, %v2793
        %v2932 = vsel %vm2795, %v2931, %v2930
        %v2933 = vperm.slane %v2720, %v1180
        %v2934 = vperm.slane %v2721, %v2793
        %v2935 = vsel %vm2795, %v2934, %v2933
        %v2936 = vperm.slane %v2722, %v1180
        %v2937 = vperm.slane %v2723, %v2793
        %v2938 = vsel %vm2795, %v2937, %v2936
        %v2939 = vperm.slane %v2724, %v1180
        %v2940 = vperm.slane %v2725, %v2793
        %v2941 = vsel %vm2795, %v2940, %v2939
        %v2942 = vperm.slane %v2726, %v1180
        %v2943 = vperm.slane %v2727, %v2793
        %v2944 = vsel %vm2795, %v2943, %v2942
        %v2945 = vsel %vm2842, %v2902, %v2899
        %v2946 = vsel %vm2844, %v2905, %v2945
        %v2947 = vsel %vm2846, %v2908, %v2946
        %v2948 = vsel %vm2848, %v2911, %v2947
        %v2949 = vsel %vm2850, %v2914, %v2948
        %v2950 = vsel %vm2852, %v2917, %v2949
        %v2951 = vsel %vm2854, %v2920, %v2950
        %v2952 = vsel %vm2842, %v2926, %v2923
        %v2953 = vsel %vm2844, %v2929, %v2952
        %v2954 = vsel %vm2846, %v2932, %v2953
        %v2955 = vsel %vm2848, %v2935, %v2954
        %v2956 = vsel %vm2850, %v2938, %v2955
        %v2957 = vsel %vm2852, %v2941, %v2956
        %v2958 = vsel %vm2854, %v2944, %v2957
        %v2961 = vsel %vm1181, %v2855, %v2951
        %v2962 = vsel %vm1182, %v2862, %v2958
        %vm2963 = vcmask 130048
        %v2964 = vsel %vm2963, %v2961, -inf
        %2965 = vmax.xlane.f32.xlu0 %v2964
        %v2966 = vpop.xlane.xlu0 %2965
        %v2967 = vsel %vm2963, %v2962, -inf
        %2968 = vmax.xlane.f32.xlu0 %v2967
        %v2969 = vpop.xlane.xlu0 %2968
        %v2970 = vsub.f32 %v2961, %v2966
        %v2971 = vsub.f32 %v2962, %v2969
        %v2972 = vmul.f32 %v2970, 1.442695
        %v2973 = vpow.pop %v2972
        %v2974 = vmul.f32 %v2971, 1.442695
        %v2975 = vpow.pop %v2974
        %v2976 = vsel %vm2963, %v2973, 0.0
        %2977 = vadd.xlane.f32.xlu0 %v2976
        %v2978 = vpop.xlane.xlu0 %2977
        %v2979 = vsel %vm2963, %v2975, 0.0
        %2980 = vadd.xlane.f32.xlu0 %v2979
        %v2981 = vpop.xlane.xlu0 %2980
        %v2982 = vrcp.pop %v2978
        %v2983 = vmul.f32 %v2978, %v2982
        %v2984 = vsub.f32 1.0, %v2983
        %v2985 = vmul.f32 %v2982, %v2984
        %v2986 = vadd.f32 %v2982, %v2985
        %vm2987 = vweird.f32 %v2978
        %vm2988 = vweird.f32 %v2982
        %vm2989 = vmor %vm2987, %vm2988
        %v2990 = vsel %vm2989, %v2982, %v2986
        %v2991 = vand.u32 2147483647, %v2978
        %vm2992 = vcmp.eq.f32.partialorder %v2991, 8.507059e+37
        %v2993 = vand.u32 %v2978, 2147483648
        %v2994 = vor.u32 1.1754944e-38, %v2993
        %v2995 = vsel %vm2992, %v2994, %v2990
        %v2996 = vmul.f32 %v2973, %v2995
        %v2997 = vrcp.pop %v2981
        %v2998 = vmul.f32 %v2981, %v2997
        %v2999 = vsub.f32 1.0, %v2998
        %v3000 = vmul.f32 %v2997, %v2999
        %v3001 = vadd.f32 %v2997, %v3000
        %vm3002 = vweird.f32 %v2981
        %vm3003 = vweird.f32 %v2997
        %vm3004 = vmor %vm3002, %vm3003
        %v3005 = vsel %vm3004, %v2997, %v3001
        %v3006 = vand.u32 2147483647, %v2981
        %vm3007 = vcmp.eq.f32.partialorder %v3006, 8.507059e+37
        %v3008 = vand.u32 %v2981, 2147483648
        %v3009 = vor.u32 1.1754944e-38, %v3008
        %v3010 = vsel %vm3007, %v3009, %v3005
        %v3011 = vmul.f32 %v2975, %v3010
        %v3013 = vsel %vm2963, %v2996, 0
        %v3016 = vsel %vm2963, %v3011, 0
        %3018 = vmatpush.msra.mxu0 0.0
        %3019 = vmatpush.msra.mxu0 0.0
        %3020 = vmatpush.msra.mxu0 0.0
        %3021 = vmatpush.msra.mxu0 0.0
        %3022 = vmatpush.msra.mxu0 0.0
        %3023 = vmatpush.msra.mxu0 0.0
        %3024 = vmatpush.msra.mxu0 0.0
        %3025 = vmatpush.msra.mxu0 0.0
        %3026 = vmatpush.msra.mxu0 0.0
        %3027 = vmatpush.msra.mxu0 0.0
        %3028 = vmatpush.msra.mxu0 0.0
        %3029 = vmatpush.msra.mxu0 0.0
        %3030 = vmatpush.msra.mxu0 0.0
        %3031 = vmatpush.msra.mxu0 0.0
        %3032 = vmatpush.msra.mxu0 %v1175
        %3033 = vmatpush.msra.mxu0 %v1174
        %3034 = vmatmul.f32.gmra.mxu0 %v3013
        %v3035 = vpop.f32.mrf.mxu0
        %v3036 = vadd.f32 0.0, %v3035
        %3037 = vmatmul.f32.gmra.mxu0 %v3016
        %v3038 = vpop.f32.mrf.mxu0
        %v3039 = vadd.f32 0.0, %v3038
        %3040 = vdwg.mxu0
        %v3041 = vld [vmem:[%s23] sm:$0xff]
        %v3042 = vld [vmem:[%s23 + $0x8] sm:$0xff]
        %v3043 = vld [vmem:[%s23 + $0x10] sm:$0xff]
        %v3044 = vld [vmem:[%s23 + $0x18] sm:$0xff]
        %v3045 = vld [vmem:[%s23 + $0x20] sm:$0xff]
        %v3046 = vld [vmem:[%s23 + $0x28] sm:$0xff]
        %v3047 = vld [vmem:[%s23 + $0x30] sm:$0xff]
        %v3048 = vld [vmem:[%s23 + $0x38] sm:$0xff]
        %v3050 = vsel %vm1303, %v3036, 0
        %v3053 = vsel %vm1303, %v3039, 0
        %3055 = vmatpush.msra.mxu0 0.0
        %3056 = vmatpush.msra.mxu0 0.0
        %3057 = vmatpush.msra.mxu0 0.0
        %3058 = vmatpush.msra.mxu0 0.0
        %3059 = vmatpush.msra.mxu0 0.0
        %3060 = vmatpush.msra.mxu0 0.0
        %3061 = vmatpush.msra.mxu0 0.0
        %3062 = vmatpush.msra.mxu0 0.0
        %3063 = vmatpush.msra.mxu0 0.0
        %3064 = vmatpush.msra.mxu0 0.0
        %3065 = vmatpush.msra.mxu0 0.0
        %3066 = vmatpush.msra.mxu0 0.0
        %3067 = vmatpush.msra.mxu0 %v3048
        %3068 = vmatpush.msra.mxu0 %v3047
        %3069 = vmatpush.msra.mxu0 %v3046
        %3070 = vmatpush.msra.mxu0 %v3045
        %3071 = vmatmul.f32.gmra.mxu0 %v3050
        %v3072 = vpop.f32.mrf.mxu0
        %v3073 = vadd.f32 0.0, %v3072
        %3074 = vmatmul.f32.gmra.mxu0 %v3053
        %v3075 = vpop.f32.mrf.mxu0
        %v3076 = vadd.f32 0.0, %v3075
        %3077 = vdwg.mxu0
        %v3078 = vsel %vm1303, %v1174, 0
        %v3080 = vsel %vm1303, %v1175, 0
        %3082 = vmatpush.msra.mxu0 0.0
        %3083 = vmatpush.msra.mxu0 0.0
        %3084 = vmatpush.msra.mxu0 0.0
        %3085 = vmatpush.msra.mxu0 0.0
        %3086 = vmatpush.msra.mxu0 0.0
        %3087 = vmatpush.msra.mxu0 0.0
        %3088 = vmatpush.msra.mxu0 0.0
        %3089 = vmatpush.msra.mxu0 0.0
        %3090 = vmatpush.msra.mxu0 0.0
        %3091 = vmatpush.msra.mxu0 0.0
        %3092 = vmatpush.msra.mxu0 0.0
        %3093 = vmatpush.msra.mxu0 0.0
        %3094 = vmatpush.msra.mxu0 %v3044
        %3095 = vmatpush.msra.mxu0 %v3043
        %3096 = vmatpush.msra.mxu0 %v3042
        %3097 = vmatpush.msra.mxu0 %v3041
        %3098 = vmatmul.f32.gmra.mxu0 %v3078
        %v3099 = vpop.f32.mrf.mxu0
        %v3100 = vadd.f32 %v3073, %v3099
        %3101 = vmatmul.f32.gmra.mxu0 %v3080
        %v3102 = vpop.f32.mrf.mxu0
        %v3103 = vadd.f32 %v3076, %v3102
        %3104 = vdwg.mxu0
        %v3105 = vld [vmem:[%s25] sm:$0x1]
        %v3107 = vperm.slane %v3105, 0
        %v3109 = vadd.f32 %v3100, %v3107
        %v3110 = vadd.f32 %v3103, %v3107
        %vm3111 = vcmp.gt.f32.partialorder %v3109, 0.0
        %vm3112 = vcmp.gt.f32.partialorder %v3110, 0.0
        %v3113 = vmul.f32 %v3109, 0.01
        %v3114 = vmul.f32 %v3110, 0.01
        %v3115 = vsel %vm3111, %v3109, %v3113
        %v3116 = vsel %vm3112, %v3110, %v3114
        %v3119 = vrot.slane %v3115, 1
        %v3120 = vrot.slane %v3115, 2
        %v3121 = vrot.slane %v3115, 3
        %v3122 = vrot.slane %v3115, 4
        %v3123 = vrot.slane %v3115, 5
        %v3124 = vrot.slane %v3115, 6
        %v3125 = vrot.slane %v3115, 7
        %v3126 = vrot.slane %v3116, 1
        %v3127 = vrot.slane %v3116, 2
        %v3128 = vrot.slane %v3116, 3
        %v3129 = vrot.slane %v3116, 4
        %v3130 = vrot.slane %v3116, 5
        %v3131 = vrot.slane %v3116, 6
        %v3132 = vrot.slane %v3116, 7
        %v3133 = vperm.slane %v3115, 0
        %v3134 = vperm.slane %v3119, 0
        %v3135 = vperm.slane %v3120, 0
        %v3136 = vperm.slane %v3121, 0
        %v3137 = vperm.slane %v3122, 0
        %v3138 = vperm.slane %v3123, 0
        %v3139 = vperm.slane %v3124, 0
        %v3140 = vperm.slane %v3125, 0
        %v3141 = vperm.slane %v3116, 0
        %v3142 = vperm.slane %v3126, 0
        %v3143 = vperm.slane %v3127, 0
        %v3144 = vperm.slane %v3128, 0
        %v3145 = vperm.slane %v3129, 0
        %v3146 = vperm.slane %v3130, 0
        %v3147 = vperm.slane %v3131, 0
        %v3148 = vperm.slane %v3132, 0
        %v3165 = vsub.f32 %v3133, %v3115
        %v3166 = vsub.f32 %v3133, %v3116
        %v3167 = vsub.f32 %v3134, %v3115
        %v3168 = vsub.f32 %v3134, %v3116
        %v3169 = vsub.f32 %v3135, %v3115
        %v3170 = vsub.f32 %v3135, %v3116
        %v3171 = vsub.f32 %v3136, %v3115
        %v3172 = vsub.f32 %v3136, %v3116
        %v3173 = vsub.f32 %v3137, %v3115
        %v3174 = vsub.f32 %v3137, %v3116
        %v3175 = vsub.f32 %v3138, %v3115
        %v3176 = vsub.f32 %v3138, %v3116
        %v3177 = vsub.f32 %v3139, %v3115
        %v3178 = vsub.f32 %v3139, %v3116
        %v3179 = vsub.f32 %v3140, %v3115
        %v3180 = vsub.f32 %v3140, %v3116
        %v3181 = vsub.f32 %v3141, %v3115
        %v3182 = vsub.f32 %v3141, %v3116
        %v3183 = vsub.f32 %v3142, %v3115
        %v3184 = vsub.f32 %v3142, %v3116
        %v3185 = vsub.f32 %v3143, %v3115
        %v3186 = vsub.f32 %v3143, %v3116
        %v3187 = vsub.f32 %v3144, %v3115
        %v3188 = vsub.f32 %v3144, %v3116
        %v3189 = vsub.f32 %v3145, %v3115
        %v3190 = vsub.f32 %v3145, %v3116
        %v3191 = vsub.f32 %v3146, %v3115
        %v3192 = vsub.f32 %v3146, %v3116
        %v3193 = vsub.f32 %v3147, %v3115
        %v3194 = vsub.f32 %v3147, %v3116
        %v3195 = vsub.f32 %v3148, %v3115
        %v3196 = vsub.f32 %v3148, %v3116
        %v3197 = vand.u32 2147483647, %v3165
        %v3198 = vand.u32 2147483647, %v3166
        %v3199 = vand.u32 2147483647, %v3167
        %v3200 = vand.u32 2147483647, %v3168
        %v3201 = vand.u32 2147483647, %v3169
        %v3202 = vand.u32 2147483647, %v3170
        %v3203 = vand.u32 2147483647, %v3171
        %v3204 = vand.u32 2147483647, %v3172
        %v3205 = vand.u32 2147483647, %v3173
        %v3206 = vand.u32 2147483647, %v3174
        %v3207 = vand.u32 2147483647, %v3175
        %v3208 = vand.u32 2147483647, %v3176
        %v3209 = vand.u32 2147483647, %v3177
        %v3210 = vand.u32 2147483647, %v3178
        %v3211 = vand.u32 2147483647, %v3179
        %v3212 = vand.u32 2147483647, %v3180
        %v3213 = vand.u32 2147483647, %v3181
        %v3214 = vand.u32 2147483647, %v3182
        %v3215 = vand.u32 2147483647, %v3183
        %v3216 = vand.u32 2147483647, %v3184
        %v3217 = vand.u32 2147483647, %v3185
        %v3218 = vand.u32 2147483647, %v3186
        %v3219 = vand.u32 2147483647, %v3187
        %v3220 = vand.u32 2147483647, %v3188
        %v3221 = vand.u32 2147483647, %v3189
        %v3222 = vand.u32 2147483647, %v3190
        %v3223 = vand.u32 2147483647, %v3191
        %v3224 = vand.u32 2147483647, %v3192
        %v3225 = vand.u32 2147483647, %v3193
        %v3226 = vand.u32 2147483647, %v3194
        %v3227 = vand.u32 2147483647, %v3195
        %v3228 = vand.u32 2147483647, %v3196
        %v3229 = vld [vmem:[%s27] sm:$0xff]
        %v3230 = vld [vmem:[%s27 + $0x8] sm:$0xff]
        %v3231 = vld [vmem:[%s27 + $0x10] sm:$0xff]
        %v3232 = vld [vmem:[%s27 + $0x18] sm:$0xff]
        %v3233 = vld [vmem:[%s27 + $0x20] sm:$0xff]
        %v3234 = vld [vmem:[%s27 + $0x28] sm:$0xff]
        %v3236 = vsel %vm2963, %v3197, 0
        %v3239 = vsel %vm2963, %v3198, 0
        %v3242 = vsel %vm2963, %v3199, 0
        %v3245 = vsel %vm2963, %v3200, 0
        %v3248 = vsel %vm2963, %v3201, 0
        %v3251 = vsel %vm2963, %v3202, 0
        %v3254 = vsel %vm2963, %v3203, 0
        %v3257 = vsel %vm2963, %v3204, 0
        %v3260 = vsel %vm2963, %v3205, 0
        %v3263 = vsel %vm2963, %v3206, 0
        %v3266 = vsel %vm2963, %v3207, 0
        %v3269 = vsel %vm2963, %v3208, 0
        %v3272 = vsel %vm2963, %v3209, 0
        %v3275 = vsel %vm2963, %v3210, 0
        %v3278 = vsel %vm2963, %v3211, 0
        %v3281 = vsel %vm2963, %v3212, 0
        %v3284 = vsel %vm2963, %v3213, 0
        %v3287 = vsel %vm2963, %v3214, 0
        %v3290 = vsel %vm2963, %v3215, 0
        %v3293 = vsel %vm2963, %v3216, 0
        %v3296 = vsel %vm2963, %v3217, 0
        %v3299 = vsel %vm2963, %v3218, 0
        %v3302 = vsel %vm2963, %v3219, 0
        %v3305 = vsel %vm2963, %v3220, 0
        %v3308 = vsel %vm2963, %v3221, 0
        %v3311 = vsel %vm2963, %v3222, 0
        %v3314 = vsel %vm2963, %v3223, 0
        %v3317 = vsel %vm2963, %v3224, 0
        %v3320 = vsel %vm2963, %v3225, 0
        %v3323 = vsel %vm2963, %v3226, 0
        %v3326 = vsel %vm2963, %v3227, 0
        %v3329 = vsel %vm2963, %v3228, 0
        %3331 = vmatpush.msra.mxu0 0.0
        %3332 = vmatpush.msra.mxu0 0.0
        %3333 = vmatpush.msra.mxu0 0.0
        %3334 = vmatpush.msra.mxu0 0.0
        %3335 = vmatpush.msra.mxu0 0.0
        %3336 = vmatpush.msra.mxu0 0.0
        %3337 = vmatpush.msra.mxu0 0.0
        %3338 = vmatpush.msra.mxu0 0.0
        %3339 = vmatpush.msra.mxu0 0.0
        %3340 = vmatpush.msra.mxu0 0.0
        %3341 = vmatpush.msra.mxu0 0.0
        %3342 = vmatpush.msra.mxu0 0.0
        %3343 = vmatpush.msra.mxu0 0.0
        %3344 = vmatpush.msra.mxu0 0.0
        %3345 = vmatpush.msra.mxu0 %v3234
        %3346 = vmatpush.msra.mxu0 %v3233
        %3347 = vmatmul.f32.gmra.mxu0 %v3236
        %v3348 = vpop.f32.mrf.mxu0
        %v3349 = vadd.f32 0.0, %v3348
        %3350 = vmatmul.f32.gmra.mxu0 %v3239
        %v3351 = vpop.f32.mrf.mxu0
        %v3352 = vadd.f32 0.0, %v3351
        %3353 = vmatmul.f32.gmra.mxu0 %v3242
        %v3354 = vpop.f32.mrf.mxu0
        %v3355 = vadd.f32 0.0, %v3354
        %3356 = vmatmul.f32.gmra.mxu0 %v3245
        %v3357 = vpop.f32.mrf.mxu0
        %v3358 = vadd.f32 0.0, %v3357
        %3359 = vmatmul.f32.gmra.mxu0 %v3248
        %v3360 = vpop.f32.mrf.mxu0
        %v3361 = vadd.f32 0.0, %v3360
        %3362 = vmatmul.f32.gmra.mxu0 %v3251
        %v3363 = vpop.f32.mrf.mxu0
        %v3364 = vadd.f32 0.0, %v3363
        %3365 = vmatmul.f32.gmra.mxu0 %v3254
        %v3366 = vpop.f32.mrf.mxu0
        %v3367 = vadd.f32 0.0, %v3366
        %3368 = vmatmul.f32.gmra.mxu0 %v3257
        %v3369 = vpop.f32.mrf.mxu0
        %v3370 = vadd.f32 0.0, %v3369
        %3371 = vmatmul.f32.gmra.mxu0 %v3260
        %v3372 = vpop.f32.mrf.mxu0
        %v3373 = vadd.f32 0.0, %v3372
        %3374 = vmatmul.f32.gmra.mxu0 %v3263
        %v3375 = vpop.f32.mrf.mxu0
        %v3376 = vadd.f32 0.0, %v3375
        %3377 = vmatmul.f32.gmra.mxu0 %v3266
        %v3378 = vpop.f32.mrf.mxu0
        %v3379 = vadd.f32 0.0, %v3378
        %3380 = vmatmul.f32.gmra.mxu0 %v3269
        %v3381 = vpop.f32.mrf.mxu0
        %v3382 = vadd.f32 0.0, %v3381
        %3383 = vmatmul.f32.gmra.mxu0 %v3272
        %v3384 = vpop.f32.mrf.mxu0
        %v3385 = vadd.f32 0.0, %v3384
        %3386 = vmatmul.f32.gmra.mxu0 %v3275
        %v3387 = vpop.f32.mrf.mxu0
        %v3388 = vadd.f32 0.0, %v3387
        %3389 = vmatmul.f32.gmra.mxu0 %v3278
        %v3390 = vpop.f32.mrf.mxu0
        %v3391 = vadd.f32 0.0, %v3390
        %3392 = vmatmul.f32.gmra.mxu0 %v3281
        %v3393 = vpop.f32.mrf.mxu0
        %v3394 = vadd.f32 0.0, %v3393
        %3395 = vmatmul.f32.gmra.mxu0 %v3284
        %v3396 = vpop.f32.mrf.mxu0
        %v3397 = vadd.f32 0.0, %v3396
        %3398 = vmatmul.f32.gmra.mxu0 %v3287
        %v3399 = vpop.f32.mrf.mxu0
        %v3400 = vadd.f32 0.0, %v3399
        %3401 = vmatmul.f32.gmra.mxu0 %v3290
        %v3402 = vpop.f32.mrf.mxu0
        %v3403 = vadd.f32 0.0, %v3402
        %3404 = vmatmul.f32.gmra.mxu0 %v3293
        %v3405 = vpop.f32.mrf.mxu0
        %v3406 = vadd.f32 0.0, %v3405
        %3407 = vmatmul.f32.gmra.mxu0 %v3296
        %v3408 = vpop.f32.mrf.mxu0
        %v3409 = vadd.f32 0.0, %v3408
        %3410 = vmatmul.f32.gmra.mxu0 %v3299
        %v3411 = vpop.f32.mrf.mxu0
        %v3412 = vadd.f32 0.0, %v3411
        %3413 = vmatmul.f32.gmra.mxu0 %v3302
        %v3414 = vpop.f32.mrf.mxu0
        %v3415 = vadd.f32 0.0, %v3414
        %3416 = vmatmul.f32.gmra.mxu0 %v3305
        %v3417 = vpop.f32.mrf.mxu0
        %v3418 = vadd.f32 0.0, %v3417
        %3419 = vmatmul.f32.gmra.mxu0 %v3308
        %v3420 = vpop.f32.mrf.mxu0
        %v3421 = vadd.f32 0.0, %v3420
        %3422 = vmatmul.f32.gmra.mxu0 %v3311
        %v3423 = vpop.f32.mrf.mxu0
        %v3424 = vadd.f32 0.0, %v3423
        %3425 = vmatmul.f32.gmra.mxu0 %v3314
        %v3426 = vpop.f32.mrf.mxu0
        %v3427 = vadd.f32 0.0, %v3426
        %3428 = vmatmul.f32.gmra.mxu0 %v3317
        %v3429 = vpop.f32.mrf.mxu0
        %v3430 = vadd.f32 0.0, %v3429
        %3431 = vmatmul.f32.gmra.mxu0 %v3320
        %v3432 = vpop.f32.mrf.mxu0
        %v3433 = vadd.f32 0.0, %v3432
        %3434 = vmatmul.f32.gmra.mxu0 %v3323
        %v3435 = vpop.f32.mrf.mxu0
        %v3436 = vadd.f32 0.0, %v3435
        %3437 = vmatmul.f32.gmra.mxu0 %v3326
        %v3438 = vpop.f32.mrf.mxu0
        %v3439 = vadd.f32 0.0, %v3438
        %3440 = vmatmul.f32.gmra.mxu0 %v3329
        %v3441 = vpop.f32.mrf.mxu0
        %v3442 = vadd.f32 0.0, %v3441
        %3443 = vdwg.mxu0
        %3444 = vmatpush.msra.mxu0 0.0
        %3445 = vmatpush.msra.mxu0 0.0
        %3446 = vmatpush.msra.mxu0 0.0
        %3447 = vmatpush.msra.mxu0 0.0
        %3448 = vmatpush.msra.mxu0 0.0
        %3449 = vmatpush.msra.mxu0 0.0
        %3450 = vmatpush.msra.mxu0 0.0
        %3451 = vmatpush.msra.mxu0 0.0
        %3452 = vmatpush.msra.mxu0 0.0
        %3453 = vmatpush.msra.mxu0 0.0
        %3454 = vmatpush.msra.mxu0 0.0
        %3455 = vmatpush.msra.mxu0 0.0
        %3456 = vmatpush.msra.mxu0 %v3232
        %3457 = vmatpush.msra.mxu0 %v3231
        %3458 = vmatpush.msra.mxu0 %v3230
        %3459 = vmatpush.msra.mxu0 %v3229
        %3460 = vmatmul.f32.gmra.mxu0 %v1305
        %v3461 = vpop.f32.mrf.mxu0
        %v3462 = vadd.f32 %v3349, %v3461
        %3463 = vmatmul.f32.gmra.mxu0 %v1308
        %v3464 = vpop.f32.mrf.mxu0
        %v3465 = vadd.f32 %v3352, %v3464
        %3466 = vmatmul.f32.gmra.mxu0 %v1311
        %v3467 = vpop.f32.mrf.mxu0
        %v3468 = vadd.f32 %v3355, %v3467
        %3469 = vmatmul.f32.gmra.mxu0 %v1314
        %v3470 = vpop.f32.mrf.mxu0
        %v3471 = vadd.f32 %v3358, %v3470
        %3472 = vmatmul.f32.gmra.mxu0 %v1317
        %v3473 = vpop.f32.mrf.mxu0
        %v3474 = vadd.f32 %v3361, %v3473
        %3475 = vmatmul.f32.gmra.mxu0 %v1320
        %v3476 = vpop.f32.mrf.mxu0
        %v3477 = vadd.f32 %v3364, %v3476
        %3478 = vmatmul.f32.gmra.mxu0 %v1323
        %v3479 = vpop.f32.mrf.mxu0
        %v3480 = vadd.f32 %v3367, %v3479
        %3481 = vmatmul.f32.gmra.mxu0 %v1326
        %v3482 = vpop.f32.mrf.mxu0
        %v3483 = vadd.f32 %v3370, %v3482
        %3484 = vmatmul.f32.gmra.mxu0 %v1329
        %v3485 = vpop.f32.mrf.mxu0
        %v3486 = vadd.f32 %v3373, %v3485
        %3487 = vmatmul.f32.gmra.mxu0 %v1332
        %v3488 = vpop.f32.mrf.mxu0
        %v3489 = vadd.f32 %v3376, %v3488
        %3490 = vmatmul.f32.gmra.mxu0 %v1335
        %v3491 = vpop.f32.mrf.mxu0
        %v3492 = vadd.f32 %v3379, %v3491
        %3493 = vmatmul.f32.gmra.mxu0 %v1338
        %v3494 = vpop.f32.mrf.mxu0
        %v3495 = vadd.f32 %v3382, %v3494
        %3496 = vmatmul.f32.gmra.mxu0 %v1341
        %v3497 = vpop.f32.mrf.mxu0
        %v3498 = vadd.f32 %v3385, %v3497
        %3499 = vmatmul.f32.gmra.mxu0 %v1344
        %v3500 = vpop.f32.mrf.mxu0
        %v3501 = vadd.f32 %v3388, %v3500
        %3502 = vmatmul.f32.gmra.mxu0 %v1347
        %v3503 = vpop.f32.mrf.mxu0
        %v3504 = vadd.f32 %v3391, %v3503
        %3505 = vmatmul.f32.gmra.mxu0 %v1350
        %v3506 = vpop.f32.mrf.mxu0
        %v3507 = vadd.f32 %v3394, %v3506
        %3508 = vmatmul.f32.gmra.mxu0 %v1353
        %v3509 = vpop.f32.mrf.mxu0
        %v3510 = vadd.f32 %v3397, %v3509
        %3511 = vmatmul.f32.gmra.mxu0 %v1356
        %v3512 = vpop.f32.mrf.mxu0
        %v3513 = vadd.f32 %v3400, %v3512
        %3514 = vmatmul.f32.gmra.mxu0 %v1359
        %v3515 = vpop.f32.mrf.mxu0
        %v3516 = vadd.f32 %v3403, %v3515
        %3517 = vmatmul.f32.gmra.mxu0 %v1362
        %v3518 = vpop.f32.mrf.mxu0
        %v3519 = vadd.f32 %v3406, %v3518
        %3520 = vmatmul.f32.gmra.mxu0 %v1365
        %v3521 = vpop.f32.mrf.mxu0
        %v3522 = vadd.f32 %v3409, %v3521
        %3523 = vmatmul.f32.gmra.mxu0 %v1368
        %v3524 = vpop.f32.mrf.mxu0
        %v3525 = vadd.f32 %v3412, %v3524
        %3526 = vmatmul.f32.gmra.mxu0 %v1371
        %v3527 = vpop.f32.mrf.mxu0
        %v3528 = vadd.f32 %v3415, %v3527
        %3529 = vmatmul.f32.gmra.mxu0 %v1374
        %v3530 = vpop.f32.mrf.mxu0
        %v3531 = vadd.f32 %v3418, %v3530
        %3532 = vmatmul.f32.gmra.mxu0 %v1377
        %v3533 = vpop.f32.mrf.mxu0
        %v3534 = vadd.f32 %v3421, %v3533
        %3535 = vmatmul.f32.gmra.mxu0 %v1380
        %v3536 = vpop.f32.mrf.mxu0
        %v3537 = vadd.f32 %v3424, %v3536
        %3538 = vmatmul.f32.gmra.mxu0 %v1383
        %v3539 = vpop.f32.mrf.mxu0
        %v3540 = vadd.f32 %v3427, %v3539
        %3541 = vmatmul.f32.gmra.mxu0 %v1386
        %v3542 = vpop.f32.mrf.mxu0
        %v3543 = vadd.f32 %v3430, %v3542
        %3544 = vmatmul.f32.gmra.mxu0 %v1389
        %v3545 = vpop.f32.mrf.mxu0
        %v3546 = vadd.f32 %v3433, %v3545
        %3547 = vmatmul.f32.gmra.mxu0 %v1392
        %v3548 = vpop.f32.mrf.mxu0
        %v3549 = vadd.f32 %v3436, %v3548
        %3550 = vmatmul.f32.gmra.mxu0 %v1395
        %v3551 = vpop.f32.mrf.mxu0
        %v3552 = vadd.f32 %v3439, %v3551
        %3553 = vmatmul.f32.gmra.mxu0 %v1398
        %v3554 = vpop.f32.mrf.mxu0
        %v3555 = vadd.f32 %v3442, %v3554
        %3556 = vdwg.mxu0
        %v3557 = vld [vmem:[%s29] sm:$0x1]
        %v3559 = vperm.slane %v3557, 0
        %v3561 = vadd.f32 %v3462, %v3559
        %v3562 = vadd.f32 %v3465, %v3559
        %v3563 = vadd.f32 %v3468, %v3559
        %v3564 = vadd.f32 %v3471, %v3559
        %v3565 = vadd.f32 %v3474, %v3559
        %v3566 = vadd.f32 %v3477, %v3559
        %v3567 = vadd.f32 %v3480, %v3559
        %v3568 = vadd.f32 %v3483, %v3559
        %v3569 = vadd.f32 %v3486, %v3559
        %v3570 = vadd.f32 %v3489, %v3559
        %v3571 = vadd.f32 %v3492, %v3559
        %v3572 = vadd.f32 %v3495, %v3559
        %v3573 = vadd.f32 %v3498, %v3559
        %v3574 = vadd.f32 %v3501, %v3559
        %v3575 = vadd.f32 %v3504, %v3559
        %v3576 = vadd.f32 %v3507, %v3559
        %v3577 = vadd.f32 %v3510, %v3559
        %v3578 = vadd.f32 %v3513, %v3559
        %v3579 = vadd.f32 %v3516, %v3559
        %v3580 = vadd.f32 %v3519, %v3559
        %v3581 = vadd.f32 %v3522, %v3559
        %v3582 = vadd.f32 %v3525, %v3559
        %v3583 = vadd.f32 %v3528, %v3559
        %v3584 = vadd.f32 %v3531, %v3559
        %v3585 = vadd.f32 %v3534, %v3559
        %v3586 = vadd.f32 %v3537, %v3559
        %v3587 = vadd.f32 %v3540, %v3559
        %v3588 = vadd.f32 %v3543, %v3559
        %v3589 = vadd.f32 %v3546, %v3559
        %v3590 = vadd.f32 %v3549, %v3559
        %v3591 = vadd.f32 %v3552, %v3559
        %v3592 = vadd.f32 %v3555, %v3559
        %vm3593 = vcmp.gt.f32.partialorder %v3561, 0.0
        %vm3594 = vcmp.gt.f32.partialorder %v3562, 0.0
        %vm3595 = vcmp.gt.f32.partialorder %v3563, 0.0
        %vm3596 = vcmp.gt.f32.partialorder %v3564, 0.0
        %vm3597 = vcmp.gt.f32.partialorder %v3565, 0.0
        %vm3598 = vcmp.gt.f32.partialorder %v3566, 0.0
        %vm3599 = vcmp.gt.f32.partialorder %v3567, 0.0
        %vm3600 = vcmp.gt.f32.partialorder %v3568, 0.0
        %vm3601 = vcmp.gt.f32.partialorder %v3569, 0.0
        %vm3602 = vcmp.gt.f32.partialorder %v3570, 0.0
        %vm3603 = vcmp.gt.f32.partialorder %v3571, 0.0
        %vm3604 = vcmp.gt.f32.partialorder %v3572, 0.0
        %vm3605 = vcmp.gt.f32.partialorder %v3573, 0.0
        %vm3606 = vcmp.gt.f32.partialorder %v3574, 0.0
        %vm3607 = vcmp.gt.f32.partialorder %v3575, 0.0
        %vm3608 = vcmp.gt.f32.partialorder %v3576, 0.0
        %vm3609 = vcmp.gt.f32.partialorder %v3577, 0.0
        %vm3610 = vcmp.gt.f32.partialorder %v3578, 0.0
        %vm3611 = vcmp.gt.f32.partialorder %v3579, 0.0
        %vm3612 = vcmp.gt.f32.partialorder %v3580, 0.0
        %vm3613 = vcmp.gt.f32.partialorder %v3581, 0.0
        %vm3614 = vcmp.gt.f32.partialorder %v3582, 0.0
        %vm3615 = vcmp.gt.f32.partialorder %v3583, 0.0
        %vm3616 = vcmp.gt.f32.partialorder %v3584, 0.0
        %vm3617 = vcmp.gt.f32.partialorder %v3585, 0.0
        %vm3618 = vcmp.gt.f32.partialorder %v3586, 0.0
        %vm3619 = vcmp.gt.f32.partialorder %v3587, 0.0
        %vm3620 = vcmp.gt.f32.partialorder %v3588, 0.0
        %vm3621 = vcmp.gt.f32.partialorder %v3589, 0.0
        %vm3622 = vcmp.gt.f32.partialorder %v3590, 0.0
        %vm3623 = vcmp.gt.f32.partialorder %v3591, 0.0
        %vm3624 = vcmp.gt.f32.partialorder %v3592, 0.0
        %v3625 = vmul.f32 %v3561, 0.01
        %v3626 = vmul.f32 %v3562, 0.01
        %v3627 = vmul.f32 %v3563, 0.01
        %v3628 = vmul.f32 %v3564, 0.01
        %v3629 = vmul.f32 %v3565, 0.01
        %v3630 = vmul.f32 %v3566, 0.01
        %v3631 = vmul.f32 %v3567, 0.01
        %v3632 = vmul.f32 %v3568, 0.01
        %v3633 = vmul.f32 %v3569, 0.01
        %v3634 = vmul.f32 %v3570, 0.01
        %v3635 = vmul.f32 %v3571, 0.01
        %v3636 = vmul.f32 %v3572, 0.01
        %v3637 = vmul.f32 %v3573, 0.01
        %v3638 = vmul.f32 %v3574, 0.01
        %v3639 = vmul.f32 %v3575, 0.01
        %v3640 = vmul.f32 %v3576, 0.01
        %v3641 = vmul.f32 %v3577, 0.01
        %v3642 = vmul.f32 %v3578, 0.01
        %v3643 = vmul.f32 %v3579, 0.01
        %v3644 = vmul.f32 %v3580, 0.01
        %v3645 = vmul.f32 %v3581, 0.01
        %v3646 = vmul.f32 %v3582, 0.01
        %v3647 = vmul.f32 %v3583, 0.01
        %v3648 = vmul.f32 %v3584, 0.01
        %v3649 = vmul.f32 %v3585, 0.01
        %v3650 = vmul.f32 %v3586, 0.01
        %v3651 = vmul.f32 %v3587, 0.01
        %v3652 = vmul.f32 %v3588, 0.01
        %v3653 = vmul.f32 %v3589, 0.01
        %v3654 = vmul.f32 %v3590, 0.01
        %v3655 = vmul.f32 %v3591, 0.01
        %v3656 = vmul.f32 %v3592, 0.01
        %v3657 = vsel %vm3593, %v3561, %v3625
        %v3658 = vsel %vm3594, %v3562, %v3626
        %v3659 = vsel %vm3595, %v3563, %v3627
        %v3660 = vsel %vm3596, %v3564, %v3628
        %v3661 = vsel %vm3597, %v3565, %v3629
        %v3662 = vsel %vm3598, %v3566, %v3630
        %v3663 = vsel %vm3599, %v3567, %v3631
        %v3664 = vsel %vm3600, %v3568, %v3632
        %v3665 = vsel %vm3601, %v3569, %v3633
        %v3666 = vsel %vm3602, %v3570, %v3634
        %v3667 = vsel %vm3603, %v3571, %v3635
        %v3668 = vsel %vm3604, %v3572, %v3636
        %v3669 = vsel %vm3605, %v3573, %v3637
        %v3670 = vsel %vm3606, %v3574, %v3638
        %v3671 = vsel %vm3607, %v3575, %v3639
        %v3672 = vsel %vm3608, %v3576, %v3640
        %v3673 = vsel %vm3609, %v3577, %v3641
        %v3674 = vsel %vm3610, %v3578, %v3642
        %v3675 = vsel %vm3611, %v3579, %v3643
        %v3676 = vsel %vm3612, %v3580, %v3644
        %v3677 = vsel %vm3613, %v3581, %v3645
        %v3678 = vsel %vm3614, %v3582, %v3646
        %v3679 = vsel %vm3615, %v3583, %v3647
        %v3680 = vsel %vm3616, %v3584, %v3648
        %v3681 = vsel %vm3617, %v3585, %v3649
        %v3682 = vsel %vm3618, %v3586, %v3650
        %v3683 = vsel %vm3619, %v3587, %v3651
        %v3684 = vsel %vm3620, %v3588, %v3652
        %v3685 = vsel %vm3621, %v3589, %v3653
        %v3686 = vsel %vm3622, %v3590, %v3654
        %v3687 = vsel %vm3623, %v3591, %v3655
        %v3688 = vsel %vm3624, %v3592, %v3656
        %v3689 = vld [vmem:[%s31] sm:$0xff]
        %v3690 = vld [vmem:[%s31 + $0x8] sm:$0xff]
        %v3691 = vld [vmem:[%s31 + $0x10] sm:$0xff]
        %v3692 = vld [vmem:[%s31 + $0x18] sm:$0xff]
        %v3693 = vld [vmem:[%s31 + $0x20] sm:$0xff]
        %v3694 = vld [vmem:[%s31 + $0x28] sm:$0xff]
        %v3695 = vld [vmem:[%s31 + $0x30] sm:$0xff]
        %v3696 = vld [vmem:[%s31 + $0x38] sm:$0xff]
        %v3697 = vld [vmem:[%s33] sm:$0x1]
        %v3699 = vperm.slane %v3697, 0
        %v3702 = vsel %vm1621, %v3657, 0
        %v3705 = vsel %vm1621, %v3658, 0
        %v3708 = vsel %vm1621, %v3659, 0
        %v3711 = vsel %vm1621, %v3660, 0
        %v3714 = vsel %vm1621, %v3661, 0
        %v3717 = vsel %vm1621, %v3662, 0
        %v3720 = vsel %vm1621, %v3663, 0
        %v3723 = vsel %vm1621, %v3664, 0
        %v3726 = vsel %vm1621, %v3665, 0
        %v3729 = vsel %vm1621, %v3666, 0
        %v3732 = vsel %vm1621, %v3667, 0
        %v3735 = vsel %vm1621, %v3668, 0
        %v3738 = vsel %vm1621, %v3669, 0
        %v3741 = vsel %vm1621, %v3670, 0
        %v3744 = vsel %vm1621, %v3671, 0
        %v3747 = vsel %vm1621, %v3672, 0
        %v3750 = vsel %vm1621, %v3673, 0
        %v3753 = vsel %vm1621, %v3674, 0
        %v3756 = vsel %vm1621, %v3675, 0
        %v3759 = vsel %vm1621, %v3676, 0
        %v3762 = vsel %vm1621, %v3677, 0
        %v3765 = vsel %vm1621, %v3678, 0
        %v3768 = vsel %vm1621, %v3679, 0
        %v3771 = vsel %vm1621, %v3680, 0
        %v3774 = vsel %vm1621, %v3681, 0
        %v3777 = vsel %vm1621, %v3682, 0
        %v3780 = vsel %vm1621, %v3683, 0
        %v3783 = vsel %vm1621, %v3684, 0
        %v3786 = vsel %vm1621, %v3685, 0
        %v3789 = vsel %vm1621, %v3686, 0
        %v3792 = vsel %vm1621, %v3687, 0
        %v3795 = vsel %vm1621, %v3688, 0
        %3797 = vmatpush.msra.mxu0 0.0
        %3798 = vmatpush.msra.mxu0 0.0
        %3799 = vmatpush.msra.mxu0 0.0
        %3800 = vmatpush.msra.mxu0 0.0
        %3801 = vmatpush.msra.mxu0 0.0
        %3802 = vmatpush.msra.mxu0 0.0
        %3803 = vmatpush.msra.mxu0 0.0
        %3804 = vmatpush.msra.mxu0 0.0
        %3805 = vmatpush.msra.mxu0 %v3696
        %3806 = vmatpush.msra.mxu0 %v3695
        %3807 = vmatpush.msra.mxu0 %v3694
        %3808 = vmatpush.msra.mxu0 %v3693
        %3809 = vmatpush.msra.mxu0 %v3692
        %3810 = vmatpush.msra.mxu0 %v3691
        %3811 = vmatpush.msra.mxu0 %v3690
        %3812 = vmatpush.msra.mxu0 %v3689
        %3813 = vmatmul.f32.gmra.mxu0 %v3702
        %v3814 = vpop.f32.mrf.mxu0
        %v3815 = vadd.f32 %v3699, %v3814
        %3816 = vmatmul.f32.gmra.mxu0 %v3705
        %v3817 = vpop.f32.mrf.mxu0
        %v3818 = vadd.f32 %v3699, %v3817
        %3819 = vmatmul.f32.gmra.mxu0 %v3708
        %v3820 = vpop.f32.mrf.mxu0
        %v3821 = vadd.f32 %v3699, %v3820
        %3822 = vmatmul.f32.gmra.mxu0 %v3711
        %v3823 = vpop.f32.mrf.mxu0
        %v3824 = vadd.f32 %v3699, %v3823
        %3825 = vmatmul.f32.gmra.mxu0 %v3714
        %v3826 = vpop.f32.mrf.mxu0
        %v3827 = vadd.f32 %v3699, %v3826
        %3828 = vmatmul.f32.gmra.mxu0 %v3717
        %v3829 = vpop.f32.mrf.mxu0
        %v3830 = vadd.f32 %v3699, %v3829
        %3831 = vmatmul.f32.gmra.mxu0 %v3720
        %v3832 = vpop.f32.mrf.mxu0
        %v3833 = vadd.f32 %v3699, %v3832
        %3834 = vmatmul.f32.gmra.mxu0 %v3723
        %v3835 = vpop.f32.mrf.mxu0
        %v3836 = vadd.f32 %v3699, %v3835
        %3837 = vmatmul.f32.gmra.mxu0 %v3726
        %v3838 = vpop.f32.mrf.mxu0
        %v3839 = vadd.f32 %v3699, %v3838
        %3840 = vmatmul.f32.gmra.mxu0 %v3729
        %v3841 = vpop.f32.mrf.mxu0
        %v3842 = vadd.f32 %v3699, %v3841
        %3843 = vmatmul.f32.gmra.mxu0 %v3732
        %v3844 = vpop.f32.mrf.mxu0
        %v3845 = vadd.f32 %v3699, %v3844
        %3846 = vmatmul.f32.gmra.mxu0 %v3735
        %v3847 = vpop.f32.mrf.mxu0
        %v3848 = vadd.f32 %v3699, %v3847
        %3849 = vmatmul.f32.gmra.mxu0 %v3738
        %v3850 = vpop.f32.mrf.mxu0
        %v3851 = vadd.f32 %v3699, %v3850
        %3852 = vmatmul.f32.gmra.mxu0 %v3741
        %v3853 = vpop.f32.mrf.mxu0
        %v3854 = vadd.f32 %v3699, %v3853
        %3855 = vmatmul.f32.gmra.mxu0 %v3744
        %v3856 = vpop.f32.mrf.mxu0
        %v3857 = vadd.f32 %v3699, %v3856
        %3858 = vmatmul.f32.gmra.mxu0 %v3747
        %v3859 = vpop.f32.mrf.mxu0
        %v3860 = vadd.f32 %v3699, %v3859
        %3861 = vmatmul.f32.gmra.mxu0 %v3750
        %v3862 = vpop.f32.mrf.mxu0
        %v3863 = vadd.f32 %v3699, %v3862
        %3864 = vmatmul.f32.gmra.mxu0 %v3753
        %v3865 = vpop.f32.mrf.mxu0
        %v3866 = vadd.f32 %v3699, %v3865
        %3867 = vmatmul.f32.gmra.mxu0 %v3756
        %v3868 = vpop.f32.mrf.mxu0
        %v3869 = vadd.f32 %v3699, %v3868
        %3870 = vmatmul.f32.gmra.mxu0 %v3759
        %v3871 = vpop.f32.mrf.mxu0
        %v3872 = vadd.f32 %v3699, %v3871
        %3873 = vmatmul.f32.gmra.mxu0 %v3762
        %v3874 = vpop.f32.mrf.mxu0
        %v3875 = vadd.f32 %v3699, %v3874
        %3876 = vmatmul.f32.gmra.mxu0 %v3765
        %v3877 = vpop.f32.mrf.mxu0
        %v3878 = vadd.f32 %v3699, %v3877
        %3879 = vmatmul.f32.gmra.mxu0 %v3768
        %v3880 = vpop.f32.mrf.mxu0
        %v3881 = vadd.f32 %v3699, %v3880
        %3882 = vmatmul.f32.gmra.mxu0 %v3771
        %v3883 = vpop.f32.mrf.mxu0
        %v3884 = vadd.f32 %v3699, %v3883
        %3885 = vmatmul.f32.gmra.mxu0 %v3774
        %v3886 = vpop.f32.mrf.mxu0
        %v3887 = vadd.f32 %v3699, %v3886
        %3888 = vmatmul.f32.gmra.mxu0 %v3777
        %v3889 = vpop.f32.mrf.mxu0
        %v3890 = vadd.f32 %v3699, %v3889
        %3891 = vmatmul.f32.gmra.mxu0 %v3780
        %v3892 = vpop.f32.mrf.mxu0
        %v3893 = vadd.f32 %v3699, %v3892
        %3894 = vmatmul.f32.gmra.mxu0 %v3783
        %v3895 = vpop.f32.mrf.mxu0
        %v3896 = vadd.f32 %v3699, %v3895
        %3897 = vmatmul.f32.gmra.mxu0 %v3786
        %v3898 = vpop.f32.mrf.mxu0
        %v3899 = vadd.f32 %v3699, %v3898
        %3900 = vmatmul.f32.gmra.mxu0 %v3789
        %v3901 = vpop.f32.mrf.mxu0
        %v3902 = vadd.f32 %v3699, %v3901
        %3903 = vmatmul.f32.gmra.mxu0 %v3792
        %v3904 = vpop.f32.mrf.mxu0
        %v3905 = vadd.f32 %v3699, %v3904
        %3906 = vmatmul.f32.gmra.mxu0 %v3795
        %v3907 = vpop.f32.mrf.mxu0
        %v3908 = vadd.f32 %v3699, %v3907
        %3909 = vdwg.mxu0
        %vm3910 = vcmp.gt.f32.partialorder %v3815, 0.0
        %vm3911 = vcmp.gt.f32.partialorder %v3818, 0.0
        %vm3912 = vcmp.gt.f32.partialorder %v3821, 0.0
        %vm3913 = vcmp.gt.f32.partialorder %v3824, 0.0
        %vm3914 = vcmp.gt.f32.partialorder %v3827, 0.0
        %vm3915 = vcmp.gt.f32.partialorder %v3830, 0.0
        %vm3916 = vcmp.gt.f32.partialorder %v3833, 0.0
        %vm3917 = vcmp.gt.f32.partialorder %v3836, 0.0
        %vm3918 = vcmp.gt.f32.partialorder %v3839, 0.0
        %vm3919 = vcmp.gt.f32.partialorder %v3842, 0.0
        %vm3920 = vcmp.gt.f32.partialorder %v3845, 0.0
        %vm3921 = vcmp.gt.f32.partialorder %v3848, 0.0
        %vm3922 = vcmp.gt.f32.partialorder %v3851, 0.0
        %vm3923 = vcmp.gt.f32.partialorder %v3854, 0.0
        %vm3924 = vcmp.gt.f32.partialorder %v3857, 0.0
        %vm3925 = vcmp.gt.f32.partialorder %v3860, 0.0
        %vm3926 = vcmp.gt.f32.partialorder %v3863, 0.0
        %vm3927 = vcmp.gt.f32.partialorder %v3866, 0.0
        %vm3928 = vcmp.gt.f32.partialorder %v3869, 0.0
        %vm3929 = vcmp.gt.f32.partialorder %v3872, 0.0
        %vm3930 = vcmp.gt.f32.partialorder %v3875, 0.0
        %vm3931 = vcmp.gt.f32.partialorder %v3878, 0.0
        %vm3932 = vcmp.gt.f32.partialorder %v3881, 0.0
        %vm3933 = vcmp.gt.f32.partialorder %v3884, 0.0
        %vm3934 = vcmp.gt.f32.partialorder %v3887, 0.0
        %vm3935 = vcmp.gt.f32.partialorder %v3890, 0.0
        %vm3936 = vcmp.gt.f32.partialorder %v3893, 0.0
        %vm3937 = vcmp.gt.f32.partialorder %v3896, 0.0
        %vm3938 = vcmp.gt.f32.partialorder %v3899, 0.0
        %vm3939 = vcmp.gt.f32.partialorder %v3902, 0.0
        %vm3940 = vcmp.gt.f32.partialorder %v3905, 0.0
        %vm3941 = vcmp.gt.f32.partialorder %v3908, 0.0
        %v3942 = vmul.f32 %v3815, 0.01
        %v3943 = vmul.f32 %v3818, 0.01
        %v3944 = vmul.f32 %v3821, 0.01
        %v3945 = vmul.f32 %v3824, 0.01
        %v3946 = vmul.f32 %v3827, 0.01
        %v3947 = vmul.f32 %v3830, 0.01
        %v3948 = vmul.f32 %v3833, 0.01
        %v3949 = vmul.f32 %v3836, 0.01
        %v3950 = vmul.f32 %v3839, 0.01
        %v3951 = vmul.f32 %v3842, 0.01
        %v3952 = vmul.f32 %v3845, 0.01
        %v3953 = vmul.f32 %v3848, 0.01
        %v3954 = vmul.f32 %v3851, 0.01
        %v3955 = vmul.f32 %v3854, 0.01
        %v3956 = vmul.f32 %v3857, 0.01
        %v3957 = vmul.f32 %v3860, 0.01
        %v3958 = vmul.f32 %v3863, 0.01
        %v3959 = vmul.f32 %v3866, 0.01
        %v3960 = vmul.f32 %v3869, 0.01
        %v3961 = vmul.f32 %v3872, 0.01
        %v3962 = vmul.f32 %v3875, 0.01
        %v3963 = vmul.f32 %v3878, 0.01
        %v3964 = vmul.f32 %v3881, 0.01
        %v3965 = vmul.f32 %v3884, 0.01
        %v3966 = vmul.f32 %v3887, 0.01
        %v3967 = vmul.f32 %v3890, 0.01
        %v3968 = vmul.f32 %v3893, 0.01
        %v3969 = vmul.f32 %v3896, 0.01
        %v3970 = vmul.f32 %v3899, 0.01
        %v3971 = vmul.f32 %v3902, 0.01
        %v3972 = vmul.f32 %v3905, 0.01
        %v3973 = vmul.f32 %v3908, 0.01
        %v3974 = vsel %vm3910, %v3815, %v3942
        %v3975 = vsel %vm3911, %v3818, %v3943
        %v3976 = vsel %vm3912, %v3821, %v3944
        %v3977 = vsel %vm3913, %v3824, %v3945
        %v3978 = vsel %vm3914, %v3827, %v3946
        %v3979 = vsel %vm3915, %v3830, %v3947
        %v3980 = vsel %vm3916, %v3833, %v3948
        %v3981 = vsel %vm3917, %v3836, %v3949
        %v3982 = vsel %vm3918, %v3839, %v3950
        %v3983 = vsel %vm3919, %v3842, %v3951
        %v3984 = vsel %vm3920, %v3845, %v3952
        %v3985 = vsel %vm3921, %v3848, %v3953
        %v3986 = vsel %vm3922, %v3851, %v3954
        %v3987 = vsel %vm3923, %v3854, %v3955
        %v3988 = vsel %vm3924, %v3857, %v3956
        %v3989 = vsel %vm3925, %v3860, %v3957
        %v3990 = vsel %vm3926, %v3863, %v3958
        %v3991 = vsel %vm3927, %v3866, %v3959
        %v3992 = vsel %vm3928, %v3869, %v3960
        %v3993 = vsel %vm3929, %v3872, %v3961
        %v3994 = vsel %vm3930, %v3875, %v3962
        %v3995 = vsel %vm3931, %v3878, %v3963
        %v3996 = vsel %vm3932, %v3881, %v3964
        %v3997 = vsel %vm3933, %v3884, %v3965
        %v3998 = vsel %vm3934, %v3887, %v3966
        %v3999 = vsel %vm3935, %v3890, %v3967
        %v4000 = vsel %vm3936, %v3893, %v3968
        %v4001 = vsel %vm3937, %v3896, %v3969
        %v4002 = vsel %vm3938, %v3899, %v3970
        %v4003 = vsel %vm3939, %v3902, %v3971
        %v4004 = vsel %vm3940, %v3905, %v3972
        %v4005 = vsel %vm3941, %v3908, %v3973
        %v4006 = vld [vmem:[%s35] sm:$0xff]
        %v4007 = vld [vmem:[%s35 + $0x8] sm:$0xff]
        %v4008 = vld [vmem:[%s35 + $0x10] sm:$0xff]
        %v4009 = vld [vmem:[%s35 + $0x18] sm:$0xff]
        %v4010 = vld [vmem:[%s35 + $0x20] sm:$0xff]
        %v4011 = vld [vmem:[%s35 + $0x28] sm:$0xff]
        %v4012 = vld [vmem:[%s35 + $0x30] sm:$0xff]
        %v4013 = vld [vmem:[%s35 + $0x38] sm:$0xff]
        %v4014 = vld [vmem:[%s37] sm:$0x1]
        %v4016 = vperm.slane %v4014, 0
        %v4019 = vsel %vm1621, %v3974, 0
        %v4022 = vsel %vm1621, %v3975, 0
        %v4025 = vsel %vm1621, %v3976, 0
        %v4028 = vsel %vm1621, %v3977, 0
        %v4031 = vsel %vm1621, %v3978, 0
        %v4034 = vsel %vm1621, %v3979, 0
        %v4037 = vsel %vm1621, %v3980, 0
        %v4040 = vsel %vm1621, %v3981, 0
        %v4043 = vsel %vm1621, %v3982, 0
        %v4046 = vsel %vm1621, %v3983, 0
        %v4049 = vsel %vm1621, %v3984, 0
        %v4052 = vsel %vm1621, %v3985, 0
        %v4055 = vsel %vm1621, %v3986, 0
        %v4058 = vsel %vm1621, %v3987, 0
        %v4061 = vsel %vm1621, %v3988, 0
        %v4064 = vsel %vm1621, %v3989, 0
        %v4067 = vsel %vm1621, %v3990, 0
        %v4070 = vsel %vm1621, %v3991, 0
        %v4073 = vsel %vm1621, %v3992, 0
        %v4076 = vsel %vm1621, %v3993, 0
        %v4079 = vsel %vm1621, %v3994, 0
        %v4082 = vsel %vm1621, %v3995, 0
        %v4085 = vsel %vm1621, %v3996, 0
        %v4088 = vsel %vm1621, %v3997, 0
        %v4091 = vsel %vm1621, %v3998, 0
        %v4094 = vsel %vm1621, %v3999, 0
        %v4097 = vsel %vm1621, %v4000, 0
        %v4100 = vsel %vm1621, %v4001, 0
        %v4103 = vsel %vm1621, %v4002, 0
        %v4106 = vsel %vm1621, %v4003, 0
        %v4109 = vsel %vm1621, %v4004, 0
        %v4112 = vsel %vm1621, %v4005, 0
        %4114 = vmatpush.msra.mxu0 0.0
        %4115 = vmatpush.msra.mxu0 0.0
        %4116 = vmatpush.msra.mxu0 0.0
        %4117 = vmatpush.msra.mxu0 0.0
        %4118 = vmatpush.msra.mxu0 0.0
        %4119 = vmatpush.msra.mxu0 0.0
        %4120 = vmatpush.msra.mxu0 0.0
        %4121 = vmatpush.msra.mxu0 0.0
        %4122 = vmatpush.msra.mxu0 %v4013
        %4123 = vmatpush.msra.mxu0 %v4012
        %4124 = vmatpush.msra.mxu0 %v4011
        %4125 = vmatpush.msra.mxu0 %v4010
        %4126 = vmatpush.msra.mxu0 %v4009
        %4127 = vmatpush.msra.mxu0 %v4008
        %4128 = vmatpush.msra.mxu0 %v4007
        %4129 = vmatpush.msra.mxu0 %v4006
        %4130 = vmatmul.f32.gmra.mxu0 %v4019
        %v4131 = vpop.f32.mrf.mxu0
        %v4132 = vadd.f32 %v4016, %v4131
        %4133 = vmatmul.f32.gmra.mxu0 %v4022
        %v4134 = vpop.f32.mrf.mxu0
        %v4135 = vadd.f32 %v4016, %v4134
        %4136 = vmatmul.f32.gmra.mxu0 %v4025
        %v4137 = vpop.f32.mrf.mxu0
        %v4138 = vadd.f32 %v4016, %v4137
        %4139 = vmatmul.f32.gmra.mxu0 %v4028
        %v4140 = vpop.f32.mrf.mxu0
        %v4141 = vadd.f32 %v4016, %v4140
        %4142 = vmatmul.f32.gmra.mxu0 %v4031
        %v4143 = vpop.f32.mrf.mxu0
        %v4144 = vadd.f32 %v4016, %v4143
        %4145 = vmatmul.f32.gmra.mxu0 %v4034
        %v4146 = vpop.f32.mrf.mxu0
        %v4147 = vadd.f32 %v4016, %v4146
        %4148 = vmatmul.f32.gmra.mxu0 %v4037
        %v4149 = vpop.f32.mrf.mxu0
        %v4150 = vadd.f32 %v4016, %v4149
        %4151 = vmatmul.f32.gmra.mxu0 %v4040
        %v4152 = vpop.f32.mrf.mxu0
        %v4153 = vadd.f32 %v4016, %v4152
        %4154 = vmatmul.f32.gmra.mxu0 %v4043
        %v4155 = vpop.f32.mrf.mxu0
        %v4156 = vadd.f32 %v4016, %v4155
        %4157 = vmatmul.f32.gmra.mxu0 %v4046
        %v4158 = vpop.f32.mrf.mxu0
        %v4159 = vadd.f32 %v4016, %v4158
        %4160 = vmatmul.f32.gmra.mxu0 %v4049
        %v4161 = vpop.f32.mrf.mxu0
        %v4162 = vadd.f32 %v4016, %v4161
        %4163 = vmatmul.f32.gmra.mxu0 %v4052
        %v4164 = vpop.f32.mrf.mxu0
        %v4165 = vadd.f32 %v4016, %v4164
        %4166 = vmatmul.f32.gmra.mxu0 %v4055
        %v4167 = vpop.f32.mrf.mxu0
        %v4168 = vadd.f32 %v4016, %v4167
        %4169 = vmatmul.f32.gmra.mxu0 %v4058
        %v4170 = vpop.f32.mrf.mxu0
        %v4171 = vadd.f32 %v4016, %v4170
        %4172 = vmatmul.f32.gmra.mxu0 %v4061
        %v4173 = vpop.f32.mrf.mxu0
        %v4174 = vadd.f32 %v4016, %v4173
        %4175 = vmatmul.f32.gmra.mxu0 %v4064
        %v4176 = vpop.f32.mrf.mxu0
        %v4177 = vadd.f32 %v4016, %v4176
        %4178 = vmatmul.f32.gmra.mxu0 %v4067
        %v4179 = vpop.f32.mrf.mxu0
        %v4180 = vadd.f32 %v4016, %v4179
        %4181 = vmatmul.f32.gmra.mxu0 %v4070
        %v4182 = vpop.f32.mrf.mxu0
        %v4183 = vadd.f32 %v4016, %v4182
        %4184 = vmatmul.f32.gmra.mxu0 %v4073
        %v4185 = vpop.f32.mrf.mxu0
        %v4186 = vadd.f32 %v4016, %v4185
        %4187 = vmatmul.f32.gmra.mxu0 %v4076
        %v4188 = vpop.f32.mrf.mxu0
        %v4189 = vadd.f32 %v4016, %v4188
        %4190 = vmatmul.f32.gmra.mxu0 %v4079
        %v4191 = vpop.f32.mrf.mxu0
        %v4192 = vadd.f32 %v4016, %v4191
        %4193 = vmatmul.f32.gmra.mxu0 %v4082
        %v4194 = vpop.f32.mrf.mxu0
        %v4195 = vadd.f32 %v4016, %v4194
        %4196 = vmatmul.f32.gmra.mxu0 %v4085
        %v4197 = vpop.f32.mrf.mxu0
        %v4198 = vadd.f32 %v4016, %v4197
        %4199 = vmatmul.f32.gmra.mxu0 %v4088
        %v4200 = vpop.f32.mrf.mxu0
        %v4201 = vadd.f32 %v4016, %v4200
        %4202 = vmatmul.f32.gmra.mxu0 %v4091
        %v4203 = vpop.f32.mrf.mxu0
        %v4204 = vadd.f32 %v4016, %v4203
        %4205 = vmatmul.f32.gmra.mxu0 %v4094
        %v4206 = vpop.f32.mrf.mxu0
        %v4207 = vadd.f32 %v4016, %v4206
        %4208 = vmatmul.f32.gmra.mxu0 %v4097
        %v4209 = vpop.f32.mrf.mxu0
        %v4210 = vadd.f32 %v4016, %v4209
        %4211 = vmatmul.f32.gmra.mxu0 %v4100
        %v4212 = vpop.f32.mrf.mxu0
        %v4213 = vadd.f32 %v4016, %v4212
        %4214 = vmatmul.f32.gmra.mxu0 %v4103
        %v4215 = vpop.f32.mrf.mxu0
        %v4216 = vadd.f32 %v4016, %v4215
        %4217 = vmatmul.f32.gmra.mxu0 %v4106
        %v4218 = vpop.f32.mrf.mxu0
        %v4219 = vadd.f32 %v4016, %v4218
        %4220 = vmatmul.f32.gmra.mxu0 %v4109
        %v4221 = vpop.f32.mrf.mxu0
        %v4222 = vadd.f32 %v4016, %v4221
        %4223 = vmatmul.f32.gmra.mxu0 %v4112
        %v4224 = vpop.f32.mrf.mxu0
        %v4225 = vadd.f32 %v4016, %v4224
        %4226 = vdwg.mxu0
        %vm4227 = vcmp.gt.f32.partialorder %v4132, 0.0
        %vm4228 = vcmp.gt.f32.partialorder %v4135, 0.0
        %vm4229 = vcmp.gt.f32.partialorder %v4138, 0.0
        %vm4230 = vcmp.gt.f32.partialorder %v4141, 0.0
        %vm4231 = vcmp.gt.f32.partialorder %v4144, 0.0
        %vm4232 = vcmp.gt.f32.partialorder %v4147, 0.0
        %vm4233 = vcmp.gt.f32.partialorder %v4150, 0.0
        %vm4234 = vcmp.gt.f32.partialorder %v4153, 0.0
        %vm4235 = vcmp.gt.f32.partialorder %v4156, 0.0
        %vm4236 = vcmp.gt.f32.partialorder %v4159, 0.0
        %vm4237 = vcmp.gt.f32.partialorder %v4162, 0.0
        %vm4238 = vcmp.gt.f32.partialorder %v4165, 0.0
        %vm4239 = vcmp.gt.f32.partialorder %v4168, 0.0
        %vm4240 = vcmp.gt.f32.partialorder %v4171, 0.0
        %vm4241 = vcmp.gt.f32.partialorder %v4174, 0.0
        %vm4242 = vcmp.gt.f32.partialorder %v4177, 0.0
        %vm4243 = vcmp.gt.f32.partialorder %v4180, 0.0
        %vm4244 = vcmp.gt.f32.partialorder %v4183, 0.0
        %vm4245 = vcmp.gt.f32.partialorder %v4186, 0.0
        %vm4246 = vcmp.gt.f32.partialorder %v4189, 0.0
        %vm4247 = vcmp.gt.f32.partialorder %v4192, 0.0
        %vm4248 = vcmp.gt.f32.partialorder %v4195, 0.0
        %vm4249 = vcmp.gt.f32.partialorder %v4198, 0.0
        %vm4250 = vcmp.gt.f32.partialorder %v4201, 0.0
        %vm4251 = vcmp.gt.f32.partialorder %v4204, 0.0
        %vm4252 = vcmp.gt.f32.partialorder %v4207, 0.0
        %vm4253 = vcmp.gt.f32.partialorder %v4210, 0.0
        %vm4254 = vcmp.gt.f32.partialorder %v4213, 0.0
        %vm4255 = vcmp.gt.f32.partialorder %v4216, 0.0
        %vm4256 = vcmp.gt.f32.partialorder %v4219, 0.0
        %vm4257 = vcmp.gt.f32.partialorder %v4222, 0.0
        %vm4258 = vcmp.gt.f32.partialorder %v4225, 0.0
        %v4259 = vmul.f32 %v4132, 0.01
        %v4260 = vmul.f32 %v4135, 0.01
        %v4261 = vmul.f32 %v4138, 0.01
        %v4262 = vmul.f32 %v4141, 0.01
        %v4263 = vmul.f32 %v4144, 0.01
        %v4264 = vmul.f32 %v4147, 0.01
        %v4265 = vmul.f32 %v4150, 0.01
        %v4266 = vmul.f32 %v4153, 0.01
        %v4267 = vmul.f32 %v4156, 0.01
        %v4268 = vmul.f32 %v4159, 0.01
        %v4269 = vmul.f32 %v4162, 0.01
        %v4270 = vmul.f32 %v4165, 0.01
        %v4271 = vmul.f32 %v4168, 0.01
        %v4272 = vmul.f32 %v4171, 0.01
        %v4273 = vmul.f32 %v4174, 0.01
        %v4274 = vmul.f32 %v4177, 0.01
        %v4275 = vmul.f32 %v4180, 0.01
        %v4276 = vmul.f32 %v4183, 0.01
        %v4277 = vmul.f32 %v4186, 0.01
        %v4278 = vmul.f32 %v4189, 0.01
        %v4279 = vmul.f32 %v4192, 0.01
        %v4280 = vmul.f32 %v4195, 0.01
        %v4281 = vmul.f32 %v4198, 0.01
        %v4282 = vmul.f32 %v4201, 0.01
        %v4283 = vmul.f32 %v4204, 0.01
        %v4284 = vmul.f32 %v4207, 0.01
        %v4285 = vmul.f32 %v4210, 0.01
        %v4286 = vmul.f32 %v4213, 0.01
        %v4287 = vmul.f32 %v4216, 0.01
        %v4288 = vmul.f32 %v4219, 0.01
        %v4289 = vmul.f32 %v4222, 0.01
        %v4290 = vmul.f32 %v4225, 0.01
        %v4291 = vsel %vm4227, %v4132, %v4259
        %v4292 = vsel %vm4228, %v4135, %v4260
        %v4293 = vsel %vm4229, %v4138, %v4261
        %v4294 = vsel %vm4230, %v4141, %v4262
        %v4295 = vsel %vm4231, %v4144, %v4263
        %v4296 = vsel %vm4232, %v4147, %v4264
        %v4297 = vsel %vm4233, %v4150, %v4265
        %v4298 = vsel %vm4234, %v4153, %v4266
        %v4299 = vsel %vm4235, %v4156, %v4267
        %v4300 = vsel %vm4236, %v4159, %v4268
        %v4301 = vsel %vm4237, %v4162, %v4269
        %v4302 = vsel %vm4238, %v4165, %v4270
        %v4303 = vsel %vm4239, %v4168, %v4271
        %v4304 = vsel %vm4240, %v4171, %v4272
        %v4305 = vsel %vm4241, %v4174, %v4273
        %v4306 = vsel %vm4242, %v4177, %v4274
        %v4307 = vsel %vm4243, %v4180, %v4275
        %v4308 = vsel %vm4244, %v4183, %v4276
        %v4309 = vsel %vm4245, %v4186, %v4277
        %v4310 = vsel %vm4246, %v4189, %v4278
        %v4311 = vsel %vm4247, %v4192, %v4279
        %v4312 = vsel %vm4248, %v4195, %v4280
        %v4313 = vsel %vm4249, %v4198, %v4281
        %v4314 = vsel %vm4250, %v4201, %v4282
        %v4315 = vsel %vm4251, %v4204, %v4283
        %v4316 = vsel %vm4252, %v4207, %v4284
        %v4317 = vsel %vm4253, %v4210, %v4285
        %v4318 = vsel %vm4254, %v4213, %v4286
        %v4319 = vsel %vm4255, %v4216, %v4287
        %v4320 = vsel %vm4256, %v4219, %v4288
        %v4321 = vsel %vm4257, %v4222, %v4289
        %v4322 = vsel %vm4258, %v4225, %v4290
        %v4323 = vld [vmem:[%s39] sm:$0xff]
        %v4324 = vld [vmem:[%s39 + $0x8] sm:$0xff]
        %v4325 = vld [vmem:[%s39 + $0x10] sm:$0xff]
        %v4326 = vld [vmem:[%s39 + $0x18] sm:$0xff]
        %v4327 = vld [vmem:[%s41] sm:$0x1]
        %v4329 = vperm.slane %v4327, 0
        %v4332 = vsel %vm1303, %v4291, 0
        %v4335 = vsel %vm1303, %v4292, 0
        %v4338 = vsel %vm1303, %v4293, 0
        %v4341 = vsel %vm1303, %v4294, 0
        %v4344 = vsel %vm1303, %v4295, 0
        %v4347 = vsel %vm1303, %v4296, 0
        %v4350 = vsel %vm1303, %v4297, 0
        %v4353 = vsel %vm1303, %v4298, 0
        %v4356 = vsel %vm1303, %v4299, 0
        %v4359 = vsel %vm1303, %v4300, 0
        %v4362 = vsel %vm1303, %v4301, 0
        %v4365 = vsel %vm1303, %v4302, 0
        %v4368 = vsel %vm1303, %v4303, 0
        %v4371 = vsel %vm1303, %v4304, 0
        %v4374 = vsel %vm1303, %v4305, 0
        %v4377 = vsel %vm1303, %v4306, 0
        %v4380 = vsel %vm1303, %v4307, 0
        %v4383 = vsel %vm1303, %v4308, 0
        %v4386 = vsel %vm1303, %v4309, 0
        %v4389 = vsel %vm1303, %v4310, 0
        %v4392 = vsel %vm1303, %v4311, 0
        %v4395 = vsel %vm1303, %v4312, 0
        %v4398 = vsel %vm1303, %v4313, 0
        %v4401 = vsel %vm1303, %v4314, 0
        %v4404 = vsel %vm1303, %v4315, 0
        %v4407 = vsel %vm1303, %v4316, 0
        %v4410 = vsel %vm1303, %v4317, 0
        %v4413 = vsel %vm1303, %v4318, 0
        %v4416 = vsel %vm1303, %v4319, 0
        %v4419 = vsel %vm1303, %v4320, 0
        %v4422 = vsel %vm1303, %v4321, 0
        %v4425 = vsel %vm1303, %v4322, 0
        %4427 = vmatpush.msra.mxu0 0.0
        %4428 = vmatpush.msra.mxu0 0.0
        %4429 = vmatpush.msra.mxu0 0.0
        %4430 = vmatpush.msra.mxu0 0.0
        %4431 = vmatpush.msra.mxu0 0.0
        %4432 = vmatpush.msra.mxu0 0.0
        %4433 = vmatpush.msra.mxu0 0.0
        %4434 = vmatpush.msra.mxu0 0.0
        %4435 = vmatpush.msra.mxu0 0.0
        %4436 = vmatpush.msra.mxu0 0.0
        %4437 = vmatpush.msra.mxu0 0.0
        %4438 = vmatpush.msra.mxu0 0.0
        %4439 = vmatpush.msra.mxu0 %v4326
        %4440 = vmatpush.msra.mxu0 %v4325
        %4441 = vmatpush.msra.mxu0 %v4324
        %4442 = vmatpush.msra.mxu0 %v4323
        %4443 = vmatmul.f32.gmra.mxu0 %v4332
        %v4444 = vpop.f32.mrf.mxu0
        %v4445 = vadd.f32 %v4329, %v4444
        %4446 = vmatmul.f32.gmra.mxu0 %v4335
        %v4447 = vpop.f32.mrf.mxu0
        %v4448 = vadd.f32 %v4329, %v4447
        %4449 = vmatmul.f32.gmra.mxu0 %v4338
        %v4450 = vpop.f32.mrf.mxu0
        %v4451 = vadd.f32 %v4329, %v4450
        %4452 = vmatmul.f32.gmra.mxu0 %v4341
        %v4453 = vpop.f32.mrf.mxu0
        %v4454 = vadd.f32 %v4329, %v4453
        %4455 = vmatmul.f32.gmra.mxu0 %v4344
        %v4456 = vpop.f32.mrf.mxu0
        %v4457 = vadd.f32 %v4329, %v4456
        %4458 = vmatmul.f32.gmra.mxu0 %v4347
        %v4459 = vpop.f32.mrf.mxu0
        %v4460 = vadd.f32 %v4329, %v4459
        %4461 = vmatmul.f32.gmra.mxu0 %v4350
        %v4462 = vpop.f32.mrf.mxu0
        %v4463 = vadd.f32 %v4329, %v4462
        %4464 = vmatmul.f32.gmra.mxu0 %v4353
        %v4465 = vpop.f32.mrf.mxu0
        %v4466 = vadd.f32 %v4329, %v4465
        %4467 = vmatmul.f32.gmra.mxu0 %v4356
        %v4468 = vpop.f32.mrf.mxu0
        %v4469 = vadd.f32 %v4329, %v4468
        %4470 = vmatmul.f32.gmra.mxu0 %v4359
        %v4471 = vpop.f32.mrf.mxu0
        %v4472 = vadd.f32 %v4329, %v4471
        %4473 = vmatmul.f32.gmra.mxu0 %v4362
        %v4474 = vpop.f32.mrf.mxu0
        %v4475 = vadd.f32 %v4329, %v4474
        %4476 = vmatmul.f32.gmra.mxu0 %v4365
        %v4477 = vpop.f32.mrf.mxu0
        %v4478 = vadd.f32 %v4329, %v4477
        %4479 = vmatmul.f32.gmra.mxu0 %v4368
        %v4480 = vpop.f32.mrf.mxu0
        %v4481 = vadd.f32 %v4329, %v4480
        %4482 = vmatmul.f32.gmra.mxu0 %v4371
        %v4483 = vpop.f32.mrf.mxu0
        %v4484 = vadd.f32 %v4329, %v4483
        %4485 = vmatmul.f32.gmra.mxu0 %v4374
        %v4486 = vpop.f32.mrf.mxu0
        %v4487 = vadd.f32 %v4329, %v4486
        %4488 = vmatmul.f32.gmra.mxu0 %v4377
        %v4489 = vpop.f32.mrf.mxu0
        %v4490 = vadd.f32 %v4329, %v4489
        %4491 = vmatmul.f32.gmra.mxu0 %v4380
        %v4492 = vpop.f32.mrf.mxu0
        %v4493 = vadd.f32 %v4329, %v4492
        %4494 = vmatmul.f32.gmra.mxu0 %v4383
        %v4495 = vpop.f32.mrf.mxu0
        %v4496 = vadd.f32 %v4329, %v4495
        %4497 = vmatmul.f32.gmra.mxu0 %v4386
        %v4498 = vpop.f32.mrf.mxu0
        %v4499 = vadd.f32 %v4329, %v4498
        %4500 = vmatmul.f32.gmra.mxu0 %v4389
        %v4501 = vpop.f32.mrf.mxu0
        %v4502 = vadd.f32 %v4329, %v4501
        %4503 = vmatmul.f32.gmra.mxu0 %v4392
        %v4504 = vpop.f32.mrf.mxu0
        %v4505 = vadd.f32 %v4329, %v4504
        %4506 = vmatmul.f32.gmra.mxu0 %v4395
        %v4507 = vpop.f32.mrf.mxu0
        %v4508 = vadd.f32 %v4329, %v4507
        %4509 = vmatmul.f32.gmra.mxu0 %v4398
        %v4510 = vpop.f32.mrf.mxu0
        %v4511 = vadd.f32 %v4329, %v4510
        %4512 = vmatmul.f32.gmra.mxu0 %v4401
        %v4513 = vpop.f32.mrf.mxu0
        %v4514 = vadd.f32 %v4329, %v4513
        %4515 = vmatmul.f32.gmra.mxu0 %v4404
        %v4516 = vpop.f32.mrf.mxu0
        %v4517 = vadd.f32 %v4329, %v4516
        %4518 = vmatmul.f32.gmra.mxu0 %v4407
        %v4519 = vpop.f32.mrf.mxu0
        %v4520 = vadd.f32 %v4329, %v4519
        %4521 = vmatmul.f32.gmra.mxu0 %v4410
        %v4522 = vpop.f32.mrf.mxu0
        %v4523 = vadd.f32 %v4329, %v4522
        %4524 = vmatmul.f32.gmra.mxu0 %v4413
        %v4525 = vpop.f32.mrf.mxu0
        %v4526 = vadd.f32 %v4329, %v4525
        %4527 = vmatmul.f32.gmra.mxu0 %v4416
        %v4528 = vpop.f32.mrf.mxu0
        %v4529 = vadd.f32 %v4329, %v4528
        %4530 = vmatmul.f32.gmra.mxu0 %v4419
        %v4531 = vpop.f32.mrf.mxu0
        %v4532 = vadd.f32 %v4329, %v4531
        %4533 = vmatmul.f32.gmra.mxu0 %v4422
        %v4534 = vpop.f32.mrf.mxu0
        %v4535 = vadd.f32 %v4329, %v4534
        %4536 = vmatmul.f32.gmra.mxu0 %v4425
        %v4537 = vpop.f32.mrf.mxu0
        %v4538 = vadd.f32 %v4329, %v4537
        %4539 = vdwg.mxu0
        %vm4540 = vcmp.gt.f32.partialorder %v4445, 0.0
        %vm4541 = vcmp.gt.f32.partialorder %v4448, 0.0
        %vm4542 = vcmp.gt.f32.partialorder %v4451, 0.0
        %vm4543 = vcmp.gt.f32.partialorder %v4454, 0.0
        %vm4544 = vcmp.gt.f32.partialorder %v4457, 0.0
        %vm4545 = vcmp.gt.f32.partialorder %v4460, 0.0
        %vm4546 = vcmp.gt.f32.partialorder %v4463, 0.0
        %vm4547 = vcmp.gt.f32.partialorder %v4466, 0.0
        %vm4548 = vcmp.gt.f32.partialorder %v4469, 0.0
        %vm4549 = vcmp.gt.f32.partialorder %v4472, 0.0
        %vm4550 = vcmp.gt.f32.partialorder %v4475, 0.0
        %vm4551 = vcmp.gt.f32.partialorder %v4478, 0.0
        %vm4552 = vcmp.gt.f32.partialorder %v4481, 0.0
        %vm4553 = vcmp.gt.f32.partialorder %v4484, 0.0
        %vm4554 = vcmp.gt.f32.partialorder %v4487, 0.0
        %vm4555 = vcmp.gt.f32.partialorder %v4490, 0.0
        %vm4556 = vcmp.gt.f32.partialorder %v4493, 0.0
        %vm4557 = vcmp.gt.f32.partialorder %v4496, 0.0
        %vm4558 = vcmp.gt.f32.partialorder %v4499, 0.0
        %vm4559 = vcmp.gt.f32.partialorder %v4502, 0.0
        %vm4560 = vcmp.gt.f32.partialorder %v4505, 0.0
        %vm4561 = vcmp.gt.f32.partialorder %v4508, 0.0
        %vm4562 = vcmp.gt.f32.partialorder %v4511, 0.0
        %vm4563 = vcmp.gt.f32.partialorder %v4514, 0.0
        %vm4564 = vcmp.gt.f32.partialorder %v4517, 0.0
        %vm4565 = vcmp.gt.f32.partialorder %v4520, 0.0
        %vm4566 = vcmp.gt.f32.partialorder %v4523, 0.0
        %vm4567 = vcmp.gt.f32.partialorder %v4526, 0.0
        %vm4568 = vcmp.gt.f32.partialorder %v4529, 0.0
        %vm4569 = vcmp.gt.f32.partialorder %v4532, 0.0
        %vm4570 = vcmp.gt.f32.partialorder %v4535, 0.0
        %vm4571 = vcmp.gt.f32.partialorder %v4538, 0.0
        %v4572 = vmul.f32 %v4445, 0.01
        %v4573 = vmul.f32 %v4448, 0.01
        %v4574 = vmul.f32 %v4451, 0.01
        %v4575 = vmul.f32 %v4454, 0.01
        %v4576 = vmul.f32 %v4457, 0.01
        %v4577 = vmul.f32 %v4460, 0.01
        %v4578 = vmul.f32 %v4463, 0.01
        %v4579 = vmul.f32 %v4466, 0.01
        %v4580 = vmul.f32 %v4469, 0.01
        %v4581 = vmul.f32 %v4472, 0.01
        %v4582 = vmul.f32 %v4475, 0.01
        %v4583 = vmul.f32 %v4478, 0.01
        %v4584 = vmul.f32 %v4481, 0.01
        %v4585 = vmul.f32 %v4484, 0.01
        %v4586 = vmul.f32 %v4487, 0.01
        %v4587 = vmul.f32 %v4490, 0.01
        %v4588 = vmul.f32 %v4493, 0.01
        %v4589 = vmul.f32 %v4496, 0.01
        %v4590 = vmul.f32 %v4499, 0.01
        %v4591 = vmul.f32 %v4502, 0.01
        %v4592 = vmul.f32 %v4505, 0.01
        %v4593 = vmul.f32 %v4508, 0.01
        %v4594 = vmul.f32 %v4511, 0.01
        %v4595 = vmul.f32 %v4514, 0.01
        %v4596 = vmul.f32 %v4517, 0.01
        %v4597 = vmul.f32 %v4520, 0.01
        %v4598 = vmul.f32 %v4523, 0.01
        %v4599 = vmul.f32 %v4526, 0.01
        %v4600 = vmul.f32 %v4529, 0.01
        %v4601 = vmul.f32 %v4532, 0.01
        %v4602 = vmul.f32 %v4535, 0.01
        %v4603 = vmul.f32 %v4538, 0.01
        %v4604 = vsel %vm4540, %v4445, %v4572
        %v4605 = vsel %vm4541, %v4448, %v4573
        %v4606 = vsel %vm4542, %v4451, %v4574
        %v4607 = vsel %vm4543, %v4454, %v4575
        %v4608 = vsel %vm4544, %v4457, %v4576
        %v4609 = vsel %vm4545, %v4460, %v4577
        %v4610 = vsel %vm4546, %v4463, %v4578
        %v4611 = vsel %vm4547, %v4466, %v4579
        %v4612 = vsel %vm4548, %v4469, %v4580
        %v4613 = vsel %vm4549, %v4472, %v4581
        %v4614 = vsel %vm4550, %v4475, %v4582
        %v4615 = vsel %vm4551, %v4478, %v4583
        %v4616 = vsel %vm4552, %v4481, %v4584
        %v4617 = vsel %vm4553, %v4484, %v4585
        %v4618 = vsel %vm4554, %v4487, %v4586
        %v4619 = vsel %vm4555, %v4490, %v4587
        %v4620 = vsel %vm4556, %v4493, %v4588
        %v4621 = vsel %vm4557, %v4496, %v4589
        %v4622 = vsel %vm4558, %v4499, %v4590
        %v4623 = vsel %vm4559, %v4502, %v4591
        %v4624 = vsel %vm4560, %v4505, %v4592
        %v4625 = vsel %vm4561, %v4508, %v4593
        %v4626 = vsel %vm4562, %v4511, %v4594
        %v4627 = vsel %vm4563, %v4514, %v4595
        %v4628 = vsel %vm4564, %v4517, %v4596
        %v4629 = vsel %vm4565, %v4520, %v4597
        %v4630 = vsel %vm4566, %v4523, %v4598
        %v4631 = vsel %vm4567, %v4526, %v4599
        %v4632 = vsel %vm4568, %v4529, %v4600
        %v4633 = vsel %vm4569, %v4532, %v4601
        %v4634 = vsel %vm4570, %v4535, %v4602
        %v4635 = vsel %vm4571, %v4538, %v4603
        %v4636 = vld [vmem:[%s43] sm:$0x1]
        %v4638 = vperm.slane %v4636, 0
        %v4640 = vmul.f32 %v4604, %v4638
        %v4641 = vmul.f32 %v4605, %v4638
        %v4642 = vmul.f32 %v4606, %v4638
        %v4643 = vmul.f32 %v4607, %v4638
        %v4644 = vmul.f32 %v4608, %v4638
        %v4645 = vmul.f32 %v4609, %v4638
        %v4646 = vmul.f32 %v4610, %v4638
        %v4647 = vmul.f32 %v4611, %v4638
        %v4648 = vmul.f32 %v4612, %v4638
        %v4649 = vmul.f32 %v4613, %v4638
        %v4650 = vmul.f32 %v4614, %v4638
        %v4651 = vmul.f32 %v4615, %v4638
        %v4652 = vmul.f32 %v4616, %v4638
        %v4653 = vmul.f32 %v4617, %v4638
        %v4654 = vmul.f32 %v4618, %v4638
        %v4655 = vmul.f32 %v4619, %v4638
        %v4656 = vmul.f32 %v4620, %v4638
        %v4657 = vmul.f32 %v4621, %v4638
        %v4658 = vmul.f32 %v4622, %v4638
        %v4659 = vmul.f32 %v4623, %v4638
        %v4660 = vmul.f32 %v4624, %v4638
        %v4661 = vmul.f32 %v4625, %v4638
        %v4662 = vmul.f32 %v4626, %v4638
        %v4663 = vmul.f32 %v4627, %v4638
        %v4664 = vmul.f32 %v4628, %v4638
        %v4665 = vmul.f32 %v4629, %v4638
        %v4666 = vmul.f32 %v4630, %v4638
        %v4667 = vmul.f32 %v4631, %v4638
        %v4668 = vmul.f32 %v4632, %v4638
        %v4669 = vmul.f32 %v4633, %v4638
        %v4670 = vmul.f32 %v4634, %v4638
        %v4671 = vmul.f32 %v4635, %v4638
        %v4672 = vsel %vm1303, %v4640, 0.0
        %4673 = vadd.xlane.f32.xlu0 %v4672
        %v4674 = vpop.xlane.xlu0 %4673
        %v4675 = vsel %vm1303, %v4641, 0.0
        %4676 = vadd.xlane.f32.xlu0 %v4675
        %v4677 = vpop.xlane.xlu0 %4676
        %v4678 = vsel %vm1303, %v4642, 0.0
        %4679 = vadd.xlane.f32.xlu0 %v4678
        %v4680 = vpop.xlane.xlu0 %4679
        %v4681 = vsel %vm1303, %v4643, 0.0
        %4682 = vadd.xlane.f32.xlu0 %v4681
        %v4683 = vpop.xlane.xlu0 %4682
        %v4684 = vsel %vm1303, %v4644, 0.0
        %4685 = vadd.xlane.f32.xlu0 %v4684
        %v4686 = vpop.xlane.xlu0 %4685
        %v4687 = vsel %vm1303, %v4645, 0.0
        %4688 = vadd.xlane.f32.xlu0 %v4687
        %v4689 = vpop.xlane.xlu0 %4688
        %v4690 = vsel %vm1303, %v4646, 0.0
        %4691 = vadd.xlane.f32.xlu0 %v4690
        %v4692 = vpop.xlane.xlu0 %4691
        %v4693 = vsel %vm1303, %v4647, 0.0
        %4694 = vadd.xlane.f32.xlu0 %v4693
        %v4695 = vpop.xlane.xlu0 %4694
        %v4696 = vsel %vm1303, %v4648, 0.0
        %4697 = vadd.xlane.f32.xlu0 %v4696
        %v4698 = vpop.xlane.xlu0 %4697
        %v4699 = vsel %vm1303, %v4649, 0.0
        %4700 = vadd.xlane.f32.xlu0 %v4699
        %v4701 = vpop.xlane.xlu0 %4700
        %v4702 = vsel %vm1303, %v4650, 0.0
        %4703 = vadd.xlane.f32.xlu0 %v4702
        %v4704 = vpop.xlane.xlu0 %4703
        %v4705 = vsel %vm1303, %v4651, 0.0
        %4706 = vadd.xlane.f32.xlu0 %v4705
        %v4707 = vpop.xlane.xlu0 %4706
        %v4708 = vsel %vm1303, %v4652, 0.0
        %4709 = vadd.xlane.f32.xlu0 %v4708
        %v4710 = vpop.xlane.xlu0 %4709
        %v4711 = vsel %vm1303, %v4653, 0.0
        %4712 = vadd.xlane.f32.xlu0 %v4711
        %v4713 = vpop.xlane.xlu0 %4712
        %v4714 = vsel %vm1303, %v4654, 0.0
        %4715 = vadd.xlane.f32.xlu0 %v4714
        %v4716 = vpop.xlane.xlu0 %4715
        %v4717 = vsel %vm1303, %v4655, 0.0
        %4718 = vadd.xlane.f32.xlu0 %v4717
        %v4719 = vpop.xlane.xlu0 %4718
        %v4720 = vsel %vm1303, %v4656, 0.0
        %4721 = vadd.xlane.f32.xlu0 %v4720
        %v4722 = vpop.xlane.xlu0 %4721
        %v4723 = vsel %vm1303, %v4657, 0.0
        %4724 = vadd.xlane.f32.xlu0 %v4723
        %v4725 = vpop.xlane.xlu0 %4724
        %v4726 = vsel %vm1303, %v4658, 0.0
        %4727 = vadd.xlane.f32.xlu0 %v4726
        %v4728 = vpop.xlane.xlu0 %4727
        %v4729 = vsel %vm1303, %v4659, 0.0
        %4730 = vadd.xlane.f32.xlu0 %v4729
        %v4731 = vpop.xlane.xlu0 %4730
        %v4732 = vsel %vm1303, %v4660, 0.0
        %4733 = vadd.xlane.f32.xlu0 %v4732
        %v4734 = vpop.xlane.xlu0 %4733
        %v4735 = vsel %vm1303, %v4661, 0.0
        %4736 = vadd.xlane.f32.xlu0 %v4735
        %v4737 = vpop.xlane.xlu0 %4736
        %v4738 = vsel %vm1303, %v4662, 0.0
        %4739 = vadd.xlane.f32.xlu0 %v4738
        %v4740 = vpop.xlane.xlu0 %4739
        %v4741 = vsel %vm1303, %v4663, 0.0
        %4742 = vadd.xlane.f32.xlu0 %v4741
        %v4743 = vpop.xlane.xlu0 %4742
        %v4744 = vsel %vm1303, %v4664, 0.0
        %4745 = vadd.xlane.f32.xlu0 %v4744
        %v4746 = vpop.xlane.xlu0 %4745
        %v4747 = vsel %vm1303, %v4665, 0.0
        %4748 = vadd.xlane.f32.xlu0 %v4747
        %v4749 = vpop.xlane.xlu0 %4748
        %v4750 = vsel %vm1303, %v4666, 0.0
        %4751 = vadd.xlane.f32.xlu0 %v4750
        %v4752 = vpop.xlane.xlu0 %4751
        %v4753 = vsel %vm1303, %v4667, 0.0
        %4754 = vadd.xlane.f32.xlu0 %v4753
        %v4755 = vpop.xlane.xlu0 %4754
        %v4756 = vsel %vm1303, %v4668, 0.0
        %4757 = vadd.xlane.f32.xlu0 %v4756
        %v4758 = vpop.xlane.xlu0 %4757
        %v4759 = vsel %vm1303, %v4669, 0.0
        %4760 = vadd.xlane.f32.xlu0 %v4759
        %v4761 = vpop.xlane.xlu0 %4760
        %v4762 = vsel %vm1303, %v4670, 0.0
        %4763 = vadd.xlane.f32.xlu0 %v4762
        %v4764 = vpop.xlane.xlu0 %4763
        %v4765 = vsel %vm1303, %v4671, 0.0
        %4766 = vadd.xlane.f32.xlu0 %v4765
        %v4767 = vpop.xlane.xlu0 %4766
        %v4768 = vld [vmem:[#allocation3] sm:$0x1]
        %v4770 = vperm.slane %v4768, 0
        %4771 = vset.pattern.permute.xlu0 0
        %4772 = vperm.xlu0 %4771, %v4770
        %v4773 = vpop.permute.xlu0 %4772
        %v4775 = vadd.f32 %v4674, %v4773
        %v4776 = vadd.f32 %v4677, %v4773
        %v4777 = vadd.f32 %v4680, %v4773
        %v4778 = vadd.f32 %v4683, %v4773
        %v4779 = vadd.f32 %v4686, %v4773
        %v4780 = vadd.f32 %v4689, %v4773
        %v4781 = vadd.f32 %v4692, %v4773
        %v4782 = vadd.f32 %v4695, %v4773
        %v4783 = vadd.f32 %v4698, %v4773
        %v4784 = vadd.f32 %v4701, %v4773
        %v4785 = vadd.f32 %v4704, %v4773
        %v4786 = vadd.f32 %v4707, %v4773
        %v4787 = vadd.f32 %v4710, %v4773
        %v4788 = vadd.f32 %v4713, %v4773
        %v4789 = vadd.f32 %v4716, %v4773
        %v4790 = vadd.f32 %v4719, %v4773
        %v4791 = vadd.f32 %v4722, %v4773
        %v4792 = vadd.f32 %v4725, %v4773
        %v4793 = vadd.f32 %v4728, %v4773
        %v4794 = vadd.f32 %v4731, %v4773
        %v4795 = vadd.f32 %v4734, %v4773
        %v4796 = vadd.f32 %v4737, %v4773
        %v4797 = vadd.f32 %v4740, %v4773
        %v4798 = vadd.f32 %v4743, %v4773
        %v4799 = vadd.f32 %v4746, %v4773
        %v4800 = vadd.f32 %v4749, %v4773
        %v4801 = vadd.f32 %v4752, %v4773
        %v4802 = vadd.f32 %v4755, %v4773
        %v4803 = vadd.f32 %v4758, %v4773
        %v4804 = vadd.f32 %v4761, %v4773
        %v4805 = vadd.f32 %v4764, %v4773
        %v4806 = vadd.f32 %v4767, %v4773
        %v4807 = vsub.f32 %v4775, 1e+08
        %v4808 = vsub.f32 %v4776, 1e+08
        %v4809 = vsub.f32 %v4777, 1e+08
        %v4810 = vsub.f32 %v4778, 1e+08
        %v4811 = vsub.f32 %v4779, 1e+08
        %v4812 = vsub.f32 %v4780, 1e+08
        %v4813 = vsub.f32 %v4781, 1e+08
        %v4814 = vsub.f32 %v4782, 1e+08
        %v4815 = vsub.f32 %v4783, 1e+08
        %v4816 = vsub.f32 %v4784, 1e+08
        %v4817 = vsub.f32 %v4785, 1e+08
        %v4818 = vsub.f32 %v4786, 1e+08
        %v4819 = vsub.f32 %v4787, 1e+08
        %v4820 = vsub.f32 %v4788, 1e+08
        %v4821 = vsub.f32 %v4789, 1e+08
        %v4822 = vsub.f32 %v4790, 1e+08
        %v4823 = vsub.f32 %v4791, 1e+08
        %v4824 = vsub.f32 %v4792, 1e+08
        %v4825 = vsub.f32 %v4793, 1e+08
        %v4826 = vsub.f32 %v4794, 1e+08
        %v4827 = vsub.f32 %v4795, 1e+08
        %v4828 = vsub.f32 %v4796, 1e+08
        %v4829 = vsub.f32 %v4797, 1e+08
        %v4830 = vsub.f32 %v4798, 1e+08
        %v4831 = vsub.f32 %v4799, 1e+08
        %v4832 = vsub.f32 %v4800, 1e+08
        %v4833 = vsub.f32 %v4801, 1e+08
        %v4834 = vsub.f32 %v4802, 1e+08
        %v4835 = vsub.f32 %v4803, 1e+08
        %v4836 = vsub.f32 %v4804, 1e+08
        %v4837 = vsub.f32 %v4805, 1e+08
        %v4838 = vsub.f32 %v4806, 1e+08
        %v4871 = vperm.slane %v4807, %v1180
        %v4872 = vperm.slane %v4808, %v2793
        %v4873 = vsel %vm2795, %v4872, %v4871
        %v4874 = vperm.slane %v4809, %v1180
        %v4875 = vperm.slane %v4810, %v2793
        %v4876 = vsel %vm2795, %v4875, %v4874
        %v4877 = vperm.slane %v4811, %v1180
        %v4878 = vperm.slane %v4812, %v2793
        %v4879 = vsel %vm2795, %v4878, %v4877
        %v4880 = vperm.slane %v4813, %v1180
        %v4881 = vperm.slane %v4814, %v2793
        %v4882 = vsel %vm2795, %v4881, %v4880
        %v4883 = vperm.slane %v4815, %v1180
        %v4884 = vperm.slane %v4816, %v2793
        %v4885 = vsel %vm2795, %v4884, %v4883
        %v4886 = vperm.slane %v4817, %v1180
        %v4887 = vperm.slane %v4818, %v2793
        %v4888 = vsel %vm2795, %v4887, %v4886
        %v4889 = vperm.slane %v4819, %v1180
        %v4890 = vperm.slane %v4820, %v2793
        %v4891 = vsel %vm2795, %v4890, %v4889
        %v4892 = vperm.slane %v4821, %v1180
        %v4893 = vperm.slane %v4822, %v2793
        %v4894 = vsel %vm2795, %v4893, %v4892
        %v4895 = vperm.slane %v4823, %v1180
        %v4896 = vperm.slane %v4824, %v2793
        %v4897 = vsel %vm2795, %v4896, %v4895
        %v4898 = vperm.slane %v4825, %v1180
        %v4899 = vperm.slane %v4826, %v2793
        %v4900 = vsel %vm2795, %v4899, %v4898
        %v4901 = vperm.slane %v4827, %v1180
        %v4902 = vperm.slane %v4828, %v2793
        %v4903 = vsel %vm2795, %v4902, %v4901
        %v4904 = vperm.slane %v4829, %v1180
        %v4905 = vperm.slane %v4830, %v2793
        %v4906 = vsel %vm2795, %v4905, %v4904
        %v4907 = vperm.slane %v4831, %v1180
        %v4908 = vperm.slane %v4832, %v2793
        %v4909 = vsel %vm2795, %v4908, %v4907
        %v4910 = vperm.slane %v4833, %v1180
        %v4911 = vperm.slane %v4834, %v2793
        %v4912 = vsel %vm2795, %v4911, %v4910
        %v4913 = vperm.slane %v4835, %v1180
        %v4914 = vperm.slane %v4836, %v2793
        %v4915 = vsel %vm2795, %v4914, %v4913
        %v4916 = vperm.slane %v4837, %v1180
        %v4917 = vperm.slane %v4838, %v2793
        %v4918 = vsel %vm2795, %v4917, %v4916
        %v4919 = vsel %vm2842, %v4876, %v4873
        %v4920 = vsel %vm2844, %v4879, %v4919
        %v4921 = vsel %vm2846, %v4882, %v4920
        %v4922 = vsel %vm2848, %v4885, %v4921
        %v4923 = vsel %vm2850, %v4888, %v4922
        %v4924 = vsel %vm2852, %v4891, %v4923
        %v4925 = vsel %vm2854, %v4894, %v4924
        %v4926 = vsel %vm2842, %v4900, %v4897
        %v4927 = vsel %vm2844, %v4903, %v4926
        %v4928 = vsel %vm2846, %v4906, %v4927
        %v4929 = vsel %vm2848, %v4909, %v4928
        %v4930 = vsel %vm2850, %v4912, %v4929
        %v4931 = vsel %vm2852, %v4915, %v4930
        %v4932 = vsel %vm2854, %v4918, %v4931
        %v4967 = vperm.slane %v4775, %v1180
        %v4968 = vperm.slane %v4776, %v2793
        %v4969 = vsel %vm2795, %v4968, %v4967
        %v4970 = vperm.slane %v4777, %v1180
        %v4971 = vperm.slane %v4778, %v2793
        %v4972 = vsel %vm2795, %v4971, %v4970
        %v4973 = vperm.slane %v4779, %v1180
        %v4974 = vperm.slane %v4780, %v2793
        %v4975 = vsel %vm2795, %v4974, %v4973
        %v4976 = vperm.slane %v4781, %v1180
        %v4977 = vperm.slane %v4782, %v2793
        %v4978 = vsel %vm2795, %v4977, %v4976
        %v4979 = vperm.slane %v4783, %v1180
        %v4980 = vperm.slane %v4784, %v2793
        %v4981 = vsel %vm2795, %v4980, %v4979
        %v4982 = vperm.slane %v4785, %v1180
        %v4983 = vperm.slane %v4786, %v2793
        %v4984 = vsel %vm2795, %v4983, %v4982
        %v4985 = vperm.slane %v4787, %v1180
        %v4986 = vperm.slane %v4788, %v2793
        %v4987 = vsel %vm2795, %v4986, %v4985
        %v4988 = vperm.slane %v4789, %v1180
        %v4989 = vperm.slane %v4790, %v2793
        %v4990 = vsel %vm2795, %v4989, %v4988
        %v4991 = vperm.slane %v4791, %v1180
        %v4992 = vperm.slane %v4792, %v2793
        %v4993 = vsel %vm2795, %v4992, %v4991
        %v4994 = vperm.slane %v4793, %v1180
        %v4995 = vperm.slane %v4794, %v2793
        %v4996 = vsel %vm2795, %v4995, %v4994
        %v4997 = vperm.slane %v4795, %v1180
        %v4998 = vperm.slane %v4796, %v2793
        %v4999 = vsel %vm2795, %v4998, %v4997
        %v5000 = vperm.slane %v4797, %v1180
        %v5001 = vperm.slane %v4798, %v2793
        %v5002 = vsel %vm2795, %v5001, %v5000
        %v5003 = vperm.slane %v4799, %v1180
        %v5004 = vperm.slane %v4800, %v2793
        %v5005 = vsel %vm2795, %v5004, %v5003
        %v5006 = vperm.slane %v4801, %v1180
        %v5007 = vperm.slane %v4802, %v2793
        %v5008 = vsel %vm2795, %v5007, %v5006
        %v5009 = vperm.slane %v4803, %v1180
        %v5010 = vperm.slane %v4804, %v2793
        %v5011 = vsel %vm2795, %v5010, %v5009
        %v5012 = vperm.slane %v4805, %v1180
        %v5013 = vperm.slane %v4806, %v2793
        %v5014 = vsel %vm2795, %v5013, %v5012
        %v5015 = vsel %vm2842, %v4972, %v4969
        %v5016 = vsel %vm2844, %v4975, %v5015
        %v5017 = vsel %vm2846, %v4978, %v5016
        %v5018 = vsel %vm2848, %v4981, %v5017
        %v5019 = vsel %vm2850, %v4984, %v5018
        %v5020 = vsel %vm2852, %v4987, %v5019
        %v5021 = vsel %vm2854, %v4990, %v5020
        %v5022 = vsel %vm2842, %v4996, %v4993
        %v5023 = vsel %vm2844, %v4999, %v5022
        %v5024 = vsel %vm2846, %v5002, %v5023
        %v5025 = vsel %vm2848, %v5005, %v5024
        %v5026 = vsel %vm2850, %v5008, %v5025
        %v5027 = vsel %vm2852, %v5011, %v5026
        %v5028 = vsel %vm2854, %v5014, %v5027
        %v5031 = vsel %vm1181, %v4925, %v5021
        %v5032 = vsel %vm1182, %v4932, %v5028
        %v5033 = vsel %vm2963, %v5031, -inf
        %5034 = vmax.xlane.f32.xlu0 %v5033
        %v5035 = vpop.xlane.xlu0 %5034
        %v5036 = vsel %vm2963, %v5032, -inf
        %5037 = vmax.xlane.f32.xlu0 %v5036
        %v5038 = vpop.xlane.xlu0 %5037
        %v5039 = vsub.f32 %v5031, %v5035
        %v5040 = vsub.f32 %v5032, %v5038
        %v5041 = vmul.f32 %v5039, 1.442695
        %v5042 = vpow.pop %v5041
        %v5043 = vmul.f32 %v5040, 1.442695
        %v5044 = vpow.pop %v5043
        %v5045 = vsel %vm2963, %v5042, 0.0
        %5046 = vadd.xlane.f32.xlu0 %v5045
        %v5047 = vpop.xlane.xlu0 %5046
        %v5048 = vsel %vm2963, %v5044, 0.0
        %5049 = vadd.xlane.f32.xlu0 %v5048
        %v5050 = vpop.xlane.xlu0 %5049
        %v5051 = vrcp.pop %v5047
        %v5052 = vmul.f32 %v5047, %v5051
        %v5053 = vsub.f32 1.0, %v5052
        %v5054 = vmul.f32 %v5051, %v5053
        %v5055 = vadd.f32 %v5051, %v5054
        %vm5056 = vweird.f32 %v5047
        %vm5057 = vweird.f32 %v5051
        %vm5058 = vmor %vm5056, %vm5057
        %v5059 = vsel %vm5058, %v5051, %v5055
        %v5060 = vand.u32 2147483647, %v5047
        %vm5061 = vcmp.eq.f32.partialorder %v5060, 8.507059e+37
        %v5062 = vand.u32 %v5047, 2147483648
        %v5063 = vor.u32 1.1754944e-38, %v5062
        %v5064 = vsel %vm5061, %v5063, %v5059
        %v5065 = vmul.f32 %v5042, %v5064
        %v5066 = vrcp.pop %v5050
        %v5067 = vmul.f32 %v5050, %v5066
        %v5068 = vsub.f32 1.0, %v5067
        %v5069 = vmul.f32 %v5066, %v5068
        %v5070 = vadd.f32 %v5066, %v5069
        %vm5071 = vweird.f32 %v5050
        %vm5072 = vweird.f32 %v5066
        %vm5073 = vmor %vm5071, %vm5072
        %v5074 = vsel %vm5073, %v5066, %v5070
        %v5075 = vand.u32 2147483647, %v5050
        %vm5076 = vcmp.eq.f32.partialorder %v5075, 8.507059e+37
        %v5077 = vand.u32 %v5050, 2147483648
        %v5078 = vor.u32 1.1754944e-38, %v5077
        %v5079 = vsel %vm5076, %v5078, %v5074
        %v5080 = vmul.f32 %v5044, %v5079
        %v5082 = vsel %vm2963, %v5065, 0
        %v5085 = vsel %vm2963, %v5080, 0
        %5087 = vmatpush.msra.mxu0 0.0
        %5088 = vmatpush.msra.mxu0 0.0
        %5089 = vmatpush.msra.mxu0 0.0
        %5090 = vmatpush.msra.mxu0 0.0
        %5091 = vmatpush.msra.mxu0 0.0
        %5092 = vmatpush.msra.mxu0 0.0
        %5093 = vmatpush.msra.mxu0 0.0
        %5094 = vmatpush.msra.mxu0 0.0
        %5095 = vmatpush.msra.mxu0 0.0
        %5096 = vmatpush.msra.mxu0 0.0
        %5097 = vmatpush.msra.mxu0 0.0
        %5098 = vmatpush.msra.mxu0 0.0
        %5099 = vmatpush.msra.mxu0 0.0
        %5100 = vmatpush.msra.mxu0 0.0
        %5101 = vmatpush.msra.mxu0 %v1175
        %5102 = vmatpush.msra.mxu0 %v1174
        %5103 = vmatmul.f32.gmra.mxu0 %v5082
        %v5104 = vpop.f32.mrf.mxu0
        %v5105 = vadd.f32 0.0, %v5104
        %5106 = vmatmul.f32.gmra.mxu0 %v5085
        %v5107 = vpop.f32.mrf.mxu0
        %v5108 = vadd.f32 0.0, %v5107
        %5109 = vdwg.mxu0
        %5110 = vmatpush.msra.mxu0 0.0
        %5111 = vmatpush.msra.mxu0 0.0
        %5112 = vmatpush.msra.mxu0 0.0
        %5113 = vmatpush.msra.mxu0 0.0
        %5114 = vmatpush.msra.mxu0 0.0
        %5115 = vmatpush.msra.mxu0 0.0
        %5116 = vmatpush.msra.mxu0 0.0
        %5117 = vmatpush.msra.mxu0 0.0
        %5118 = vmatpush.msra.mxu0 0.0
        %5119 = vmatpush.msra.mxu0 0.0
        %5120 = vmatpush.msra.mxu0 0.0
        %5121 = vmatpush.msra.mxu0 0.0
        %5122 = vmatpush.msra.mxu0 0.0
        %5123 = vmatpush.msra.mxu0 0.0
        %5124 = vmatpush.msra.mxu0 %v3116
        %5125 = vmatpush.msra.mxu0 %v3115
        %5126 = vmatmul.f32.gmra.mxu0 %v5082
        %v5127 = vpop.f32.mrf.mxu0
        %v5128 = vadd.f32 0.0, %v5127
        %5129 = vmatmul.f32.gmra.mxu0 %v5085
        %v5130 = vpop.f32.mrf.mxu0
        %v5131 = vadd.f32 0.0, %v5130
        %5132 = vdwg.mxu0
        %v5133 = vld [vmem:[%s47] sm:$0xff]
        %v5134 = vld [vmem:[%s47 + $0x8] sm:$0xff]
        %v5135 = vld [vmem:[%s47 + $0x10] sm:$0xff]
        %v5136 = vld [vmem:[%s47 + $0x18] sm:$0xff]
        %v5137 = vld [vmem:[%s47 + $0x20] sm:$0xff]
        %v5138 = vld [vmem:[%s47 + $0x28] sm:$0xff]
        %v5139 = vsel %vm2963, %v3115, 0
        %v5141 = vsel %vm2963, %v3116, 0
        %5143 = vmatpush.msra.mxu0 0.0
        %5144 = vmatpush.msra.mxu0 0.0
        %5145 = vmatpush.msra.mxu0 0.0
        %5146 = vmatpush.msra.mxu0 0.0
        %5147 = vmatpush.msra.mxu0 0.0
        %5148 = vmatpush.msra.mxu0 0.0
        %5149 = vmatpush.msra.mxu0 0.0
        %5150 = vmatpush.msra.mxu0 0.0
        %5151 = vmatpush.msra.mxu0 0.0
        %5152 = vmatpush.msra.mxu0 0.0
        %5153 = vmatpush.msra.mxu0 0.0
        %5154 = vmatpush.msra.mxu0 0.0
        %5155 = vmatpush.msra.mxu0 0.0
        %5156 = vmatpush.msra.mxu0 0.0
        %5157 = vmatpush.msra.mxu0 %v5138
        %5158 = vmatpush.msra.mxu0 %v5137
        %5159 = vmatmul.f32.gmra.mxu0 %v5139
        %v5160 = vpop.f32.mrf.mxu0
        %v5161 = vadd.f32 0.0, %v5160
        %5162 = vmatmul.f32.gmra.mxu0 %v5141
        %v5163 = vpop.f32.mrf.mxu0
        %v5164 = vadd.f32 0.0, %v5163
        %5165 = vdwg.mxu0
        %5166 = vmatpush.msra.mxu0 0.0
        %5167 = vmatpush.msra.mxu0 0.0
        %5168 = vmatpush.msra.mxu0 0.0
        %5169 = vmatpush.msra.mxu0 0.0
        %5170 = vmatpush.msra.mxu0 0.0
        %5171 = vmatpush.msra.mxu0 0.0
        %5172 = vmatpush.msra.mxu0 0.0
        %5173 = vmatpush.msra.mxu0 0.0
        %5174 = vmatpush.msra.mxu0 0.0
        %5175 = vmatpush.msra.mxu0 0.0
        %5176 = vmatpush.msra.mxu0 0.0
        %5177 = vmatpush.msra.mxu0 0.0
        %5178 = vmatpush.msra.mxu0 %v5136
        %5179 = vmatpush.msra.mxu0 %v5135
        %5180 = vmatpush.msra.mxu0 %v5134
        %5181 = vmatpush.msra.mxu0 %v5133
        %5182 = vmatmul.f32.gmra.mxu0 %v3078
        %v5183 = vpop.f32.mrf.mxu0
        %v5184 = vadd.f32 %v5161, %v5183
        %5185 = vmatmul.f32.gmra.mxu0 %v3080
        %v5186 = vpop.f32.mrf.mxu0
        %v5187 = vadd.f32 %v5164, %v5186
        %5188 = vdwg.mxu0
        %v5189 = vld [vmem:[%s47 + $0x30] sm:$0xff]
        %v5190 = vld [vmem:[%s47 + $0x38] sm:$0xff]
        %v5191 = vld [vmem:[%s47 + $0x40] sm:$0xff]
        %v5192 = vld [vmem:[%s47 + $0x48] sm:$0xff]
        %v5193 = vld [vmem:[%s47 + $0x50] sm:$0xff]
        %v5194 = vld [vmem:[%s47 + $0x58] sm:$0xff]
        %v5196 = vsel %vm2963, %v5128, 0
        %v5199 = vsel %vm2963, %v5131, 0
        %5201 = vmatpush.msra.mxu0 0.0
        %5202 = vmatpush.msra.mxu0 0.0
        %5203 = vmatpush.msra.mxu0 0.0
        %5204 = vmatpush.msra.mxu0 0.0
        %5205 = vmatpush.msra.mxu0 0.0
        %5206 = vmatpush.msra.mxu0 0.0
        %5207 = vmatpush.msra.mxu0 0.0
        %5208 = vmatpush.msra.mxu0 0.0
        %5209 = vmatpush.msra.mxu0 0.0
        %5210 = vmatpush.msra.mxu0 0.0
        %5211 = vmatpush.msra.mxu0 0.0
        %5212 = vmatpush.msra.mxu0 0.0
        %5213 = vmatpush.msra.mxu0 0.0
        %5214 = vmatpush.msra.mxu0 0.0
        %5215 = vmatpush.msra.mxu0 %v5194
        %5216 = vmatpush.msra.mxu0 %v5193
        %5217 = vmatmul.f32.gmra.mxu0 %v5196
        %v5218 = vpop.f32.mrf.mxu0
        %v5219 = vadd.f32 0.0, %v5218
        %5220 = vmatmul.f32.gmra.mxu0 %v5199
        %v5221 = vpop.f32.mrf.mxu0
        %v5222 = vadd.f32 0.0, %v5221
        %5223 = vdwg.mxu0
        %v5225 = vsel %vm1303, %v5105, 0
        %v5228 = vsel %vm1303, %v5108, 0
        %5230 = vmatpush.msra.mxu0 0.0
        %5231 = vmatpush.msra.mxu0 0.0
        %5232 = vmatpush.msra.mxu0 0.0
        %5233 = vmatpush.msra.mxu0 0.0
        %5234 = vmatpush.msra.mxu0 0.0
        %5235 = vmatpush.msra.mxu0 0.0
        %5236 = vmatpush.msra.mxu0 0.0
        %5237 = vmatpush.msra.mxu0 0.0
        %5238 = vmatpush.msra.mxu0 0.0
        %5239 = vmatpush.msra.mxu0 0.0
        %5240 = vmatpush.msra.mxu0 0.0
        %5241 = vmatpush.msra.mxu0 0.0
        %5242 = vmatpush.msra.mxu0 %v5192
        %5243 = vmatpush.msra.mxu0 %v5191
        %5244 = vmatpush.msra.mxu0 %v5190
        %5245 = vmatpush.msra.mxu0 %v5189
        %5246 = vmatmul.f32.gmra.mxu0 %v5225
        %v5247 = vpop.f32.mrf.mxu0
        %v5248 = vadd.f32 %v5219, %v5247
        %5249 = vmatmul.f32.gmra.mxu0 %v5228
        %v5250 = vpop.f32.mrf.mxu0
        %v5251 = vadd.f32 %v5222, %v5250
        %5252 = vdwg.mxu0
        %v5253 = vadd.f32 %v5184, %v5248
        %v5254 = vadd.f32 %v5187, %v5251
        %v5255 = vld [vmem:[%s49] sm:$0x1]
        %v5257 = vperm.slane %v5255, 0
        %v5259 = vadd.f32 %v5253, %v5257
        %v5260 = vadd.f32 %v5254, %v5257
        %vm5261 = vcmp.gt.f32.partialorder %v5259, 0.0
        %vm5262 = vcmp.gt.f32.partialorder %v5260, 0.0
        %v5263 = vmul.f32 %v5259, 0.01
        %v5264 = vmul.f32 %v5260, 0.01
        %v5265 = vsel %vm5261, %v5259, %v5263
        %v5266 = vsel %vm5262, %v5260, %v5264
        %v5269 = vrot.slane %v5265, 1
        %v5270 = vrot.slane %v5265, 2
        %v5271 = vrot.slane %v5265, 3
        %v5272 = vrot.slane %v5265, 4
        %v5273 = vrot.slane %v5265, 5
        %v5274 = vrot.slane %v5265, 6
        %v5275 = vrot.slane %v5265, 7
        %v5276 = vrot.slane %v5266, 1
        %v5277 = vrot.slane %v5266, 2
        %v5278 = vrot.slane %v5266, 3
        %v5279 = vrot.slane %v5266, 4
        %v5280 = vrot.slane %v5266, 5
        %v5281 = vrot.slane %v5266, 6
        %v5282 = vrot.slane %v5266, 7
        %v5283 = vperm.slane %v5265, 0
        %v5284 = vperm.slane %v5269, 0
        %v5285 = vperm.slane %v5270, 0
        %v5286 = vperm.slane %v5271, 0
        %v5287 = vperm.slane %v5272, 0
        %v5288 = vperm.slane %v5273, 0
        %v5289 = vperm.slane %v5274, 0
        %v5290 = vperm.slane %v5275, 0
        %v5291 = vperm.slane %v5266, 0
        %v5292 = vperm.slane %v5276, 0
        %v5293 = vperm.slane %v5277, 0
        %v5294 = vperm.slane %v5278, 0
        %v5295 = vperm.slane %v5279, 0
        %v5296 = vperm.slane %v5280, 0
        %v5297 = vperm.slane %v5281, 0
        %v5298 = vperm.slane %v5282, 0
        %v5315 = vsub.f32 %v5283, %v5265
        %v5316 = vsub.f32 %v5283, %v5266
        %v5317 = vsub.f32 %v5284, %v5265
        %v5318 = vsub.f32 %v5284, %v5266
        %v5319 = vsub.f32 %v5285, %v5265
        %v5320 = vsub.f32 %v5285, %v5266
        %v5321 = vsub.f32 %v5286, %v5265
        %v5322 = vsub.f32 %v5286, %v5266
        %v5323 = vsub.f32 %v5287, %v5265
        %v5324 = vsub.f32 %v5287, %v5266
        %v5325 = vsub.f32 %v5288, %v5265
        %v5326 = vsub.f32 %v5288, %v5266
        %v5327 = vsub.f32 %v5289, %v5265
        %v5328 = vsub.f32 %v5289, %v5266
        %v5329 = vsub.f32 %v5290, %v5265
        %v5330 = vsub.f32 %v5290, %v5266
        %v5331 = vsub.f32 %v5291, %v5265
        %v5332 = vsub.f32 %v5291, %v5266
        %v5333 = vsub.f32 %v5292, %v5265
        %v5334 = vsub.f32 %v5292, %v5266
        %v5335 = vsub.f32 %v5293, %v5265
        %v5336 = vsub.f32 %v5293, %v5266
        %v5337 = vsub.f32 %v5294, %v5265
        %v5338 = vsub.f32 %v5294, %v5266
        %v5339 = vsub.f32 %v5295, %v5265
        %v5340 = vsub.f32 %v5295, %v5266
        %v5341 = vsub.f32 %v5296, %v5265
        %v5342 = vsub.f32 %v5296, %v5266
        %v5343 = vsub.f32 %v5297, %v5265
        %v5344 = vsub.f32 %v5297, %v5266
        %v5345 = vsub.f32 %v5298, %v5265
        %v5346 = vsub.f32 %v5298, %v5266
        %v5347 = vand.u32 2147483647, %v5315
        %v5348 = vand.u32 2147483647, %v5316
        %v5349 = vand.u32 2147483647, %v5317
        %v5350 = vand.u32 2147483647, %v5318
        %v5351 = vand.u32 2147483647, %v5319
        %v5352 = vand.u32 2147483647, %v5320
        %v5353 = vand.u32 2147483647, %v5321
        %v5354 = vand.u32 2147483647, %v5322
        %v5355 = vand.u32 2147483647, %v5323
        %v5356 = vand.u32 2147483647, %v5324
        %v5357 = vand.u32 2147483647, %v5325
        %v5358 = vand.u32 2147483647, %v5326
        %v5359 = vand.u32 2147483647, %v5327
        %v5360 = vand.u32 2147483647, %v5328
        %v5361 = vand.u32 2147483647, %v5329
        %v5362 = vand.u32 2147483647, %v5330
        %v5363 = vand.u32 2147483647, %v5331
        %v5364 = vand.u32 2147483647, %v5332
        %v5365 = vand.u32 2147483647, %v5333
        %v5366 = vand.u32 2147483647, %v5334
        %v5367 = vand.u32 2147483647, %v5335
        %v5368 = vand.u32 2147483647, %v5336
        %v5369 = vand.u32 2147483647, %v5337
        %v5370 = vand.u32 2147483647, %v5338
        %v5371 = vand.u32 2147483647, %v5339
        %v5372 = vand.u32 2147483647, %v5340
        %v5373 = vand.u32 2147483647, %v5341
        %v5374 = vand.u32 2147483647, %v5342
        %v5375 = vand.u32 2147483647, %v5343
        %v5376 = vand.u32 2147483647, %v5344
        %v5377 = vand.u32 2147483647, %v5345
        %v5378 = vand.u32 2147483647, %v5346
        %v5379 = vld [vmem:[%s51] sm:$0xff]
        %v5380 = vld [vmem:[%s51 + $0x8] sm:$0xff]
        %v5381 = vld [vmem:[%s51 + $0x10] sm:$0xff]
        %v5382 = vld [vmem:[%s51 + $0x18] sm:$0xff]
        %v5383 = vld [vmem:[%s51 + $0x20] sm:$0xff]
        %v5384 = vld [vmem:[%s51 + $0x28] sm:$0xff]
        %5385 = vmatpush.msra.mxu0 0.0
        %5386 = vmatpush.msra.mxu0 0.0
        %5387 = vmatpush.msra.mxu0 0.0
        %5388 = vmatpush.msra.mxu0 0.0
        %5389 = vmatpush.msra.mxu0 0.0
        %5390 = vmatpush.msra.mxu0 0.0
        %5391 = vmatpush.msra.mxu0 0.0
        %5392 = vmatpush.msra.mxu0 0.0
        %5393 = vmatpush.msra.mxu0 0.0
        %5394 = vmatpush.msra.mxu0 0.0
        %5395 = vmatpush.msra.mxu0 0.0
        %5396 = vmatpush.msra.mxu0 0.0
        %5397 = vmatpush.msra.mxu0 0.0
        %5398 = vmatpush.msra.mxu0 0.0
        %5399 = vmatpush.msra.mxu0 %v5384
        %5400 = vmatpush.msra.mxu0 %v5383
        %5401 = vmatmul.f32.gmra.mxu0 %v3236
        %v5402 = vpop.f32.mrf.mxu0
        %v5403 = vadd.f32 0.0, %v5402
        %5404 = vmatmul.f32.gmra.mxu0 %v3239
        %v5405 = vpop.f32.mrf.mxu0
        %v5406 = vadd.f32 0.0, %v5405
        %5407 = vmatmul.f32.gmra.mxu0 %v3242
        %v5408 = vpop.f32.mrf.mxu0
        %v5409 = vadd.f32 0.0, %v5408
        %5410 = vmatmul.f32.gmra.mxu0 %v3245
        %v5411 = vpop.f32.mrf.mxu0
        %v5412 = vadd.f32 0.0, %v5411
        %5413 = vmatmul.f32.gmra.mxu0 %v3248
        %v5414 = vpop.f32.mrf.mxu0
        %v5415 = vadd.f32 0.0, %v5414
        %5416 = vmatmul.f32.gmra.mxu0 %v3251
        %v5417 = vpop.f32.mrf.mxu0
        %v5418 = vadd.f32 0.0, %v5417
        %5419 = vmatmul.f32.gmra.mxu0 %v3254
        %v5420 = vpop.f32.mrf.mxu0
        %v5421 = vadd.f32 0.0, %v5420
        %5422 = vmatmul.f32.gmra.mxu0 %v3257
        %v5423 = vpop.f32.mrf.mxu0
        %v5424 = vadd.f32 0.0, %v5423
        %5425 = vmatmul.f32.gmra.mxu0 %v3260
        %v5426 = vpop.f32.mrf.mxu0
        %v5427 = vadd.f32 0.0, %v5426
        %5428 = vmatmul.f32.gmra.mxu0 %v3263
        %v5429 = vpop.f32.mrf.mxu0
        %v5430 = vadd.f32 0.0, %v5429
        %5431 = vmatmul.f32.gmra.mxu0 %v3266
        %v5432 = vpop.f32.mrf.mxu0
        %v5433 = vadd.f32 0.0, %v5432
        %5434 = vmatmul.f32.gmra.mxu0 %v3269
        %v5435 = vpop.f32.mrf.mxu0
        %v5436 = vadd.f32 0.0, %v5435
        %5437 = vmatmul.f32.gmra.mxu0 %v3272
        %v5438 = vpop.f32.mrf.mxu0
        %v5439 = vadd.f32 0.0, %v5438
        %5440 = vmatmul.f32.gmra.mxu0 %v3275
        %v5441 = vpop.f32.mrf.mxu0
        %v5442 = vadd.f32 0.0, %v5441
        %5443 = vmatmul.f32.gmra.mxu0 %v3278
        %v5444 = vpop.f32.mrf.mxu0
        %v5445 = vadd.f32 0.0, %v5444
        %5446 = vmatmul.f32.gmra.mxu0 %v3281
        %v5447 = vpop.f32.mrf.mxu0
        %v5448 = vadd.f32 0.0, %v5447
        %5449 = vmatmul.f32.gmra.mxu0 %v3284
        %v5450 = vpop.f32.mrf.mxu0
        %v5451 = vadd.f32 0.0, %v5450
        %5452 = vmatmul.f32.gmra.mxu0 %v3287
        %v5453 = vpop.f32.mrf.mxu0
        %v5454 = vadd.f32 0.0, %v5453
        %5455 = vmatmul.f32.gmra.mxu0 %v3290
        %v5456 = vpop.f32.mrf.mxu0
        %v5457 = vadd.f32 0.0, %v5456
        %5458 = vmatmul.f32.gmra.mxu0 %v3293
        %v5459 = vpop.f32.mrf.mxu0
        %v5460 = vadd.f32 0.0, %v5459
        %5461 = vmatmul.f32.gmra.mxu0 %v3296
        %v5462 = vpop.f32.mrf.mxu0
        %v5463 = vadd.f32 0.0, %v5462
        %5464 = vmatmul.f32.gmra.mxu0 %v3299
        %v5465 = vpop.f32.mrf.mxu0
        %v5466 = vadd.f32 0.0, %v5465
        %5467 = vmatmul.f32.gmra.mxu0 %v3302
        %v5468 = vpop.f32.mrf.mxu0
        %v5469 = vadd.f32 0.0, %v5468
        %5470 = vmatmul.f32.gmra.mxu0 %v3305
        %v5471 = vpop.f32.mrf.mxu0
        %v5472 = vadd.f32 0.0, %v5471
        %5473 = vmatmul.f32.gmra.mxu0 %v3308
        %v5474 = vpop.f32.mrf.mxu0
        %v5475 = vadd.f32 0.0, %v5474
        %5476 = vmatmul.f32.gmra.mxu0 %v3311
        %v5477 = vpop.f32.mrf.mxu0
        %v5478 = vadd.f32 0.0, %v5477
        %5479 = vmatmul.f32.gmra.mxu0 %v3314
        %v5480 = vpop.f32.mrf.mxu0
        %v5481 = vadd.f32 0.0, %v5480
        %5482 = vmatmul.f32.gmra.mxu0 %v3317
        %v5483 = vpop.f32.mrf.mxu0
        %v5484 = vadd.f32 0.0, %v5483
        %5485 = vmatmul.f32.gmra.mxu0 %v3320
        %v5486 = vpop.f32.mrf.mxu0
        %v5487 = vadd.f32 0.0, %v5486
        %5488 = vmatmul.f32.gmra.mxu0 %v3323
        %v5489 = vpop.f32.mrf.mxu0
        %v5490 = vadd.f32 0.0, %v5489
        %5491 = vmatmul.f32.gmra.mxu0 %v3326
        %v5492 = vpop.f32.mrf.mxu0
        %v5493 = vadd.f32 0.0, %v5492
        %5494 = vmatmul.f32.gmra.mxu0 %v3329
        %v5495 = vpop.f32.mrf.mxu0
        %v5496 = vadd.f32 0.0, %v5495
        %5497 = vdwg.mxu0
        %5498 = vmatpush.msra.mxu0 0.0
        %5499 = vmatpush.msra.mxu0 0.0
        %5500 = vmatpush.msra.mxu0 0.0
        %5501 = vmatpush.msra.mxu0 0.0
        %5502 = vmatpush.msra.mxu0 0.0
        %5503 = vmatpush.msra.mxu0 0.0
        %5504 = vmatpush.msra.mxu0 0.0
        %5505 = vmatpush.msra.mxu0 0.0
        %5506 = vmatpush.msra.mxu0 0.0
        %5507 = vmatpush.msra.mxu0 0.0
        %5508 = vmatpush.msra.mxu0 0.0
        %5509 = vmatpush.msra.mxu0 0.0
        %5510 = vmatpush.msra.mxu0 %v5382
        %5511 = vmatpush.msra.mxu0 %v5381
        %5512 = vmatpush.msra.mxu0 %v5380
        %5513 = vmatpush.msra.mxu0 %v5379
        %5514 = vmatmul.f32.gmra.mxu0 %v1305
        %v5515 = vpop.f32.mrf.mxu0
        %v5516 = vadd.f32 %v5403, %v5515
        %5517 = vmatmul.f32.gmra.mxu0 %v1308
        %v5518 = vpop.f32.mrf.mxu0
        %v5519 = vadd.f32 %v5406, %v5518
        %5520 = vmatmul.f32.gmra.mxu0 %v1311
        %v5521 = vpop.f32.mrf.mxu0
        %v5522 = vadd.f32 %v5409, %v5521
        %5523 = vmatmul.f32.gmra.mxu0 %v1314
        %v5524 = vpop.f32.mrf.mxu0
        %v5525 = vadd.f32 %v5412, %v5524
        %5526 = vmatmul.f32.gmra.mxu0 %v1317
        %v5527 = vpop.f32.mrf.mxu0
        %v5528 = vadd.f32 %v5415, %v5527
        %5529 = vmatmul.f32.gmra.mxu0 %v1320
        %v5530 = vpop.f32.mrf.mxu0
        %v5531 = vadd.f32 %v5418, %v5530
        %5532 = vmatmul.f32.gmra.mxu0 %v1323
        %v5533 = vpop.f32.mrf.mxu0
        %v5534 = vadd.f32 %v5421, %v5533
        %5535 = vmatmul.f32.gmra.mxu0 %v1326
        %v5536 = vpop.f32.mrf.mxu0
        %v5537 = vadd.f32 %v5424, %v5536
        %5538 = vmatmul.f32.gmra.mxu0 %v1329
        %v5539 = vpop.f32.mrf.mxu0
        %v5540 = vadd.f32 %v5427, %v5539
        %5541 = vmatmul.f32.gmra.mxu0 %v1332
        %v5542 = vpop.f32.mrf.mxu0
        %v5543 = vadd.f32 %v5430, %v5542
        %5544 = vmatmul.f32.gmra.mxu0 %v1335
        %v5545 = vpop.f32.mrf.mxu0
        %v5546 = vadd.f32 %v5433, %v5545
        %5547 = vmatmul.f32.gmra.mxu0 %v1338
        %v5548 = vpop.f32.mrf.mxu0
        %v5549 = vadd.f32 %v5436, %v5548
        %5550 = vmatmul.f32.gmra.mxu0 %v1341
        %v5551 = vpop.f32.mrf.mxu0
        %v5552 = vadd.f32 %v5439, %v5551
        %5553 = vmatmul.f32.gmra.mxu0 %v1344
        %v5554 = vpop.f32.mrf.mxu0
        %v5555 = vadd.f32 %v5442, %v5554
        %5556 = vmatmul.f32.gmra.mxu0 %v1347
        %v5557 = vpop.f32.mrf.mxu0
        %v5558 = vadd.f32 %v5445, %v5557
        %5559 = vmatmul.f32.gmra.mxu0 %v1350
        %v5560 = vpop.f32.mrf.mxu0
        %v5561 = vadd.f32 %v5448, %v5560
        %5562 = vmatmul.f32.gmra.mxu0 %v1353
        %v5563 = vpop.f32.mrf.mxu0
        %v5564 = vadd.f32 %v5451, %v5563
        %5565 = vmatmul.f32.gmra.mxu0 %v1356
        %v5566 = vpop.f32.mrf.mxu0
        %v5567 = vadd.f32 %v5454, %v5566
        %5568 = vmatmul.f32.gmra.mxu0 %v1359
        %v5569 = vpop.f32.mrf.mxu0
        %v5570 = vadd.f32 %v5457, %v5569
        %5571 = vmatmul.f32.gmra.mxu0 %v1362
        %v5572 = vpop.f32.mrf.mxu0
        %v5573 = vadd.f32 %v5460, %v5572
        %5574 = vmatmul.f32.gmra.mxu0 %v1365
        %v5575 = vpop.f32.mrf.mxu0
        %v5576 = vadd.f32 %v5463, %v5575
        %5577 = vmatmul.f32.gmra.mxu0 %v1368
        %v5578 = vpop.f32.mrf.mxu0
        %v5579 = vadd.f32 %v5466, %v5578
        %5580 = vmatmul.f32.gmra.mxu0 %v1371
        %v5581 = vpop.f32.mrf.mxu0
        %v5582 = vadd.f32 %v5469, %v5581
        %5583 = vmatmul.f32.gmra.mxu0 %v1374
        %v5584 = vpop.f32.mrf.mxu0
        %v5585 = vadd.f32 %v5472, %v5584
        %5586 = vmatmul.f32.gmra.mxu0 %v1377
        %v5587 = vpop.f32.mrf.mxu0
        %v5588 = vadd.f32 %v5475, %v5587
        %5589 = vmatmul.f32.gmra.mxu0 %v1380
        %v5590 = vpop.f32.mrf.mxu0
        %v5591 = vadd.f32 %v5478, %v5590
        %5592 = vmatmul.f32.gmra.mxu0 %v1383
        %v5593 = vpop.f32.mrf.mxu0
        %v5594 = vadd.f32 %v5481, %v5593
        %5595 = vmatmul.f32.gmra.mxu0 %v1386
        %v5596 = vpop.f32.mrf.mxu0
        %v5597 = vadd.f32 %v5484, %v5596
        %5598 = vmatmul.f32.gmra.mxu0 %v1389
        %v5599 = vpop.f32.mrf.mxu0
        %v5600 = vadd.f32 %v5487, %v5599
        %5601 = vmatmul.f32.gmra.mxu0 %v1392
        %v5602 = vpop.f32.mrf.mxu0
        %v5603 = vadd.f32 %v5490, %v5602
        %5604 = vmatmul.f32.gmra.mxu0 %v1395
        %v5605 = vpop.f32.mrf.mxu0
        %v5606 = vadd.f32 %v5493, %v5605
        %5607 = vmatmul.f32.gmra.mxu0 %v1398
        %v5608 = vpop.f32.mrf.mxu0
        %v5609 = vadd.f32 %v5496, %v5608
        %5610 = vdwg.mxu0
        %v5611 = vld [vmem:[%s51 + $0x30] sm:$0xff]
        %v5612 = vld [vmem:[%s51 + $0x38] sm:$0xff]
        %v5614 = vsel %vm2963, %v5347, 0
        %v5617 = vsel %vm2963, %v5348, 0
        %v5620 = vsel %vm2963, %v5349, 0
        %v5623 = vsel %vm2963, %v5350, 0
        %v5626 = vsel %vm2963, %v5351, 0
        %v5629 = vsel %vm2963, %v5352, 0
        %v5632 = vsel %vm2963, %v5353, 0
        %v5635 = vsel %vm2963, %v5354, 0
        %v5638 = vsel %vm2963, %v5355, 0
        %v5641 = vsel %vm2963, %v5356, 0
        %v5644 = vsel %vm2963, %v5357, 0
        %v5647 = vsel %vm2963, %v5358, 0
        %v5650 = vsel %vm2963, %v5359, 0
        %v5653 = vsel %vm2963, %v5360, 0
        %v5656 = vsel %vm2963, %v5361, 0
        %v5659 = vsel %vm2963, %v5362, 0
        %v5662 = vsel %vm2963, %v5363, 0
        %v5665 = vsel %vm2963, %v5364, 0
        %v5668 = vsel %vm2963, %v5365, 0
        %v5671 = vsel %vm2963, %v5366, 0
        %v5674 = vsel %vm2963, %v5367, 0
        %v5677 = vsel %vm2963, %v5368, 0
        %v5680 = vsel %vm2963, %v5369, 0
        %v5683 = vsel %vm2963, %v5370, 0
        %v5686 = vsel %vm2963, %v5371, 0
        %v5689 = vsel %vm2963, %v5372, 0
        %v5692 = vsel %vm2963, %v5373, 0
        %v5695 = vsel %vm2963, %v5374, 0
        %v5698 = vsel %vm2963, %v5375, 0
        %v5701 = vsel %vm2963, %v5376, 0
        %v5704 = vsel %vm2963, %v5377, 0
        %v5707 = vsel %vm2963, %v5378, 0
        %5709 = vmatpush.msra.mxu0 0.0
        %5710 = vmatpush.msra.mxu0 0.0
        %5711 = vmatpush.msra.mxu0 0.0
        %5712 = vmatpush.msra.mxu0 0.0
        %5713 = vmatpush.msra.mxu0 0.0
        %5714 = vmatpush.msra.mxu0 0.0
        %5715 = vmatpush.msra.mxu0 0.0
        %5716 = vmatpush.msra.mxu0 0.0
        %5717 = vmatpush.msra.mxu0 0.0
        %5718 = vmatpush.msra.mxu0 0.0
        %5719 = vmatpush.msra.mxu0 0.0
        %5720 = vmatpush.msra.mxu0 0.0
        %5721 = vmatpush.msra.mxu0 0.0
        %5722 = vmatpush.msra.mxu0 0.0
        %5723 = vmatpush.msra.mxu0 %v5612
        %5724 = vmatpush.msra.mxu0 %v5611
        %5725 = vmatmul.f32.gmra.mxu0 %v5614
        %v5726 = vpop.f32.mrf.mxu0
        %v5727 = vadd.f32 0.0, %v5726
        %5728 = vmatmul.f32.gmra.mxu0 %v5617
        %v5729 = vpop.f32.mrf.mxu0
        %v5730 = vadd.f32 0.0, %v5729
        %5731 = vmatmul.f32.gmra.mxu0 %v5620
        %v5732 = vpop.f32.mrf.mxu0
        %v5733 = vadd.f32 0.0, %v5732
        %5734 = vmatmul.f32.gmra.mxu0 %v5623
        %v5735 = vpop.f32.mrf.mxu0
        %v5736 = vadd.f32 0.0, %v5735
        %5737 = vmatmul.f32.gmra.mxu0 %v5626
        %v5738 = vpop.f32.mrf.mxu0
        %v5739 = vadd.f32 0.0, %v5738
        %5740 = vmatmul.f32.gmra.mxu0 %v5629
        %v5741 = vpop.f32.mrf.mxu0
        %v5742 = vadd.f32 0.0, %v5741
        %5743 = vmatmul.f32.gmra.mxu0 %v5632
        %v5744 = vpop.f32.mrf.mxu0
        %v5745 = vadd.f32 0.0, %v5744
        %5746 = vmatmul.f32.gmra.mxu0 %v5635
        %v5747 = vpop.f32.mrf.mxu0
        %v5748 = vadd.f32 0.0, %v5747
        %5749 = vmatmul.f32.gmra.mxu0 %v5638
        %v5750 = vpop.f32.mrf.mxu0
        %v5751 = vadd.f32 0.0, %v5750
        %5752 = vmatmul.f32.gmra.mxu0 %v5641
        %v5753 = vpop.f32.mrf.mxu0
        %v5754 = vadd.f32 0.0, %v5753
        %5755 = vmatmul.f32.gmra.mxu0 %v5644
        %v5756 = vpop.f32.mrf.mxu0
        %v5757 = vadd.f32 0.0, %v5756
        %5758 = vmatmul.f32.gmra.mxu0 %v5647
        %v5759 = vpop.f32.mrf.mxu0
        %v5760 = vadd.f32 0.0, %v5759
        %5761 = vmatmul.f32.gmra.mxu0 %v5650
        %v5762 = vpop.f32.mrf.mxu0
        %v5763 = vadd.f32 0.0, %v5762
        %5764 = vmatmul.f32.gmra.mxu0 %v5653
        %v5765 = vpop.f32.mrf.mxu0
        %v5766 = vadd.f32 0.0, %v5765
        %5767 = vmatmul.f32.gmra.mxu0 %v5656
        %v5768 = vpop.f32.mrf.mxu0
        %v5769 = vadd.f32 0.0, %v5768
        %5770 = vmatmul.f32.gmra.mxu0 %v5659
        %v5771 = vpop.f32.mrf.mxu0
        %v5772 = vadd.f32 0.0, %v5771
        %5773 = vmatmul.f32.gmra.mxu0 %v5662
        %v5774 = vpop.f32.mrf.mxu0
        %v5775 = vadd.f32 0.0, %v5774
        %5776 = vmatmul.f32.gmra.mxu0 %v5665
        %v5777 = vpop.f32.mrf.mxu0
        %v5778 = vadd.f32 0.0, %v5777
        %5779 = vmatmul.f32.gmra.mxu0 %v5668
        %v5780 = vpop.f32.mrf.mxu0
        %v5781 = vadd.f32 0.0, %v5780
        %5782 = vmatmul.f32.gmra.mxu0 %v5671
        %v5783 = vpop.f32.mrf.mxu0
        %v5784 = vadd.f32 0.0, %v5783
        %5785 = vmatmul.f32.gmra.mxu0 %v5674
        %v5786 = vpop.f32.mrf.mxu0
        %v5787 = vadd.f32 0.0, %v5786
        %5788 = vmatmul.f32.gmra.mxu0 %v5677
        %v5789 = vpop.f32.mrf.mxu0
        %v5790 = vadd.f32 0.0, %v5789
        %5791 = vmatmul.f32.gmra.mxu0 %v5680
        %v5792 = vpop.f32.mrf.mxu0
        %v5793 = vadd.f32 0.0, %v5792
        %5794 = vmatmul.f32.gmra.mxu0 %v5683
        %v5795 = vpop.f32.mrf.mxu0
        %v5796 = vadd.f32 0.0, %v5795
        %5797 = vmatmul.f32.gmra.mxu0 %v5686
        %v5798 = vpop.f32.mrf.mxu0
        %v5799 = vadd.f32 0.0, %v5798
        %5800 = vmatmul.f32.gmra.mxu0 %v5689
        %v5801 = vpop.f32.mrf.mxu0
        %v5802 = vadd.f32 0.0, %v5801
        %5803 = vmatmul.f32.gmra.mxu0 %v5692
        %v5804 = vpop.f32.mrf.mxu0
        %v5805 = vadd.f32 0.0, %v5804
        %5806 = vmatmul.f32.gmra.mxu0 %v5695
        %v5807 = vpop.f32.mrf.mxu0
        %v5808 = vadd.f32 0.0, %v5807
        %5809 = vmatmul.f32.gmra.mxu0 %v5698
        %v5810 = vpop.f32.mrf.mxu0
        %v5811 = vadd.f32 0.0, %v5810
        %5812 = vmatmul.f32.gmra.mxu0 %v5701
        %v5813 = vpop.f32.mrf.mxu0
        %v5814 = vadd.f32 0.0, %v5813
        %5815 = vmatmul.f32.gmra.mxu0 %v5704
        %v5816 = vpop.f32.mrf.mxu0
        %v5817 = vadd.f32 0.0, %v5816
        %5818 = vmatmul.f32.gmra.mxu0 %v5707
        %v5819 = vpop.f32.mrf.mxu0
        %v5820 = vadd.f32 0.0, %v5819
        %5821 = vdwg.mxu0
        %v5822 = vadd.f32 %v5516, %v5727
        %v5823 = vadd.f32 %v5519, %v5730
        %v5824 = vadd.f32 %v5522, %v5733
        %v5825 = vadd.f32 %v5525, %v5736
        %v5826 = vadd.f32 %v5528, %v5739
        %v5827 = vadd.f32 %v5531, %v5742
        %v5828 = vadd.f32 %v5534, %v5745
        %v5829 = vadd.f32 %v5537, %v5748
        %v5830 = vadd.f32 %v5540, %v5751
        %v5831 = vadd.f32 %v5543, %v5754
        %v5832 = vadd.f32 %v5546, %v5757
        %v5833 = vadd.f32 %v5549, %v5760
        %v5834 = vadd.f32 %v5552, %v5763
        %v5835 = vadd.f32 %v5555, %v5766
        %v5836 = vadd.f32 %v5558, %v5769
        %v5837 = vadd.f32 %v5561, %v5772
        %v5838 = vadd.f32 %v5564, %v5775
        %v5839 = vadd.f32 %v5567, %v5778
        %v5840 = vadd.f32 %v5570, %v5781
        %v5841 = vadd.f32 %v5573, %v5784
        %v5842 = vadd.f32 %v5576, %v5787
        %v5843 = vadd.f32 %v5579, %v5790
        %v5844 = vadd.f32 %v5582, %v5793
        %v5845 = vadd.f32 %v5585, %v5796
        %v5846 = vadd.f32 %v5588, %v5799
        %v5847 = vadd.f32 %v5591, %v5802
        %v5848 = vadd.f32 %v5594, %v5805
        %v5849 = vadd.f32 %v5597, %v5808
        %v5850 = vadd.f32 %v5600, %v5811
        %v5851 = vadd.f32 %v5603, %v5814
        %v5852 = vadd.f32 %v5606, %v5817
        %v5853 = vadd.f32 %v5609, %v5820
        %v5854 = vld [vmem:[%s53] sm:$0x1]
        %v5856 = vperm.slane %v5854, 0
        %v5858 = vadd.f32 %v5822, %v5856
        %v5859 = vadd.f32 %v5823, %v5856
        %v5860 = vadd.f32 %v5824, %v5856
        %v5861 = vadd.f32 %v5825, %v5856
        %v5862 = vadd.f32 %v5826, %v5856
        %v5863 = vadd.f32 %v5827, %v5856
        %v5864 = vadd.f32 %v5828, %v5856
        %v5865 = vadd.f32 %v5829, %v5856
        %v5866 = vadd.f32 %v5830, %v5856
        %v5867 = vadd.f32 %v5831, %v5856
        %v5868 = vadd.f32 %v5832, %v5856
        %v5869 = vadd.f32 %v5833, %v5856
        %v5870 = vadd.f32 %v5834, %v5856
        %v5871 = vadd.f32 %v5835, %v5856
        %v5872 = vadd.f32 %v5836, %v5856
        %v5873 = vadd.f32 %v5837, %v5856
        %v5874 = vadd.f32 %v5838, %v5856
        %v5875 = vadd.f32 %v5839, %v5856
        %v5876 = vadd.f32 %v5840, %v5856
        %v5877 = vadd.f32 %v5841, %v5856
        %v5878 = vadd.f32 %v5842, %v5856
        %v5879 = vadd.f32 %v5843, %v5856
        %v5880 = vadd.f32 %v5844, %v5856
        %v5881 = vadd.f32 %v5845, %v5856
        %v5882 = vadd.f32 %v5846, %v5856
        %v5883 = vadd.f32 %v5847, %v5856
        %v5884 = vadd.f32 %v5848, %v5856
        %v5885 = vadd.f32 %v5849, %v5856
        %v5886 = vadd.f32 %v5850, %v5856
        %v5887 = vadd.f32 %v5851, %v5856
        %v5888 = vadd.f32 %v5852, %v5856
        %v5889 = vadd.f32 %v5853, %v5856
        %vm5890 = vcmp.gt.f32.partialorder %v5858, 0.0
        %vm5891 = vcmp.gt.f32.partialorder %v5859, 0.0
        %vm5892 = vcmp.gt.f32.partialorder %v5860, 0.0
        %vm5893 = vcmp.gt.f32.partialorder %v5861, 0.0
        %vm5894 = vcmp.gt.f32.partialorder %v5862, 0.0
        %vm5895 = vcmp.gt.f32.partialorder %v5863, 0.0
        %vm5896 = vcmp.gt.f32.partialorder %v5864, 0.0
        %vm5897 = vcmp.gt.f32.partialorder %v5865, 0.0
        %vm5898 = vcmp.gt.f32.partialorder %v5866, 0.0
        %vm5899 = vcmp.gt.f32.partialorder %v5867, 0.0
        %vm5900 = vcmp.gt.f32.partialorder %v5868, 0.0
        %vm5901 = vcmp.gt.f32.partialorder %v5869, 0.0
        %vm5902 = vcmp.gt.f32.partialorder %v5870, 0.0
        %vm5903 = vcmp.gt.f32.partialorder %v5871, 0.0
        %vm5904 = vcmp.gt.f32.partialorder %v5872, 0.0
        %vm5905 = vcmp.gt.f32.partialorder %v5873, 0.0
        %vm5906 = vcmp.gt.f32.partialorder %v5874, 0.0
        %vm5907 = vcmp.gt.f32.partialorder %v5875, 0.0
        %vm5908 = vcmp.gt.f32.partialorder %v5876, 0.0
        %vm5909 = vcmp.gt.f32.partialorder %v5877, 0.0
        %vm5910 = vcmp.gt.f32.partialorder %v5878, 0.0
        %vm5911 = vcmp.gt.f32.partialorder %v5879, 0.0
        %vm5912 = vcmp.gt.f32.partialorder %v5880, 0.0
        %vm5913 = vcmp.gt.f32.partialorder %v5881, 0.0
        %vm5914 = vcmp.gt.f32.partialorder %v5882, 0.0
        %vm5915 = vcmp.gt.f32.partialorder %v5883, 0.0
        %vm5916 = vcmp.gt.f32.partialorder %v5884, 0.0
        %vm5917 = vcmp.gt.f32.partialorder %v5885, 0.0
        %vm5918 = vcmp.gt.f32.partialorder %v5886, 0.0
        %vm5919 = vcmp.gt.f32.partialorder %v5887, 0.0
        %vm5920 = vcmp.gt.f32.partialorder %v5888, 0.0
        %vm5921 = vcmp.gt.f32.partialorder %v5889, 0.0
        %v5922 = vmul.f32 %v5858, 0.01
        %v5923 = vmul.f32 %v5859, 0.01
        %v5924 = vmul.f32 %v5860, 0.01
        %v5925 = vmul.f32 %v5861, 0.01
        %v5926 = vmul.f32 %v5862, 0.01
        %v5927 = vmul.f32 %v5863, 0.01
        %v5928 = vmul.f32 %v5864, 0.01
        %v5929 = vmul.f32 %v5865, 0.01
        %v5930 = vmul.f32 %v5866, 0.01
        %v5931 = vmul.f32 %v5867, 0.01
        %v5932 = vmul.f32 %v5868, 0.01
        %v5933 = vmul.f32 %v5869, 0.01
        %v5934 = vmul.f32 %v5870, 0.01
        %v5935 = vmul.f32 %v5871, 0.01
        %v5936 = vmul.f32 %v5872, 0.01
        %v5937 = vmul.f32 %v5873, 0.01
        %v5938 = vmul.f32 %v5874, 0.01
        %v5939 = vmul.f32 %v5875, 0.01
        %v5940 = vmul.f32 %v5876, 0.01
        %v5941 = vmul.f32 %v5877, 0.01
        %v5942 = vmul.f32 %v5878, 0.01
        %v5943 = vmul.f32 %v5879, 0.01
        %v5944 = vmul.f32 %v5880, 0.01
        %v5945 = vmul.f32 %v5881, 0.01
        %v5946 = vmul.f32 %v5882, 0.01
        %v5947 = vmul.f32 %v5883, 0.01
        %v5948 = vmul.f32 %v5884, 0.01
        %v5949 = vmul.f32 %v5885, 0.01
        %v5950 = vmul.f32 %v5886, 0.01
        %v5951 = vmul.f32 %v5887, 0.01
        %v5952 = vmul.f32 %v5888, 0.01
        %v5953 = vmul.f32 %v5889, 0.01
        %v5954 = vsel %vm5890, %v5858, %v5922
        %v5955 = vsel %vm5891, %v5859, %v5923
        %v5956 = vsel %vm5892, %v5860, %v5924
        %v5957 = vsel %vm5893, %v5861, %v5925
        %v5958 = vsel %vm5894, %v5862, %v5926
        %v5959 = vsel %vm5895, %v5863, %v5927
        %v5960 = vsel %vm5896, %v5864, %v5928
        %v5961 = vsel %vm5897, %v5865, %v5929
        %v5962 = vsel %vm5898, %v5866, %v5930
        %v5963 = vsel %vm5899, %v5867, %v5931
        %v5964 = vsel %vm5900, %v5868, %v5932
        %v5965 = vsel %vm5901, %v5869, %v5933
        %v5966 = vsel %vm5902, %v5870, %v5934
        %v5967 = vsel %vm5903, %v5871, %v5935
        %v5968 = vsel %vm5904, %v5872, %v5936
        %v5969 = vsel %vm5905, %v5873, %v5937
        %v5970 = vsel %vm5906, %v5874, %v5938
        %v5971 = vsel %vm5907, %v5875, %v5939
        %v5972 = vsel %vm5908, %v5876, %v5940
        %v5973 = vsel %vm5909, %v5877, %v5941
        %v5974 = vsel %vm5910, %v5878, %v5942
        %v5975 = vsel %vm5911, %v5879, %v5943
        %v5976 = vsel %vm5912, %v5880, %v5944
        %v5977 = vsel %vm5913, %v5881, %v5945
        %v5978 = vsel %vm5914, %v5882, %v5946
        %v5979 = vsel %vm5915, %v5883, %v5947
        %v5980 = vsel %vm5916, %v5884, %v5948
        %v5981 = vsel %vm5917, %v5885, %v5949
        %v5982 = vsel %vm5918, %v5886, %v5950
        %v5983 = vsel %vm5919, %v5887, %v5951
        %v5984 = vsel %vm5920, %v5888, %v5952
        %v5985 = vsel %vm5921, %v5889, %v5953
        %v5986 = vld [vmem:[%s55] sm:$0xff]
        %v5987 = vld [vmem:[%s55 + $0x8] sm:$0xff]
        %v5988 = vld [vmem:[%s55 + $0x10] sm:$0xff]
        %v5989 = vld [vmem:[%s55 + $0x18] sm:$0xff]
        %v5990 = vld [vmem:[%s55 + $0x20] sm:$0xff]
        %v5991 = vld [vmem:[%s55 + $0x28] sm:$0xff]
        %v5992 = vld [vmem:[%s55 + $0x30] sm:$0xff]
        %v5993 = vld [vmem:[%s55 + $0x38] sm:$0xff]
        %v5994 = vld [vmem:[%s57] sm:$0x1]
        %v5996 = vperm.slane %v5994, 0
        %v5999 = vsel %vm1621, %v5954, 0
        %v6002 = vsel %vm1621, %v5955, 0
        %v6005 = vsel %vm1621, %v5956, 0
        %v6008 = vsel %vm1621, %v5957, 0
        %v6011 = vsel %vm1621, %v5958, 0
        %v6014 = vsel %vm1621, %v5959, 0
        %v6017 = vsel %vm1621, %v5960, 0
        %v6020 = vsel %vm1621, %v5961, 0
        %v6023 = vsel %vm1621, %v5962, 0
        %v6026 = vsel %vm1621, %v5963, 0
        %v6029 = vsel %vm1621, %v5964, 0
        %v6032 = vsel %vm1621, %v5965, 0
        %v6035 = vsel %vm1621, %v5966, 0
        %v6038 = vsel %vm1621, %v5967, 0
        %v6041 = vsel %vm1621, %v5968, 0
        %v6044 = vsel %vm1621, %v5969, 0
        %v6047 = vsel %vm1621, %v5970, 0
        %v6050 = vsel %vm1621, %v5971, 0
        %v6053 = vsel %vm1621, %v5972, 0
        %v6056 = vsel %vm1621, %v5973, 0
        %v6059 = vsel %vm1621, %v5974, 0
        %v6062 = vsel %vm1621, %v5975, 0
        %v6065 = vsel %vm1621, %v5976, 0
        %v6068 = vsel %vm1621, %v5977, 0
        %v6071 = vsel %vm1621, %v5978, 0
        %v6074 = vsel %vm1621, %v5979, 0
        %v6077 = vsel %vm1621, %v5980, 0
        %v6080 = vsel %vm1621, %v5981, 0
        %v6083 = vsel %vm1621, %v5982, 0
        %v6086 = vsel %vm1621, %v5983, 0
        %v6089 = vsel %vm1621, %v5984, 0
        %v6092 = vsel %vm1621, %v5985, 0
        %6094 = vmatpush.msra.mxu0 0.0
        %6095 = vmatpush.msra.mxu0 0.0
        %6096 = vmatpush.msra.mxu0 0.0
        %6097 = vmatpush.msra.mxu0 0.0
        %6098 = vmatpush.msra.mxu0 0.0
        %6099 = vmatpush.msra.mxu0 0.0
        %6100 = vmatpush.msra.mxu0 0.0
        %6101 = vmatpush.msra.mxu0 0.0
        %6102 = vmatpush.msra.mxu0 %v5993
        %6103 = vmatpush.msra.mxu0 %v5992
        %6104 = vmatpush.msra.mxu0 %v5991
        %6105 = vmatpush.msra.mxu0 %v5990
        %6106 = vmatpush.msra.mxu0 %v5989
        %6107 = vmatpush.msra.mxu0 %v5988
        %6108 = vmatpush.msra.mxu0 %v5987
        %6109 = vmatpush.msra.mxu0 %v5986
        %6110 = vmatmul.f32.gmra.mxu0 %v5999
        %v6111 = vpop.f32.mrf.mxu0
        %v6112 = vadd.f32 %v5996, %v6111
        %6113 = vmatmul.f32.gmra.mxu0 %v6002
        %v6114 = vpop.f32.mrf.mxu0
        %v6115 = vadd.f32 %v5996, %v6114
        %6116 = vmatmul.f32.gmra.mxu0 %v6005
        %v6117 = vpop.f32.mrf.mxu0
        %v6118 = vadd.f32 %v5996, %v6117
        %6119 = vmatmul.f32.gmra.mxu0 %v6008
        %v6120 = vpop.f32.mrf.mxu0
        %v6121 = vadd.f32 %v5996, %v6120
        %6122 = vmatmul.f32.gmra.mxu0 %v6011
        %v6123 = vpop.f32.mrf.mxu0
        %v6124 = vadd.f32 %v5996, %v6123
        %6125 = vmatmul.f32.gmra.mxu0 %v6014
        %v6126 = vpop.f32.mrf.mxu0
        %v6127 = vadd.f32 %v5996, %v6126
        %6128 = vmatmul.f32.gmra.mxu0 %v6017
        %v6129 = vpop.f32.mrf.mxu0
        %v6130 = vadd.f32 %v5996, %v6129
        %6131 = vmatmul.f32.gmra.mxu0 %v6020
        %v6132 = vpop.f32.mrf.mxu0
        %v6133 = vadd.f32 %v5996, %v6132
        %6134 = vmatmul.f32.gmra.mxu0 %v6023
        %v6135 = vpop.f32.mrf.mxu0
        %v6136 = vadd.f32 %v5996, %v6135
        %6137 = vmatmul.f32.gmra.mxu0 %v6026
        %v6138 = vpop.f32.mrf.mxu0
        %v6139 = vadd.f32 %v5996, %v6138
        %6140 = vmatmul.f32.gmra.mxu0 %v6029
        %v6141 = vpop.f32.mrf.mxu0
        %v6142 = vadd.f32 %v5996, %v6141
        %6143 = vmatmul.f32.gmra.mxu0 %v6032
        %v6144 = vpop.f32.mrf.mxu0
        %v6145 = vadd.f32 %v5996, %v6144
        %6146 = vmatmul.f32.gmra.mxu0 %v6035
        %v6147 = vpop.f32.mrf.mxu0
        %v6148 = vadd.f32 %v5996, %v6147
        %6149 = vmatmul.f32.gmra.mxu0 %v6038
        %v6150 = vpop.f32.mrf.mxu0
        %v6151 = vadd.f32 %v5996, %v6150
        %6152 = vmatmul.f32.gmra.mxu0 %v6041
        %v6153 = vpop.f32.mrf.mxu0
        %v6154 = vadd.f32 %v5996, %v6153
        %6155 = vmatmul.f32.gmra.mxu0 %v6044
        %v6156 = vpop.f32.mrf.mxu0
        %v6157 = vadd.f32 %v5996, %v6156
        %6158 = vmatmul.f32.gmra.mxu0 %v6047
        %v6159 = vpop.f32.mrf.mxu0
        %v6160 = vadd.f32 %v5996, %v6159
        %6161 = vmatmul.f32.gmra.mxu0 %v6050
        %v6162 = vpop.f32.mrf.mxu0
        %v6163 = vadd.f32 %v5996, %v6162
        %6164 = vmatmul.f32.gmra.mxu0 %v6053
        %v6165 = vpop.f32.mrf.mxu0
        %v6166 = vadd.f32 %v5996, %v6165
        %6167 = vmatmul.f32.gmra.mxu0 %v6056
        %v6168 = vpop.f32.mrf.mxu0
        %v6169 = vadd.f32 %v5996, %v6168
        %6170 = vmatmul.f32.gmra.mxu0 %v6059
        %v6171 = vpop.f32.mrf.mxu0
        %v6172 = vadd.f32 %v5996, %v6171
        %6173 = vmatmul.f32.gmra.mxu0 %v6062
        %v6174 = vpop.f32.mrf.mxu0
        %v6175 = vadd.f32 %v5996, %v6174
        %6176 = vmatmul.f32.gmra.mxu0 %v6065
        %v6177 = vpop.f32.mrf.mxu0
        %v6178 = vadd.f32 %v5996, %v6177
        %6179 = vmatmul.f32.gmra.mxu0 %v6068
        %v6180 = vpop.f32.mrf.mxu0
        %v6181 = vadd.f32 %v5996, %v6180
        %6182 = vmatmul.f32.gmra.mxu0 %v6071
        %v6183 = vpop.f32.mrf.mxu0
        %v6184 = vadd.f32 %v5996, %v6183
        %6185 = vmatmul.f32.gmra.mxu0 %v6074
        %v6186 = vpop.f32.mrf.mxu0
        %v6187 = vadd.f32 %v5996, %v6186
        %6188 = vmatmul.f32.gmra.mxu0 %v6077
        %v6189 = vpop.f32.mrf.mxu0
        %v6190 = vadd.f32 %v5996, %v6189
        %6191 = vmatmul.f32.gmra.mxu0 %v6080
        %v6192 = vpop.f32.mrf.mxu0
        %v6193 = vadd.f32 %v5996, %v6192
        %6194 = vmatmul.f32.gmra.mxu0 %v6083
        %v6195 = vpop.f32.mrf.mxu0
        %v6196 = vadd.f32 %v5996, %v6195
        %6197 = vmatmul.f32.gmra.mxu0 %v6086
        %v6198 = vpop.f32.mrf.mxu0
        %v6199 = vadd.f32 %v5996, %v6198
        %6200 = vmatmul.f32.gmra.mxu0 %v6089
        %v6201 = vpop.f32.mrf.mxu0
        %v6202 = vadd.f32 %v5996, %v6201
        %6203 = vmatmul.f32.gmra.mxu0 %v6092
        %v6204 = vpop.f32.mrf.mxu0
        %v6205 = vadd.f32 %v5996, %v6204
        %6206 = vdwg.mxu0
        %vm6207 = vcmp.gt.f32.partialorder %v6112, 0.0
        %vm6208 = vcmp.gt.f32.partialorder %v6115, 0.0
        %vm6209 = vcmp.gt.f32.partialorder %v6118, 0.0
        %vm6210 = vcmp.gt.f32.partialorder %v6121, 0.0
        %vm6211 = vcmp.gt.f32.partialorder %v6124, 0.0
        %vm6212 = vcmp.gt.f32.partialorder %v6127, 0.0
        %vm6213 = vcmp.gt.f32.partialorder %v6130, 0.0
        %vm6214 = vcmp.gt.f32.partialorder %v6133, 0.0
        %vm6215 = vcmp.gt.f32.partialorder %v6136, 0.0
        %vm6216 = vcmp.gt.f32.partialorder %v6139, 0.0
        %vm6217 = vcmp.gt.f32.partialorder %v6142, 0.0
        %vm6218 = vcmp.gt.f32.partialorder %v6145, 0.0
        %vm6219 = vcmp.gt.f32.partialorder %v6148, 0.0
        %vm6220 = vcmp.gt.f32.partialorder %v6151, 0.0
        %vm6221 = vcmp.gt.f32.partialorder %v6154, 0.0
        %vm6222 = vcmp.gt.f32.partialorder %v6157, 0.0
        %vm6223 = vcmp.gt.f32.partialorder %v6160, 0.0
        %vm6224 = vcmp.gt.f32.partialorder %v6163, 0.0
        %vm6225 = vcmp.gt.f32.partialorder %v6166, 0.0
        %vm6226 = vcmp.gt.f32.partialorder %v6169, 0.0
        %vm6227 = vcmp.gt.f32.partialorder %v6172, 0.0
        %vm6228 = vcmp.gt.f32.partialorder %v6175, 0.0
        %vm6229 = vcmp.gt.f32.partialorder %v6178, 0.0
        %vm6230 = vcmp.gt.f32.partialorder %v6181, 0.0
        %vm6231 = vcmp.gt.f32.partialorder %v6184, 0.0
        %vm6232 = vcmp.gt.f32.partialorder %v6187, 0.0
        %vm6233 = vcmp.gt.f32.partialorder %v6190, 0.0
        %vm6234 = vcmp.gt.f32.partialorder %v6193, 0.0
        %vm6235 = vcmp.gt.f32.partialorder %v6196, 0.0
        %vm6236 = vcmp.gt.f32.partialorder %v6199, 0.0
        %vm6237 = vcmp.gt.f32.partialorder %v6202, 0.0
        %vm6238 = vcmp.gt.f32.partialorder %v6205, 0.0
        %v6239 = vmul.f32 %v6112, 0.01
        %v6240 = vmul.f32 %v6115, 0.01
        %v6241 = vmul.f32 %v6118, 0.01
        %v6242 = vmul.f32 %v6121, 0.01
        %v6243 = vmul.f32 %v6124, 0.01
        %v6244 = vmul.f32 %v6127, 0.01
        %v6245 = vmul.f32 %v6130, 0.01
        %v6246 = vmul.f32 %v6133, 0.01
        %v6247 = vmul.f32 %v6136, 0.01
        %v6248 = vmul.f32 %v6139, 0.01
        %v6249 = vmul.f32 %v6142, 0.01
        %v6250 = vmul.f32 %v6145, 0.01
        %v6251 = vmul.f32 %v6148, 0.01
        %v6252 = vmul.f32 %v6151, 0.01
        %v6253 = vmul.f32 %v6154, 0.01
        %v6254 = vmul.f32 %v6157, 0.01
        %v6255 = vmul.f32 %v6160, 0.01
        %v6256 = vmul.f32 %v6163, 0.01
        %v6257 = vmul.f32 %v6166, 0.01
        %v6258 = vmul.f32 %v6169, 0.01
        %v6259 = vmul.f32 %v6172, 0.01
        %v6260 = vmul.f32 %v6175, 0.01
        %v6261 = vmul.f32 %v6178, 0.01
        %v6262 = vmul.f32 %v6181, 0.01
        %v6263 = vmul.f32 %v6184, 0.01
        %v6264 = vmul.f32 %v6187, 0.01
        %v6265 = vmul.f32 %v6190, 0.01
        %v6266 = vmul.f32 %v6193, 0.01
        %v6267 = vmul.f32 %v6196, 0.01
        %v6268 = vmul.f32 %v6199, 0.01
        %v6269 = vmul.f32 %v6202, 0.01
        %v6270 = vmul.f32 %v6205, 0.01
        %v6271 = vsel %vm6207, %v6112, %v6239
        %v6272 = vsel %vm6208, %v6115, %v6240
        %v6273 = vsel %vm6209, %v6118, %v6241
        %v6274 = vsel %vm6210, %v6121, %v6242
        %v6275 = vsel %vm6211, %v6124, %v6243
        %v6276 = vsel %vm6212, %v6127, %v6244
        %v6277 = vsel %vm6213, %v6130, %v6245
        %v6278 = vsel %vm6214, %v6133, %v6246
        %v6279 = vsel %vm6215, %v6136, %v6247
        %v6280 = vsel %vm6216, %v6139, %v6248
        %v6281 = vsel %vm6217, %v6142, %v6249
        %v6282 = vsel %vm6218, %v6145, %v6250
        %v6283 = vsel %vm6219, %v6148, %v6251
        %v6284 = vsel %vm6220, %v6151, %v6252
        %v6285 = vsel %vm6221, %v6154, %v6253
        %v6286 = vsel %vm6222, %v6157, %v6254
        %v6287 = vsel %vm6223, %v6160, %v6255
        %v6288 = vsel %vm6224, %v6163, %v6256
        %v6289 = vsel %vm6225, %v6166, %v6257
        %v6290 = vsel %vm6226, %v6169, %v6258
        %v6291 = vsel %vm6227, %v6172, %v6259
        %v6292 = vsel %vm6228, %v6175, %v6260
        %v6293 = vsel %vm6229, %v6178, %v6261
        %v6294 = vsel %vm6230, %v6181, %v6262
        %v6295 = vsel %vm6231, %v6184, %v6263
        %v6296 = vsel %vm6232, %v6187, %v6264
        %v6297 = vsel %vm6233, %v6190, %v6265
        %v6298 = vsel %vm6234, %v6193, %v6266
        %v6299 = vsel %vm6235, %v6196, %v6267
        %v6300 = vsel %vm6236, %v6199, %v6268
        %v6301 = vsel %vm6237, %v6202, %v6269
        %v6302 = vsel %vm6238, %v6205, %v6270
        %v6303 = vld [vmem:[%s59] sm:$0xff]
        %v6304 = vld [vmem:[%s59 + $0x8] sm:$0xff]
        %v6305 = vld [vmem:[%s59 + $0x10] sm:$0xff]
        %v6306 = vld [vmem:[%s59 + $0x18] sm:$0xff]
        %v6307 = vld [vmem:[%s59 + $0x20] sm:$0xff]
        %v6308 = vld [vmem:[%s59 + $0x28] sm:$0xff]
        %v6309 = vld [vmem:[%s59 + $0x30] sm:$0xff]
        %v6310 = vld [vmem:[%s59 + $0x38] sm:$0xff]
        %v6311 = vld [vmem:[%s61] sm:$0x1]
        %v6313 = vperm.slane %v6311, 0
        %v6316 = vsel %vm1621, %v6271, 0
        %v6319 = vsel %vm1621, %v6272, 0
        %v6322 = vsel %vm1621, %v6273, 0
        %v6325 = vsel %vm1621, %v6274, 0
        %v6328 = vsel %vm1621, %v6275, 0
        %v6331 = vsel %vm1621, %v6276, 0
        %v6334 = vsel %vm1621, %v6277, 0
        %v6337 = vsel %vm1621, %v6278, 0
        %v6340 = vsel %vm1621, %v6279, 0
        %v6343 = vsel %vm1621, %v6280, 0
        %v6346 = vsel %vm1621, %v6281, 0
        %v6349 = vsel %vm1621, %v6282, 0
        %v6352 = vsel %vm1621, %v6283, 0
        %v6355 = vsel %vm1621, %v6284, 0
        %v6358 = vsel %vm1621, %v6285, 0
        %v6361 = vsel %vm1621, %v6286, 0
        %v6364 = vsel %vm1621, %v6287, 0
        %v6367 = vsel %vm1621, %v6288, 0
        %v6370 = vsel %vm1621, %v6289, 0
        %v6373 = vsel %vm1621, %v6290, 0
        %v6376 = vsel %vm1621, %v6291, 0
        %v6379 = vsel %vm1621, %v6292, 0
        %v6382 = vsel %vm1621, %v6293, 0
        %v6385 = vsel %vm1621, %v6294, 0
        %v6388 = vsel %vm1621, %v6295, 0
        %v6391 = vsel %vm1621, %v6296, 0
        %v6394 = vsel %vm1621, %v6297, 0
        %v6397 = vsel %vm1621, %v6298, 0
        %v6400 = vsel %vm1621, %v6299, 0
        %v6403 = vsel %vm1621, %v6300, 0
        %v6406 = vsel %vm1621, %v6301, 0
        %v6409 = vsel %vm1621, %v6302, 0
        %6411 = vmatpush.msra.mxu0 0.0
        %6412 = vmatpush.msra.mxu0 0.0
        %6413 = vmatpush.msra.mxu0 0.0
        %6414 = vmatpush.msra.mxu0 0.0
        %6415 = vmatpush.msra.mxu0 0.0
        %6416 = vmatpush.msra.mxu0 0.0
        %6417 = vmatpush.msra.mxu0 0.0
        %6418 = vmatpush.msra.mxu0 0.0
        %6419 = vmatpush.msra.mxu0 %v6310
        %6420 = vmatpush.msra.mxu0 %v6309
        %6421 = vmatpush.msra.mxu0 %v6308
        %6422 = vmatpush.msra.mxu0 %v6307
        %6423 = vmatpush.msra.mxu0 %v6306
        %6424 = vmatpush.msra.mxu0 %v6305
        %6425 = vmatpush.msra.mxu0 %v6304
        %6426 = vmatpush.msra.mxu0 %v6303
        %6427 = vmatmul.f32.gmra.mxu0 %v6316
        %v6428 = vpop.f32.mrf.mxu0
        %v6429 = vadd.f32 %v6313, %v6428
        %6430 = vmatmul.f32.gmra.mxu0 %v6319
        %v6431 = vpop.f32.mrf.mxu0
        %v6432 = vadd.f32 %v6313, %v6431
        %6433 = vmatmul.f32.gmra.mxu0 %v6322
        %v6434 = vpop.f32.mrf.mxu0
        %v6435 = vadd.f32 %v6313, %v6434
        %6436 = vmatmul.f32.gmra.mxu0 %v6325
        %v6437 = vpop.f32.mrf.mxu0
        %v6438 = vadd.f32 %v6313, %v6437
        %6439 = vmatmul.f32.gmra.mxu0 %v6328
        %v6440 = vpop.f32.mrf.mxu0
        %v6441 = vadd.f32 %v6313, %v6440
        %6442 = vmatmul.f32.gmra.mxu0 %v6331
        %v6443 = vpop.f32.mrf.mxu0
        %v6444 = vadd.f32 %v6313, %v6443
        %6445 = vmatmul.f32.gmra.mxu0 %v6334
        %v6446 = vpop.f32.mrf.mxu0
        %v6447 = vadd.f32 %v6313, %v6446
        %6448 = vmatmul.f32.gmra.mxu0 %v6337
        %v6449 = vpop.f32.mrf.mxu0
        %v6450 = vadd.f32 %v6313, %v6449
        %6451 = vmatmul.f32.gmra.mxu0 %v6340
        %v6452 = vpop.f32.mrf.mxu0
        %v6453 = vadd.f32 %v6313, %v6452
        %6454 = vmatmul.f32.gmra.mxu0 %v6343
        %v6455 = vpop.f32.mrf.mxu0
        %v6456 = vadd.f32 %v6313, %v6455
        %6457 = vmatmul.f32.gmra.mxu0 %v6346
        %v6458 = vpop.f32.mrf.mxu0
        %v6459 = vadd.f32 %v6313, %v6458
        %6460 = vmatmul.f32.gmra.mxu0 %v6349
        %v6461 = vpop.f32.mrf.mxu0
        %v6462 = vadd.f32 %v6313, %v6461
        %6463 = vmatmul.f32.gmra.mxu0 %v6352
        %v6464 = vpop.f32.mrf.mxu0
        %v6465 = vadd.f32 %v6313, %v6464
        %6466 = vmatmul.f32.gmra.mxu0 %v6355
        %v6467 = vpop.f32.mrf.mxu0
        %v6468 = vadd.f32 %v6313, %v6467
        %6469 = vmatmul.f32.gmra.mxu0 %v6358
        %v6470 = vpop.f32.mrf.mxu0
        %v6471 = vadd.f32 %v6313, %v6470
        %6472 = vmatmul.f32.gmra.mxu0 %v6361
        %v6473 = vpop.f32.mrf.mxu0
        %v6474 = vadd.f32 %v6313, %v6473
        %6475 = vmatmul.f32.gmra.mxu0 %v6364
        %v6476 = vpop.f32.mrf.mxu0
        %v6477 = vadd.f32 %v6313, %v6476
        %6478 = vmatmul.f32.gmra.mxu0 %v6367
        %v6479 = vpop.f32.mrf.mxu0
        %v6480 = vadd.f32 %v6313, %v6479
        %6481 = vmatmul.f32.gmra.mxu0 %v6370
        %v6482 = vpop.f32.mrf.mxu0
        %v6483 = vadd.f32 %v6313, %v6482
        %6484 = vmatmul.f32.gmra.mxu0 %v6373
        %v6485 = vpop.f32.mrf.mxu0
        %v6486 = vadd.f32 %v6313, %v6485
        %6487 = vmatmul.f32.gmra.mxu0 %v6376
        %v6488 = vpop.f32.mrf.mxu0
        %v6489 = vadd.f32 %v6313, %v6488
        %6490 = vmatmul.f32.gmra.mxu0 %v6379
        %v6491 = vpop.f32.mrf.mxu0
        %v6492 = vadd.f32 %v6313, %v6491
        %6493 = vmatmul.f32.gmra.mxu0 %v6382
        %v6494 = vpop.f32.mrf.mxu0
        %v6495 = vadd.f32 %v6313, %v6494
        %6496 = vmatmul.f32.gmra.mxu0 %v6385
        %v6497 = vpop.f32.mrf.mxu0
        %v6498 = vadd.f32 %v6313, %v6497
        %6499 = vmatmul.f32.gmra.mxu0 %v6388
        %v6500 = vpop.f32.mrf.mxu0
        %v6501 = vadd.f32 %v6313, %v6500
        %6502 = vmatmul.f32.gmra.mxu0 %v6391
        %v6503 = vpop.f32.mrf.mxu0
        %v6504 = vadd.f32 %v6313, %v6503
        %6505 = vmatmul.f32.gmra.mxu0 %v6394
        %v6506 = vpop.f32.mrf.mxu0
        %v6507 = vadd.f32 %v6313, %v6506
        %6508 = vmatmul.f32.gmra.mxu0 %v6397
        %v6509 = vpop.f32.mrf.mxu0
        %v6510 = vadd.f32 %v6313, %v6509
        %6511 = vmatmul.f32.gmra.mxu0 %v6400
        %v6512 = vpop.f32.mrf.mxu0
        %v6513 = vadd.f32 %v6313, %v6512
        %6514 = vmatmul.f32.gmra.mxu0 %v6403
        %v6515 = vpop.f32.mrf.mxu0
        %v6516 = vadd.f32 %v6313, %v6515
        %6517 = vmatmul.f32.gmra.mxu0 %v6406
        %v6518 = vpop.f32.mrf.mxu0
        %v6519 = vadd.f32 %v6313, %v6518
        %6520 = vmatmul.f32.gmra.mxu0 %v6409
        %v6521 = vpop.f32.mrf.mxu0
        %v6522 = vadd.f32 %v6313, %v6521
        %6523 = vdwg.mxu0
        %vm6524 = vcmp.gt.f32.partialorder %v6429, 0.0
        %vm6525 = vcmp.gt.f32.partialorder %v6432, 0.0
        %vm6526 = vcmp.gt.f32.partialorder %v6435, 0.0
        %vm6527 = vcmp.gt.f32.partialorder %v6438, 0.0
        %vm6528 = vcmp.gt.f32.partialorder %v6441, 0.0
        %vm6529 = vcmp.gt.f32.partialorder %v6444, 0.0
        %vm6530 = vcmp.gt.f32.partialorder %v6447, 0.0
        %vm6531 = vcmp.gt.f32.partialorder %v6450, 0.0
        %vm6532 = vcmp.gt.f32.partialorder %v6453, 0.0
        %vm6533 = vcmp.gt.f32.partialorder %v6456, 0.0
        %vm6534 = vcmp.gt.f32.partialorder %v6459, 0.0
        %vm6535 = vcmp.gt.f32.partialorder %v6462, 0.0
        %vm6536 = vcmp.gt.f32.partialorder %v6465, 0.0
        %vm6537 = vcmp.gt.f32.partialorder %v6468, 0.0
        %vm6538 = vcmp.gt.f32.partialorder %v6471, 0.0
        %vm6539 = vcmp.gt.f32.partialorder %v6474, 0.0
        %vm6540 = vcmp.gt.f32.partialorder %v6477, 0.0
        %vm6541 = vcmp.gt.f32.partialorder %v6480, 0.0
        %vm6542 = vcmp.gt.f32.partialorder %v6483, 0.0
        %vm6543 = vcmp.gt.f32.partialorder %v6486, 0.0
        %vm6544 = vcmp.gt.f32.partialorder %v6489, 0.0
        %vm6545 = vcmp.gt.f32.partialorder %v6492, 0.0
        %vm6546 = vcmp.gt.f32.partialorder %v6495, 0.0
        %vm6547 = vcmp.gt.f32.partialorder %v6498, 0.0
        %vm6548 = vcmp.gt.f32.partialorder %v6501, 0.0
        %vm6549 = vcmp.gt.f32.partialorder %v6504, 0.0
        %vm6550 = vcmp.gt.f32.partialorder %v6507, 0.0
        %vm6551 = vcmp.gt.f32.partialorder %v6510, 0.0
        %vm6552 = vcmp.gt.f32.partialorder %v6513, 0.0
        %vm6553 = vcmp.gt.f32.partialorder %v6516, 0.0
        %vm6554 = vcmp.gt.f32.partialorder %v6519, 0.0
        %vm6555 = vcmp.gt.f32.partialorder %v6522, 0.0
        %v6556 = vmul.f32 %v6429, 0.01
        %v6557 = vmul.f32 %v6432, 0.01
        %v6558 = vmul.f32 %v6435, 0.01
        %v6559 = vmul.f32 %v6438, 0.01
        %v6560 = vmul.f32 %v6441, 0.01
        %v6561 = vmul.f32 %v6444, 0.01
        %v6562 = vmul.f32 %v6447, 0.01
        %v6563 = vmul.f32 %v6450, 0.01
        %v6564 = vmul.f32 %v6453, 0.01
        %v6565 = vmul.f32 %v6456, 0.01
        %v6566 = vmul.f32 %v6459, 0.01
        %v6567 = vmul.f32 %v6462, 0.01
        %v6568 = vmul.f32 %v6465, 0.01
        %v6569 = vmul.f32 %v6468, 0.01
        %v6570 = vmul.f32 %v6471, 0.01
        %v6571 = vmul.f32 %v6474, 0.01
        %v6572 = vmul.f32 %v6477, 0.01
        %v6573 = vmul.f32 %v6480, 0.01
        %v6574 = vmul.f32 %v6483, 0.01
        %v6575 = vmul.f32 %v6486, 0.01
        %v6576 = vmul.f32 %v6489, 0.01
        %v6577 = vmul.f32 %v6492, 0.01
        %v6578 = vmul.f32 %v6495, 0.01
        %v6579 = vmul.f32 %v6498, 0.01
        %v6580 = vmul.f32 %v6501, 0.01
        %v6581 = vmul.f32 %v6504, 0.01
        %v6582 = vmul.f32 %v6507, 0.01
        %v6583 = vmul.f32 %v6510, 0.01
        %v6584 = vmul.f32 %v6513, 0.01
        %v6585 = vmul.f32 %v6516, 0.01
        %v6586 = vmul.f32 %v6519, 0.01
        %v6587 = vmul.f32 %v6522, 0.01
        %v6588 = vsel %vm6524, %v6429, %v6556
        %v6589 = vsel %vm6525, %v6432, %v6557
        %v6590 = vsel %vm6526, %v6435, %v6558
        %v6591 = vsel %vm6527, %v6438, %v6559
        %v6592 = vsel %vm6528, %v6441, %v6560
        %v6593 = vsel %vm6529, %v6444, %v6561
        %v6594 = vsel %vm6530, %v6447, %v6562
        %v6595 = vsel %vm6531, %v6450, %v6563
        %v6596 = vsel %vm6532, %v6453, %v6564
        %v6597 = vsel %vm6533, %v6456, %v6565
        %v6598 = vsel %vm6534, %v6459, %v6566
        %v6599 = vsel %vm6535, %v6462, %v6567
        %v6600 = vsel %vm6536, %v6465, %v6568
        %v6601 = vsel %vm6537, %v6468, %v6569
        %v6602 = vsel %vm6538, %v6471, %v6570
        %v6603 = vsel %vm6539, %v6474, %v6571
        %v6604 = vsel %vm6540, %v6477, %v6572
        %v6605 = vsel %vm6541, %v6480, %v6573
        %v6606 = vsel %vm6542, %v6483, %v6574
        %v6607 = vsel %vm6543, %v6486, %v6575
        %v6608 = vsel %vm6544, %v6489, %v6576
        %v6609 = vsel %vm6545, %v6492, %v6577
        %v6610 = vsel %vm6546, %v6495, %v6578
        %v6611 = vsel %vm6547, %v6498, %v6579
        %v6612 = vsel %vm6548, %v6501, %v6580
        %v6613 = vsel %vm6549, %v6504, %v6581
        %v6614 = vsel %vm6550, %v6507, %v6582
        %v6615 = vsel %vm6551, %v6510, %v6583
        %v6616 = vsel %vm6552, %v6513, %v6584
        %v6617 = vsel %vm6553, %v6516, %v6585
        %v6618 = vsel %vm6554, %v6519, %v6586
        %v6619 = vsel %vm6555, %v6522, %v6587
        %v6620 = vld [vmem:[%s63] sm:$0xff]
        %v6621 = vld [vmem:[%s63 + $0x8] sm:$0xff]
        %v6622 = vld [vmem:[%s63 + $0x10] sm:$0xff]
        %v6623 = vld [vmem:[%s63 + $0x18] sm:$0xff]
        %v6624 = vld [vmem:[%s65] sm:$0x1]
        %v6626 = vperm.slane %v6624, 0
        %v6629 = vsel %vm1303, %v6588, 0
        %v6632 = vsel %vm1303, %v6589, 0
        %v6635 = vsel %vm1303, %v6590, 0
        %v6638 = vsel %vm1303, %v6591, 0
        %v6641 = vsel %vm1303, %v6592, 0
        %v6644 = vsel %vm1303, %v6593, 0
        %v6647 = vsel %vm1303, %v6594, 0
        %v6650 = vsel %vm1303, %v6595, 0
        %v6653 = vsel %vm1303, %v6596, 0
        %v6656 = vsel %vm1303, %v6597, 0
        %v6659 = vsel %vm1303, %v6598, 0
        %v6662 = vsel %vm1303, %v6599, 0
        %v6665 = vsel %vm1303, %v6600, 0
        %v6668 = vsel %vm1303, %v6601, 0
        %v6671 = vsel %vm1303, %v6602, 0
        %v6674 = vsel %vm1303, %v6603, 0
        %v6677 = vsel %vm1303, %v6604, 0
        %v6680 = vsel %vm1303, %v6605, 0
        %v6683 = vsel %vm1303, %v6606, 0
        %v6686 = vsel %vm1303, %v6607, 0
        %v6689 = vsel %vm1303, %v6608, 0
        %v6692 = vsel %vm1303, %v6609, 0
        %v6695 = vsel %vm1303, %v6610, 0
        %v6698 = vsel %vm1303, %v6611, 0
        %v6701 = vsel %vm1303, %v6612, 0
        %v6704 = vsel %vm1303, %v6613, 0
        %v6707 = vsel %vm1303, %v6614, 0
        %v6710 = vsel %vm1303, %v6615, 0
        %v6713 = vsel %vm1303, %v6616, 0
        %v6716 = vsel %vm1303, %v6617, 0
        %v6719 = vsel %vm1303, %v6618, 0
        %v6722 = vsel %vm1303, %v6619, 0
        %6724 = vmatpush.msra.mxu0 0.0
        %6725 = vmatpush.msra.mxu0 0.0
        %6726 = vmatpush.msra.mxu0 0.0
        %6727 = vmatpush.msra.mxu0 0.0
        %6728 = vmatpush.msra.mxu0 0.0
        %6729 = vmatpush.msra.mxu0 0.0
        %6730 = vmatpush.msra.mxu0 0.0
        %6731 = vmatpush.msra.mxu0 0.0
        %6732 = vmatpush.msra.mxu0 0.0
        %6733 = vmatpush.msra.mxu0 0.0
        %6734 = vmatpush.msra.mxu0 0.0
        %6735 = vmatpush.msra.mxu0 0.0
        %6736 = vmatpush.msra.mxu0 %v6623
        %6737 = vmatpush.msra.mxu0 %v6622
        %6738 = vmatpush.msra.mxu0 %v6621
        %6739 = vmatpush.msra.mxu0 %v6620
        %6740 = vmatmul.f32.gmra.mxu0 %v6629
        %v6741 = vpop.f32.mrf.mxu0
        %v6742 = vadd.f32 %v6626, %v6741
        %6743 = vmatmul.f32.gmra.mxu0 %v6632
        %v6744 = vpop.f32.mrf.mxu0
        %v6745 = vadd.f32 %v6626, %v6744
        %6746 = vmatmul.f32.gmra.mxu0 %v6635
        %v6747 = vpop.f32.mrf.mxu0
        %v6748 = vadd.f32 %v6626, %v6747
        %6749 = vmatmul.f32.gmra.mxu0 %v6638
        %v6750 = vpop.f32.mrf.mxu0
        %v6751 = vadd.f32 %v6626, %v6750
        %6752 = vmatmul.f32.gmra.mxu0 %v6641
        %v6753 = vpop.f32.mrf.mxu0
        %v6754 = vadd.f32 %v6626, %v6753
        %6755 = vmatmul.f32.gmra.mxu0 %v6644
        %v6756 = vpop.f32.mrf.mxu0
        %v6757 = vadd.f32 %v6626, %v6756
        %6758 = vmatmul.f32.gmra.mxu0 %v6647
        %v6759 = vpop.f32.mrf.mxu0
        %v6760 = vadd.f32 %v6626, %v6759
        %6761 = vmatmul.f32.gmra.mxu0 %v6650
        %v6762 = vpop.f32.mrf.mxu0
        %v6763 = vadd.f32 %v6626, %v6762
        %6764 = vmatmul.f32.gmra.mxu0 %v6653
        %v6765 = vpop.f32.mrf.mxu0
        %v6766 = vadd.f32 %v6626, %v6765
        %6767 = vmatmul.f32.gmra.mxu0 %v6656
        %v6768 = vpop.f32.mrf.mxu0
        %v6769 = vadd.f32 %v6626, %v6768
        %6770 = vmatmul.f32.gmra.mxu0 %v6659
        %v6771 = vpop.f32.mrf.mxu0
        %v6772 = vadd.f32 %v6626, %v6771
        %6773 = vmatmul.f32.gmra.mxu0 %v6662
        %v6774 = vpop.f32.mrf.mxu0
        %v6775 = vadd.f32 %v6626, %v6774
        %6776 = vmatmul.f32.gmra.mxu0 %v6665
        %v6777 = vpop.f32.mrf.mxu0
        %v6778 = vadd.f32 %v6626, %v6777
        %6779 = vmatmul.f32.gmra.mxu0 %v6668
        %v6780 = vpop.f32.mrf.mxu0
        %v6781 = vadd.f32 %v6626, %v6780
        %6782 = vmatmul.f32.gmra.mxu0 %v6671
        %v6783 = vpop.f32.mrf.mxu0
        %v6784 = vadd.f32 %v6626, %v6783
        %6785 = vmatmul.f32.gmra.mxu0 %v6674
        %v6786 = vpop.f32.mrf.mxu0
        %v6787 = vadd.f32 %v6626, %v6786
        %6788 = vmatmul.f32.gmra.mxu0 %v6677
        %v6789 = vpop.f32.mrf.mxu0
        %v6790 = vadd.f32 %v6626, %v6789
        %6791 = vmatmul.f32.gmra.mxu0 %v6680
        %v6792 = vpop.f32.mrf.mxu0
        %v6793 = vadd.f32 %v6626, %v6792
        %6794 = vmatmul.f32.gmra.mxu0 %v6683
        %v6795 = vpop.f32.mrf.mxu0
        %v6796 = vadd.f32 %v6626, %v6795
        %6797 = vmatmul.f32.gmra.mxu0 %v6686
        %v6798 = vpop.f32.mrf.mxu0
        %v6799 = vadd.f32 %v6626, %v6798
        %6800 = vmatmul.f32.gmra.mxu0 %v6689
        %v6801 = vpop.f32.mrf.mxu0
        %v6802 = vadd.f32 %v6626, %v6801
        %6803 = vmatmul.f32.gmra.mxu0 %v6692
        %v6804 = vpop.f32.mrf.mxu0
        %v6805 = vadd.f32 %v6626, %v6804
        %6806 = vmatmul.f32.gmra.mxu0 %v6695
        %v6807 = vpop.f32.mrf.mxu0
        %v6808 = vadd.f32 %v6626, %v6807
        %6809 = vmatmul.f32.gmra.mxu0 %v6698
        %v6810 = vpop.f32.mrf.mxu0
        %v6811 = vadd.f32 %v6626, %v6810
        %6812 = vmatmul.f32.gmra.mxu0 %v6701
        %v6813 = vpop.f32.mrf.mxu0
        %v6814 = vadd.f32 %v6626, %v6813
        %6815 = vmatmul.f32.gmra.mxu0 %v6704
        %v6816 = vpop.f32.mrf.mxu0
        %v6817 = vadd.f32 %v6626, %v6816
        %6818 = vmatmul.f32.gmra.mxu0 %v6707
        %v6819 = vpop.f32.mrf.mxu0
        %v6820 = vadd.f32 %v6626, %v6819
        %6821 = vmatmul.f32.gmra.mxu0 %v6710
        %v6822 = vpop.f32.mrf.mxu0
        %v6823 = vadd.f32 %v6626, %v6822
        %6824 = vmatmul.f32.gmra.mxu0 %v6713
        %v6825 = vpop.f32.mrf.mxu0
        %v6826 = vadd.f32 %v6626, %v6825
        %6827 = vmatmul.f32.gmra.mxu0 %v6716
        %v6828 = vpop.f32.mrf.mxu0
        %v6829 = vadd.f32 %v6626, %v6828
        %6830 = vmatmul.f32.gmra.mxu0 %v6719
        %v6831 = vpop.f32.mrf.mxu0
        %v6832 = vadd.f32 %v6626, %v6831
        %6833 = vmatmul.f32.gmra.mxu0 %v6722
        %v6834 = vpop.f32.mrf.mxu0
        %v6835 = vadd.f32 %v6626, %v6834
        %6836 = vdwg.mxu0
        %vm6837 = vcmp.gt.f32.partialorder %v6742, 0.0
        %vm6838 = vcmp.gt.f32.partialorder %v6745, 0.0
        %vm6839 = vcmp.gt.f32.partialorder %v6748, 0.0
        %vm6840 = vcmp.gt.f32.partialorder %v6751, 0.0
        %vm6841 = vcmp.gt.f32.partialorder %v6754, 0.0
        %vm6842 = vcmp.gt.f32.partialorder %v6757, 0.0
        %vm6843 = vcmp.gt.f32.partialorder %v6760, 0.0
        %vm6844 = vcmp.gt.f32.partialorder %v6763, 0.0
        %vm6845 = vcmp.gt.f32.partialorder %v6766, 0.0
        %vm6846 = vcmp.gt.f32.partialorder %v6769, 0.0
        %vm6847 = vcmp.gt.f32.partialorder %v6772, 0.0
        %vm6848 = vcmp.gt.f32.partialorder %v6775, 0.0
        %vm6849 = vcmp.gt.f32.partialorder %v6778, 0.0
        %vm6850 = vcmp.gt.f32.partialorder %v6781, 0.0
        %vm6851 = vcmp.gt.f32.partialorder %v6784, 0.0
        %vm6852 = vcmp.gt.f32.partialorder %v6787, 0.0
        %vm6853 = vcmp.gt.f32.partialorder %v6790, 0.0
        %vm6854 = vcmp.gt.f32.partialorder %v6793, 0.0
        %vm6855 = vcmp.gt.f32.partialorder %v6796, 0.0
        %vm6856 = vcmp.gt.f32.partialorder %v6799, 0.0
        %vm6857 = vcmp.gt.f32.partialorder %v6802, 0.0
        %vm6858 = vcmp.gt.f32.partialorder %v6805, 0.0
        %vm6859 = vcmp.gt.f32.partialorder %v6808, 0.0
        %vm6860 = vcmp.gt.f32.partialorder %v6811, 0.0
        %vm6861 = vcmp.gt.f32.partialorder %v6814, 0.0
        %vm6862 = vcmp.gt.f32.partialorder %v6817, 0.0
        %vm6863 = vcmp.gt.f32.partialorder %v6820, 0.0
        %vm6864 = vcmp.gt.f32.partialorder %v6823, 0.0
        %vm6865 = vcmp.gt.f32.partialorder %v6826, 0.0
        %vm6866 = vcmp.gt.f32.partialorder %v6829, 0.0
        %vm6867 = vcmp.gt.f32.partialorder %v6832, 0.0
        %vm6868 = vcmp.gt.f32.partialorder %v6835, 0.0
        %v6869 = vmul.f32 %v6742, 0.01
        %v6870 = vmul.f32 %v6745, 0.01
        %v6871 = vmul.f32 %v6748, 0.01
        %v6872 = vmul.f32 %v6751, 0.01
        %v6873 = vmul.f32 %v6754, 0.01
        %v6874 = vmul.f32 %v6757, 0.01
        %v6875 = vmul.f32 %v6760, 0.01
        %v6876 = vmul.f32 %v6763, 0.01
        %v6877 = vmul.f32 %v6766, 0.01
        %v6878 = vmul.f32 %v6769, 0.01
        %v6879 = vmul.f32 %v6772, 0.01
        %v6880 = vmul.f32 %v6775, 0.01
        %v6881 = vmul.f32 %v6778, 0.01
        %v6882 = vmul.f32 %v6781, 0.01
        %v6883 = vmul.f32 %v6784, 0.01
        %v6884 = vmul.f32 %v6787, 0.01
        %v6885 = vmul.f32 %v6790, 0.01
        %v6886 = vmul.f32 %v6793, 0.01
        %v6887 = vmul.f32 %v6796, 0.01
        %v6888 = vmul.f32 %v6799, 0.01
        %v6889 = vmul.f32 %v6802, 0.01
        %v6890 = vmul.f32 %v6805, 0.01
        %v6891 = vmul.f32 %v6808, 0.01
        %v6892 = vmul.f32 %v6811, 0.01
        %v6893 = vmul.f32 %v6814, 0.01
        %v6894 = vmul.f32 %v6817, 0.01
        %v6895 = vmul.f32 %v6820, 0.01
        %v6896 = vmul.f32 %v6823, 0.01
        %v6897 = vmul.f32 %v6826, 0.01
        %v6898 = vmul.f32 %v6829, 0.01
        %v6899 = vmul.f32 %v6832, 0.01
        %v6900 = vmul.f32 %v6835, 0.01
        %v6901 = vsel %vm6837, %v6742, %v6869
        %v6902 = vsel %vm6838, %v6745, %v6870
        %v6903 = vsel %vm6839, %v6748, %v6871
        %v6904 = vsel %vm6840, %v6751, %v6872
        %v6905 = vsel %vm6841, %v6754, %v6873
        %v6906 = vsel %vm6842, %v6757, %v6874
        %v6907 = vsel %vm6843, %v6760, %v6875
        %v6908 = vsel %vm6844, %v6763, %v6876
        %v6909 = vsel %vm6845, %v6766, %v6877
        %v6910 = vsel %vm6846, %v6769, %v6878
        %v6911 = vsel %vm6847, %v6772, %v6879
        %v6912 = vsel %vm6848, %v6775, %v6880
        %v6913 = vsel %vm6849, %v6778, %v6881
        %v6914 = vsel %vm6850, %v6781, %v6882
        %v6915 = vsel %vm6851, %v6784, %v6883
        %v6916 = vsel %vm6852, %v6787, %v6884
        %v6917 = vsel %vm6853, %v6790, %v6885
        %v6918 = vsel %vm6854, %v6793, %v6886
        %v6919 = vsel %vm6855, %v6796, %v6887
        %v6920 = vsel %vm6856, %v6799, %v6888
        %v6921 = vsel %vm6857, %v6802, %v6889
        %v6922 = vsel %vm6858, %v6805, %v6890
        %v6923 = vsel %vm6859, %v6808, %v6891
        %v6924 = vsel %vm6860, %v6811, %v6892
        %v6925 = vsel %vm6861, %v6814, %v6893
        %v6926 = vsel %vm6862, %v6817, %v6894
        %v6927 = vsel %vm6863, %v6820, %v6895
        %v6928 = vsel %vm6864, %v6823, %v6896
        %v6929 = vsel %vm6865, %v6826, %v6897
        %v6930 = vsel %vm6866, %v6829, %v6898
        %v6931 = vsel %vm6867, %v6832, %v6899
        %v6932 = vsel %vm6868, %v6835, %v6900
        %v6933 = vld [vmem:[%s67] sm:$0x1]
        %v6935 = vperm.slane %v6933, 0
        %v6937 = vmul.f32 %v6901, %v6935
        %v6938 = vmul.f32 %v6902, %v6935
        %v6939 = vmul.f32 %v6903, %v6935
        %v6940 = vmul.f32 %v6904, %v6935
        %v6941 = vmul.f32 %v6905, %v6935
        %v6942 = vmul.f32 %v6906, %v6935
        %v6943 = vmul.f32 %v6907, %v6935
        %v6944 = vmul.f32 %v6908, %v6935
        %v6945 = vmul.f32 %v6909, %v6935
        %v6946 = vmul.f32 %v6910, %v6935
        %v6947 = vmul.f32 %v6911, %v6935
        %v6948 = vmul.f32 %v6912, %v6935
        %v6949 = vmul.f32 %v6913, %v6935
        %v6950 = vmul.f32 %v6914, %v6935
        %v6951 = vmul.f32 %v6915, %v6935
        %v6952 = vmul.f32 %v6916, %v6935
        %v6953 = vmul.f32 %v6917, %v6935
        %v6954 = vmul.f32 %v6918, %v6935
        %v6955 = vmul.f32 %v6919, %v6935
        %v6956 = vmul.f32 %v6920, %v6935
        %v6957 = vmul.f32 %v6921, %v6935
        %v6958 = vmul.f32 %v6922, %v6935
        %v6959 = vmul.f32 %v6923, %v6935
        %v6960 = vmul.f32 %v6924, %v6935
        %v6961 = vmul.f32 %v6925, %v6935
        %v6962 = vmul.f32 %v6926, %v6935
        %v6963 = vmul.f32 %v6927, %v6935
        %v6964 = vmul.f32 %v6928, %v6935
        %v6965 = vmul.f32 %v6929, %v6935
        %v6966 = vmul.f32 %v6930, %v6935
        %v6967 = vmul.f32 %v6931, %v6935
        %v6968 = vmul.f32 %v6932, %v6935
        %v6969 = vsel %vm1303, %v6937, 0.0
        %6970 = vadd.xlane.f32.xlu0 %v6969
        %v6971 = vpop.xlane.xlu0 %6970
        %v6972 = vsel %vm1303, %v6938, 0.0
        %6973 = vadd.xlane.f32.xlu0 %v6972
        %v6974 = vpop.xlane.xlu0 %6973
        %v6975 = vsel %vm1303, %v6939, 0.0
        %6976 = vadd.xlane.f32.xlu0 %v6975
        %v6977 = vpop.xlane.xlu0 %6976
        %v6978 = vsel %vm1303, %v6940, 0.0
        %6979 = vadd.xlane.f32.xlu0 %v6978
        %v6980 = vpop.xlane.xlu0 %6979
        %v6981 = vsel %vm1303, %v6941, 0.0
        %6982 = vadd.xlane.f32.xlu0 %v6981
        %v6983 = vpop.xlane.xlu0 %6982
        %v6984 = vsel %vm1303, %v6942, 0.0
        %6985 = vadd.xlane.f32.xlu0 %v6984
        %v6986 = vpop.xlane.xlu0 %6985
        %v6987 = vsel %vm1303, %v6943, 0.0
        %6988 = vadd.xlane.f32.xlu0 %v6987
        %v6989 = vpop.xlane.xlu0 %6988
        %v6990 = vsel %vm1303, %v6944, 0.0
        %6991 = vadd.xlane.f32.xlu0 %v6990
        %v6992 = vpop.xlane.xlu0 %6991
        %v6993 = vsel %vm1303, %v6945, 0.0
        %6994 = vadd.xlane.f32.xlu0 %v6993
        %v6995 = vpop.xlane.xlu0 %6994
        %v6996 = vsel %vm1303, %v6946, 0.0
        %6997 = vadd.xlane.f32.xlu0 %v6996
        %v6998 = vpop.xlane.xlu0 %6997
        %v6999 = vsel %vm1303, %v6947, 0.0
        %7000 = vadd.xlane.f32.xlu0 %v6999
        %v7001 = vpop.xlane.xlu0 %7000
        %v7002 = vsel %vm1303, %v6948, 0.0
        %7003 = vadd.xlane.f32.xlu0 %v7002
        %v7004 = vpop.xlane.xlu0 %7003
        %v7005 = vsel %vm1303, %v6949, 0.0
        %7006 = vadd.xlane.f32.xlu0 %v7005
        %v7007 = vpop.xlane.xlu0 %7006
        %v7008 = vsel %vm1303, %v6950, 0.0
        %7009 = vadd.xlane.f32.xlu0 %v7008
        %v7010 = vpop.xlane.xlu0 %7009
        %v7011 = vsel %vm1303, %v6951, 0.0
        %7012 = vadd.xlane.f32.xlu0 %v7011
        %v7013 = vpop.xlane.xlu0 %7012
        %v7014 = vsel %vm1303, %v6952, 0.0
        %7015 = vadd.xlane.f32.xlu0 %v7014
        %v7016 = vpop.xlane.xlu0 %7015
        %v7017 = vsel %vm1303, %v6953, 0.0
        %7018 = vadd.xlane.f32.xlu0 %v7017
        %v7019 = vpop.xlane.xlu0 %7018
        %v7020 = vsel %vm1303, %v6954, 0.0
        %7021 = vadd.xlane.f32.xlu0 %v7020
        %v7022 = vpop.xlane.xlu0 %7021
        %v7023 = vsel %vm1303, %v6955, 0.0
        %7024 = vadd.xlane.f32.xlu0 %v7023
        %v7025 = vpop.xlane.xlu0 %7024
        %v7026 = vsel %vm1303, %v6956, 0.0
        %7027 = vadd.xlane.f32.xlu0 %v7026
        %v7028 = vpop.xlane.xlu0 %7027
        %v7029 = vsel %vm1303, %v6957, 0.0
        %7030 = vadd.xlane.f32.xlu0 %v7029
        %v7031 = vpop.xlane.xlu0 %7030
        %v7032 = vsel %vm1303, %v6958, 0.0
        %7033 = vadd.xlane.f32.xlu0 %v7032
        %v7034 = vpop.xlane.xlu0 %7033
        %v7035 = vsel %vm1303, %v6959, 0.0
        %7036 = vadd.xlane.f32.xlu0 %v7035
        %v7037 = vpop.xlane.xlu0 %7036
        %v7038 = vsel %vm1303, %v6960, 0.0
        %7039 = vadd.xlane.f32.xlu0 %v7038
        %v7040 = vpop.xlane.xlu0 %7039
        %v7041 = vsel %vm1303, %v6961, 0.0
        %7042 = vadd.xlane.f32.xlu0 %v7041
        %v7043 = vpop.xlane.xlu0 %7042
        %v7044 = vsel %vm1303, %v6962, 0.0
        %7045 = vadd.xlane.f32.xlu0 %v7044
        %v7046 = vpop.xlane.xlu0 %7045
        %v7047 = vsel %vm1303, %v6963, 0.0
        %7048 = vadd.xlane.f32.xlu0 %v7047
        %v7049 = vpop.xlane.xlu0 %7048
        %v7050 = vsel %vm1303, %v6964, 0.0
        %7051 = vadd.xlane.f32.xlu0 %v7050
        %v7052 = vpop.xlane.xlu0 %7051
        %v7053 = vsel %vm1303, %v6965, 0.0
        %7054 = vadd.xlane.f32.xlu0 %v7053
        %v7055 = vpop.xlane.xlu0 %7054
        %v7056 = vsel %vm1303, %v6966, 0.0
        %7057 = vadd.xlane.f32.xlu0 %v7056
        %v7058 = vpop.xlane.xlu0 %7057
        %v7059 = vsel %vm1303, %v6967, 0.0
        %7060 = vadd.xlane.f32.xlu0 %v7059
        %v7061 = vpop.xlane.xlu0 %7060
        %v7062 = vsel %vm1303, %v6968, 0.0
        %7063 = vadd.xlane.f32.xlu0 %v7062
        %v7064 = vpop.xlane.xlu0 %7063
        %v7065 = vld [vmem:[#allocation4] sm:$0x1]
        %v7067 = vperm.slane %v7065, 0
        %7068 = vset.pattern.permute.xlu0 0
        %7069 = vperm.xlu0 %7068, %v7067
        %v7070 = vpop.permute.xlu0 %7069
        %v7072 = vadd.f32 %v6971, %v7070
        %v7073 = vadd.f32 %v6974, %v7070
        %v7074 = vadd.f32 %v6977, %v7070
        %v7075 = vadd.f32 %v6980, %v7070
        %v7076 = vadd.f32 %v6983, %v7070
        %v7077 = vadd.f32 %v6986, %v7070
        %v7078 = vadd.f32 %v6989, %v7070
        %v7079 = vadd.f32 %v6992, %v7070
        %v7080 = vadd.f32 %v6995, %v7070
        %v7081 = vadd.f32 %v6998, %v7070
        %v7082 = vadd.f32 %v7001, %v7070
        %v7083 = vadd.f32 %v7004, %v7070
        %v7084 = vadd.f32 %v7007, %v7070
        %v7085 = vadd.f32 %v7010, %v7070
        %v7086 = vadd.f32 %v7013, %v7070
        %v7087 = vadd.f32 %v7016, %v7070
        %v7088 = vadd.f32 %v7019, %v7070
        %v7089 = vadd.f32 %v7022, %v7070
        %v7090 = vadd.f32 %v7025, %v7070
        %v7091 = vadd.f32 %v7028, %v7070
        %v7092 = vadd.f32 %v7031, %v7070
        %v7093 = vadd.f32 %v7034, %v7070
        %v7094 = vadd.f32 %v7037, %v7070
        %v7095 = vadd.f32 %v7040, %v7070
        %v7096 = vadd.f32 %v7043, %v7070
        %v7097 = vadd.f32 %v7046, %v7070
        %v7098 = vadd.f32 %v7049, %v7070
        %v7099 = vadd.f32 %v7052, %v7070
        %v7100 = vadd.f32 %v7055, %v7070
        %v7101 = vadd.f32 %v7058, %v7070
        %v7102 = vadd.f32 %v7061, %v7070
        %v7103 = vadd.f32 %v7064, %v7070
        %v7104 = vsub.f32 %v7072, 1e+08
        %v7105 = vsub.f32 %v7073, 1e+08
        %v7106 = vsub.f32 %v7074, 1e+08
        %v7107 = vsub.f32 %v7075, 1e+08
        %v7108 = vsub.f32 %v7076, 1e+08
        %v7109 = vsub.f32 %v7077, 1e+08
        %v7110 = vsub.f32 %v7078, 1e+08
        %v7111 = vsub.f32 %v7079, 1e+08
        %v7112 = vsub.f32 %v7080, 1e+08
        %v7113 = vsub.f32 %v7081, 1e+08
        %v7114 = vsub.f32 %v7082, 1e+08
        %v7115 = vsub.f32 %v7083, 1e+08
        %v7116 = vsub.f32 %v7084, 1e+08
        %v7117 = vsub.f32 %v7085, 1e+08
        %v7118 = vsub.f32 %v7086, 1e+08
        %v7119 = vsub.f32 %v7087, 1e+08
        %v7120 = vsub.f32 %v7088, 1e+08
        %v7121 = vsub.f32 %v7089, 1e+08
        %v7122 = vsub.f32 %v7090, 1e+08
        %v7123 = vsub.f32 %v7091, 1e+08
        %v7124 = vsub.f32 %v7092, 1e+08
        %v7125 = vsub.f32 %v7093, 1e+08
        %v7126 = vsub.f32 %v7094, 1e+08
        %v7127 = vsub.f32 %v7095, 1e+08
        %v7128 = vsub.f32 %v7096, 1e+08
        %v7129 = vsub.f32 %v7097, 1e+08
        %v7130 = vsub.f32 %v7098, 1e+08
        %v7131 = vsub.f32 %v7099, 1e+08
        %v7132 = vsub.f32 %v7100, 1e+08
        %v7133 = vsub.f32 %v7101, 1e+08
        %v7134 = vsub.f32 %v7102, 1e+08
        %v7135 = vsub.f32 %v7103, 1e+08
        %v7168 = vperm.slane %v7104, %v1180
        %v7169 = vperm.slane %v7105, %v2793
        %v7170 = vsel %vm2795, %v7169, %v7168
        %v7171 = vperm.slane %v7106, %v1180
        %v7172 = vperm.slane %v7107, %v2793
        %v7173 = vsel %vm2795, %v7172, %v7171
        %v7174 = vperm.slane %v7108, %v1180
        %v7175 = vperm.slane %v7109, %v2793
        %v7176 = vsel %vm2795, %v7175, %v7174
        %v7177 = vperm.slane %v7110, %v1180
        %v7178 = vperm.slane %v7111, %v2793
        %v7179 = vsel %vm2795, %v7178, %v7177
        %v7180 = vperm.slane %v7112, %v1180
        %v7181 = vperm.slane %v7113, %v2793
        %v7182 = vsel %vm2795, %v7181, %v7180
        %v7183 = vperm.slane %v7114, %v1180
        %v7184 = vperm.slane %v7115, %v2793
        %v7185 = vsel %vm2795, %v7184, %v7183
        %v7186 = vperm.slane %v7116, %v1180
        %v7187 = vperm.slane %v7117, %v2793
        %v7188 = vsel %vm2795, %v7187, %v7186
        %v7189 = vperm.slane %v7118, %v1180
        %v7190 = vperm.slane %v7119, %v2793
        %v7191 = vsel %vm2795, %v7190, %v7189
        %v7192 = vperm.slane %v7120, %v1180
        %v7193 = vperm.slane %v7121, %v2793
        %v7194 = vsel %vm2795, %v7193, %v7192
        %v7195 = vperm.slane %v7122, %v1180
        %v7196 = vperm.slane %v7123, %v2793
        %v7197 = vsel %vm2795, %v7196, %v7195
        %v7198 = vperm.slane %v7124, %v1180
        %v7199 = vperm.slane %v7125, %v2793
        %v7200 = vsel %vm2795, %v7199, %v7198
        %v7201 = vperm.slane %v7126, %v1180
        %v7202 = vperm.slane %v7127, %v2793
        %v7203 = vsel %vm2795, %v7202, %v7201
        %v7204 = vperm.slane %v7128, %v1180
        %v7205 = vperm.slane %v7129, %v2793
        %v7206 = vsel %vm2795, %v7205, %v7204
        %v7207 = vperm.slane %v7130, %v1180
        %v7208 = vperm.slane %v7131, %v2793
        %v7209 = vsel %vm2795, %v7208, %v7207
        %v7210 = vperm.slane %v7132, %v1180
        %v7211 = vperm.slane %v7133, %v2793
        %v7212 = vsel %vm2795, %v7211, %v7210
        %v7213 = vperm.slane %v7134, %v1180
        %v7214 = vperm.slane %v7135, %v2793
        %v7215 = vsel %vm2795, %v7214, %v7213
        %v7216 = vsel %vm2842, %v7173, %v7170
        %v7217 = vsel %vm2844, %v7176, %v7216
        %v7218 = vsel %vm2846, %v7179, %v7217
        %v7219 = vsel %vm2848, %v7182, %v7218
        %v7220 = vsel %vm2850, %v7185, %v7219
        %v7221 = vsel %vm2852, %v7188, %v7220
        %v7222 = vsel %vm2854, %v7191, %v7221
        %v7223 = vsel %vm2842, %v7197, %v7194
        %v7224 = vsel %vm2844, %v7200, %v7223
        %v7225 = vsel %vm2846, %v7203, %v7224
        %v7226 = vsel %vm2848, %v7206, %v7225
        %v7227 = vsel %vm2850, %v7209, %v7226
        %v7228 = vsel %vm2852, %v7212, %v7227
        %v7229 = vsel %vm2854, %v7215, %v7228
        %v7264 = vperm.slane %v7072, %v1180
        %v7265 = vperm.slane %v7073, %v2793
        %v7266 = vsel %vm2795, %v7265, %v7264
        %v7267 = vperm.slane %v7074, %v1180
        %v7268 = vperm.slane %v7075, %v2793
        %v7269 = vsel %vm2795, %v7268, %v7267
        %v7270 = vperm.slane %v7076, %v1180
        %v7271 = vperm.slane %v7077, %v2793
        %v7272 = vsel %vm2795, %v7271, %v7270
        %v7273 = vperm.slane %v7078, %v1180
        %v7274 = vperm.slane %v7079, %v2793
        %v7275 = vsel %vm2795, %v7274, %v7273
        %v7276 = vperm.slane %v7080, %v1180
        %v7277 = vperm.slane %v7081, %v2793
        %v7278 = vsel %vm2795, %v7277, %v7276
        %v7279 = vperm.slane %v7082, %v1180
        %v7280 = vperm.slane %v7083, %v2793
        %v7281 = vsel %vm2795, %v7280, %v7279
        %v7282 = vperm.slane %v7084, %v1180
        %v7283 = vperm.slane %v7085, %v2793
        %v7284 = vsel %vm2795, %v7283, %v7282
        %v7285 = vperm.slane %v7086, %v1180
        %v7286 = vperm.slane %v7087, %v2793
        %v7287 = vsel %vm2795, %v7286, %v7285
        %v7288 = vperm.slane %v7088, %v1180
        %v7289 = vperm.slane %v7089, %v2793
        %v7290 = vsel %vm2795, %v7289, %v7288
        %v7291 = vperm.slane %v7090, %v1180
        %v7292 = vperm.slane %v7091, %v2793
        %v7293 = vsel %vm2795, %v7292, %v7291
        %v7294 = vperm.slane %v7092, %v1180
        %v7295 = vperm.slane %v7093, %v2793
        %v7296 = vsel %vm2795, %v7295, %v7294
        %v7297 = vperm.slane %v7094, %v1180
        %v7298 = vperm.slane %v7095, %v2793
        %v7299 = vsel %vm2795, %v7298, %v7297
        %v7300 = vperm.slane %v7096, %v1180
        %v7301 = vperm.slane %v7097, %v2793
        %v7302 = vsel %vm2795, %v7301, %v7300
        %v7303 = vperm.slane %v7098, %v1180
        %v7304 = vperm.slane %v7099, %v2793
        %v7305 = vsel %vm2795, %v7304, %v7303
        %v7306 = vperm.slane %v7100, %v1180
        %v7307 = vperm.slane %v7101, %v2793
        %v7308 = vsel %vm2795, %v7307, %v7306
        %v7309 = vperm.slane %v7102, %v1180
        %v7310 = vperm.slane %v7103, %v2793
        %v7311 = vsel %vm2795, %v7310, %v7309
        %v7312 = vsel %vm2842, %v7269, %v7266
        %v7313 = vsel %vm2844, %v7272, %v7312
        %v7314 = vsel %vm2846, %v7275, %v7313
        %v7315 = vsel %vm2848, %v7278, %v7314
        %v7316 = vsel %vm2850, %v7281, %v7315
        %v7317 = vsel %vm2852, %v7284, %v7316
        %v7318 = vsel %vm2854, %v7287, %v7317
        %v7319 = vsel %vm2842, %v7293, %v7290
        %v7320 = vsel %vm2844, %v7296, %v7319
        %v7321 = vsel %vm2846, %v7299, %v7320
        %v7322 = vsel %vm2848, %v7302, %v7321
        %v7323 = vsel %vm2850, %v7305, %v7322
        %v7324 = vsel %vm2852, %v7308, %v7323
        %v7325 = vsel %vm2854, %v7311, %v7324
        %v7328 = vsel %vm1181, %v7222, %v7318
        %v7329 = vsel %vm1182, %v7229, %v7325
        %v7330 = vsel %vm2963, %v7328, -inf
        %7331 = vmax.xlane.f32.xlu0 %v7330
        %v7332 = vpop.xlane.xlu0 %7331
        %v7333 = vsel %vm2963, %v7329, -inf
        %7334 = vmax.xlane.f32.xlu0 %v7333
        %v7335 = vpop.xlane.xlu0 %7334
        %v7336 = vsub.f32 %v7328, %v7332
        %v7337 = vsub.f32 %v7329, %v7335
        %v7338 = vmul.f32 %v7336, 1.442695
        %v7339 = vpow.pop %v7338
        %v7340 = vmul.f32 %v7337, 1.442695
        %v7341 = vpow.pop %v7340
        %v7342 = vsel %vm2963, %v7339, 0.0
        %7343 = vadd.xlane.f32.xlu0 %v7342
        %v7344 = vpop.xlane.xlu0 %7343
        %v7345 = vsel %vm2963, %v7341, 0.0
        %7346 = vadd.xlane.f32.xlu0 %v7345
        %v7347 = vpop.xlane.xlu0 %7346
        %v7348 = vrcp.pop %v7344
        %v7349 = vmul.f32 %v7344, %v7348
        %v7350 = vsub.f32 1.0, %v7349
        %v7351 = vmul.f32 %v7348, %v7350
        %v7352 = vadd.f32 %v7348, %v7351
        %vm7353 = vweird.f32 %v7344
        %vm7354 = vweird.f32 %v7348
        %vm7355 = vmor %vm7353, %vm7354
        %v7356 = vsel %vm7355, %v7348, %v7352
        %v7357 = vand.u32 2147483647, %v7344
        %vm7358 = vcmp.eq.f32.partialorder %v7357, 8.507059e+37
        %v7359 = vand.u32 %v7344, 2147483648
        %v7360 = vor.u32 1.1754944e-38, %v7359
        %v7361 = vsel %vm7358, %v7360, %v7356
        %v7362 = vmul.f32 %v7339, %v7361
        %v7363 = vrcp.pop %v7347
        %v7364 = vmul.f32 %v7347, %v7363
        %v7365 = vsub.f32 1.0, %v7364
        %v7366 = vmul.f32 %v7363, %v7365
        %v7367 = vadd.f32 %v7363, %v7366
        %vm7368 = vweird.f32 %v7347
        %vm7369 = vweird.f32 %v7363
        %vm7370 = vmor %vm7368, %vm7369
        %v7371 = vsel %vm7370, %v7363, %v7367
        %v7372 = vand.u32 2147483647, %v7347
        %vm7373 = vcmp.eq.f32.partialorder %v7372, 8.507059e+37
        %v7374 = vand.u32 %v7347, 2147483648
        %v7375 = vor.u32 1.1754944e-38, %v7374
        %v7376 = vsel %vm7373, %v7375, %v7371
        %v7377 = vmul.f32 %v7341, %v7376
        %v7379 = vsel %vm2963, %v7362, 0
        %v7382 = vsel %vm2963, %v7377, 0
        %7384 = vmatpush.msra.mxu0 0.0
        %7385 = vmatpush.msra.mxu0 0.0
        %7386 = vmatpush.msra.mxu0 0.0
        %7387 = vmatpush.msra.mxu0 0.0
        %7388 = vmatpush.msra.mxu0 0.0
        %7389 = vmatpush.msra.mxu0 0.0
        %7390 = vmatpush.msra.mxu0 0.0
        %7391 = vmatpush.msra.mxu0 0.0
        %7392 = vmatpush.msra.mxu0 0.0
        %7393 = vmatpush.msra.mxu0 0.0
        %7394 = vmatpush.msra.mxu0 0.0
        %7395 = vmatpush.msra.mxu0 0.0
        %7396 = vmatpush.msra.mxu0 0.0
        %7397 = vmatpush.msra.mxu0 0.0
        %7398 = vmatpush.msra.mxu0 %v1175
        %7399 = vmatpush.msra.mxu0 %v1174
        %7400 = vmatmul.f32.gmra.mxu0 %v7379
        %v7401 = vpop.f32.mrf.mxu0
        %v7402 = vadd.f32 0.0, %v7401
        %7403 = vmatmul.f32.gmra.mxu0 %v7382
        %v7404 = vpop.f32.mrf.mxu0
        %v7405 = vadd.f32 0.0, %v7404
        %7406 = vdwg.mxu0
        %7407 = vmatpush.msra.mxu0 0.0
        %7408 = vmatpush.msra.mxu0 0.0
        %7409 = vmatpush.msra.mxu0 0.0
        %7410 = vmatpush.msra.mxu0 0.0
        %7411 = vmatpush.msra.mxu0 0.0
        %7412 = vmatpush.msra.mxu0 0.0
        %7413 = vmatpush.msra.mxu0 0.0
        %7414 = vmatpush.msra.mxu0 0.0
        %7415 = vmatpush.msra.mxu0 0.0
        %7416 = vmatpush.msra.mxu0 0.0
        %7417 = vmatpush.msra.mxu0 0.0
        %7418 = vmatpush.msra.mxu0 0.0
        %7419 = vmatpush.msra.mxu0 0.0
        %7420 = vmatpush.msra.mxu0 0.0
        %7421 = vmatpush.msra.mxu0 %v3116
        %7422 = vmatpush.msra.mxu0 %v3115
        %7423 = vmatmul.f32.gmra.mxu0 %v7379
        %v7424 = vpop.f32.mrf.mxu0
        %v7425 = vadd.f32 0.0, %v7424
        %7426 = vmatmul.f32.gmra.mxu0 %v7382
        %v7427 = vpop.f32.mrf.mxu0
        %v7428 = vadd.f32 0.0, %v7427
        %7429 = vdwg.mxu0
        %7430 = vmatpush.msra.mxu0 0.0
        %7431 = vmatpush.msra.mxu0 0.0
        %7432 = vmatpush.msra.mxu0 0.0
        %7433 = vmatpush.msra.mxu0 0.0
        %7434 = vmatpush.msra.mxu0 0.0
        %7435 = vmatpush.msra.mxu0 0.0
        %7436 = vmatpush.msra.mxu0 0.0
        %7437 = vmatpush.msra.mxu0 0.0
        %7438 = vmatpush.msra.mxu0 0.0
        %7439 = vmatpush.msra.mxu0 0.0
        %7440 = vmatpush.msra.mxu0 0.0
        %7441 = vmatpush.msra.mxu0 0.0
        %7442 = vmatpush.msra.mxu0 0.0
        %7443 = vmatpush.msra.mxu0 0.0
        %7444 = vmatpush.msra.mxu0 %v5266
        %7445 = vmatpush.msra.mxu0 %v5265
        %7446 = vmatmul.f32.gmra.mxu0 %v7379
        %v7447 = vpop.f32.mrf.mxu0
        %v7448 = vadd.f32 0.0, %v7447
        %7449 = vmatmul.f32.gmra.mxu0 %v7382
        %v7450 = vpop.f32.mrf.mxu0
        %v7451 = vadd.f32 0.0, %v7450
        %7452 = vdwg.mxu0
        %v7453 = vld [vmem:[%s71] sm:$0xff]
        %v7454 = vld [vmem:[%s71 + $0x8] sm:$0xff]
        %v7455 = vld [vmem:[%s71 + $0x10] sm:$0xff]
        %v7456 = vld [vmem:[%s71 + $0x18] sm:$0xff]
        %v7457 = vld [vmem:[%s71 + $0x20] sm:$0xff]
        %v7458 = vld [vmem:[%s71 + $0x28] sm:$0xff]
        %7459 = vmatpush.msra.mxu0 0.0
        %7460 = vmatpush.msra.mxu0 0.0
        %7461 = vmatpush.msra.mxu0 0.0
        %7462 = vmatpush.msra.mxu0 0.0
        %7463 = vmatpush.msra.mxu0 0.0
        %7464 = vmatpush.msra.mxu0 0.0
        %7465 = vmatpush.msra.mxu0 0.0
        %7466 = vmatpush.msra.mxu0 0.0
        %7467 = vmatpush.msra.mxu0 0.0
        %7468 = vmatpush.msra.mxu0 0.0
        %7469 = vmatpush.msra.mxu0 0.0
        %7470 = vmatpush.msra.mxu0 0.0
        %7471 = vmatpush.msra.mxu0 0.0
        %7472 = vmatpush.msra.mxu0 0.0
        %7473 = vmatpush.msra.mxu0 %v7458
        %7474 = vmatpush.msra.mxu0 %v7457
        %7475 = vmatmul.f32.gmra.mxu0 %v5139
        %v7476 = vpop.f32.mrf.mxu0
        %v7477 = vadd.f32 0.0, %v7476
        %7478 = vmatmul.f32.gmra.mxu0 %v5141
        %v7479 = vpop.f32.mrf.mxu0
        %v7480 = vadd.f32 0.0, %v7479
        %7481 = vdwg.mxu0
        %7482 = vmatpush.msra.mxu0 0.0
        %7483 = vmatpush.msra.mxu0 0.0
        %7484 = vmatpush.msra.mxu0 0.0
        %7485 = vmatpush.msra.mxu0 0.0
        %7486 = vmatpush.msra.mxu0 0.0
        %7487 = vmatpush.msra.mxu0 0.0
        %7488 = vmatpush.msra.mxu0 0.0
        %7489 = vmatpush.msra.mxu0 0.0
        %7490 = vmatpush.msra.mxu0 0.0
        %7491 = vmatpush.msra.mxu0 0.0
        %7492 = vmatpush.msra.mxu0 0.0
        %7493 = vmatpush.msra.mxu0 0.0
        %7494 = vmatpush.msra.mxu0 %v7456
        %7495 = vmatpush.msra.mxu0 %v7455
        %7496 = vmatpush.msra.mxu0 %v7454
        %7497 = vmatpush.msra.mxu0 %v7453
        %7498 = vmatmul.f32.gmra.mxu0 %v3078
        %v7499 = vpop.f32.mrf.mxu0
        %v7500 = vadd.f32 %v7477, %v7499
        %7501 = vmatmul.f32.gmra.mxu0 %v3080
        %v7502 = vpop.f32.mrf.mxu0
        %v7503 = vadd.f32 %v7480, %v7502
        %7504 = vdwg.mxu0
        %v7505 = vld [vmem:[%s71 + $0x30] sm:$0xff]
        %v7506 = vld [vmem:[%s71 + $0x38] sm:$0xff]
        %v7507 = vsel %vm2963, %v5265, 0
        %v7509 = vsel %vm2963, %v5266, 0
        %7511 = vmatpush.msra.mxu0 0.0
        %7512 = vmatpush.msra.mxu0 0.0
        %7513 = vmatpush.msra.mxu0 0.0
        %7514 = vmatpush.msra.mxu0 0.0
        %7515 = vmatpush.msra.mxu0 0.0
        %7516 = vmatpush.msra.mxu0 0.0
        %7517 = vmatpush.msra.mxu0 0.0
        %7518 = vmatpush.msra.mxu0 0.0
        %7519 = vmatpush.msra.mxu0 0.0
        %7520 = vmatpush.msra.mxu0 0.0
        %7521 = vmatpush.msra.mxu0 0.0
        %7522 = vmatpush.msra.mxu0 0.0
        %7523 = vmatpush.msra.mxu0 0.0
        %7524 = vmatpush.msra.mxu0 0.0
        %7525 = vmatpush.msra.mxu0 %v7506
        %7526 = vmatpush.msra.mxu0 %v7505
        %7527 = vmatmul.f32.gmra.mxu0 %v7507
        %v7528 = vpop.f32.mrf.mxu0
        %v7529 = vadd.f32 0.0, %v7528
        %7530 = vmatmul.f32.gmra.mxu0 %v7509
        %v7531 = vpop.f32.mrf.mxu0
        %v7532 = vadd.f32 0.0, %v7531
        %7533 = vdwg.mxu0
        %v7534 = vadd.f32 %v7500, %v7529
        %v7535 = vadd.f32 %v7503, %v7532
        %v7536 = vld [vmem:[%s71 + $0x40] sm:$0xff]
        %v7537 = vld [vmem:[%s71 + $0x48] sm:$0xff]
        %v7538 = vld [vmem:[%s71 + $0x50] sm:$0xff]
        %v7539 = vld [vmem:[%s71 + $0x58] sm:$0xff]
        %v7540 = vld [vmem:[%s71 + $0x60] sm:$0xff]
        %v7541 = vld [vmem:[%s71 + $0x68] sm:$0xff]
        %v7543 = vsel %vm2963, %v7425, 0
        %v7546 = vsel %vm2963, %v7428, 0
        %7548 = vmatpush.msra.mxu0 0.0
        %7549 = vmatpush.msra.mxu0 0.0
        %7550 = vmatpush.msra.mxu0 0.0
        %7551 = vmatpush.msra.mxu0 0.0
        %7552 = vmatpush.msra.mxu0 0.0
        %7553 = vmatpush.msra.mxu0 0.0
        %7554 = vmatpush.msra.mxu0 0.0
        %7555 = vmatpush.msra.mxu0 0.0
        %7556 = vmatpush.msra.mxu0 0.0
        %7557 = vmatpush.msra.mxu0 0.0
        %7558 = vmatpush.msra.mxu0 0.0
        %7559 = vmatpush.msra.mxu0 0.0
        %7560 = vmatpush.msra.mxu0 0.0
        %7561 = vmatpush.msra.mxu0 0.0
        %7562 = vmatpush.msra.mxu0 %v7541
        %7563 = vmatpush.msra.mxu0 %v7540
        %7564 = vmatmul.f32.gmra.mxu0 %v7543
        %v7565 = vpop.f32.mrf.mxu0
        %v7566 = vadd.f32 0.0, %v7565
        %7567 = vmatmul.f32.gmra.mxu0 %v7546
        %v7568 = vpop.f32.mrf.mxu0
        %v7569 = vadd.f32 0.0, %v7568
        %7570 = vdwg.mxu0
        %v7572 = vsel %vm1303, %v7402, 0
        %v7575 = vsel %vm1303, %v7405, 0
        %7577 = vmatpush.msra.mxu0 0.0
        %7578 = vmatpush.msra.mxu0 0.0
        %7579 = vmatpush.msra.mxu0 0.0
        %7580 = vmatpush.msra.mxu0 0.0
        %7581 = vmatpush.msra.mxu0 0.0
        %7582 = vmatpush.msra.mxu0 0.0
        %7583 = vmatpush.msra.mxu0 0.0
        %7584 = vmatpush.msra.mxu0 0.0
        %7585 = vmatpush.msra.mxu0 0.0
        %7586 = vmatpush.msra.mxu0 0.0
        %7587 = vmatpush.msra.mxu0 0.0
        %7588 = vmatpush.msra.mxu0 0.0
        %7589 = vmatpush.msra.mxu0 %v7539
        %7590 = vmatpush.msra.mxu0 %v7538
        %7591 = vmatpush.msra.mxu0 %v7537
        %7592 = vmatpush.msra.mxu0 %v7536
        %7593 = vmatmul.f32.gmra.mxu0 %v7572
        %v7594 = vpop.f32.mrf.mxu0
        %v7595 = vadd.f32 %v7566, %v7594
        %7596 = vmatmul.f32.gmra.mxu0 %v7575
        %v7597 = vpop.f32.mrf.mxu0
        %v7598 = vadd.f32 %v7569, %v7597
        %7599 = vdwg.mxu0
        %v7600 = vld [vmem:[%s71 + $0x70] sm:$0xff]
        %v7601 = vld [vmem:[%s71 + $0x78] sm:$0xff]
        %v7603 = vsel %vm2963, %v7448, 0
        %v7606 = vsel %vm2963, %v7451, 0
        %7608 = vmatpush.msra.mxu0 0.0
        %7609 = vmatpush.msra.mxu0 0.0
        %7610 = vmatpush.msra.mxu0 0.0
        %7611 = vmatpush.msra.mxu0 0.0
        %7612 = vmatpush.msra.mxu0 0.0
        %7613 = vmatpush.msra.mxu0 0.0
        %7614 = vmatpush.msra.mxu0 0.0
        %7615 = vmatpush.msra.mxu0 0.0
        %7616 = vmatpush.msra.mxu0 0.0
        %7617 = vmatpush.msra.mxu0 0.0
        %7618 = vmatpush.msra.mxu0 0.0
        %7619 = vmatpush.msra.mxu0 0.0
        %7620 = vmatpush.msra.mxu0 0.0
        %7621 = vmatpush.msra.mxu0 0.0
        %7622 = vmatpush.msra.mxu0 %v7601
        %7623 = vmatpush.msra.mxu0 %v7600
        %7624 = vmatmul.f32.gmra.mxu0 %v7603
        %v7625 = vpop.f32.mrf.mxu0
        %v7626 = vadd.f32 0.0, %v7625
        %7627 = vmatmul.f32.gmra.mxu0 %v7606
        %v7628 = vpop.f32.mrf.mxu0
        %v7629 = vadd.f32 0.0, %v7628
        %7630 = vdwg.mxu0
        %v7631 = vadd.f32 %v7595, %v7626
        %v7632 = vadd.f32 %v7598, %v7629
        %v7633 = vadd.f32 %v7534, %v7631
        %v7634 = vadd.f32 %v7535, %v7632
        %v7635 = vld [vmem:[#allocation5] sm:$0x1]
        %v7637 = vperm.slane %v7635, 0
        %v7639 = vadd.f32 %v7633, %v7637
        %v7640 = vadd.f32 %v7634, %v7637
        %vm7641 = vcmask 7168
        %7642 = vst.msk [vmem:[%s1173] sm:$0xff] %vm7641, %v7639
        %7643 = vst.msk [vmem:[%s1173 + $0x8] sm:$0xff] %vm7641, %v7640
        %7644 = vst.msk [vmem:[%s1163] sm:$0xff] %vm2963, %v7362
        %7645 = vst.msk [vmem:[%s1163 + $0x8] sm:$0xff] %vm2963, %v7377
        %p7646 = scmp.lt.s32.totalorder %s100, 1
        %s7647 = scalar_select %p7646, %s100, 1
        %s7648 = smul.addr %s7647, 2
        %s7649 = smul.addr %s7648, 8
        %s7650 = scalar_lea.vmem %s75, %s7649
        %s7651 = sand.u32 %s916, 1
        %s7652 = scalar_lea.sflag [#allocation7], %s7651
        %s7653 = sand.u32 %s916, 1
        %s7654 = smul.addr %s7653, 16
        %s7655 = scalar_lea.vmem [#allocation6], %s7654
        // Predicated region
        $region169: #{tpu_custom_call.1} parent=167 // pred_check
          %p7656 = pneg %p900
        $region170: #{tpu_custom_call.1} parent=167 // pred_check_branch
          %7658 = sbr.rel (%p7656) target = $region172
        $region171: #{tpu_custom_call.1} parent=167 // pred_region
          _
        $region172: #{tpu_custom_call.1} parent=167 // pred_fallthru
          _
        // Predicated region
        $region173: #{tpu_custom_call.1} parent=167 // pred_check
          %p7659 = pneg %p926
        $region174: #{tpu_custom_call.1} parent=167 // pred_check_branch
          %7661 = sbr.rel (%p7659) target = $region176
        $region175: #{tpu_custom_call.1} parent=167 // pred_region
          %7663 = vsyncadd %s7652, 0
          %s7664 = smul.addr %s100, 2
          %s7665 = smul.addr %s7664, 8
          %s7666 = scalar_lea.hbm %s77, %s7665
          %s7667 = sshll.u32 %s7655, 4
          %s7668 = int_to_ptr.vmem [resolvable:$true] %s7667
          %s7669 = sshll.u32 %s7666, 4
          %s7670 = int_to_ptr.hbm [resolvable:$true] %s7669
          %7675 = dma.vmem_to_hbm [thread:$0]  %s7668, 256, %s7670, %s7652, 128, 128, 8
        $region176: #{tpu_custom_call.1} parent=167 // pred_fallthru
          _
      $region168: #{tpu_custom_call.1} parent=5 // pred_fallthru
        _
      %p7676 = scmp.le.s32.totalorder 2, %s95
      // Predicated region
      $region177: #{tpu_custom_call.1} parent=5 // pred_check
        %p7677 = pneg %p7676
      $region178: #{tpu_custom_call.1} parent=5 // pred_check_branch
        %7679 = sbr.rel (%p7677) target = $region180
      $region179: #{tpu_custom_call.1} parent=5 // pred_region
        %s7680 = ssub.s32 %s95, 2
        // Predicated region
        $region181: #{tpu_custom_call.1} parent=179 // pred_check
          %p7681 = pneg %p906
        $region182: #{tpu_custom_call.1} parent=179 // pred_check_branch
          %7683 = sbr.rel (%p7681) target = $region184
        $region183: #{tpu_custom_call.1} parent=179 // pred_region
          %p7684 = scmp.lt.s32.totalorder %s101, 1
          %s7685 = scalar_select %p7684, %s101, 1
          %s7686 = smul.addr %s7685, 2
          %s7687 = smul.addr %s7686, 8
          %s7688 = scalar_lea.vmem %s75, %s7687
        $region184: #{tpu_custom_call.1} parent=179 // pred_fallthru
          _
        // Predicated region
        $region185: #{tpu_custom_call.1} parent=179 // pred_check
          %p7689 = pneg %p932
        $region186: #{tpu_custom_call.1} parent=179 // pred_check_branch
          %7691 = sbr.rel (%p7689) target = $region188
        $region187: #{tpu_custom_call.1} parent=179 // pred_region
          %s7692 = sand.u32 %s917, 1
          %s7693 = scalar_lea.sflag [#allocation7], %s7692
          %s7694 = sand.u32 %s917, 1
          %s7695 = smul.addr %s7694, 16
          %s7696 = scalar_lea.vmem [#allocation6], %s7695
          %7698 = dma.done %s7693, 256
        $region188: #{tpu_custom_call.1} parent=179 // pred_fallthru
          _
      $region180: #{tpu_custom_call.1} parent=5 // pred_fallthru
        _
    $region6: #{tpu_custom_call.1} parent=1 // loop_footer
      %s99 = sadd.s32 1, %s95
    $region7: #{tpu_custom_call.1} parent=1 // loop_footer_branch
      %94 = sbr.rel target = $region3
    $region8: #{tpu_custom_call.1} parent=1 // loop_exit
      _
    %7699 = vsyncpa [#allocation7], 1
    %s7700 = scalar_lea.sflag [#allocation7], 1
    %7701 = vsyncpa %s7700, 1

</llo_original>
